<compile_context>
chip_gen: v6e
topology: v6e:2x2x1
jax: 0.10.0
libtpu: 0.0.40
codegen_flags: <defaults>
</compile_context>

<pallas_src>
import jax
import jax.numpy as jnp
from jax.experimental import pallas as pl
from jax.experimental.pallas import tpu as pltpu


# ------------------------------ fused kernel --------------------------------

def cnn_fused_kernel(x_ref, w1_ref, b1_ref, w2_ref, b2_ref,
                     fw1_ref, fb1_ref, fw2_ref, fb2_ref,
                     o_ref, pad_ref, patch_ref, pool_ref):
    # x_ref:    (NB, H, W, Cin)                 batch block (NHWC), f32
    # w1_ref:   (9*Cin, C1) bf16   b1_ref: (1, C1) f32
    # w2_ref:   (9*C1,  C2) bf16   b2_ref: (1, C2) f32
    # fw1_ref:  (8*C2, 256) bf16   fb1_ref: (1, 256) f32   (pool+fc1 merged)
    # fw2_ref:  (256, OUT_PAD) bf16  fb2_ref: (1, OUT_PAD) f32
    # o_ref:    (NB, OUT_PAD) f32
    # pad_ref:  (NB, H+2, W+2, CPAD) f32  zero-padded activation scratch (reused)
    # patch_ref:(NB*H*W, 9*CPAD) f32      im2col patch scratch (reused)
    # pool_ref: (NB, 8*C2) f32            pooled features in (h, w, c) order
    NB, H, W, Cin = x_ref.shape
    C1 = w1_ref.shape[-1]
    C2 = w2_ref.shape[-1]
    M = NB * H * W

    def build_patch(C):
        # Assemble the (M, 9*C) im2col patch with 9 lane-slice stores; tap
        # order (kh, kw, c) matches the weight row order.  Exact channel count
        # -> no zero columns in K.
        for kh in range(3):
            for kw in range(3):
                t = kh * 3 + kw
                tap = pad_ref[:, kh:kh + H, kw:kw + W, :C].reshape(M, C)
                patch_ref[:, t * C:(t + 1) * C] = tap
        return patch_ref[:, :9 * C].astype(jnp.bfloat16)

    # ---- conv1 + bias + relu: in-kernel zero pad, im2col, ONE bf16 matmul ----
    pad_ref[...] = jnp.zeros_like(pad_ref)          # border must be zero
    pad_ref[:, 1:H + 1, 1:W + 1, :Cin] = x_ref[...]
    h1 = jnp.dot(build_patch(Cin), w1_ref[...],
                 preferred_element_type=jnp.float32)
    h1 = jnp.maximum(h1 + b1_ref[...], 0.0)                         # (M, C1)

    # ---- conv2 + bias + relu: reuse the padded scratch (border still zero) ----
    pad_ref[:, 1:H + 1, 1:W + 1, :C1] = h1.reshape(NB, H, W, C1)
    h2 = jnp.dot(build_patch(C1), w2_ref[...],
                 preferred_element_type=jnp.float32)
    h2 = jnp.maximum(h2 + b2_ref[...], 0.0).reshape(NB, H, W, C2)

    # ---- AdaptiveAvgPool2d((4,2)) + flatten + fc1 as ONE matmul ----
    OH, OW = 4, 2
    sh, sw = H // OH, W // OW
    inv = 1.0 / float(sh * sw)
    for i in range(OH):
        for j in range(OW):
            win = h2[:, i * sh:(i + 1) * sh, j * sw:(j + 1) * sw, :]
            pooled = jnp.sum(win, axis=(1, 2)) * inv                 # (NB, C2)
            idx = i * OW + j
            pool_ref[:, idx * C2:(idx + 1) * C2] = pooled
    z = jnp.dot(pool_ref[...].astype(jnp.bfloat16), fw1_ref[...],
                preferred_element_type=jnp.float32)
    z = jnp.maximum(z + fb1_ref[...], 0.0)                           # (NB, 256)

    # ---- fc2 (lane-dense, 128-padded output) ----
    out = jnp.dot(z.astype(jnp.bfloat16), fw2_ref[...],
                  preferred_element_type=jnp.float32) + fb2_ref[...]
    o_ref[...] = out


# ------------------------------ JAX wrapper ----------------------------------

def _round_up(v, m):
    return (v + m - 1) // m * m


@jax.jit
def cnn_forward(x_nchw, p):
    """Fused Pallas forward pass. x_nchw: (N, Cin, H, W) float32."""
    x = jnp.transpose(x_nchw, (0, 2, 3, 1)).astype(jnp.float32)     # -> NHWC
    N, H, W, Cin = x.shape
    assert H % 4 == 0 and W % 2 == 0  # uniform-window adaptive-pool fast path

    c1 = p["w1"].shape[-1]
    c2 = p["w2"].shape[-1]
    out_pad = p["fw2"].shape[-1]
    out_dim = p["fw2_oi"].shape[0]
    cpad = max(c1, Cin)

    # Batch block: NB samples per grid step; pad N so every block is full.
    NB = N if N <= 8 else 8
    n_padded = _round_up(N, NB)
    if n_padded != N:
        x = jnp.pad(x, ((0, n_padded - N), (0, 0), (0, 0), (0, 0)))

    def whole(a):
        r = a.ndim
        return pl.BlockSpec(a.shape, lambda n: (0,) * r)

    out = pl.pallas_call(
        cnn_fused_kernel,
        out_shape=jax.ShapeDtypeStruct((n_padded, out_pad), jnp.float32),
        grid=(n_padded // NB,),
        in_specs=[
            pl.BlockSpec((NB, H, W, Cin), lambda n: (n, 0, 0, 0)),
            whole(p["w1"]), whole(p["b1"]),
            whole(p["w2"]), whole(p["b2"]),
            whole(p["fw1"]), whole(p["fb1"]),
            whole(p["fw2"]), whole(p["fb2"]),
        ],
        out_specs=pl.BlockSpec((NB, out_pad), lambda n: (n, 0)),
        scratch_shapes=[
            pltpu.VMEM((NB, H + 2, W + 2, cpad), jnp.float32),   # padded act
            pltpu.VMEM((NB * H * W, 9 * cpad), jnp.float32),     # im2col patch
            pltpu.VMEM((NB, 8 * c2), jnp.float32),               # pooled feats
        ],
        compiler_params=pltpu.CompilerParams(
            dimension_semantics=("parallel",),
            vmem_limit_bytes=32 * 1024 * 1024),
    )(x, p["w1"], p["b1"], p["w2"], p["b2"],
      p["fw1"], p["fb1"], p["fw2"], p["fb2"])
    return out[:N, :out_dim]


# ------------------------- pure-JAX reference (NCHW) -------------------------

def cnn_reference(x_nchw, p):
    dn = ("NCHW", "OIHW", "NCHW")
    prec = jax.lax.Precision.HIGHEST
    y = jax.lax.conv_general_dilated(x_nchw, p["cw1_oihw"], (1, 1), "SAME",
                                     dimension_numbers=dn, precision=prec)
    y = jnp.maximum(y + p["cb1"][None, :, None, None], 0.0)
    y = jax.lax.conv_general_dilated(y, p["cw2_oihw"], (1, 1), "SAME",
                                     dimension_numbers=dn, precision=prec)
    y = jnp.maximum(y + p["cb2"][None, :, None, None], 0.0)
    N, C, H, W = y.shape
    y = y.reshape(N, C, 4, H // 4, 2, W // 2).mean(axis=(3, 5))   # adaptive pool
    y = y.reshape(N, -1)                                          # NCHW flatten
    y = jnp.maximum(jnp.dot(y, p["fw1_oi"].T, precision=prec) + p["fb1_vec"], 0.0)
    return jnp.dot(y, p["fw2_oi"].T, precision=prec) + p["fb2_vec"]


# --------------------------------- params ------------------------------------

def make_params(key, input_channels, output_dim):
    ks = jax.random.split(key, 8)
    s = 0.05
    cw1 = jax.random.normal(ks[0], (16, input_channels, 3, 3), jnp.float32) * s  # OIHW
    cb1 = jax.random.normal(ks[1], (16,), jnp.float32) * s
    cw2 = jax.random.normal(ks[2], (32, 16, 3, 3), jnp.float32) * s
    cb2 = jax.random.normal(ks[3], (32,), jnp.float32) * s
    fw1 = jax.random.normal(ks[4], (256, 32 * 4 * 2), jnp.float32) * s            # (out, in)
    fb1 = jax.random.normal(ks[5], (256,), jnp.float32) * s
    fw2 = jax.random.normal(ks[6], (output_dim, 256), jnp.float32) * s
    fb2 = jax.random.normal(ks[7], (output_dim,), jnp.float32) * s

    def conv_w_im2col(w_oihw):
        # (O, I, 3, 3) -> (9*I, O) bf16, rows ordered (kh, kw, c).
        # Exact size: no zero-padded rows (kernel slices only real channels).
        o = w_oihw.shape[0]
        return (jnp.transpose(w_oihw, (2, 3, 1, 0))      # (3, 3, I, O)
                .reshape(-1, o).astype(jnp.bfloat16))

    # AdaptiveAvgPool + flatten + fc1 fused into one matmul: permute fc1 rows
    # from PyTorch's (c, h, w) flatten order to the kernel's pooled (h, w, c)
    # order ONCE here (free at run time).
    fw1_k = (fw1.T.reshape(32, 4, 2, 256)     # (c, h, w, out)
             .transpose(1, 2, 0, 3)           # (h, w, c, out)
             .reshape(4 * 2 * 32, 256)
             .astype(jnp.bfloat16))

    # fc2: lane-dense output — zero-pad output_dim up to a full 128-lane tile.
    out_pad = _round_up(output_dim, 128)
    fw2_k = jnp.zeros((256, out_pad), jnp.float32).at[:, :output_dim].set(fw2.T)
    fb2_k = jnp.zeros((1, out_pad), jnp.float32).at[0, :output_dim].set(fb2)

    return {
        # PyTorch-layout copies (used by the pure-JAX reference)
        "cw1_oihw": cw1, "cw2_oihw": cw2, "cb1": cb1, "cb2": cb2,
        "fw1_oi": fw1, "fb1_vec": fb1, "fw2_oi": fw2, "fb2_vec": fb2,
        # fused-kernel layouts
        "w1": conv_w_im2col(cw1), "b1": cb1.reshape(1, -1),
        "w2": conv_w_im2col(cw2), "b2": cb2.reshape(1, -1),
        "fw1": fw1_k, "fb1": fb1.reshape(1, -1),
        "fw2": fw2_k.astype(jnp.bfloat16), "fb2": fb2_k,
    }


# ----------------------------------- main -------------------------------------

if __name__ == "__main__":
    key = jax.random.PRNGKey(0)
    k_x, k_p = jax.random.split(key)

    batch, input_channels, H, W = 2, 4, 16, 16
    output_dim = 10

    x = jax.random.normal(k_x, (batch, input_channels, H, W), jnp.float32)
    params = make_params(k_p, input_channels, output_dim)

    out = jax.block_until_ready(cnn_forward(x, params))
    ref = jax.block_until_ready(cnn_reference(x, params))

    assert out.shape == (batch, output_dim), out.shape
    max_diff = float(jnp.max(jnp.abs(out - ref)))
    assert jnp.allclose(out, ref, atol=2e-2, rtol=2e-2), f"max abs diff {max_diff}"

    print("KERNEL_OK")
</pallas_src>

<mosaic_0001>
module attributes {stable_mosaic.version = 11 : i64} {
  func.func @cnn_fused_kernel(%arg0: i32, %arg1: memref<2x16x16x4xf32, #tpu.memory_space<vmem>>, %arg2: memref<36x16xbf16, #tpu.memory_space<vmem>>, %arg3: memref<1x16xf32, #tpu.memory_space<vmem>>, %arg4: memref<144x32xbf16, #tpu.memory_space<vmem>>, %arg5: memref<1x32xf32, #tpu.memory_space<vmem>>, %arg6: memref<256x256xbf16, #tpu.memory_space<vmem>>, %arg7: memref<1x256xf32, #tpu.memory_space<vmem>>, %arg8: memref<256x128xbf16, #tpu.memory_space<vmem>>, %arg9: memref<1x128xf32, #tpu.memory_space<vmem>>, %arg10: memref<2x128xf32, #tpu.memory_space<vmem>>, %arg11: memref<2x18x18x16xf32, #tpu.memory_space<vmem>>, %arg12: memref<512x144xf32, #tpu.memory_space<vmem>>, %arg13: memref<2x256xf32, #tpu.memory_space<vmem>>) attributes {dimension_semantics = [#tpu.dimension_semantics<parallel>], iteration_bounds = array<i64: 1>, scalar_prefetch = 0 : i64, scratch_operands = 3 : i64, tpu.core_type = #tpu.core_type<tc>, window_params = [{transform_indices = @transform_0, window_bounds = array<i64: 2, 16, 16, 4>}, {pipeline_mode = #tpu.pipeline_mode<synchronous>, transform_indices = @transform_1, window_bounds = array<i64: 36, 16>}, {pipeline_mode = #tpu.pipeline_mode<synchronous>, transform_indices = @transform_2, window_bounds = array<i64: 1, 16>}, {pipeline_mode = #tpu.pipeline_mode<synchronous>, transform_indices = @transform_3, window_bounds = array<i64: 144, 32>}, {pipeline_mode = #tpu.pipeline_mode<synchronous>, transform_indices = @transform_4, window_bounds = array<i64: 1, 32>}, {pipeline_mode = #tpu.pipeline_mode<synchronous>, transform_indices = @transform_5, window_bounds = array<i64: 256, 256>}, {pipeline_mode = #tpu.pipeline_mode<synchronous>, transform_indices = @transform_6, window_bounds = array<i64: 1, 256>}, {pipeline_mode = #tpu.pipeline_mode<synchronous>, transform_indices = @transform_7, window_bounds = array<i64: 256, 128>}, {pipeline_mode = #tpu.pipeline_mode<synchronous>, transform_indices = @transform_8, window_bounds = array<i64: 1, 128>}, {transform_indices = @transform_9, window_bounds = array<i64: 2, 128>}]} {
    %cst = arith.constant 0.000000e+00 : f32
    %0 = vector.broadcast %cst : f32 to vector<2x18x18x16xf32>
    %c0 = arith.constant 0 : index
    %c0_0 = arith.constant 0 : index
    %c0_1 = arith.constant 0 : index
    %c0_2 = arith.constant 0 : index
    %1 = vector.load %arg11[%c0, %c0_0, %c0_1, %c0_2] : memref<2x18x18x16xf32, #tpu.memory_space<vmem>>, vector<2x18x18x16xf32>
    tpu.vector_store %arg11[%c0, %c0_0, %c0_1, %c0_2], %0 {strides = array<i32>} : memref<2x18x18x16xf32, #tpu.memory_space<vmem>>, vector<2x18x18x16xf32>,
    %c0_3 = arith.constant 0 : index
    %c0_4 = arith.constant 0 : index
    %c0_5 = arith.constant 0 : index
    %c0_6 = arith.constant 0 : index
    %2 = vector.load %arg1[%c0_3, %c0_4, %c0_5, %c0_6] : memref<2x16x16x4xf32, #tpu.memory_space<vmem>>, vector<2x16x16x4xf32>
    %c0_7 = arith.constant 0 : index
    %c1 = arith.constant 1 : index
    %c1_8 = arith.constant 1 : index
    %c0_9 = arith.constant 0 : index
    %3 = vector.load %arg11[%c0_7, %c1, %c1_8, %c0_9] : memref<2x18x18x16xf32, #tpu.memory_space<vmem>>, vector<2x16x16x4xf32>
    tpu.vector_store %arg11[%c0_7, %c1, %c1_8, %c0_9], %2 {strides = array<i32>} : memref<2x18x18x16xf32, #tpu.memory_space<vmem>>, vector<2x16x16x4xf32>,
    %c0_10 = arith.constant 0 : index
    %c0_11 = arith.constant 0 : index
    %c0_12 = arith.constant 0 : index
    %c0_13 = arith.constant 0 : index
    %4 = vector.load %arg11[%c0_10, %c0_11, %c0_12, %c0_13] : memref<2x18x18x16xf32, #tpu.memory_space<vmem>>, vector<2x16x16x4xf32>
    %5 = vector.shape_cast %4 : vector<2x16x16x4xf32> to vector<512x4xf32>
    %c0_14 = arith.constant 0 : index
    %c0_15 = arith.constant 0 : index
    %6 = vector.load %arg12[%c0_14, %c0_15] : memref<512x144xf32, #tpu.memory_space<vmem>>, vector<512x4xf32>
    tpu.vector_store %arg12[%c0_14, %c0_15], %5 {strides = array<i32>} : memref<512x144xf32, #tpu.memory_space<vmem>>, vector<512x4xf32>,
    %c0_16 = arith.constant 0 : index
    %c0_17 = arith.constant 0 : index
    %c1_18 = arith.constant 1 : index
    %c0_19 = arith.constant 0 : index
    %7 = vector.load %arg11[%c0_16, %c0_17, %c1_18, %c0_19] : memref<2x18x18x16xf32, #tpu.memory_space<vmem>>, vector<2x16x16x4xf32>
    %8 = vector.shape_cast %7 : vector<2x16x16x4xf32> to vector<512x4xf32>
    %c0_20 = arith.constant 0 : index
    %c4 = arith.constant 4 : index
    %9 = vector.load %arg12[%c0_20, %c4] : memref<512x144xf32, #tpu.memory_space<vmem>>, vector<512x4xf32>
    tpu.vector_store %arg12[%c0_20, %c4], %8 {strides = array<i32>} : memref<512x144xf32, #tpu.memory_space<vmem>>, vector<512x4xf32>,
    %c0_21 = arith.constant 0 : index
    %c0_22 = arith.constant 0 : index
    %c2 = arith.constant 2 : index
    %c0_23 = arith.constant 0 : index
    %10 = vector.load %arg11[%c0_21, %c0_22, %c2, %c0_23] : memref<2x18x18x16xf32, #tpu.memory_space<vmem>>, vector<2x16x16x4xf32>
    %11 = vector.shape_cast %10 : vector<2x16x16x4xf32> to vector<512x4xf32>
    %c0_24 = arith.constant 0 : index
    %c8 = arith.constant 8 : index
    %12 = vector.load %arg12[%c0_24, %c8] : memref<512x144xf32, #tpu.memory_space<vmem>>, vector<512x4xf32>
    tpu.vector_store %arg12[%c0_24, %c8], %11 {strides = array<i32>} : memref<512x144xf32, #tpu.memory_space<vmem>>, vector<512x4xf32>,
    %c0_25 = arith.constant 0 : index
    %c1_26 = arith.constant 1 : index
    %c0_27 = arith.constant 0 : index
    %c0_28 = arith.constant 0 : index
    %13 = vector.load %arg11[%c0_25, %c1_26, %c0_27, %c0_28] : memref<2x18x18x16xf32, #tpu.memory_space<vmem>>, vector<2x16x16x4xf32>
    %14 = vector.shape_cast %13 : vector<2x16x16x4xf32> to vector<512x4xf32>
    %c0_29 = arith.constant 0 : index
    %c12 = arith.constant 12 : index
    %15 = vector.load %arg12[%c0_29, %c12] : memref<512x144xf32, #tpu.memory_space<vmem>>, vector<512x4xf32>
    tpu.vector_store %arg12[%c0_29, %c12], %14 {strides = array<i32>} : memref<512x144xf32, #tpu.memory_space<vmem>>, vector<512x4xf32>,
    %c0_30 = arith.constant 0 : index
    %c1_31 = arith.constant 1 : index
    %c1_32 = arith.constant 1 : index
    %c0_33 = arith.constant 0 : index
    %16 = vector.load %arg11[%c0_30, %c1_31, %c1_32, %c0_33] : memref<2x18x18x16xf32, #tpu.memory_space<vmem>>, vector<2x16x16x4xf32>
    %17 = vector.shape_cast %16 : vector<2x16x16x4xf32> to vector<512x4xf32>
    %c0_34 = arith.constant 0 : index
    %c16 = arith.constant 16 : index
    %18 = vector.load %arg12[%c0_34, %c16] : memref<512x144xf32, #tpu.memory_space<vmem>>, vector<512x4xf32>
    tpu.vector_store %arg12[%c0_34, %c16], %17 {strides = array<i32>} : memref<512x144xf32, #tpu.memory_space<vmem>>, vector<512x4xf32>,
    %c0_35 = arith.constant 0 : index
    %c1_36 = arith.constant 1 : index
    %c2_37 = arith.constant 2 : index
    %c0_38 = arith.constant 0 : index
    %19 = vector.load %arg11[%c0_35, %c1_36, %c2_37, %c0_38] : memref<2x18x18x16xf32, #tpu.memory_space<vmem>>, vector<2x16x16x4xf32>
    %20 = vector.shape_cast %19 : vector<2x16x16x4xf32> to vector<512x4xf32>
    %c0_39 = arith.constant 0 : index
    %c20 = arith.constant 20 : index
    %21 = vector.load %arg12[%c0_39, %c20] : memref<512x144xf32, #tpu.memory_space<vmem>>, vector<512x4xf32>
    tpu.vector_store %arg12[%c0_39, %c20], %20 {strides = array<i32>} : memref<512x144xf32, #tpu.memory_space<vmem>>, vector<512x4xf32>,
    %c0_40 = arith.constant 0 : index
    %c2_41 = arith.constant 2 : index
    %c0_42 = arith.constant 0 : index
    %c0_43 = arith.constant 0 : index
    %22 = vector.load %arg11[%c0_40, %c2_41, %c0_42, %c0_43] : memref<2x18x18x16xf32, #tpu.memory_space<vmem>>, vector<2x16x16x4xf32>
    %23 = vector.shape_cast %22 : vector<2x16x16x4xf32> to vector<512x4xf32>
    %c0_44 = arith.constant 0 : index
    %c24 = arith.constant 24 : index
    %24 = vector.load %arg12[%c0_44, %c24] : memref<512x144xf32, #tpu.memory_space<vmem>>, vector<512x4xf32>
    tpu.vector_store %arg12[%c0_44, %c24], %23 {strides = array<i32>} : memref<512x144xf32, #tpu.memory_space<vmem>>, vector<512x4xf32>,
    %c0_45 = arith.constant 0 : index
    %c2_46 = arith.constant 2 : index
    %c1_47 = arith.constant 1 : index
    %c0_48 = arith.constant 0 : index
    %25 = vector.load %arg11[%c0_45, %c2_46, %c1_47, %c0_48] : memref<2x18x18x16xf32, #tpu.memory_space<vmem>>, vector<2x16x16x4xf32>
    %26 = vector.shape_cast %25 : vector<2x16x16x4xf32> to vector<512x4xf32>
    %c0_49 = arith.constant 0 : index
    %c28 = arith.constant 28 : index
    %27 = vector.load %arg12[%c0_49, %c28] : memref<512x144xf32, #tpu.memory_space<vmem>>, vector<512x4xf32>
    tpu.vector_store %arg12[%c0_49, %c28], %26 {strides = array<i32>} : memref<512x144xf32, #tpu.memory_space<vmem>>, vector<512x4xf32>,
    %c0_50 = arith.constant 0 : index
    %c2_51 = arith.constant 2 : index
    %c2_52 = arith.constant 2 : index
    %c0_53 = arith.constant 0 : index
    %28 = vector.load %arg11[%c0_50, %c2_51, %c2_52, %c0_53] : memref<2x18x18x16xf32, #tpu.memory_space<vmem>>, vector<2x16x16x4xf32>
    %29 = vector.shape_cast %28 : vector<2x16x16x4xf32> to vector<512x4xf32>
    %c0_54 = arith.constant 0 : index
    %c32 = arith.constant 32 : index
    %30 = vector.load %arg12[%c0_54, %c32] : memref<512x144xf32, #tpu.memory_space<vmem>>, vector<512x4xf32>
    tpu.vector_store %arg12[%c0_54, %c32], %29 {strides = array<i32>} : memref<512x144xf32, #tpu.memory_space<vmem>>, vector<512x4xf32>,
    %c0_55 = arith.constant 0 : index
    %c0_56 = arith.constant 0 : index
    %31 = vector.load %arg12[%c0_55, %c0_56] : memref<512x144xf32, #tpu.memory_space<vmem>>, vector<512x36xf32>
    %32 = arith.truncf %31 : vector<512x36xf32> to vector<512x36xbf16>
    %c0_57 = arith.constant 0 : index
    %c0_58 = arith.constant 0 : index
    %33 = vector.load %arg2[%c0_57, %c0_58] : memref<36x16xbf16, #tpu.memory_space<vmem>>, vector<36x16xbf16>
    %cst_59 = arith.constant dense<0.000000e+00> : vector<512x16xf32>
    %34 = tpu.matmul %32, %33, %cst_59 {dimension_numbers = #tpu.dot_dimension_numbers<[1], [0], [0], [1], [0, 0, 1, 1], [], []>} : vector<512x36xbf16>, vector<36x16xbf16>, vector<512x16xf32> -> vector<512x16xf32>
    %c0_60 = arith.constant 0 : index
    %c0_61 = arith.constant 0 : index
    %35 = vector.load %arg3[%c0_60, %c0_61] : memref<1x16xf32, #tpu.memory_space<vmem>>, vector<1x16xf32>
    %36 = vector.broadcast %35 : vector<1x16xf32> to vector<512x16xf32>
    %37 = arith.addf %34, %36 : vector<512x16xf32>
    %cst_62 = arith.constant 0.000000e+00 : f32
    %38 = vector.broadcast %cst_62 : f32 to vector<512x16xf32>
    %39 = arith.maximumf %37, %38 : vector<512x16xf32>
    %40 = vector.shape_cast %39 : vector<512x16xf32> to vector<2x16x16x16xf32>
    %c0_63 = arith.constant 0 : index
    %c1_64 = arith.constant 1 : index
    %c1_65 = arith.constant 1 : index
    %c0_66 = arith.constant 0 : index
    %41 = vector.load %arg11[%c0_63, %c1_64, %c1_65, %c0_66] : memref<2x18x18x16xf32, #tpu.memory_space<vmem>>, vector<2x16x16x16xf32>
    tpu.vector_store %arg11[%c0_63, %c1_64, %c1_65, %c0_66], %40 {strides = array<i32>} : memref<2x18x18x16xf32, #tpu.memory_space<vmem>>, vector<2x16x16x16xf32>,
    %c0_67 = arith.constant 0 : index
    %c0_68 = arith.constant 0 : index
    %c0_69 = arith.constant 0 : index
    %c0_70 = arith.constant 0 : index
    %42 = vector.load %arg11[%c0_67, %c0_68, %c0_69, %c0_70] : memref<2x18x18x16xf32, #tpu.memory_space<vmem>>, vector<2x16x16x16xf32>
    %43 = vector.shape_cast %42 : vector<2x16x16x16xf32> to vector<512x16xf32>
    %c0_71 = arith.constant 0 : index
    %c0_72 = arith.constant 0 : index
    %44 = vector.load %arg12[%c0_71, %c0_72] : memref<512x144xf32, #tpu.memory_space<vmem>>, vector<512x16xf32>
    tpu.vector_store %arg12[%c0_71, %c0_72], %43 {strides = array<i32>} : memref<512x144xf32, #tpu.memory_space<vmem>>, vector<512x16xf32>,
    %c0_73 = arith.constant 0 : index
    %c0_74 = arith.constant 0 : index
    %c1_75 = arith.constant 1 : index
    %c0_76 = arith.constant 0 : index
    %45 = vector.load %arg11[%c0_73, %c0_74, %c1_75, %c0_76] : memref<2x18x18x16xf32, #tpu.memory_space<vmem>>, vector<2x16x16x16xf32>
    %46 = vector.shape_cast %45 : vector<2x16x16x16xf32> to vector<512x16xf32>
    %c0_77 = arith.constant 0 : index
    %c16_78 = arith.constant 16 : index
    %47 = vector.load %arg12[%c0_77, %c16_78] : memref<512x144xf32, #tpu.memory_space<vmem>>, vector<512x16xf32>
    tpu.vector_store %arg12[%c0_77, %c16_78], %46 {strides = array<i32>} : memref<512x144xf32, #tpu.memory_space<vmem>>, vector<512x16xf32>,
    %c0_79 = arith.constant 0 : index
    %c0_80 = arith.constant 0 : index
    %c2_81 = arith.constant 2 : index
    %c0_82 = arith.constant 0 : index
    %48 = vector.load %arg11[%c0_79, %c0_80, %c2_81, %c0_82] : memref<2x18x18x16xf32, #tpu.memory_space<vmem>>, vector<2x16x16x16xf32>
    %49 = vector.shape_cast %48 : vector<2x16x16x16xf32> to vector<512x16xf32>
    %c0_83 = arith.constant 0 : index
    %c32_84 = arith.constant 32 : index
    %50 = vector.load %arg12[%c0_83, %c32_84] : memref<512x144xf32, #tpu.memory_space<vmem>>, vector<512x16xf32>
    tpu.vector_store %arg12[%c0_83, %c32_84], %49 {strides = array<i32>} : memref<512x144xf32, #tpu.memory_space<vmem>>, vector<512x16xf32>,
    %c0_85 = arith.constant 0 : index
    %c1_86 = arith.constant 1 : index
    %c0_87 = arith.constant 0 : index
    %c0_88 = arith.constant 0 : index
    %51 = vector.load %arg11[%c0_85, %c1_86, %c0_87, %c0_88] : memref<2x18x18x16xf32, #tpu.memory_space<vmem>>, vector<2x16x16x16xf32>
    %52 = vector.shape_cast %51 : vector<2x16x16x16xf32> to vector<512x16xf32>
    %c0_89 = arith.constant 0 : index
    %c48 = arith.constant 48 : index
    %53 = vector.load %arg12[%c0_89, %c48] : memref<512x144xf32, #tpu.memory_space<vmem>>, vector<512x16xf32>
    tpu.vector_store %arg12[%c0_89, %c48], %52 {strides = array<i32>} : memref<512x144xf32, #tpu.memory_space<vmem>>, vector<512x16xf32>,
    %c0_90 = arith.constant 0 : index
    %c1_91 = arith.constant 1 : index
    %c1_92 = arith.constant 1 : index
    %c0_93 = arith.constant 0 : index
    %54 = vector.load %arg11[%c0_90, %c1_91, %c1_92, %c0_93] : memref<2x18x18x16xf32, #tpu.memory_space<vmem>>, vector<2x16x16x16xf32>
    %55 = vector.shape_cast %54 : vector<2x16x16x16xf32> to vector<512x16xf32>
    %c0_94 = arith.constant 0 : index
    %c64 = arith.constant 64 : index
    %56 = vector.load %arg12[%c0_94, %c64] : memref<512x144xf32, #tpu.memory_space<vmem>>, vector<512x16xf32>
    tpu.vector_store %arg12[%c0_94, %c64], %55 {strides = array<i32>} : memref<512x144xf32, #tpu.memory_space<vmem>>, vector<512x16xf32>,
    %c0_95 = arith.constant 0 : index
    %c1_96 = arith.constant 1 : index
    %c2_97 = arith.constant 2 : index
    %c0_98 = arith.constant 0 : index
    %57 = vector.load %arg11[%c0_95, %c1_96, %c2_97, %c0_98] : memref<2x18x18x16xf32, #tpu.memory_space<vmem>>, vector<2x16x16x16xf32>
    %58 = vector.shape_cast %57 : vector<2x16x16x16xf32> to vector<512x16xf32>
    %c0_99 = arith.constant 0 : index
    %c80 = arith.constant 80 : index
    %59 = vector.load %arg12[%c0_99, %c80] : memref<512x144xf32, #tpu.memory_space<vmem>>, vector<512x16xf32>
    tpu.vector_store %arg12[%c0_99, %c80], %58 {strides = array<i32>} : memref<512x144xf32, #tpu.memory_space<vmem>>, vector<512x16xf32>,
    %c0_100 = arith.constant 0 : index
    %c2_101 = arith.constant 2 : index
    %c0_102 = arith.constant 0 : index
    %c0_103 = arith.constant 0 : index
    %60 = vector.load %arg11[%c0_100, %c2_101, %c0_102, %c0_103] : memref<2x18x18x16xf32, #tpu.memory_space<vmem>>, vector<2x16x16x16xf32>
    %61 = vector.shape_cast %60 : vector<2x16x16x16xf32> to vector<512x16xf32>
    %c0_104 = arith.constant 0 : index
    %c96 = arith.constant 96 : index
    %62 = vector.load %arg12[%c0_104, %c96] : memref<512x144xf32, #tpu.memory_space<vmem>>, vector<512x16xf32>
    tpu.vector_store %arg12[%c0_104, %c96], %61 {strides = array<i32>} : memref<512x144xf32, #tpu.memory_space<vmem>>, vector<512x16xf32>,
    %c0_105 = arith.constant 0 : index
    %c2_106 = arith.constant 2 : index
    %c1_107 = arith.constant 1 : index
    %c0_108 = arith.constant 0 : index
    %63 = vector.load %arg11[%c0_105, %c2_106, %c1_107, %c0_108] : memref<2x18x18x16xf32, #tpu.memory_space<vmem>>, vector<2x16x16x16xf32>
    %64 = vector.shape_cast %63 : vector<2x16x16x16xf32> to vector<512x16xf32>
    %c0_109 = arith.constant 0 : index
    %c112 = arith.constant 112 : index
    %65 = vector.load %arg12[%c0_109, %c112] : memref<512x144xf32, #tpu.memory_space<vmem>>, vector<512x16xf32>
    tpu.vector_store %arg12[%c0_109, %c112], %64 {strides = array<i32>} : memref<512x144xf32, #tpu.memory_space<vmem>>, vector<512x16xf32>,
    %c0_110 = arith.constant 0 : index
    %c2_111 = arith.constant 2 : index
    %c2_112 = arith.constant 2 : index
    %c0_113 = arith.constant 0 : index
    %66 = vector.load %arg11[%c0_110, %c2_111, %c2_112, %c0_113] : memref<2x18x18x16xf32, #tpu.memory_space<vmem>>, vector<2x16x16x16xf32>
    %67 = vector.shape_cast %66 : vector<2x16x16x16xf32> to vector<512x16xf32>
    %c0_114 = arith.constant 0 : index
    %c128 = arith.constant 128 : index
    %68 = vector.load %arg12[%c0_114, %c128] : memref<512x144xf32, #tpu.memory_space<vmem>>, vector<512x16xf32>
    tpu.vector_store %arg12[%c0_114, %c128], %67 {strides = array<i32>} : memref<512x144xf32, #tpu.memory_space<vmem>>, vector<512x16xf32>,
    %c0_115 = arith.constant 0 : index
    %c0_116 = arith.constant 0 : index
    %69 = vector.load %arg12[%c0_115, %c0_116] : memref<512x144xf32, #tpu.memory_space<vmem>>, vector<512x144xf32>
    %70 = arith.truncf %69 : vector<512x144xf32> to vector<512x144xbf16>
    %c0_117 = arith.constant 0 : index
    %c0_118 = arith.constant 0 : index
    %71 = vector.load %arg4[%c0_117, %c0_118] : memref<144x32xbf16, #tpu.memory_space<vmem>>, vector<144x32xbf16>
    %cst_119 = arith.constant dense<0.000000e+00> : vector<512x32xf32>
    %72 = tpu.matmul %70, %71, %cst_119 {dimension_numbers = #tpu.dot_dimension_numbers<[1], [0], [0], [1], [0, 0, 1, 1], [], []>} : vector<512x144xbf16>, vector<144x32xbf16>, vector<512x32xf32> -> vector<512x32xf32>
    %c0_120 = arith.constant 0 : index
    %c0_121 = arith.constant 0 : index
    %73 = vector.load %arg5[%c0_120, %c0_121] : memref<1x32xf32, #tpu.memory_space<vmem>>, vector<1x32xf32>
    %74 = vector.broadcast %73 : vector<1x32xf32> to vector<512x32xf32>
    %75 = arith.addf %72, %74 : vector<512x32xf32>
    %cst_122 = arith.constant 0.000000e+00 : f32
    %76 = vector.broadcast %cst_122 : f32 to vector<512x32xf32>
    %77 = arith.maximumf %75, %76 : vector<512x32xf32>
    %78 = vector.shape_cast %77 : vector<512x32xf32> to vector<2x16x16x32xf32>
    %79 = vector.extract_strided_slice %78 {offsets = [0, 0, 0, 0], sizes = [2, 4, 8, 32], strides = [1, 1, 1, 1]} : vector<2x16x16x32xf32> to vector<2x4x8x32xf32>
    %cst_123 = arith.constant dense<0.000000e+00> : vector<2x32xf32>
    %80 = vector.multi_reduction <add>, %79, %cst_123 [1, 2] : vector<2x4x8x32xf32> to vector<2x32xf32>
    %cst_124 = arith.constant 3.125000e-02 : f32
    %81 = vector.broadcast %cst_124 : f32 to vector<2x32xf32>
    %82 = arith.mulf %80, %81 : vector<2x32xf32>
    %c0_125 = arith.constant 0 : index
    %c0_126 = arith.constant 0 : index
    %83 = vector.load %arg13[%c0_125, %c0_126] : memref<2x256xf32, #tpu.memory_space<vmem>>, vector<2x32xf32>
    tpu.vector_store %arg13[%c0_125, %c0_126], %82 {strides = array<i32>} : memref<2x256xf32, #tpu.memory_space<vmem>>, vector<2x32xf32>,
    %84 = vector.extract_strided_slice %78 {offsets = [0, 0, 8, 0], sizes = [2, 4, 8, 32], strides = [1, 1, 1, 1]} : vector<2x16x16x32xf32> to vector<2x4x8x32xf32>
    %cst_127 = arith.constant dense<0.000000e+00> : vector<2x32xf32>
    %85 = vector.multi_reduction <add>, %84, %cst_127 [1, 2] : vector<2x4x8x32xf32> to vector<2x32xf32>
    %cst_128 = arith.constant 3.125000e-02 : f32
    %86 = vector.broadcast %cst_128 : f32 to vector<2x32xf32>
    %87 = arith.mulf %85, %86 : vector<2x32xf32>
    %c0_129 = arith.constant 0 : index
    %c32_130 = arith.constant 32 : index
    %88 = vector.load %arg13[%c0_129, %c32_130] : memref<2x256xf32, #tpu.memory_space<vmem>>, vector<2x32xf32>
    tpu.vector_store %arg13[%c0_129, %c32_130], %87 {strides = array<i32>} : memref<2x256xf32, #tpu.memory_space<vmem>>, vector<2x32xf32>,
    %89 = vector.extract_strided_slice %78 {offsets = [0, 4, 0, 0], sizes = [2, 4, 8, 32], strides = [1, 1, 1, 1]} : vector<2x16x16x32xf32> to vector<2x4x8x32xf32>
    %cst_131 = arith.constant dense<0.000000e+00> : vector<2x32xf32>
    %90 = vector.multi_reduction <add>, %89, %cst_131 [1, 2] : vector<2x4x8x32xf32> to vector<2x32xf32>
    %cst_132 = arith.constant 3.125000e-02 : f32
    %91 = vector.broadcast %cst_132 : f32 to vector<2x32xf32>
    %92 = arith.mulf %90, %91 : vector<2x32xf32>
    %c0_133 = arith.constant 0 : index
    %c64_134 = arith.constant 64 : index
    %93 = vector.load %arg13[%c0_133, %c64_134] : memref<2x256xf32, #tpu.memory_space<vmem>>, vector<2x32xf32>
    tpu.vector_store %arg13[%c0_133, %c64_134], %92 {strides = array<i32>} : memref<2x256xf32, #tpu.memory_space<vmem>>, vector<2x32xf32>,
    %94 = vector.extract_strided_slice %78 {offsets = [0, 4, 8, 0], sizes = [2, 4, 8, 32], strides = [1, 1, 1, 1]} : vector<2x16x16x32xf32> to vector<2x4x8x32xf32>
    %cst_135 = arith.constant dense<0.000000e+00> : vector<2x32xf32>
    %95 = vector.multi_reduction <add>, %94, %cst_135 [1, 2] : vector<2x4x8x32xf32> to vector<2x32xf32>
    %cst_136 = arith.constant 3.125000e-02 : f32
    %96 = vector.broadcast %cst_136 : f32 to vector<2x32xf32>
    %97 = arith.mulf %95, %96 : vector<2x32xf32>
    %c0_137 = arith.constant 0 : index
    %c96_138 = arith.constant 96 : index
    %98 = vector.load %arg13[%c0_137, %c96_138] : memref<2x256xf32, #tpu.memory_space<vmem>>, vector<2x32xf32>
    tpu.vector_store %arg13[%c0_137, %c96_138], %97 {strides = array<i32>} : memref<2x256xf32, #tpu.memory_space<vmem>>, vector<2x32xf32>,
    %99 = vector.extract_strided_slice %78 {offsets = [0, 8, 0, 0], sizes = [2, 4, 8, 32], strides = [1, 1, 1, 1]} : vector<2x16x16x32xf32> to vector<2x4x8x32xf32>
    %cst_139 = arith.constant dense<0.000000e+00> : vector<2x32xf32>
    %100 = vector.multi_reduction <add>, %99, %cst_139 [1, 2] : vector<2x4x8x32xf32> to vector<2x32xf32>
    %cst_140 = arith.constant 3.125000e-02 : f32
    %101 = vector.broadcast %cst_140 : f32 to vector<2x32xf32>
    %102 = arith.mulf %100, %101 : vector<2x32xf32>
    %c0_141 = arith.constant 0 : index
    %c128_142 = arith.constant 128 : index
    %103 = vector.load %arg13[%c0_141, %c128_142] : memref<2x256xf32, #tpu.memory_space<vmem>>, vector<2x32xf32>
    tpu.vector_store %arg13[%c0_141, %c128_142], %102 {strides = array<i32>} : memref<2x256xf32, #tpu.memory_space<vmem>>, vector<2x32xf32>,
    %104 = vector.extract_strided_slice %78 {offsets = [0, 8, 8, 0], sizes = [2, 4, 8, 32], strides = [1, 1, 1, 1]} : vector<2x16x16x32xf32> to vector<2x4x8x32xf32>
    %cst_143 = arith.constant dense<0.000000e+00> : vector<2x32xf32>
    %105 = vector.multi_reduction <add>, %104, %cst_143 [1, 2] : vector<2x4x8x32xf32> to vector<2x32xf32>
    %cst_144 = arith.constant 3.125000e-02 : f32
    %106 = vector.broadcast %cst_144 : f32 to vector<2x32xf32>
    %107 = arith.mulf %105, %106 : vector<2x32xf32>
    %c0_145 = arith.constant 0 : index
    %c160 = arith.constant 160 : index
    %108 = vector.load %arg13[%c0_145, %c160] : memref<2x256xf32, #tpu.memory_space<vmem>>, vector<2x32xf32>
    tpu.vector_store %arg13[%c0_145, %c160], %107 {strides = array<i32>} : memref<2x256xf32, #tpu.memory_space<vmem>>, vector<2x32xf32>,
    %109 = vector.extract_strided_slice %78 {offsets = [0, 12, 0, 0], sizes = [2, 4, 8, 32], strides = [1, 1, 1, 1]} : vector<2x16x16x32xf32> to vector<2x4x8x32xf32>
    %cst_146 = arith.constant dense<0.000000e+00> : vector<2x32xf32>
    %110 = vector.multi_reduction <add>, %109, %cst_146 [1, 2] : vector<2x4x8x32xf32> to vector<2x32xf32>
    %cst_147 = arith.constant 3.125000e-02 : f32
    %111 = vector.broadcast %cst_147 : f32 to vector<2x32xf32>
    %112 = arith.mulf %110, %111 : vector<2x32xf32>
    %c0_148 = arith.constant 0 : index
    %c192 = arith.constant 192 : index
    %113 = vector.load %arg13[%c0_148, %c192] : memref<2x256xf32, #tpu.memory_space<vmem>>, vector<2x32xf32>
    tpu.vector_store %arg13[%c0_148, %c192], %112 {strides = array<i32>} : memref<2x256xf32, #tpu.memory_space<vmem>>, vector<2x32xf32>,
    %114 = vector.extract_strided_slice %78 {offsets = [0, 12, 8, 0], sizes = [2, 4, 8, 32], strides = [1, 1, 1, 1]} : vector<2x16x16x32xf32> to vector<2x4x8x32xf32>
    %cst_149 = arith.constant dense<0.000000e+00> : vector<2x32xf32>
    %115 = vector.multi_reduction <add>, %114, %cst_149 [1, 2] : vector<2x4x8x32xf32> to vector<2x32xf32>
    %cst_150 = arith.constant 3.125000e-02 : f32
    %116 = vector.broadcast %cst_150 : f32 to vector<2x32xf32>
    %117 = arith.mulf %115, %116 : vector<2x32xf32>
    %c0_151 = arith.constant 0 : index
    %c224 = arith.constant 224 : index
    %118 = vector.load %arg13[%c0_151, %c224] : memref<2x256xf32, #tpu.memory_space<vmem>>, vector<2x32xf32>
    tpu.vector_store %arg13[%c0_151, %c224], %117 {strides = array<i32>} : memref<2x256xf32, #tpu.memory_space<vmem>>, vector<2x32xf32>,
    %c0_152 = arith.constant 0 : index
    %c0_153 = arith.constant 0 : index
    %119 = vector.load %arg13[%c0_152, %c0_153] : memref<2x256xf32, #tpu.memory_space<vmem>>, vector<2x256xf32>
    %120 = arith.truncf %119 : vector<2x256xf32> to vector<2x256xbf16>
    %c0_154 = arith.constant 0 : index
    %c0_155 = arith.constant 0 : index
    %121 = vector.load %arg6[%c0_154, %c0_155] : memref<256x256xbf16, #tpu.memory_space<vmem>>, vector<256x256xbf16>
    %cst_156 = arith.constant dense<0.000000e+00> : vector<2x256xf32>
    %122 = tpu.matmul %120, %121, %cst_156 {dimension_numbers = #tpu.dot_dimension_numbers<[1], [0], [0], [1], [0, 0, 1, 1], [], []>} : vector<2x256xbf16>, vector<256x256xbf16>, vector<2x256xf32> -> vector<2x256xf32>
    %c0_157 = arith.constant 0 : index
    %c0_158 = arith.constant 0 : index
    %123 = vector.load %arg7[%c0_157, %c0_158] : memref<1x256xf32, #tpu.memory_space<vmem>>, vector<1x256xf32>
    %124 = vector.broadcast %123 : vector<1x256xf32> to vector<2x256xf32>
    %125 = arith.addf %122, %124 : vector<2x256xf32>
    %cst_159 = arith.constant 0.000000e+00 : f32
    %126 = vector.broadcast %cst_159 : f32 to vector<2x256xf32>
    %127 = arith.maximumf %125, %126 : vector<2x256xf32>
    %128 = arith.truncf %127 : vector<2x256xf32> to vector<2x256xbf16>
    %c0_160 = arith.constant 0 : index
    %c0_161 = arith.constant 0 : index
    %129 = vector.load %arg8[%c0_160, %c0_161] : memref<256x128xbf16, #tpu.memory_space<vmem>>, vector<256x128xbf16>
    %cst_162 = arith.constant dense<0.000000e+00> : vector<2x128xf32>
    %130 = tpu.matmul %128, %129, %cst_162 {dimension_numbers = #tpu.dot_dimension_numbers<[1], [0], [0], [1], [0, 0, 1, 1], [], []>} : vector<2x256xbf16>, vector<256x128xbf16>, vector<2x128xf32> -> vector<2x128xf32>
    %c0_163 = arith.constant 0 : index
    %c0_164 = arith.constant 0 : index
    %131 = vector.load %arg9[%c0_163, %c0_164] : memref<1x128xf32, #tpu.memory_space<vmem>>, vector<1x128xf32>
    %132 = vector.broadcast %131 : vector<1x128xf32> to vector<2x128xf32>
    %133 = arith.addf %130, %132 : vector<2x128xf32>
    %c0_165 = arith.constant 0 : index
    %c0_166 = arith.constant 0 : index
    %134 = vector.load %arg10[%c0_165, %c0_166] : memref<2x128xf32, #tpu.memory_space<vmem>>, vector<2x128xf32>
    tpu.vector_store %arg10[%c0_165, %c0_166], %133 {strides = array<i32>} : memref<2x128xf32, #tpu.memory_space<vmem>>, vector<2x128xf32>,
    return
  }
  func.func @transform_0(%arg0: i32) -> (i32, i32, i32, i32) {
    %c0_i32 = arith.constant 0 : i32
    %c0_i32_0 = arith.constant 0 : i32
    %c0_i32_1 = arith.constant 0 : i32
    %c0_i32_2 = arith.constant 0 : i32
    return %arg0, %c0_i32, %c0_i32_0, %c0_i32_1 : i32, i32, i32, i32
  }
  func.func @transform_1(%arg0: i32) -> (i32, i32) {
    %c0_i32 = arith.constant 0 : i32
    %c0_i32_0 = arith.constant 0 : i32
    %c0_i32_1 = arith.constant 0 : i32
    return %c0_i32, %c0_i32_0 : i32, i32
  }
  func.func @transform_2(%arg0: i32) -> (i32, i32) {
    %c0_i32 = arith.constant 0 : i32
    %c0_i32_0 = arith.constant 0 : i32
    %c0_i32_1 = arith.constant 0 : i32
    return %c0_i32, %c0_i32_0 : i32, i32
  }
  func.func @transform_3(%arg0: i32) -> (i32, i32) {
    %c0_i32 = arith.constant 0 : i32
    %c0_i32_0 = arith.constant 0 : i32
    %c0_i32_1 = arith.constant 0 : i32
    return %c0_i32, %c0_i32_0 : i32, i32
  }
  func.func @transform_4(%arg0: i32) -> (i32, i32) {
    %c0_i32 = arith.constant 0 : i32
    %c0_i32_0 = arith.constant 0 : i32
    %c0_i32_1 = arith.constant 0 : i32
    return %c0_i32, %c0_i32_0 : i32, i32
  }
  func.func @transform_5(%arg0: i32) -> (i32, i32) {
    %c0_i32 = arith.constant 0 : i32
    %c0_i32_0 = arith.constant 0 : i32
    %c0_i32_1 = arith.constant 0 : i32
    return %c0_i32, %c0_i32_0 : i32, i32
  }
  func.func @transform_6(%arg0: i32) -> (i32, i32) {
    %c0_i32 = arith.constant 0 : i32
    %c0_i32_0 = arith.constant 0 : i32
    %c0_i32_1 = arith.constant 0 : i32
    return %c0_i32, %c0_i32_0 : i32, i32
  }
  func.func @transform_7(%arg0: i32) -> (i32, i32) {
    %c0_i32 = arith.constant 0 : i32
    %c0_i32_0 = arith.constant 0 : i32
    %c0_i32_1 = arith.constant 0 : i32
    return %c0_i32, %c0_i32_0 : i32, i32
  }
  func.func @transform_8(%arg0: i32) -> (i32, i32) {
    %c0_i32 = arith.constant 0 : i32
    %c0_i32_0 = arith.constant 0 : i32
    %c0_i32_1 = arith.constant 0 : i32
    return %c0_i32, %c0_i32_0 : i32, i32
  }
  func.func @transform_9(%arg0: i32) -> (i32, i32) {
    %c0_i32 = arith.constant 0 : i32
    %c0_i32_0 = arith.constant 0 : i32
    return %arg0, %c0_i32 : i32, i32
  }
}

</mosaic_0001>

<llo_original>
// kernel: cnn_forward.1
$region0: #{cnn_forward.1}
  #allocation0 [shape = 'u32[]', space=smem, size = 0x4, offset = 0x4, fixed_abs, tag = 'smem constant byte address 0x4 - core index']
  #allocation1 [shape = 'u32[144,128]{1,0:T(1,128)}', space=vmem, size = 0x12000, scoped, tag = 'internal scratch']
  #allocation2 [shape = 'f32[2,18,18,16]{3,2,1,0:T(8,128)}', space=vmem, size = 0x6c000, scoped, tag = 'scratch operand']
  #allocation3 [shape = 'f32[512,144]{1,0:T(8,128)}', space=vmem, size = 0x80000, scoped, tag = 'scratch operand']
  #allocation4 [shape = 'f32[2,256]{1,0:T(2,128)}', space=vmem, size = 0x800, scoped, tag = 'scratch operand']
  %s0 = inlined_call_operand.vmem [shape: f32[2,16,16,4], index: 0, kind: input, shape index: {}]
  %s1 = inlined_call_operand.vmem [shape: bf16[36,16], index: 1, kind: input, shape index: {}]
  %s2 = inlined_call_operand.vmem [shape: f32[1,16], index: 2, kind: input, shape index: {}]
  %s3 = inlined_call_operand.vmem [shape: bf16[144,32], index: 3, kind: input, shape index: {}]
  %s4 = inlined_call_operand.vmem [shape: f32[1,32], index: 4, kind: input, shape index: {}]
  %s5 = inlined_call_operand.vmem [shape: bf16[256,256], index: 5, kind: input, shape index: {}]
  %s6 = inlined_call_operand.vmem [shape: f32[1,256], index: 6, kind: input, shape index: {}]
  %s7 = inlined_call_operand.vmem [shape: bf16[256,128], index: 7, kind: input, shape index: {}]
  %s8 = inlined_call_operand.vmem [shape: f32[1,128], index: 8, kind: input, shape index: {}]
  %s9 = inlined_call_operand.hbm [shape: f32[2,128], index: 9, kind: output, shape index: {}]
  %s10 = sld [smem:[#allocation0]]
  $region46: #{cnn_forward.1} parent=0
    _
  %s12 = ssub.s32 1, %s10
  %s13 = scalar_select 0, %s12, %s10
  $region1: #{cnn_forward.1} parent=0
    #allocation5 [shape = 'u8[1024]{0}', space=vmem, size = 0x400, scoped, tag = 'output window, operand 0, single buffered']
    #allocation6 [shape = 's32[1]{0}', space=sflag, size = 0x4, scoped, tag = 'scoped memory for cnn_forward.1']
    %14 = vsyncpa [#allocation6], 0
    // Predicated region
    $region2: #{cnn_forward.1} parent=1 // pred_check
      _
    $region3: #{cnn_forward.1} parent=1 // pred_check_branch
      %16 = sbr.rel (0) target = $region5
    $region4: #{cnn_forward.1} parent=1 // pred_region
      _
    $region5: #{cnn_forward.1} parent=1 // pred_fallthru
      _
    // Predicated region
    $region6: #{cnn_forward.1} parent=1 // pred_check
      _
    $region7: #{cnn_forward.1} parent=1 // pred_check_branch
      %18 = sbr.rel (0) target = $region9
    $region8: #{cnn_forward.1} parent=1 // pred_region
      _
    $region9: #{cnn_forward.1} parent=1 // pred_fallthru
      _
    // Predicated region
    $region10: #{cnn_forward.1} parent=1 // pred_check
      _
    $region11: #{cnn_forward.1} parent=1 // pred_check_branch
      %20 = sbr.rel (0) target = $region13
    $region12: #{cnn_forward.1} parent=1 // pred_region
      _
    $region13: #{cnn_forward.1} parent=1 // pred_fallthru
      _
    // Predicated region
    $region14: #{cnn_forward.1} parent=1 // pred_check
      _
    $region15: #{cnn_forward.1} parent=1 // pred_check_branch
      %22 = sbr.rel (0) target = $region17
    $region16: #{cnn_forward.1} parent=1 // pred_region
      _
    $region17: #{cnn_forward.1} parent=1 // pred_fallthru
      _
    // Predicated region
    $region18: #{cnn_forward.1} parent=1 // pred_check
      _
    $region19: #{cnn_forward.1} parent=1 // pred_check_branch
      %24 = sbr.rel (0) target = $region21
    $region20: #{cnn_forward.1} parent=1 // pred_region
      _
    $region21: #{cnn_forward.1} parent=1 // pred_fallthru
      _
    // Predicated region
    $region22: #{cnn_forward.1} parent=1 // pred_check
      _
    $region23: #{cnn_forward.1} parent=1 // pred_check_branch
      %26 = sbr.rel (0) target = $region25
    $region24: #{cnn_forward.1} parent=1 // pred_region
      _
    $region25: #{cnn_forward.1} parent=1 // pred_fallthru
      _
    // Predicated region
    $region26: #{cnn_forward.1} parent=1 // pred_check
      _
    $region27: #{cnn_forward.1} parent=1 // pred_check_branch
      %28 = sbr.rel (0) target = $region29
    $region28: #{cnn_forward.1} parent=1 // pred_region
      _
    $region29: #{cnn_forward.1} parent=1 // pred_fallthru
      _
    // Predicated region
    $region30: #{cnn_forward.1} parent=1 // pred_check
      _
    $region31: #{cnn_forward.1} parent=1 // pred_check_branch
      %30 = sbr.rel (0) target = $region33
    $region32: #{cnn_forward.1} parent=1 // pred_region
      _
    $region33: #{cnn_forward.1} parent=1 // pred_fallthru
      _
    // Predicated region
    $region34: #{cnn_forward.1} parent=1 // pred_check
      _
    $region35: #{cnn_forward.1} parent=1 // pred_check_branch
      %32 = sbr.rel (0) target = $region37
    $region36: #{cnn_forward.1} parent=1 // pred_region
      _
    $region37: #{cnn_forward.1} parent=1 // pred_fallthru
      _
    %vm34 = vcmask 130048
    %35 = vst.msk [vmem:[#allocation2] sm:$0xff] %vm34, 0.0
    %36 = vst.msk [vmem:[#allocation2 + $0x8] sm:$0xff] %vm34, 0.0
    %vm37 = vcmask 123904
    %38 = vst.msk [vmem:[#allocation2 + $0x10] sm:$0x3] %vm37, 0.0
    %39 = vst.msk [vmem:[#allocation2 + $0x18] sm:$0xff] %vm34, 0.0
    %40 = vst.msk [vmem:[#allocation2 + $0x20] sm:$0xff] %vm34, 0.0
    %41 = vst.msk [vmem:[#allocation2 + $0x28] sm:$0x3] %vm37, 0.0
    %42 = vst.msk [vmem:[#allocation2 + $0x30] sm:$0xff] %vm34, 0.0
    %43 = vst.msk [vmem:[#allocation2 + $0x38] sm:$0xff] %vm34, 0.0
    %44 = vst.msk [vmem:[#allocation2 + $0x40] sm:$0x3] %vm37, 0.0
    %45 = vst.msk [vmem:[#allocation2 + $0x48] sm:$0xff] %vm34, 0.0
    %46 = vst.msk [vmem:[#allocation2 + $0x50] sm:$0xff] %vm34, 0.0
    %47 = vst.msk [vmem:[#allocation2 + $0x58] sm:$0x3] %vm37, 0.0
    %48 = vst.msk [vmem:[#allocation2 + $0x60] sm:$0xff] %vm34, 0.0
    %49 = vst.msk [vmem:[#allocation2 + $0x68] sm:$0xff] %vm34, 0.0
    %50 = vst.msk [vmem:[#allocation2 + $0x70] sm:$0x3] %vm37, 0.0
    %51 = vst.msk [vmem:[#allocation2 + $0x78] sm:$0xff] %vm34, 0.0
    %52 = vst.msk [vmem:[#allocation2 + $0x80] sm:$0xff] %vm34, 0.0
    %53 = vst.msk [vmem:[#allocation2 + $0x88] sm:$0x3] %vm37, 0.0
    %54 = vst.msk [vmem:[#allocation2 + $0x90] sm:$0xff] %vm34, 0.0
    %55 = vst.msk [vmem:[#allocation2 + $0x98] sm:$0xff] %vm34, 0.0
    %56 = vst.msk [vmem:[#allocation2 + $0xa0] sm:$0x3] %vm37, 0.0
    %57 = vst.msk [vmem:[#allocation2 + $0xa8] sm:$0xff] %vm34, 0.0
    %58 = vst.msk [vmem:[#allocation2 + $0xb0] sm:$0xff] %vm34, 0.0
    %59 = vst.msk [vmem:[#allocation2 + $0xb8] sm:$0x3] %vm37, 0.0
    %60 = vst.msk [vmem:[#allocation2 + $0xc0] sm:$0xff] %vm34, 0.0
    %61 = vst.msk [vmem:[#allocation2 + $0xc8] sm:$0xff] %vm34, 0.0
    %62 = vst.msk [vmem:[#allocation2 + $0xd0] sm:$0x3] %vm37, 0.0
    %63 = vst.msk [vmem:[#allocation2 + $0xd8] sm:$0xff] %vm34, 0.0
    %64 = vst.msk [vmem:[#allocation2 + $0xe0] sm:$0xff] %vm34, 0.0
    %65 = vst.msk [vmem:[#allocation2 + $0xe8] sm:$0x3] %vm37, 0.0
    %66 = vst.msk [vmem:[#allocation2 + $0xf0] sm:$0xff] %vm34, 0.0
    %67 = vst.msk [vmem:[#allocation2 + $0xf8] sm:$0xff] %vm34, 0.0
    %68 = vst.msk [vmem:[#allocation2 + $0x100] sm:$0x3] %vm37, 0.0
    %69 = vst.msk [vmem:[#allocation2 + $0x108] sm:$0xff] %vm34, 0.0
    %70 = vst.msk [vmem:[#allocation2 + $0x110] sm:$0xff] %vm34, 0.0
    %71 = vst.msk [vmem:[#allocation2 + $0x118] sm:$0x3] %vm37, 0.0
    %72 = vst.msk [vmem:[#allocation2 + $0x120] sm:$0xff] %vm34, 0.0
    %73 = vst.msk [vmem:[#allocation2 + $0x128] sm:$0xff] %vm34, 0.0
    %74 = vst.msk [vmem:[#allocation2 + $0x130] sm:$0x3] %vm37, 0.0
    %75 = vst.msk [vmem:[#allocation2 + $0x138] sm:$0xff] %vm34, 0.0
    %76 = vst.msk [vmem:[#allocation2 + $0x140] sm:$0xff] %vm34, 0.0
    %77 = vst.msk [vmem:[#allocation2 + $0x148] sm:$0x3] %vm37, 0.0
    %78 = vst.msk [vmem:[#allocation2 + $0x150] sm:$0xff] %vm34, 0.0
    %79 = vst.msk [vmem:[#allocation2 + $0x158] sm:$0xff] %vm34, 0.0
    %80 = vst.msk [vmem:[#allocation2 + $0x160] sm:$0x3] %vm37, 0.0
    %81 = vst.msk [vmem:[#allocation2 + $0x168] sm:$0xff] %vm34, 0.0
    %82 = vst.msk [vmem:[#allocation2 + $0x170] sm:$0xff] %vm34, 0.0
    %83 = vst.msk [vmem:[#allocation2 + $0x178] sm:$0x3] %vm37, 0.0
    %84 = vst.msk [vmem:[#allocation2 + $0x180] sm:$0xff] %vm34, 0.0
    %85 = vst.msk [vmem:[#allocation2 + $0x188] sm:$0xff] %vm34, 0.0
    %86 = vst.msk [vmem:[#allocation2 + $0x190] sm:$0x3] %vm37, 0.0
    %87 = vst.msk [vmem:[#allocation2 + $0x198] sm:$0xff] %vm34, 0.0
    %88 = vst.msk [vmem:[#allocation2 + $0x1a0] sm:$0xff] %vm34, 0.0
    %89 = vst.msk [vmem:[#allocation2 + $0x1a8] sm:$0x3] %vm37, 0.0
    %90 = vst.msk [vmem:[#allocation2 + $0x1b0] sm:$0xff] %vm34, 0.0
    %91 = vst.msk [vmem:[#allocation2 + $0x1b8] sm:$0xff] %vm34, 0.0
    %92 = vst.msk [vmem:[#allocation2 + $0x1c0] sm:$0x3] %vm37, 0.0
    %93 = vst.msk [vmem:[#allocation2 + $0x1c8] sm:$0xff] %vm34, 0.0
    %94 = vst.msk [vmem:[#allocation2 + $0x1d0] sm:$0xff] %vm34, 0.0
    %95 = vst.msk [vmem:[#allocation2 + $0x1d8] sm:$0x3] %vm37, 0.0
    %96 = vst.msk [vmem:[#allocation2 + $0x1e0] sm:$0xff] %vm34, 0.0
    %97 = vst.msk [vmem:[#allocation2 + $0x1e8] sm:$0xff] %vm34, 0.0
    %98 = vst.msk [vmem:[#allocation2 + $0x1f0] sm:$0x3] %vm37, 0.0
    %99 = vst.msk [vmem:[#allocation2 + $0x1f8] sm:$0xff] %vm34, 0.0
    %100 = vst.msk [vmem:[#allocation2 + $0x200] sm:$0xff] %vm34, 0.0
    %101 = vst.msk [vmem:[#allocation2 + $0x208] sm:$0x3] %vm37, 0.0
    %102 = vst.msk [vmem:[#allocation2 + $0x210] sm:$0xff] %vm34, 0.0
    %103 = vst.msk [vmem:[#allocation2 + $0x218] sm:$0xff] %vm34, 0.0
    %104 = vst.msk [vmem:[#allocation2 + $0x220] sm:$0x3] %vm37, 0.0
    %105 = vst.msk [vmem:[#allocation2 + $0x228] sm:$0xff] %vm34, 0.0
    %106 = vst.msk [vmem:[#allocation2 + $0x230] sm:$0xff] %vm34, 0.0
    %107 = vst.msk [vmem:[#allocation2 + $0x238] sm:$0x3] %vm37, 0.0
    %108 = vst.msk [vmem:[#allocation2 + $0x240] sm:$0xff] %vm34, 0.0
    %109 = vst.msk [vmem:[#allocation2 + $0x248] sm:$0xff] %vm34, 0.0
    %110 = vst.msk [vmem:[#allocation2 + $0x250] sm:$0x3] %vm37, 0.0
    %111 = vst.msk [vmem:[#allocation2 + $0x258] sm:$0xff] %vm34, 0.0
    %112 = vst.msk [vmem:[#allocation2 + $0x260] sm:$0xff] %vm34, 0.0
    %113 = vst.msk [vmem:[#allocation2 + $0x268] sm:$0x3] %vm37, 0.0
    %114 = vst.msk [vmem:[#allocation2 + $0x270] sm:$0xff] %vm34, 0.0
    %115 = vst.msk [vmem:[#allocation2 + $0x278] sm:$0xff] %vm34, 0.0
    %116 = vst.msk [vmem:[#allocation2 + $0x280] sm:$0x3] %vm37, 0.0
    %117 = vst.msk [vmem:[#allocation2 + $0x288] sm:$0xff] %vm34, 0.0
    %118 = vst.msk [vmem:[#allocation2 + $0x290] sm:$0xff] %vm34, 0.0
    %119 = vst.msk [vmem:[#allocation2 + $0x298] sm:$0x3] %vm37, 0.0
    %120 = vst.msk [vmem:[#allocation2 + $0x2a0] sm:$0xff] %vm34, 0.0
    %121 = vst.msk [vmem:[#allocation2 + $0x2a8] sm:$0xff] %vm34, 0.0
    %122 = vst.msk [vmem:[#allocation2 + $0x2b0] sm:$0x3] %vm37, 0.0
    %123 = vst.msk [vmem:[#allocation2 + $0x2b8] sm:$0xff] %vm34, 0.0
    %124 = vst.msk [vmem:[#allocation2 + $0x2c0] sm:$0xff] %vm34, 0.0
    %125 = vst.msk [vmem:[#allocation2 + $0x2c8] sm:$0x3] %vm37, 0.0
    %126 = vst.msk [vmem:[#allocation2 + $0x2d0] sm:$0xff] %vm34, 0.0
    %127 = vst.msk [vmem:[#allocation2 + $0x2d8] sm:$0xff] %vm34, 0.0
    %128 = vst.msk [vmem:[#allocation2 + $0x2e0] sm:$0x3] %vm37, 0.0
    %129 = vst.msk [vmem:[#allocation2 + $0x2e8] sm:$0xff] %vm34, 0.0
    %130 = vst.msk [vmem:[#allocation2 + $0x2f0] sm:$0xff] %vm34, 0.0
    %131 = vst.msk [vmem:[#allocation2 + $0x2f8] sm:$0x3] %vm37, 0.0
    %132 = vst.msk [vmem:[#allocation2 + $0x300] sm:$0xff] %vm34, 0.0
    %133 = vst.msk [vmem:[#allocation2 + $0x308] sm:$0xff] %vm34, 0.0
    %134 = vst.msk [vmem:[#allocation2 + $0x310] sm:$0x3] %vm37, 0.0
    %135 = vst.msk [vmem:[#allocation2 + $0x318] sm:$0xff] %vm34, 0.0
    %136 = vst.msk [vmem:[#allocation2 + $0x320] sm:$0xff] %vm34, 0.0
    %137 = vst.msk [vmem:[#allocation2 + $0x328] sm:$0x3] %vm37, 0.0
    %138 = vst.msk [vmem:[#allocation2 + $0x330] sm:$0xff] %vm34, 0.0
    %139 = vst.msk [vmem:[#allocation2 + $0x338] sm:$0xff] %vm34, 0.0
    %140 = vst.msk [vmem:[#allocation2 + $0x340] sm:$0x3] %vm37, 0.0
    %141 = vst.msk [vmem:[#allocation2 + $0x348] sm:$0xff] %vm34, 0.0
    %142 = vst.msk [vmem:[#allocation2 + $0x350] sm:$0xff] %vm34, 0.0
    %143 = vst.msk [vmem:[#allocation2 + $0x358] sm:$0x3] %vm37, 0.0
    %v144 = vld [vmem:[%s0] sm:$0xff]
    %v145 = vld [vmem:[%s0 + $0x8] sm:$0xff]
    %v146 = vld [vmem:[%s0 + $0x10] sm:$0xff]
    %v147 = vld [vmem:[%s0 + $0x18] sm:$0xff]
    %v148 = vld [vmem:[%s0 + $0x20] sm:$0xff]
    %v149 = vld [vmem:[%s0 + $0x28] sm:$0xff]
    %v150 = vld [vmem:[%s0 + $0x30] sm:$0xff]
    %v151 = vld [vmem:[%s0 + $0x38] sm:$0xff]
    %v152 = vld [vmem:[%s0 + $0x40] sm:$0xff]
    %v153 = vld [vmem:[%s0 + $0x48] sm:$0xff]
    %v154 = vld [vmem:[%s0 + $0x50] sm:$0xff]
    %v155 = vld [vmem:[%s0 + $0x58] sm:$0xff]
    %v156 = vld [vmem:[%s0 + $0x60] sm:$0xff]
    %v157 = vld [vmem:[%s0 + $0x68] sm:$0xff]
    %v158 = vld [vmem:[%s0 + $0x70] sm:$0xff]
    %v159 = vld [vmem:[%s0 + $0x78] sm:$0xff]
    %v160 = vld [vmem:[%s0 + $0x80] sm:$0xff]
    %v161 = vld [vmem:[%s0 + $0x88] sm:$0xff]
    %v162 = vld [vmem:[%s0 + $0x90] sm:$0xff]
    %v163 = vld [vmem:[%s0 + $0x98] sm:$0xff]
    %v164 = vld [vmem:[%s0 + $0xa0] sm:$0xff]
    %v165 = vld [vmem:[%s0 + $0xa8] sm:$0xff]
    %v166 = vld [vmem:[%s0 + $0xb0] sm:$0xff]
    %v167 = vld [vmem:[%s0 + $0xb8] sm:$0xff]
    %v168 = vld [vmem:[%s0 + $0xc0] sm:$0xff]
    %v169 = vld [vmem:[%s0 + $0xc8] sm:$0xff]
    %v170 = vld [vmem:[%s0 + $0xd0] sm:$0xff]
    %v171 = vld [vmem:[%s0 + $0xd8] sm:$0xff]
    %v172 = vld [vmem:[%s0 + $0xe0] sm:$0xff]
    %v173 = vld [vmem:[%s0 + $0xe8] sm:$0xff]
    %v174 = vld [vmem:[%s0 + $0xf0] sm:$0xff]
    %v175 = vld [vmem:[%s0 + $0xf8] sm:$0xff]
    %v176 = vld [vmem:[%s0 + $0x100] sm:$0xff]
    %v177 = vld [vmem:[%s0 + $0x108] sm:$0xff]
    %v178 = vld [vmem:[%s0 + $0x110] sm:$0xff]
    %v179 = vld [vmem:[%s0 + $0x118] sm:$0xff]
    %v180 = vld [vmem:[%s0 + $0x120] sm:$0xff]
    %v181 = vld [vmem:[%s0 + $0x128] sm:$0xff]
    %v182 = vld [vmem:[%s0 + $0x130] sm:$0xff]
    %v183 = vld [vmem:[%s0 + $0x138] sm:$0xff]
    %v184 = vld [vmem:[%s0 + $0x140] sm:$0xff]
    %v185 = vld [vmem:[%s0 + $0x148] sm:$0xff]
    %v186 = vld [vmem:[%s0 + $0x150] sm:$0xff]
    %v187 = vld [vmem:[%s0 + $0x158] sm:$0xff]
    %v188 = vld [vmem:[%s0 + $0x160] sm:$0xff]
    %v189 = vld [vmem:[%s0 + $0x168] sm:$0xff]
    %v190 = vld [vmem:[%s0 + $0x170] sm:$0xff]
    %v191 = vld [vmem:[%s0 + $0x178] sm:$0xff]
    %v192 = vld [vmem:[%s0 + $0x180] sm:$0xff]
    %v193 = vld [vmem:[%s0 + $0x188] sm:$0xff]
    %v194 = vld [vmem:[%s0 + $0x190] sm:$0xff]
    %v195 = vld [vmem:[%s0 + $0x198] sm:$0xff]
    %v196 = vld [vmem:[%s0 + $0x1a0] sm:$0xff]
    %v197 = vld [vmem:[%s0 + $0x1a8] sm:$0xff]
    %v198 = vld [vmem:[%s0 + $0x1b0] sm:$0xff]
    %v199 = vld [vmem:[%s0 + $0x1b8] sm:$0xff]
    %v200 = vld [vmem:[%s0 + $0x1c0] sm:$0xff]
    %v201 = vld [vmem:[%s0 + $0x1c8] sm:$0xff]
    %v202 = vld [vmem:[%s0 + $0x1d0] sm:$0xff]
    %v203 = vld [vmem:[%s0 + $0x1d8] sm:$0xff]
    %v204 = vld [vmem:[%s0 + $0x1e0] sm:$0xff]
    %v205 = vld [vmem:[%s0 + $0x1e8] sm:$0xff]
    %v206 = vld [vmem:[%s0 + $0x1f0] sm:$0xff]
    %v207 = vld [vmem:[%s0 + $0x1f8] sm:$0xff]
    %s208 = scalar_lea.vmem [#allocation2], 24
    %vm209 = vcmask 31744
    %210 = vst.msk [vmem:[%s208 + $0x1] sm:$0xff] %vm209, %v144
    %211 = vst.msk [vmem:[%s208 + $0x9] sm:$0xff] %vm209, %v145
    %212 = vst.msk [vmem:[%s208 + $0x19] sm:$0xff] %vm209, %v146
    %213 = vst.msk [vmem:[%s208 + $0x21] sm:$0xff] %vm209, %v147
    %214 = vst.msk [vmem:[%s208 + $0x31] sm:$0xff] %vm209, %v148
    %215 = vst.msk [vmem:[%s208 + $0x39] sm:$0xff] %vm209, %v149
    %216 = vst.msk [vmem:[%s208 + $0x49] sm:$0xff] %vm209, %v150
    %217 = vst.msk [vmem:[%s208 + $0x51] sm:$0xff] %vm209, %v151
    %218 = vst.msk [vmem:[%s208 + $0x61] sm:$0xff] %vm209, %v152
    %219 = vst.msk [vmem:[%s208 + $0x69] sm:$0xff] %vm209, %v153
    %220 = vst.msk [vmem:[%s208 + $0x79] sm:$0xff] %vm209, %v154
    %221 = vst.msk [vmem:[%s208 + $0x81] sm:$0xff] %vm209, %v155
    %222 = vst.msk [vmem:[%s208 + $0x91] sm:$0xff] %vm209, %v156
    %223 = vst.msk [vmem:[%s208 + $0x99] sm:$0xff] %vm209, %v157
    %224 = vst.msk [vmem:[%s208 + $0xa9] sm:$0xff] %vm209, %v158
    %225 = vst.msk [vmem:[%s208 + $0xb1] sm:$0xff] %vm209, %v159
    %226 = vst.msk [vmem:[%s208 + $0xc1] sm:$0xff] %vm209, %v160
    %227 = vst.msk [vmem:[%s208 + $0xc9] sm:$0xff] %vm209, %v161
    %228 = vst.msk [vmem:[%s208 + $0xd9] sm:$0xff] %vm209, %v162
    %229 = vst.msk [vmem:[%s208 + $0xe1] sm:$0xff] %vm209, %v163
    %230 = vst.msk [vmem:[%s208 + $0xf1] sm:$0xff] %vm209, %v164
    %231 = vst.msk [vmem:[%s208 + $0xf9] sm:$0xff] %vm209, %v165
    %232 = vst.msk [vmem:[%s208 + $0x109] sm:$0xff] %vm209, %v166
    %233 = vst.msk [vmem:[%s208 + $0x111] sm:$0xff] %vm209, %v167
    %234 = vst.msk [vmem:[%s208 + $0x121] sm:$0xff] %vm209, %v168
    %235 = vst.msk [vmem:[%s208 + $0x129] sm:$0xff] %vm209, %v169
    %236 = vst.msk [vmem:[%s208 + $0x139] sm:$0xff] %vm209, %v170
    %237 = vst.msk [vmem:[%s208 + $0x141] sm:$0xff] %vm209, %v171
    %238 = vst.msk [vmem:[%s208 + $0x151] sm:$0xff] %vm209, %v172
    %239 = vst.msk [vmem:[%s208 + $0x159] sm:$0xff] %vm209, %v173
    %240 = vst.msk [vmem:[%s208 + $0x169] sm:$0xff] %vm209, %v174
    %241 = vst.msk [vmem:[%s208 + $0x171] sm:$0xff] %vm209, %v175
    %242 = vst.msk [vmem:[%s208 + $0x1b1] sm:$0xff] %vm209, %v176
    %243 = vst.msk [vmem:[%s208 + $0x1b9] sm:$0xff] %vm209, %v177
    %244 = vst.msk [vmem:[%s208 + $0x1c9] sm:$0xff] %vm209, %v178
    %245 = vst.msk [vmem:[%s208 + $0x1d1] sm:$0xff] %vm209, %v179
    %246 = vst.msk [vmem:[%s208 + $0x1e1] sm:$0xff] %vm209, %v180
    %247 = vst.msk [vmem:[%s208 + $0x1e9] sm:$0xff] %vm209, %v181
    %248 = vst.msk [vmem:[%s208 + $0x1f9] sm:$0xff] %vm209, %v182
    %249 = vst.msk [vmem:[%s208 + $0x201] sm:$0xff] %vm209, %v183
    %250 = vst.msk [vmem:[%s208 + $0x211] sm:$0xff] %vm209, %v184
    %251 = vst.msk [vmem:[%s208 + $0x219] sm:$0xff] %vm209, %v185
    %252 = vst.msk [vmem:[%s208 + $0x229] sm:$0xff] %vm209, %v186
    %253 = vst.msk [vmem:[%s208 + $0x231] sm:$0xff] %vm209, %v187
    %254 = vst.msk [vmem:[%s208 + $0x241] sm:$0xff] %vm209, %v188
    %255 = vst.msk [vmem:[%s208 + $0x249] sm:$0xff] %vm209, %v189
    %256 = vst.msk [vmem:[%s208 + $0x259] sm:$0xff] %vm209, %v190
    %257 = vst.msk [vmem:[%s208 + $0x261] sm:$0xff] %vm209, %v191
    %258 = vst.msk [vmem:[%s208 + $0x271] sm:$0xff] %vm209, %v192
    %259 = vst.msk [vmem:[%s208 + $0x279] sm:$0xff] %vm209, %v193
    %260 = vst.msk [vmem:[%s208 + $0x289] sm:$0xff] %vm209, %v194
    %261 = vst.msk [vmem:[%s208 + $0x291] sm:$0xff] %vm209, %v195
    %262 = vst.msk [vmem:[%s208 + $0x2a1] sm:$0xff] %vm209, %v196
    %263 = vst.msk [vmem:[%s208 + $0x2a9] sm:$0xff] %vm209, %v197
    %264 = vst.msk [vmem:[%s208 + $0x2b9] sm:$0xff] %vm209, %v198
    %265 = vst.msk [vmem:[%s208 + $0x2c1] sm:$0xff] %vm209, %v199
    %266 = vst.msk [vmem:[%s208 + $0x2d1] sm:$0xff] %vm209, %v200
    %267 = vst.msk [vmem:[%s208 + $0x2d9] sm:$0xff] %vm209, %v201
    %268 = vst.msk [vmem:[%s208 + $0x2e9] sm:$0xff] %vm209, %v202
    %269 = vst.msk [vmem:[%s208 + $0x2f1] sm:$0xff] %vm209, %v203
    %270 = vst.msk [vmem:[%s208 + $0x301] sm:$0xff] %vm209, %v204
    %271 = vst.msk [vmem:[%s208 + $0x309] sm:$0xff] %vm209, %v205
    %272 = vst.msk [vmem:[%s208 + $0x319] sm:$0xff] %vm209, %v206
    %273 = vst.msk [vmem:[%s208 + $0x321] sm:$0xff] %vm209, %v207
    %v274 = vld [vmem:[#allocation2] sm:$0xff]
    %v275 = vld [vmem:[#allocation2 + $0x8] sm:$0xff]
    %v276 = vld [vmem:[#allocation2 + $0x18] sm:$0xff]
    %v277 = vld [vmem:[#allocation2 + $0x20] sm:$0xff]
    %v278 = vld [vmem:[#allocation2 + $0x30] sm:$0xff]
    %v279 = vld [vmem:[#allocation2 + $0x38] sm:$0xff]
    %v280 = vld [vmem:[#allocation2 + $0x48] sm:$0xff]
    %v281 = vld [vmem:[#allocation2 + $0x50] sm:$0xff]
    %v282 = vld [vmem:[#allocation2 + $0x60] sm:$0xff]
    %v283 = vld [vmem:[#allocation2 + $0x68] sm:$0xff]
    %v284 = vld [vmem:[#allocation2 + $0x78] sm:$0xff]
    %v285 = vld [vmem:[#allocation2 + $0x80] sm:$0xff]
    %v286 = vld [vmem:[#allocation2 + $0x90] sm:$0xff]
    %v287 = vld [vmem:[#allocation2 + $0x98] sm:$0xff]
    %v288 = vld [vmem:[#allocation2 + $0xa8] sm:$0xff]
    %v289 = vld [vmem:[#allocation2 + $0xb0] sm:$0xff]
    %v290 = vld [vmem:[#allocation2 + $0xc0] sm:$0xff]
    %v291 = vld [vmem:[#allocation2 + $0xc8] sm:$0xff]
    %v292 = vld [vmem:[#allocation2 + $0xd8] sm:$0xff]
    %v293 = vld [vmem:[#allocation2 + $0xe0] sm:$0xff]
    %v294 = vld [vmem:[#allocation2 + $0xf0] sm:$0xff]
    %v295 = vld [vmem:[#allocation2 + $0xf8] sm:$0xff]
    %v296 = vld [vmem:[#allocation2 + $0x108] sm:$0xff]
    %v297 = vld [vmem:[#allocation2 + $0x110] sm:$0xff]
    %v298 = vld [vmem:[#allocation2 + $0x120] sm:$0xff]
    %v299 = vld [vmem:[#allocation2 + $0x128] sm:$0xff]
    %v300 = vld [vmem:[#allocation2 + $0x138] sm:$0xff]
    %v301 = vld [vmem:[#allocation2 + $0x140] sm:$0xff]
    %v302 = vld [vmem:[#allocation2 + $0x150] sm:$0xff]
    %v303 = vld [vmem:[#allocation2 + $0x158] sm:$0xff]
    %v304 = vld [vmem:[#allocation2 + $0x168] sm:$0xff]
    %v305 = vld [vmem:[#allocation2 + $0x170] sm:$0xff]
    %v306 = vld [vmem:[#allocation2 + $0x1b0] sm:$0xff]
    %v307 = vld [vmem:[#allocation2 + $0x1b8] sm:$0xff]
    %v308 = vld [vmem:[#allocation2 + $0x1c8] sm:$0xff]
    %v309 = vld [vmem:[#allocation2 + $0x1d0] sm:$0xff]
    %v310 = vld [vmem:[#allocation2 + $0x1e0] sm:$0xff]
    %v311 = vld [vmem:[#allocation2 + $0x1e8] sm:$0xff]
    %v312 = vld [vmem:[#allocation2 + $0x1f8] sm:$0xff]
    %v313 = vld [vmem:[#allocation2 + $0x200] sm:$0xff]
    %v314 = vld [vmem:[#allocation2 + $0x210] sm:$0xff]
    %v315 = vld [vmem:[#allocation2 + $0x218] sm:$0xff]
    %v316 = vld [vmem:[#allocation2 + $0x228] sm:$0xff]
    %v317 = vld [vmem:[#allocation2 + $0x230] sm:$0xff]
    %v318 = vld [vmem:[#allocation2 + $0x240] sm:$0xff]
    %v319 = vld [vmem:[#allocation2 + $0x248] sm:$0xff]
    %v320 = vld [vmem:[#allocation2 + $0x258] sm:$0xff]
    %v321 = vld [vmem:[#allocation2 + $0x260] sm:$0xff]
    %v322 = vld [vmem:[#allocation2 + $0x270] sm:$0xff]
    %v323 = vld [vmem:[#allocation2 + $0x278] sm:$0xff]
    %v324 = vld [vmem:[#allocation2 + $0x288] sm:$0xff]
    %v325 = vld [vmem:[#allocation2 + $0x290] sm:$0xff]
    %v326 = vld [vmem:[#allocation2 + $0x2a0] sm:$0xff]
    %v327 = vld [vmem:[#allocation2 + $0x2a8] sm:$0xff]
    %v328 = vld [vmem:[#allocation2 + $0x2b8] sm:$0xff]
    %v329 = vld [vmem:[#allocation2 + $0x2c0] sm:$0xff]
    %v330 = vld [vmem:[#allocation2 + $0x2d0] sm:$0xff]
    %v331 = vld [vmem:[#allocation2 + $0x2d8] sm:$0xff]
    %v332 = vld [vmem:[#allocation2 + $0x2e8] sm:$0xff]
    %v333 = vld [vmem:[#allocation2 + $0x2f0] sm:$0xff]
    %v334 = vld [vmem:[#allocation2 + $0x300] sm:$0xff]
    %v335 = vld [vmem:[#allocation2 + $0x308] sm:$0xff]
    %v336 = vld [vmem:[#allocation2 + $0x318] sm:$0xff]
    %v337 = vld [vmem:[#allocation2 + $0x320] sm:$0xff]
    %338 = vst.msk [vmem:[#allocation3] sm:$0xff] %vm209, %v274
    %339 = vst.msk [vmem:[#allocation3 + $0x10] sm:$0xff] %vm209, %v275
    %340 = vst.msk [vmem:[#allocation3 + $0x20] sm:$0xff] %vm209, %v276
    %341 = vst.msk [vmem:[#allocation3 + $0x30] sm:$0xff] %vm209, %v277
    %342 = vst.msk [vmem:[#allocation3 + $0x40] sm:$0xff] %vm209, %v278
    %343 = vst.msk [vmem:[#allocation3 + $0x50] sm:$0xff] %vm209, %v279
    %344 = vst.msk [vmem:[#allocation3 + $0x60] sm:$0xff] %vm209, %v280
    %345 = vst.msk [vmem:[#allocation3 + $0x70] sm:$0xff] %vm209, %v281
    %346 = vst.msk [vmem:[#allocation3 + $0x80] sm:$0xff] %vm209, %v282
    %347 = vst.msk [vmem:[#allocation3 + $0x90] sm:$0xff] %vm209, %v283
    %348 = vst.msk [vmem:[#allocation3 + $0xa0] sm:$0xff] %vm209, %v284
    %349 = vst.msk [vmem:[#allocation3 + $0xb0] sm:$0xff] %vm209, %v285
    %350 = vst.msk [vmem:[#allocation3 + $0xc0] sm:$0xff] %vm209, %v286
    %351 = vst.msk [vmem:[#allocation3 + $0xd0] sm:$0xff] %vm209, %v287
    %352 = vst.msk [vmem:[#allocation3 + $0xe0] sm:$0xff] %vm209, %v288
    %353 = vst.msk [vmem:[#allocation3 + $0xf0] sm:$0xff] %vm209, %v289
    %354 = vst.msk [vmem:[#allocation3 + $0x100] sm:$0xff] %vm209, %v290
    %355 = vst.msk [vmem:[#allocation3 + $0x110] sm:$0xff] %vm209, %v291
    %356 = vst.msk [vmem:[#allocation3 + $0x120] sm:$0xff] %vm209, %v292
    %357 = vst.msk [vmem:[#allocation3 + $0x130] sm:$0xff] %vm209, %v293
    %358 = vst.msk [vmem:[#allocation3 + $0x140] sm:$0xff] %vm209, %v294
    %359 = vst.msk [vmem:[#allocation3 + $0x150] sm:$0xff] %vm209, %v295
    %360 = vst.msk [vmem:[#allocation3 + $0x160] sm:$0xff] %vm209, %v296
    %361 = vst.msk [vmem:[#allocation3 + $0x170] sm:$0xff] %vm209, %v297
    %362 = vst.msk [vmem:[#allocation3 + $0x180] sm:$0xff] %vm209, %v298
    %363 = vst.msk [vmem:[#allocation3 + $0x190] sm:$0xff] %vm209, %v299
    %364 = vst.msk [vmem:[#allocation3 + $0x1a0] sm:$0xff] %vm209, %v300
    %365 = vst.msk [vmem:[#allocation3 + $0x1b0] sm:$0xff] %vm209, %v301
    %366 = vst.msk [vmem:[#allocation3 + $0x1c0] sm:$0xff] %vm209, %v302
    %367 = vst.msk [vmem:[#allocation3 + $0x1d0] sm:$0xff] %vm209, %v303
    %368 = vst.msk [vmem:[#allocation3 + $0x1e0] sm:$0xff] %vm209, %v304
    %369 = vst.msk [vmem:[#allocation3 + $0x1f0] sm:$0xff] %vm209, %v305
    %370 = vst.msk [vmem:[#allocation3 + $0x200] sm:$0xff] %vm209, %v306
    %371 = vst.msk [vmem:[#allocation3 + $0x210] sm:$0xff] %vm209, %v307
    %372 = vst.msk [vmem:[#allocation3 + $0x220] sm:$0xff] %vm209, %v308
    %373 = vst.msk [vmem:[#allocation3 + $0x230] sm:$0xff] %vm209, %v309
    %374 = vst.msk [vmem:[#allocation3 + $0x240] sm:$0xff] %vm209, %v310
    %375 = vst.msk [vmem:[#allocation3 + $0x250] sm:$0xff] %vm209, %v311
    %376 = vst.msk [vmem:[#allocation3 + $0x260] sm:$0xff] %vm209, %v312
    %377 = vst.msk [vmem:[#allocation3 + $0x270] sm:$0xff] %vm209, %v313
    %378 = vst.msk [vmem:[#allocation3 + $0x280] sm:$0xff] %vm209, %v314
    %379 = vst.msk [vmem:[#allocation3 + $0x290] sm:$0xff] %vm209, %v315
    %380 = vst.msk [vmem:[#allocation3 + $0x2a0] sm:$0xff] %vm209, %v316
    %381 = vst.msk [vmem:[#allocation3 + $0x2b0] sm:$0xff] %vm209, %v317
    %382 = vst.msk [vmem:[#allocation3 + $0x2c0] sm:$0xff] %vm209, %v318
    %383 = vst.msk [vmem:[#allocation3 + $0x2d0] sm:$0xff] %vm209, %v319
    %384 = vst.msk [vmem:[#allocation3 + $0x2e0] sm:$0xff] %vm209, %v320
    %385 = vst.msk [vmem:[#allocation3 + $0x2f0] sm:$0xff] %vm209, %v321
    %386 = vst.msk [vmem:[#allocation3 + $0x300] sm:$0xff] %vm209, %v322
    %387 = vst.msk [vmem:[#allocation3 + $0x310] sm:$0xff] %vm209, %v323
    %388 = vst.msk [vmem:[#allocation3 + $0x320] sm:$0xff] %vm209, %v324
    %389 = vst.msk [vmem:[#allocation3 + $0x330] sm:$0xff] %vm209, %v325
    %390 = vst.msk [vmem:[#allocation3 + $0x340] sm:$0xff] %vm209, %v326
    %391 = vst.msk [vmem:[#allocation3 + $0x350] sm:$0xff] %vm209, %v327
    %392 = vst.msk [vmem:[#allocation3 + $0x360] sm:$0xff] %vm209, %v328
    %393 = vst.msk [vmem:[#allocation3 + $0x370] sm:$0xff] %vm209, %v329
    %394 = vst.msk [vmem:[#allocation3 + $0x380] sm:$0xff] %vm209, %v330
    %395 = vst.msk [vmem:[#allocation3 + $0x390] sm:$0xff] %vm209, %v331
    %396 = vst.msk [vmem:[#allocation3 + $0x3a0] sm:$0xff] %vm209, %v332
    %397 = vst.msk [vmem:[#allocation3 + $0x3b0] sm:$0xff] %vm209, %v333
    %398 = vst.msk [vmem:[#allocation3 + $0x3c0] sm:$0xff] %vm209, %v334
    %399 = vst.msk [vmem:[#allocation3 + $0x3d0] sm:$0xff] %vm209, %v335
    %400 = vst.msk [vmem:[#allocation3 + $0x3e0] sm:$0xff] %vm209, %v336
    %401 = vst.msk [vmem:[#allocation3 + $0x3f0] sm:$0xff] %vm209, %v337
    %v402 = vld [vmem:[#allocation2 + $0x1] sm:$0xff]
    %v403 = vld [vmem:[#allocation2 + $0x9] sm:$0xff]
    %v404 = vld [vmem:[#allocation2 + $0x19] sm:$0xff]
    %v405 = vld [vmem:[#allocation2 + $0x21] sm:$0xff]
    %v406 = vld [vmem:[#allocation2 + $0x31] sm:$0xff]
    %v407 = vld [vmem:[#allocation2 + $0x39] sm:$0xff]
    %v408 = vld [vmem:[#allocation2 + $0x49] sm:$0xff]
    %v409 = vld [vmem:[#allocation2 + $0x51] sm:$0xff]
    %v410 = vld [vmem:[#allocation2 + $0x61] sm:$0xff]
    %v411 = vld [vmem:[#allocation2 + $0x69] sm:$0xff]
    %v412 = vld [vmem:[#allocation2 + $0x79] sm:$0xff]
    %v413 = vld [vmem:[#allocation2 + $0x81] sm:$0xff]
    %v414 = vld [vmem:[#allocation2 + $0x91] sm:$0xff]
    %v415 = vld [vmem:[#allocation2 + $0x99] sm:$0xff]
    %v416 = vld [vmem:[#allocation2 + $0xa9] sm:$0xff]
    %v417 = vld [vmem:[#allocation2 + $0xb1] sm:$0xff]
    %v418 = vld [vmem:[#allocation2 + $0xc1] sm:$0xff]
    %v419 = vld [vmem:[#allocation2 + $0xc9] sm:$0xff]
    %v420 = vld [vmem:[#allocation2 + $0xd9] sm:$0xff]
    %v421 = vld [vmem:[#allocation2 + $0xe1] sm:$0xff]
    %v422 = vld [vmem:[#allocation2 + $0xf1] sm:$0xff]
    %v423 = vld [vmem:[#allocation2 + $0xf9] sm:$0xff]
    %v424 = vld [vmem:[#allocation2 + $0x109] sm:$0xff]
    %v425 = vld [vmem:[#allocation2 + $0x111] sm:$0xff]
    %v426 = vld [vmem:[#allocation2 + $0x121] sm:$0xff]
    %v427 = vld [vmem:[#allocation2 + $0x129] sm:$0xff]
    %v428 = vld [vmem:[#allocation2 + $0x139] sm:$0xff]
    %v429 = vld [vmem:[#allocation2 + $0x141] sm:$0xff]
    %v430 = vld [vmem:[#allocation2 + $0x151] sm:$0xff]
    %v431 = vld [vmem:[#allocation2 + $0x159] sm:$0xff]
    %v432 = vld [vmem:[#allocation2 + $0x169] sm:$0xff]
    %v433 = vld [vmem:[#allocation2 + $0x171] sm:$0xff]
    %v434 = vld [vmem:[#allocation2 + $0x1b1] sm:$0xff]
    %v435 = vld [vmem:[#allocation2 + $0x1b9] sm:$0xff]
    %v436 = vld [vmem:[#allocation2 + $0x1c9] sm:$0xff]
    %v437 = vld [vmem:[#allocation2 + $0x1d1] sm:$0xff]
    %v438 = vld [vmem:[#allocation2 + $0x1e1] sm:$0xff]
    %v439 = vld [vmem:[#allocation2 + $0x1e9] sm:$0xff]
    %v440 = vld [vmem:[#allocation2 + $0x1f9] sm:$0xff]
    %v441 = vld [vmem:[#allocation2 + $0x201] sm:$0xff]
    %v442 = vld [vmem:[#allocation2 + $0x211] sm:$0xff]
    %v443 = vld [vmem:[#allocation2 + $0x219] sm:$0xff]
    %v444 = vld [vmem:[#allocation2 + $0x229] sm:$0xff]
    %v445 = vld [vmem:[#allocation2 + $0x231] sm:$0xff]
    %v446 = vld [vmem:[#allocation2 + $0x241] sm:$0xff]
    %v447 = vld [vmem:[#allocation2 + $0x249] sm:$0xff]
    %v448 = vld [vmem:[#allocation2 + $0x259] sm:$0xff]
    %v449 = vld [vmem:[#allocation2 + $0x261] sm:$0xff]
    %v450 = vld [vmem:[#allocation2 + $0x271] sm:$0xff]
    %v451 = vld [vmem:[#allocation2 + $0x279] sm:$0xff]
    %v452 = vld [vmem:[#allocation2 + $0x289] sm:$0xff]
    %v453 = vld [vmem:[#allocation2 + $0x291] sm:$0xff]
    %v454 = vld [vmem:[#allocation2 + $0x2a1] sm:$0xff]
    %v455 = vld [vmem:[#allocation2 + $0x2a9] sm:$0xff]
    %v456 = vld [vmem:[#allocation2 + $0x2b9] sm:$0xff]
    %v457 = vld [vmem:[#allocation2 + $0x2c1] sm:$0xff]
    %v458 = vld [vmem:[#allocation2 + $0x2d1] sm:$0xff]
    %v459 = vld [vmem:[#allocation2 + $0x2d9] sm:$0xff]
    %v460 = vld [vmem:[#allocation2 + $0x2e9] sm:$0xff]
    %v461 = vld [vmem:[#allocation2 + $0x2f1] sm:$0xff]
    %v462 = vld [vmem:[#allocation2 + $0x301] sm:$0xff]
    %v463 = vld [vmem:[#allocation2 + $0x309] sm:$0xff]
    %v464 = vld [vmem:[#allocation2 + $0x319] sm:$0xff]
    %v465 = vld [vmem:[#allocation2 + $0x321] sm:$0xff]
    %530 = vrot.lane.b32.xlu0 %v402, 4
    %v531 = vpop.permute.xlu0 %530
    %532 = vrot.lane.b32.xlu0 %v403, 4
    %v533 = vpop.permute.xlu0 %532
    %534 = vrot.lane.b32.xlu0 %v404, 4
    %v535 = vpop.permute.xlu0 %534
    %536 = vrot.lane.b32.xlu0 %v405, 4
    %v537 = vpop.permute.xlu0 %536
    %538 = vrot.lane.b32.xlu0 %v406, 4
    %v539 = vpop.permute.xlu0 %538
    %540 = vrot.lane.b32.xlu0 %v407, 4
    %v541 = vpop.permute.xlu0 %540
    %542 = vrot.lane.b32.xlu0 %v408, 4
    %v543 = vpop.permute.xlu0 %542
    %544 = vrot.lane.b32.xlu0 %v409, 4
    %v545 = vpop.permute.xlu0 %544
    %546 = vrot.lane.b32.xlu0 %v410, 4
    %v547 = vpop.permute.xlu0 %546
    %548 = vrot.lane.b32.xlu0 %v411, 4
    %v549 = vpop.permute.xlu0 %548
    %550 = vrot.lane.b32.xlu0 %v412, 4
    %v551 = vpop.permute.xlu0 %550
    %552 = vrot.lane.b32.xlu0 %v413, 4
    %v553 = vpop.permute.xlu0 %552
    %554 = vrot.lane.b32.xlu0 %v414, 4
    %v555 = vpop.permute.xlu0 %554
    %556 = vrot.lane.b32.xlu0 %v415, 4
    %v557 = vpop.permute.xlu0 %556
    %558 = vrot.lane.b32.xlu0 %v416, 4
    %v559 = vpop.permute.xlu0 %558
    %560 = vrot.lane.b32.xlu0 %v417, 4
    %v561 = vpop.permute.xlu0 %560
    %562 = vrot.lane.b32.xlu0 %v418, 4
    %v563 = vpop.permute.xlu0 %562
    %564 = vrot.lane.b32.xlu0 %v419, 4
    %v565 = vpop.permute.xlu0 %564
    %566 = vrot.lane.b32.xlu0 %v420, 4
    %v567 = vpop.permute.xlu0 %566
    %568 = vrot.lane.b32.xlu0 %v421, 4
    %v569 = vpop.permute.xlu0 %568
    %570 = vrot.lane.b32.xlu0 %v422, 4
    %v571 = vpop.permute.xlu0 %570
    %572 = vrot.lane.b32.xlu0 %v423, 4
    %v573 = vpop.permute.xlu0 %572
    %574 = vrot.lane.b32.xlu0 %v424, 4
    %v575 = vpop.permute.xlu0 %574
    %576 = vrot.lane.b32.xlu0 %v425, 4
    %v577 = vpop.permute.xlu0 %576
    %578 = vrot.lane.b32.xlu0 %v426, 4
    %v579 = vpop.permute.xlu0 %578
    %580 = vrot.lane.b32.xlu0 %v427, 4
    %v581 = vpop.permute.xlu0 %580
    %582 = vrot.lane.b32.xlu0 %v428, 4
    %v583 = vpop.permute.xlu0 %582
    %584 = vrot.lane.b32.xlu0 %v429, 4
    %v585 = vpop.permute.xlu0 %584
    %586 = vrot.lane.b32.xlu0 %v430, 4
    %v587 = vpop.permute.xlu0 %586
    %588 = vrot.lane.b32.xlu0 %v431, 4
    %v589 = vpop.permute.xlu0 %588
    %590 = vrot.lane.b32.xlu0 %v432, 4
    %v591 = vpop.permute.xlu0 %590
    %592 = vrot.lane.b32.xlu0 %v433, 4
    %v593 = vpop.permute.xlu0 %592
    %594 = vrot.lane.b32.xlu0 %v434, 4
    %v595 = vpop.permute.xlu0 %594
    %596 = vrot.lane.b32.xlu0 %v435, 4
    %v597 = vpop.permute.xlu0 %596
    %598 = vrot.lane.b32.xlu0 %v436, 4
    %v599 = vpop.permute.xlu0 %598
    %600 = vrot.lane.b32.xlu0 %v437, 4
    %v601 = vpop.permute.xlu0 %600
    %602 = vrot.lane.b32.xlu0 %v438, 4
    %v603 = vpop.permute.xlu0 %602
    %604 = vrot.lane.b32.xlu0 %v439, 4
    %v605 = vpop.permute.xlu0 %604
    %606 = vrot.lane.b32.xlu0 %v440, 4
    %v607 = vpop.permute.xlu0 %606
    %608 = vrot.lane.b32.xlu0 %v441, 4
    %v609 = vpop.permute.xlu0 %608
    %610 = vrot.lane.b32.xlu0 %v442, 4
    %v611 = vpop.permute.xlu0 %610
    %612 = vrot.lane.b32.xlu0 %v443, 4
    %v613 = vpop.permute.xlu0 %612
    %614 = vrot.lane.b32.xlu0 %v444, 4
    %v615 = vpop.permute.xlu0 %614
    %616 = vrot.lane.b32.xlu0 %v445, 4
    %v617 = vpop.permute.xlu0 %616
    %618 = vrot.lane.b32.xlu0 %v446, 4
    %v619 = vpop.permute.xlu0 %618
    %620 = vrot.lane.b32.xlu0 %v447, 4
    %v621 = vpop.permute.xlu0 %620
    %622 = vrot.lane.b32.xlu0 %v448, 4
    %v623 = vpop.permute.xlu0 %622
    %624 = vrot.lane.b32.xlu0 %v449, 4
    %v625 = vpop.permute.xlu0 %624
    %626 = vrot.lane.b32.xlu0 %v450, 4
    %v627 = vpop.permute.xlu0 %626
    %628 = vrot.lane.b32.xlu0 %v451, 4
    %v629 = vpop.permute.xlu0 %628
    %630 = vrot.lane.b32.xlu0 %v452, 4
    %v631 = vpop.permute.xlu0 %630
    %632 = vrot.lane.b32.xlu0 %v453, 4
    %v633 = vpop.permute.xlu0 %632
    %634 = vrot.lane.b32.xlu0 %v454, 4
    %v635 = vpop.permute.xlu0 %634
    %636 = vrot.lane.b32.xlu0 %v455, 4
    %v637 = vpop.permute.xlu0 %636
    %638 = vrot.lane.b32.xlu0 %v456, 4
    %v639 = vpop.permute.xlu0 %638
    %640 = vrot.lane.b32.xlu0 %v457, 4
    %v641 = vpop.permute.xlu0 %640
    %642 = vrot.lane.b32.xlu0 %v458, 4
    %v643 = vpop.permute.xlu0 %642
    %644 = vrot.lane.b32.xlu0 %v459, 4
    %v645 = vpop.permute.xlu0 %644
    %646 = vrot.lane.b32.xlu0 %v460, 4
    %v647 = vpop.permute.xlu0 %646
    %648 = vrot.lane.b32.xlu0 %v461, 4
    %v649 = vpop.permute.xlu0 %648
    %650 = vrot.lane.b32.xlu0 %v462, 4
    %v651 = vpop.permute.xlu0 %650
    %652 = vrot.lane.b32.xlu0 %v463, 4
    %v653 = vpop.permute.xlu0 %652
    %654 = vrot.lane.b32.xlu0 %v464, 4
    %v655 = vpop.permute.xlu0 %654
    %656 = vrot.lane.b32.xlu0 %v465, 4
    %v657 = vpop.permute.xlu0 %656
    %vm722 = vcmask 64544
    %723 = vst.msk [vmem:[#allocation3] sm:$0xff] %vm722, %v531
    %724 = vst.msk [vmem:[#allocation3 + $0x10] sm:$0xff] %vm722, %v533
    %725 = vst.msk [vmem:[#allocation3 + $0x20] sm:$0xff] %vm722, %v535
    %726 = vst.msk [vmem:[#allocation3 + $0x30] sm:$0xff] %vm722, %v537
    %727 = vst.msk [vmem:[#allocation3 + $0x40] sm:$0xff] %vm722, %v539
    %728 = vst.msk [vmem:[#allocation3 + $0x50] sm:$0xff] %vm722, %v541
    %729 = vst.msk [vmem:[#allocation3 + $0x60] sm:$0xff] %vm722, %v543
    %730 = vst.msk [vmem:[#allocation3 + $0x70] sm:$0xff] %vm722, %v545
    %731 = vst.msk [vmem:[#allocation3 + $0x80] sm:$0xff] %vm722, %v547
    %732 = vst.msk [vmem:[#allocation3 + $0x90] sm:$0xff] %vm722, %v549
    %733 = vst.msk [vmem:[#allocation3 + $0xa0] sm:$0xff] %vm722, %v551
    %734 = vst.msk [vmem:[#allocation3 + $0xb0] sm:$0xff] %vm722, %v553
    %735 = vst.msk [vmem:[#allocation3 + $0xc0] sm:$0xff] %vm722, %v555
    %736 = vst.msk [vmem:[#allocation3 + $0xd0] sm:$0xff] %vm722, %v557
    %737 = vst.msk [vmem:[#allocation3 + $0xe0] sm:$0xff] %vm722, %v559
    %738 = vst.msk [vmem:[#allocation3 + $0xf0] sm:$0xff] %vm722, %v561
    %739 = vst.msk [vmem:[#allocation3 + $0x100] sm:$0xff] %vm722, %v563
    %740 = vst.msk [vmem:[#allocation3 + $0x110] sm:$0xff] %vm722, %v565
    %741 = vst.msk [vmem:[#allocation3 + $0x120] sm:$0xff] %vm722, %v567
    %742 = vst.msk [vmem:[#allocation3 + $0x130] sm:$0xff] %vm722, %v569
    %743 = vst.msk [vmem:[#allocation3 + $0x140] sm:$0xff] %vm722, %v571
    %744 = vst.msk [vmem:[#allocation3 + $0x150] sm:$0xff] %vm722, %v573
    %745 = vst.msk [vmem:[#allocation3 + $0x160] sm:$0xff] %vm722, %v575
    %746 = vst.msk [vmem:[#allocation3 + $0x170] sm:$0xff] %vm722, %v577
    %747 = vst.msk [vmem:[#allocation3 + $0x180] sm:$0xff] %vm722, %v579
    %748 = vst.msk [vmem:[#allocation3 + $0x190] sm:$0xff] %vm722, %v581
    %749 = vst.msk [vmem:[#allocation3 + $0x1a0] sm:$0xff] %vm722, %v583
    %750 = vst.msk [vmem:[#allocation3 + $0x1b0] sm:$0xff] %vm722, %v585
    %751 = vst.msk [vmem:[#allocation3 + $0x1c0] sm:$0xff] %vm722, %v587
    %752 = vst.msk [vmem:[#allocation3 + $0x1d0] sm:$0xff] %vm722, %v589
    %753 = vst.msk [vmem:[#allocation3 + $0x1e0] sm:$0xff] %vm722, %v591
    %754 = vst.msk [vmem:[#allocation3 + $0x1f0] sm:$0xff] %vm722, %v593
    %755 = vst.msk [vmem:[#allocation3 + $0x200] sm:$0xff] %vm722, %v595
    %756 = vst.msk [vmem:[#allocation3 + $0x210] sm:$0xff] %vm722, %v597
    %757 = vst.msk [vmem:[#allocation3 + $0x220] sm:$0xff] %vm722, %v599
    %758 = vst.msk [vmem:[#allocation3 + $0x230] sm:$0xff] %vm722, %v601
    %759 = vst.msk [vmem:[#allocation3 + $0x240] sm:$0xff] %vm722, %v603
    %760 = vst.msk [vmem:[#allocation3 + $0x250] sm:$0xff] %vm722, %v605
    %761 = vst.msk [vmem:[#allocation3 + $0x260] sm:$0xff] %vm722, %v607
    %762 = vst.msk [vmem:[#allocation3 + $0x270] sm:$0xff] %vm722, %v609
    %763 = vst.msk [vmem:[#allocation3 + $0x280] sm:$0xff] %vm722, %v611
    %764 = vst.msk [vmem:[#allocation3 + $0x290] sm:$0xff] %vm722, %v613
    %765 = vst.msk [vmem:[#allocation3 + $0x2a0] sm:$0xff] %vm722, %v615
    %766 = vst.msk [vmem:[#allocation3 + $0x2b0] sm:$0xff] %vm722, %v617
    %767 = vst.msk [vmem:[#allocation3 + $0x2c0] sm:$0xff] %vm722, %v619
    %768 = vst.msk [vmem:[#allocation3 + $0x2d0] sm:$0xff] %vm722, %v621
    %769 = vst.msk [vmem:[#allocation3 + $0x2e0] sm:$0xff] %vm722, %v623
    %770 = vst.msk [vmem:[#allocation3 + $0x2f0] sm:$0xff] %vm722, %v625
    %771 = vst.msk [vmem:[#allocation3 + $0x300] sm:$0xff] %vm722, %v627
    %772 = vst.msk [vmem:[#allocation3 + $0x310] sm:$0xff] %vm722, %v629
    %773 = vst.msk [vmem:[#allocation3 + $0x320] sm:$0xff] %vm722, %v631
    %774 = vst.msk [vmem:[#allocation3 + $0x330] sm:$0xff] %vm722, %v633
    %775 = vst.msk [vmem:[#allocation3 + $0x340] sm:$0xff] %vm722, %v635
    %776 = vst.msk [vmem:[#allocation3 + $0x350] sm:$0xff] %vm722, %v637
    %777 = vst.msk [vmem:[#allocation3 + $0x360] sm:$0xff] %vm722, %v639
    %778 = vst.msk [vmem:[#allocation3 + $0x370] sm:$0xff] %vm722, %v641
    %779 = vst.msk [vmem:[#allocation3 + $0x380] sm:$0xff] %vm722, %v643
    %780 = vst.msk [vmem:[#allocation3 + $0x390] sm:$0xff] %vm722, %v645
    %781 = vst.msk [vmem:[#allocation3 + $0x3a0] sm:$0xff] %vm722, %v647
    %782 = vst.msk [vmem:[#allocation3 + $0x3b0] sm:$0xff] %vm722, %v649
    %783 = vst.msk [vmem:[#allocation3 + $0x3c0] sm:$0xff] %vm722, %v651
    %784 = vst.msk [vmem:[#allocation3 + $0x3d0] sm:$0xff] %vm722, %v653
    %785 = vst.msk [vmem:[#allocation3 + $0x3e0] sm:$0xff] %vm722, %v655
    %786 = vst.msk [vmem:[#allocation3 + $0x3f0] sm:$0xff] %vm722, %v657
    %v787 = vld [vmem:[#allocation2 + $0x2] sm:$0xff]
    %v788 = vld [vmem:[#allocation2 + $0xa] sm:$0xff]
    %v789 = vld [vmem:[#allocation2 + $0x1a] sm:$0xff]
    %v790 = vld [vmem:[#allocation2 + $0x22] sm:$0xff]
    %v791 = vld [vmem:[#allocation2 + $0x32] sm:$0xff]
    %v792 = vld [vmem:[#allocation2 + $0x3a] sm:$0xff]
    %v793 = vld [vmem:[#allocation2 + $0x4a] sm:$0xff]
    %v794 = vld [vmem:[#allocation2 + $0x52] sm:$0xff]
    %v795 = vld [vmem:[#allocation2 + $0x62] sm:$0xff]
    %v796 = vld [vmem:[#allocation2 + $0x6a] sm:$0xff]
    %v797 = vld [vmem:[#allocation2 + $0x7a] sm:$0xff]
    %v798 = vld [vmem:[#allocation2 + $0x82] sm:$0xff]
    %v799 = vld [vmem:[#allocation2 + $0x92] sm:$0xff]
    %v800 = vld [vmem:[#allocation2 + $0x9a] sm:$0xff]
    %v801 = vld [vmem:[#allocation2 + $0xaa] sm:$0xff]
    %v802 = vld [vmem:[#allocation2 + $0xb2] sm:$0xff]
    %v803 = vld [vmem:[#allocation2 + $0xc2] sm:$0xff]
    %v804 = vld [vmem:[#allocation2 + $0xca] sm:$0xff]
    %v805 = vld [vmem:[#allocation2 + $0xda] sm:$0xff]
    %v806 = vld [vmem:[#allocation2 + $0xe2] sm:$0xff]
    %v807 = vld [vmem:[#allocation2 + $0xf2] sm:$0xff]
    %v808 = vld [vmem:[#allocation2 + $0xfa] sm:$0xff]
    %v809 = vld [vmem:[#allocation2 + $0x10a] sm:$0xff]
    %v810 = vld [vmem:[#allocation2 + $0x112] sm:$0xff]
    %v811 = vld [vmem:[#allocation2 + $0x122] sm:$0xff]
    %v812 = vld [vmem:[#allocation2 + $0x12a] sm:$0xff]
    %v813 = vld [vmem:[#allocation2 + $0x13a] sm:$0xff]
    %v814 = vld [vmem:[#allocation2 + $0x142] sm:$0xff]
    %v815 = vld [vmem:[#allocation2 + $0x152] sm:$0xff]
    %v816 = vld [vmem:[#allocation2 + $0x15a] sm:$0xff]
    %v817 = vld [vmem:[#allocation2 + $0x16a] sm:$0xff]
    %v818 = vld [vmem:[#allocation2 + $0x172] sm:$0xff]
    %v819 = vld [vmem:[#allocation2 + $0x1b2] sm:$0xff]
    %v820 = vld [vmem:[#allocation2 + $0x1ba] sm:$0xff]
    %v821 = vld [vmem:[#allocation2 + $0x1ca] sm:$0xff]
    %v822 = vld [vmem:[#allocation2 + $0x1d2] sm:$0xff]
    %v823 = vld [vmem:[#allocation2 + $0x1e2] sm:$0xff]
    %v824 = vld [vmem:[#allocation2 + $0x1ea] sm:$0xff]
    %v825 = vld [vmem:[#allocation2 + $0x1fa] sm:$0xff]
    %v826 = vld [vmem:[#allocation2 + $0x202] sm:$0xff]
    %v827 = vld [vmem:[#allocation2 + $0x212] sm:$0xff]
    %v828 = vld [vmem:[#allocation2 + $0x21a] sm:$0xff]
    %v829 = vld [vmem:[#allocation2 + $0x22a] sm:$0xff]
    %v830 = vld [vmem:[#allocation2 + $0x232] sm:$0xff]
    %v831 = vld [vmem:[#allocation2 + $0x242] sm:$0xff]
    %v832 = vld [vmem:[#allocation2 + $0x24a] sm:$0xff]
    %v833 = vld [vmem:[#allocation2 + $0x25a] sm:$0xff]
    %v834 = vld [vmem:[#allocation2 + $0x262] sm:$0xff]
    %v835 = vld [vmem:[#allocation2 + $0x272] sm:$0xff]
    %v836 = vld [vmem:[#allocation2 + $0x27a] sm:$0xff]
    %v837 = vld [vmem:[#allocation2 + $0x28a] sm:$0xff]
    %v838 = vld [vmem:[#allocation2 + $0x292] sm:$0xff]
    %v839 = vld [vmem:[#allocation2 + $0x2a2] sm:$0xff]
    %v840 = vld [vmem:[#allocation2 + $0x2aa] sm:$0xff]
    %v841 = vld [vmem:[#allocation2 + $0x2ba] sm:$0xff]
    %v842 = vld [vmem:[#allocation2 + $0x2c2] sm:$0xff]
    %v843 = vld [vmem:[#allocation2 + $0x2d2] sm:$0xff]
    %v844 = vld [vmem:[#allocation2 + $0x2da] sm:$0xff]
    %v845 = vld [vmem:[#allocation2 + $0x2ea] sm:$0xff]
    %v846 = vld [vmem:[#allocation2 + $0x2f2] sm:$0xff]
    %v847 = vld [vmem:[#allocation2 + $0x302] sm:$0xff]
    %v848 = vld [vmem:[#allocation2 + $0x30a] sm:$0xff]
    %v849 = vld [vmem:[#allocation2 + $0x31a] sm:$0xff]
    %v850 = vld [vmem:[#allocation2 + $0x322] sm:$0xff]
    %915 = vrot.lane.b32.xlu0 %v787, 8
    %v916 = vpop.permute.xlu0 %915
    %917 = vrot.lane.b32.xlu0 %v788, 8
    %v918 = vpop.permute.xlu0 %917
    %919 = vrot.lane.b32.xlu0 %v789, 8
    %v920 = vpop.permute.xlu0 %919
    %921 = vrot.lane.b32.xlu0 %v790, 8
    %v922 = vpop.permute.xlu0 %921
    %923 = vrot.lane.b32.xlu0 %v791, 8
    %v924 = vpop.permute.xlu0 %923
    %925 = vrot.lane.b32.xlu0 %v792, 8
    %v926 = vpop.permute.xlu0 %925
    %927 = vrot.lane.b32.xlu0 %v793, 8
    %v928 = vpop.permute.xlu0 %927
    %929 = vrot.lane.b32.xlu0 %v794, 8
    %v930 = vpop.permute.xlu0 %929
    %931 = vrot.lane.b32.xlu0 %v795, 8
    %v932 = vpop.permute.xlu0 %931
    %933 = vrot.lane.b32.xlu0 %v796, 8
    %v934 = vpop.permute.xlu0 %933
    %935 = vrot.lane.b32.xlu0 %v797, 8
    %v936 = vpop.permute.xlu0 %935
    %937 = vrot.lane.b32.xlu0 %v798, 8
    %v938 = vpop.permute.xlu0 %937
    %939 = vrot.lane.b32.xlu0 %v799, 8
    %v940 = vpop.permute.xlu0 %939
    %941 = vrot.lane.b32.xlu0 %v800, 8
    %v942 = vpop.permute.xlu0 %941
    %943 = vrot.lane.b32.xlu0 %v801, 8
    %v944 = vpop.permute.xlu0 %943
    %945 = vrot.lane.b32.xlu0 %v802, 8
    %v946 = vpop.permute.xlu0 %945
    %947 = vrot.lane.b32.xlu0 %v803, 8
    %v948 = vpop.permute.xlu0 %947
    %949 = vrot.lane.b32.xlu0 %v804, 8
    %v950 = vpop.permute.xlu0 %949
    %951 = vrot.lane.b32.xlu0 %v805, 8
    %v952 = vpop.permute.xlu0 %951
    %953 = vrot.lane.b32.xlu0 %v806, 8
    %v954 = vpop.permute.xlu0 %953
    %955 = vrot.lane.b32.xlu0 %v807, 8
    %v956 = vpop.permute.xlu0 %955
    %957 = vrot.lane.b32.xlu0 %v808, 8
    %v958 = vpop.permute.xlu0 %957
    %959 = vrot.lane.b32.xlu0 %v809, 8
    %v960 = vpop.permute.xlu0 %959
    %961 = vrot.lane.b32.xlu0 %v810, 8
    %v962 = vpop.permute.xlu0 %961
    %963 = vrot.lane.b32.xlu0 %v811, 8
    %v964 = vpop.permute.xlu0 %963
    %965 = vrot.lane.b32.xlu0 %v812, 8
    %v966 = vpop.permute.xlu0 %965
    %967 = vrot.lane.b32.xlu0 %v813, 8
    %v968 = vpop.permute.xlu0 %967
    %969 = vrot.lane.b32.xlu0 %v814, 8
    %v970 = vpop.permute.xlu0 %969
    %971 = vrot.lane.b32.xlu0 %v815, 8
    %v972 = vpop.permute.xlu0 %971
    %973 = vrot.lane.b32.xlu0 %v816, 8
    %v974 = vpop.permute.xlu0 %973
    %975 = vrot.lane.b32.xlu0 %v817, 8
    %v976 = vpop.permute.xlu0 %975
    %977 = vrot.lane.b32.xlu0 %v818, 8
    %v978 = vpop.permute.xlu0 %977
    %979 = vrot.lane.b32.xlu0 %v819, 8
    %v980 = vpop.permute.xlu0 %979
    %981 = vrot.lane.b32.xlu0 %v820, 8
    %v982 = vpop.permute.xlu0 %981
    %983 = vrot.lane.b32.xlu0 %v821, 8
    %v984 = vpop.permute.xlu0 %983
    %985 = vrot.lane.b32.xlu0 %v822, 8
    %v986 = vpop.permute.xlu0 %985
    %987 = vrot.lane.b32.xlu0 %v823, 8
    %v988 = vpop.permute.xlu0 %987
    %989 = vrot.lane.b32.xlu0 %v824, 8
    %v990 = vpop.permute.xlu0 %989
    %991 = vrot.lane.b32.xlu0 %v825, 8
    %v992 = vpop.permute.xlu0 %991
    %993 = vrot.lane.b32.xlu0 %v826, 8
    %v994 = vpop.permute.xlu0 %993
    %995 = vrot.lane.b32.xlu0 %v827, 8
    %v996 = vpop.permute.xlu0 %995
    %997 = vrot.lane.b32.xlu0 %v828, 8
    %v998 = vpop.permute.xlu0 %997
    %999 = vrot.lane.b32.xlu0 %v829, 8
    %v1000 = vpop.permute.xlu0 %999
    %1001 = vrot.lane.b32.xlu0 %v830, 8
    %v1002 = vpop.permute.xlu0 %1001
    %1003 = vrot.lane.b32.xlu0 %v831, 8
    %v1004 = vpop.permute.xlu0 %1003
    %1005 = vrot.lane.b32.xlu0 %v832, 8
    %v1006 = vpop.permute.xlu0 %1005
    %1007 = vrot.lane.b32.xlu0 %v833, 8
    %v1008 = vpop.permute.xlu0 %1007
    %1009 = vrot.lane.b32.xlu0 %v834, 8
    %v1010 = vpop.permute.xlu0 %1009
    %1011 = vrot.lane.b32.xlu0 %v835, 8
    %v1012 = vpop.permute.xlu0 %1011
    %1013 = vrot.lane.b32.xlu0 %v836, 8
    %v1014 = vpop.permute.xlu0 %1013
    %1015 = vrot.lane.b32.xlu0 %v837, 8
    %v1016 = vpop.permute.xlu0 %1015
    %1017 = vrot.lane.b32.xlu0 %v838, 8
    %v1018 = vpop.permute.xlu0 %1017
    %1019 = vrot.lane.b32.xlu0 %v839, 8
    %v1020 = vpop.permute.xlu0 %1019
    %1021 = vrot.lane.b32.xlu0 %v840, 8
    %v1022 = vpop.permute.xlu0 %1021
    %1023 = vrot.lane.b32.xlu0 %v841, 8
    %v1024 = vpop.permute.xlu0 %1023
    %1025 = vrot.lane.b32.xlu0 %v842, 8
    %v1026 = vpop.permute.xlu0 %1025
    %1027 = vrot.lane.b32.xlu0 %v843, 8
    %v1028 = vpop.permute.xlu0 %1027
    %1029 = vrot.lane.b32.xlu0 %v844, 8
    %v1030 = vpop.permute.xlu0 %1029
    %1031 = vrot.lane.b32.xlu0 %v845, 8
    %v1032 = vpop.permute.xlu0 %1031
    %1033 = vrot.lane.b32.xlu0 %v846, 8
    %v1034 = vpop.permute.xlu0 %1033
    %1035 = vrot.lane.b32.xlu0 %v847, 8
    %v1036 = vpop.permute.xlu0 %1035
    %1037 = vrot.lane.b32.xlu0 %v848, 8
    %v1038 = vpop.permute.xlu0 %1037
    %1039 = vrot.lane.b32.xlu0 %v849, 8
    %v1040 = vpop.permute.xlu0 %1039
    %1041 = vrot.lane.b32.xlu0 %v850, 8
    %v1042 = vpop.permute.xlu0 %1041
    %vm1107 = vcmask 97344
    %1108 = vst.msk [vmem:[#allocation3] sm:$0xff] %vm1107, %v916
    %1109 = vst.msk [vmem:[#allocation3 + $0x10] sm:$0xff] %vm1107, %v918
    %1110 = vst.msk [vmem:[#allocation3 + $0x20] sm:$0xff] %vm1107, %v920
    %1111 = vst.msk [vmem:[#allocation3 + $0x30] sm:$0xff] %vm1107, %v922
    %1112 = vst.msk [vmem:[#allocation3 + $0x40] sm:$0xff] %vm1107, %v924
    %1113 = vst.msk [vmem:[#allocation3 + $0x50] sm:$0xff] %vm1107, %v926
    %1114 = vst.msk [vmem:[#allocation3 + $0x60] sm:$0xff] %vm1107, %v928
    %1115 = vst.msk [vmem:[#allocation3 + $0x70] sm:$0xff] %vm1107, %v930
    %1116 = vst.msk [vmem:[#allocation3 + $0x80] sm:$0xff] %vm1107, %v932
    %1117 = vst.msk [vmem:[#allocation3 + $0x90] sm:$0xff] %vm1107, %v934
    %1118 = vst.msk [vmem:[#allocation3 + $0xa0] sm:$0xff] %vm1107, %v936
    %1119 = vst.msk [vmem:[#allocation3 + $0xb0] sm:$0xff] %vm1107, %v938
    %1120 = vst.msk [vmem:[#allocation3 + $0xc0] sm:$0xff] %vm1107, %v940
    %1121 = vst.msk [vmem:[#allocation3 + $0xd0] sm:$0xff] %vm1107, %v942
    %1122 = vst.msk [vmem:[#allocation3 + $0xe0] sm:$0xff] %vm1107, %v944
    %1123 = vst.msk [vmem:[#allocation3 + $0xf0] sm:$0xff] %vm1107, %v946
    %1124 = vst.msk [vmem:[#allocation3 + $0x100] sm:$0xff] %vm1107, %v948
    %1125 = vst.msk [vmem:[#allocation3 + $0x110] sm:$0xff] %vm1107, %v950
    %1126 = vst.msk [vmem:[#allocation3 + $0x120] sm:$0xff] %vm1107, %v952
    %1127 = vst.msk [vmem:[#allocation3 + $0x130] sm:$0xff] %vm1107, %v954
    %1128 = vst.msk [vmem:[#allocation3 + $0x140] sm:$0xff] %vm1107, %v956
    %1129 = vst.msk [vmem:[#allocation3 + $0x150] sm:$0xff] %vm1107, %v958
    %1130 = vst.msk [vmem:[#allocation3 + $0x160] sm:$0xff] %vm1107, %v960
    %1131 = vst.msk [vmem:[#allocation3 + $0x170] sm:$0xff] %vm1107, %v962
    %1132 = vst.msk [vmem:[#allocation3 + $0x180] sm:$0xff] %vm1107, %v964
    %1133 = vst.msk [vmem:[#allocation3 + $0x190] sm:$0xff] %vm1107, %v966
    %1134 = vst.msk [vmem:[#allocation3 + $0x1a0] sm:$0xff] %vm1107, %v968
    %1135 = vst.msk [vmem:[#allocation3 + $0x1b0] sm:$0xff] %vm1107, %v970
    %1136 = vst.msk [vmem:[#allocation3 + $0x1c0] sm:$0xff] %vm1107, %v972
    %1137 = vst.msk [vmem:[#allocation3 + $0x1d0] sm:$0xff] %vm1107, %v974
    %1138 = vst.msk [vmem:[#allocation3 + $0x1e0] sm:$0xff] %vm1107, %v976
    %1139 = vst.msk [vmem:[#allocation3 + $0x1f0] sm:$0xff] %vm1107, %v978
    %1140 = vst.msk [vmem:[#allocation3 + $0x200] sm:$0xff] %vm1107, %v980
    %1141 = vst.msk [vmem:[#allocation3 + $0x210] sm:$0xff] %vm1107, %v982
    %1142 = vst.msk [vmem:[#allocation3 + $0x220] sm:$0xff] %vm1107, %v984
    %1143 = vst.msk [vmem:[#allocation3 + $0x230] sm:$0xff] %vm1107, %v986
    %1144 = vst.msk [vmem:[#allocation3 + $0x240] sm:$0xff] %vm1107, %v988
    %1145 = vst.msk [vmem:[#allocation3 + $0x250] sm:$0xff] %vm1107, %v990
    %1146 = vst.msk [vmem:[#allocation3 + $0x260] sm:$0xff] %vm1107, %v992
    %1147 = vst.msk [vmem:[#allocation3 + $0x270] sm:$0xff] %vm1107, %v994
    %1148 = vst.msk [vmem:[#allocation3 + $0x280] sm:$0xff] %vm1107, %v996
    %1149 = vst.msk [vmem:[#allocation3 + $0x290] sm:$0xff] %vm1107, %v998
    %1150 = vst.msk [vmem:[#allocation3 + $0x2a0] sm:$0xff] %vm1107, %v1000
    %1151 = vst.msk [vmem:[#allocation3 + $0x2b0] sm:$0xff] %vm1107, %v1002
    %1152 = vst.msk [vmem:[#allocation3 + $0x2c0] sm:$0xff] %vm1107, %v1004
    %1153 = vst.msk [vmem:[#allocation3 + $0x2d0] sm:$0xff] %vm1107, %v1006
    %1154 = vst.msk [vmem:[#allocation3 + $0x2e0] sm:$0xff] %vm1107, %v1008
    %1155 = vst.msk [vmem:[#allocation3 + $0x2f0] sm:$0xff] %vm1107, %v1010
    %1156 = vst.msk [vmem:[#allocation3 + $0x300] sm:$0xff] %vm1107, %v1012
    %1157 = vst.msk [vmem:[#allocation3 + $0x310] sm:$0xff] %vm1107, %v1014
    %1158 = vst.msk [vmem:[#allocation3 + $0x320] sm:$0xff] %vm1107, %v1016
    %1159 = vst.msk [vmem:[#allocation3 + $0x330] sm:$0xff] %vm1107, %v1018
    %1160 = vst.msk [vmem:[#allocation3 + $0x340] sm:$0xff] %vm1107, %v1020
    %1161 = vst.msk [vmem:[#allocation3 + $0x350] sm:$0xff] %vm1107, %v1022
    %1162 = vst.msk [vmem:[#allocation3 + $0x360] sm:$0xff] %vm1107, %v1024
    %1163 = vst.msk [vmem:[#allocation3 + $0x370] sm:$0xff] %vm1107, %v1026
    %1164 = vst.msk [vmem:[#allocation3 + $0x380] sm:$0xff] %vm1107, %v1028
    %1165 = vst.msk [vmem:[#allocation3 + $0x390] sm:$0xff] %vm1107, %v1030
    %1166 = vst.msk [vmem:[#allocation3 + $0x3a0] sm:$0xff] %vm1107, %v1032
    %1167 = vst.msk [vmem:[#allocation3 + $0x3b0] sm:$0xff] %vm1107, %v1034
    %1168 = vst.msk [vmem:[#allocation3 + $0x3c0] sm:$0xff] %vm1107, %v1036
    %1169 = vst.msk [vmem:[#allocation3 + $0x3d0] sm:$0xff] %vm1107, %v1038
    %1170 = vst.msk [vmem:[#allocation3 + $0x3e0] sm:$0xff] %vm1107, %v1040
    %1171 = vst.msk [vmem:[#allocation3 + $0x3f0] sm:$0xff] %vm1107, %v1042
    %v1172 = vld [vmem:[%s208] sm:$0xff]
    %v1173 = vld [vmem:[%s208 + $0x8] sm:$0xff]
    %v1174 = vld [vmem:[%s208 + $0x18] sm:$0xff]
    %v1175 = vld [vmem:[%s208 + $0x20] sm:$0xff]
    %v1176 = vld [vmem:[%s208 + $0x30] sm:$0xff]
    %v1177 = vld [vmem:[%s208 + $0x38] sm:$0xff]
    %v1178 = vld [vmem:[%s208 + $0x48] sm:$0xff]
    %v1179 = vld [vmem:[%s208 + $0x50] sm:$0xff]
    %v1180 = vld [vmem:[%s208 + $0x60] sm:$0xff]
    %v1181 = vld [vmem:[%s208 + $0x68] sm:$0xff]
    %v1182 = vld [vmem:[%s208 + $0x78] sm:$0xff]
    %v1183 = vld [vmem:[%s208 + $0x80] sm:$0xff]
    %v1184 = vld [vmem:[%s208 + $0x90] sm:$0xff]
    %v1185 = vld [vmem:[%s208 + $0x98] sm:$0xff]
    %v1186 = vld [vmem:[%s208 + $0xa8] sm:$0xff]
    %v1187 = vld [vmem:[%s208 + $0xb0] sm:$0xff]
    %v1188 = vld [vmem:[%s208 + $0xc0] sm:$0xff]
    %v1189 = vld [vmem:[%s208 + $0xc8] sm:$0xff]
    %v1190 = vld [vmem:[%s208 + $0xd8] sm:$0xff]
    %v1191 = vld [vmem:[%s208 + $0xe0] sm:$0xff]
    %v1192 = vld [vmem:[%s208 + $0xf0] sm:$0xff]
    %v1193 = vld [vmem:[%s208 + $0xf8] sm:$0xff]
    %v1194 = vld [vmem:[%s208 + $0x108] sm:$0xff]
    %v1195 = vld [vmem:[%s208 + $0x110] sm:$0xff]
    %v1196 = vld [vmem:[%s208 + $0x120] sm:$0xff]
    %v1197 = vld [vmem:[%s208 + $0x128] sm:$0xff]
    %v1198 = vld [vmem:[%s208 + $0x138] sm:$0xff]
    %v1199 = vld [vmem:[%s208 + $0x140] sm:$0xff]
    %v1200 = vld [vmem:[%s208 + $0x150] sm:$0xff]
    %v1201 = vld [vmem:[%s208 + $0x158] sm:$0xff]
    %v1202 = vld [vmem:[%s208 + $0x168] sm:$0xff]
    %v1203 = vld [vmem:[%s208 + $0x170] sm:$0xff]
    %v1204 = vld [vmem:[%s208 + $0x1b0] sm:$0xff]
    %v1205 = vld [vmem:[%s208 + $0x1b8] sm:$0xff]
    %v1206 = vld [vmem:[%s208 + $0x1c8] sm:$0xff]
    %v1207 = vld [vmem:[%s208 + $0x1d0] sm:$0xff]
    %v1208 = vld [vmem:[%s208 + $0x1e0] sm:$0xff]
    %v1209 = vld [vmem:[%s208 + $0x1e8] sm:$0xff]
    %v1210 = vld [vmem:[%s208 + $0x1f8] sm:$0xff]
    %v1211 = vld [vmem:[%s208 + $0x200] sm:$0xff]
    %v1212 = vld [vmem:[%s208 + $0x210] sm:$0xff]
    %v1213 = vld [vmem:[%s208 + $0x218] sm:$0xff]
    %v1214 = vld [vmem:[%s208 + $0x228] sm:$0xff]
    %v1215 = vld [vmem:[%s208 + $0x230] sm:$0xff]
    %v1216 = vld [vmem:[%s208 + $0x240] sm:$0xff]
    %v1217 = vld [vmem:[%s208 + $0x248] sm:$0xff]
    %v1218 = vld [vmem:[%s208 + $0x258] sm:$0xff]
    %v1219 = vld [vmem:[%s208 + $0x260] sm:$0xff]
    %v1220 = vld [vmem:[%s208 + $0x270] sm:$0xff]
    %v1221 = vld [vmem:[%s208 + $0x278] sm:$0xff]
    %v1222 = vld [vmem:[%s208 + $0x288] sm:$0xff]
    %v1223 = vld [vmem:[%s208 + $0x290] sm:$0xff]
    %v1224 = vld [vmem:[%s208 + $0x2a0] sm:$0xff]
    %v1225 = vld [vmem:[%s208 + $0x2a8] sm:$0xff]
    %v1226 = vld [vmem:[%s208 + $0x2b8] sm:$0xff]
    %v1227 = vld [vmem:[%s208 + $0x2c0] sm:$0xff]
    %v1228 = vld [vmem:[%s208 + $0x2d0] sm:$0xff]
    %v1229 = vld [vmem:[%s208 + $0x2d8] sm:$0xff]
    %v1230 = vld [vmem:[%s208 + $0x2e8] sm:$0xff]
    %v1231 = vld [vmem:[%s208 + $0x2f0] sm:$0xff]
    %v1232 = vld [vmem:[%s208 + $0x300] sm:$0xff]
    %v1233 = vld [vmem:[%s208 + $0x308] sm:$0xff]
    %v1234 = vld [vmem:[%s208 + $0x318] sm:$0xff]
    %v1235 = vld [vmem:[%s208 + $0x320] sm:$0xff]
    %1300 = vrot.lane.b32.xlu0 %v1172, 12
    %v1301 = vpop.permute.xlu0 %1300
    %1302 = vrot.lane.b32.xlu0 %v1173, 12
    %v1303 = vpop.permute.xlu0 %1302
    %1304 = vrot.lane.b32.xlu0 %v1174, 12
    %v1305 = vpop.permute.xlu0 %1304
    %1306 = vrot.lane.b32.xlu0 %v1175, 12
    %v1307 = vpop.permute.xlu0 %1306
    %1308 = vrot.lane.b32.xlu0 %v1176, 12
    %v1309 = vpop.permute.xlu0 %1308
    %1310 = vrot.lane.b32.xlu0 %v1177, 12
    %v1311 = vpop.permute.xlu0 %1310
    %1312 = vrot.lane.b32.xlu0 %v1178, 12
    %v1313 = vpop.permute.xlu0 %1312
    %1314 = vrot.lane.b32.xlu0 %v1179, 12
    %v1315 = vpop.permute.xlu0 %1314
    %1316 = vrot.lane.b32.xlu0 %v1180, 12
    %v1317 = vpop.permute.xlu0 %1316
    %1318 = vrot.lane.b32.xlu0 %v1181, 12
    %v1319 = vpop.permute.xlu0 %1318
    %1320 = vrot.lane.b32.xlu0 %v1182, 12
    %v1321 = vpop.permute.xlu0 %1320
    %1322 = vrot.lane.b32.xlu0 %v1183, 12
    %v1323 = vpop.permute.xlu0 %1322
    %1324 = vrot.lane.b32.xlu0 %v1184, 12
    %v1325 = vpop.permute.xlu0 %1324
    %1326 = vrot.lane.b32.xlu0 %v1185, 12
    %v1327 = vpop.permute.xlu0 %1326
    %1328 = vrot.lane.b32.xlu0 %v1186, 12
    %v1329 = vpop.permute.xlu0 %1328
    %1330 = vrot.lane.b32.xlu0 %v1187, 12
    %v1331 = vpop.permute.xlu0 %1330
    %1332 = vrot.lane.b32.xlu0 %v1188, 12
    %v1333 = vpop.permute.xlu0 %1332
    %1334 = vrot.lane.b32.xlu0 %v1189, 12
    %v1335 = vpop.permute.xlu0 %1334
    %1336 = vrot.lane.b32.xlu0 %v1190, 12
    %v1337 = vpop.permute.xlu0 %1336
    %1338 = vrot.lane.b32.xlu0 %v1191, 12
    %v1339 = vpop.permute.xlu0 %1338
    %1340 = vrot.lane.b32.xlu0 %v1192, 12
    %v1341 = vpop.permute.xlu0 %1340
    %1342 = vrot.lane.b32.xlu0 %v1193, 12
    %v1343 = vpop.permute.xlu0 %1342
    %1344 = vrot.lane.b32.xlu0 %v1194, 12
    %v1345 = vpop.permute.xlu0 %1344
    %1346 = vrot.lane.b32.xlu0 %v1195, 12
    %v1347 = vpop.permute.xlu0 %1346
    %1348 = vrot.lane.b32.xlu0 %v1196, 12
    %v1349 = vpop.permute.xlu0 %1348
    %1350 = vrot.lane.b32.xlu0 %v1197, 12
    %v1351 = vpop.permute.xlu0 %1350
    %1352 = vrot.lane.b32.xlu0 %v1198, 12
    %v1353 = vpop.permute.xlu0 %1352
    %1354 = vrot.lane.b32.xlu0 %v1199, 12
    %v1355 = vpop.permute.xlu0 %1354
    %1356 = vrot.lane.b32.xlu0 %v1200, 12
    %v1357 = vpop.permute.xlu0 %1356
    %1358 = vrot.lane.b32.xlu0 %v1201, 12
    %v1359 = vpop.permute.xlu0 %1358
    %1360 = vrot.lane.b32.xlu0 %v1202, 12
    %v1361 = vpop.permute.xlu0 %1360
    %1362 = vrot.lane.b32.xlu0 %v1203, 12
    %v1363 = vpop.permute.xlu0 %1362
    %1364 = vrot.lane.b32.xlu0 %v1204, 12
    %v1365 = vpop.permute.xlu0 %1364
    %1366 = vrot.lane.b32.xlu0 %v1205, 12
    %v1367 = vpop.permute.xlu0 %1366
    %1368 = vrot.lane.b32.xlu0 %v1206, 12
    %v1369 = vpop.permute.xlu0 %1368
    %1370 = vrot.lane.b32.xlu0 %v1207, 12
    %v1371 = vpop.permute.xlu0 %1370
    %1372 = vrot.lane.b32.xlu0 %v1208, 12
    %v1373 = vpop.permute.xlu0 %1372
    %1374 = vrot.lane.b32.xlu0 %v1209, 12
    %v1375 = vpop.permute.xlu0 %1374
    %1376 = vrot.lane.b32.xlu0 %v1210, 12
    %v1377 = vpop.permute.xlu0 %1376
    %1378 = vrot.lane.b32.xlu0 %v1211, 12
    %v1379 = vpop.permute.xlu0 %1378
    %1380 = vrot.lane.b32.xlu0 %v1212, 12
    %v1381 = vpop.permute.xlu0 %1380
    %1382 = vrot.lane.b32.xlu0 %v1213, 12
    %v1383 = vpop.permute.xlu0 %1382
    %1384 = vrot.lane.b32.xlu0 %v1214, 12
    %v1385 = vpop.permute.xlu0 %1384
    %1386 = vrot.lane.b32.xlu0 %v1215, 12
    %v1387 = vpop.permute.xlu0 %1386
    %1388 = vrot.lane.b32.xlu0 %v1216, 12
    %v1389 = vpop.permute.xlu0 %1388
    %1390 = vrot.lane.b32.xlu0 %v1217, 12
    %v1391 = vpop.permute.xlu0 %1390
    %1392 = vrot.lane.b32.xlu0 %v1218, 12
    %v1393 = vpop.permute.xlu0 %1392
    %1394 = vrot.lane.b32.xlu0 %v1219, 12
    %v1395 = vpop.permute.xlu0 %1394
    %1396 = vrot.lane.b32.xlu0 %v1220, 12
    %v1397 = vpop.permute.xlu0 %1396
    %1398 = vrot.lane.b32.xlu0 %v1221, 12
    %v1399 = vpop.permute.xlu0 %1398
    %1400 = vrot.lane.b32.xlu0 %v1222, 12
    %v1401 = vpop.permute.xlu0 %1400
    %1402 = vrot.lane.b32.xlu0 %v1223, 12
    %v1403 = vpop.permute.xlu0 %1402
    %1404 = vrot.lane.b32.xlu0 %v1224, 12
    %v1405 = vpop.permute.xlu0 %1404
    %1406 = vrot.lane.b32.xlu0 %v1225, 12
    %v1407 = vpop.permute.xlu0 %1406
    %1408 = vrot.lane.b32.xlu0 %v1226, 12
    %v1409 = vpop.permute.xlu0 %1408
    %1410 = vrot.lane.b32.xlu0 %v1227, 12
    %v1411 = vpop.permute.xlu0 %1410
    %1412 = vrot.lane.b32.xlu0 %v1228, 12
    %v1413 = vpop.permute.xlu0 %1412
    %1414 = vrot.lane.b32.xlu0 %v1229, 12
    %v1415 = vpop.permute.xlu0 %1414
    %1416 = vrot.lane.b32.xlu0 %v1230, 12
    %v1417 = vpop.permute.xlu0 %1416
    %1418 = vrot.lane.b32.xlu0 %v1231, 12
    %v1419 = vpop.permute.xlu0 %1418
    %1420 = vrot.lane.b32.xlu0 %v1232, 12
    %v1421 = vpop.permute.xlu0 %1420
    %1422 = vrot.lane.b32.xlu0 %v1233, 12
    %v1423 = vpop.permute.xlu0 %1422
    %1424 = vrot.lane.b32.xlu0 %v1234, 12
    %v1425 = vpop.permute.xlu0 %1424
    %1426 = vrot.lane.b32.xlu0 %v1235, 12
    %v1427 = vpop.permute.xlu0 %1426
    %vm1492 = vcmask 130144
    %1493 = vst.msk [vmem:[#allocation3] sm:$0xff] %vm1492, %v1301
    %1494 = vst.msk [vmem:[#allocation3 + $0x10] sm:$0xff] %vm1492, %v1303
    %1495 = vst.msk [vmem:[#allocation3 + $0x20] sm:$0xff] %vm1492, %v1305
    %1496 = vst.msk [vmem:[#allocation3 + $0x30] sm:$0xff] %vm1492, %v1307
    %1497 = vst.msk [vmem:[#allocation3 + $0x40] sm:$0xff] %vm1492, %v1309
    %1498 = vst.msk [vmem:[#allocation3 + $0x50] sm:$0xff] %vm1492, %v1311
    %1499 = vst.msk [vmem:[#allocation3 + $0x60] sm:$0xff] %vm1492, %v1313
    %1500 = vst.msk [vmem:[#allocation3 + $0x70] sm:$0xff] %vm1492, %v1315
    %1501 = vst.msk [vmem:[#allocation3 + $0x80] sm:$0xff] %vm1492, %v1317
    %1502 = vst.msk [vmem:[#allocation3 + $0x90] sm:$0xff] %vm1492, %v1319
    %1503 = vst.msk [vmem:[#allocation3 + $0xa0] sm:$0xff] %vm1492, %v1321
    %1504 = vst.msk [vmem:[#allocation3 + $0xb0] sm:$0xff] %vm1492, %v1323
    %1505 = vst.msk [vmem:[#allocation3 + $0xc0] sm:$0xff] %vm1492, %v1325
    %1506 = vst.msk [vmem:[#allocation3 + $0xd0] sm:$0xff] %vm1492, %v1327
    %1507 = vst.msk [vmem:[#allocation3 + $0xe0] sm:$0xff] %vm1492, %v1329
    %1508 = vst.msk [vmem:[#allocation3 + $0xf0] sm:$0xff] %vm1492, %v1331
    %1509 = vst.msk [vmem:[#allocation3 + $0x100] sm:$0xff] %vm1492, %v1333
    %1510 = vst.msk [vmem:[#allocation3 + $0x110] sm:$0xff] %vm1492, %v1335
    %1511 = vst.msk [vmem:[#allocation3 + $0x120] sm:$0xff] %vm1492, %v1337
    %1512 = vst.msk [vmem:[#allocation3 + $0x130] sm:$0xff] %vm1492, %v1339
    %1513 = vst.msk [vmem:[#allocation3 + $0x140] sm:$0xff] %vm1492, %v1341
    %1514 = vst.msk [vmem:[#allocation3 + $0x150] sm:$0xff] %vm1492, %v1343
    %1515 = vst.msk [vmem:[#allocation3 + $0x160] sm:$0xff] %vm1492, %v1345
    %1516 = vst.msk [vmem:[#allocation3 + $0x170] sm:$0xff] %vm1492, %v1347
    %1517 = vst.msk [vmem:[#allocation3 + $0x180] sm:$0xff] %vm1492, %v1349
    %1518 = vst.msk [vmem:[#allocation3 + $0x190] sm:$0xff] %vm1492, %v1351
    %1519 = vst.msk [vmem:[#allocation3 + $0x1a0] sm:$0xff] %vm1492, %v1353
    %1520 = vst.msk [vmem:[#allocation3 + $0x1b0] sm:$0xff] %vm1492, %v1355
    %1521 = vst.msk [vmem:[#allocation3 + $0x1c0] sm:$0xff] %vm1492, %v1357
    %1522 = vst.msk [vmem:[#allocation3 + $0x1d0] sm:$0xff] %vm1492, %v1359
    %1523 = vst.msk [vmem:[#allocation3 + $0x1e0] sm:$0xff] %vm1492, %v1361
    %1524 = vst.msk [vmem:[#allocation3 + $0x1f0] sm:$0xff] %vm1492, %v1363
    %1525 = vst.msk [vmem:[#allocation3 + $0x200] sm:$0xff] %vm1492, %v1365
    %1526 = vst.msk [vmem:[#allocation3 + $0x210] sm:$0xff] %vm1492, %v1367
    %1527 = vst.msk [vmem:[#allocation3 + $0x220] sm:$0xff] %vm1492, %v1369
    %1528 = vst.msk [vmem:[#allocation3 + $0x230] sm:$0xff] %vm1492, %v1371
    %1529 = vst.msk [vmem:[#allocation3 + $0x240] sm:$0xff] %vm1492, %v1373
    %1530 = vst.msk [vmem:[#allocation3 + $0x250] sm:$0xff] %vm1492, %v1375
    %1531 = vst.msk [vmem:[#allocation3 + $0x260] sm:$0xff] %vm1492, %v1377
    %1532 = vst.msk [vmem:[#allocation3 + $0x270] sm:$0xff] %vm1492, %v1379
    %1533 = vst.msk [vmem:[#allocation3 + $0x280] sm:$0xff] %vm1492, %v1381
    %1534 = vst.msk [vmem:[#allocation3 + $0x290] sm:$0xff] %vm1492, %v1383
    %1535 = vst.msk [vmem:[#allocation3 + $0x2a0] sm:$0xff] %vm1492, %v1385
    %1536 = vst.msk [vmem:[#allocation3 + $0x2b0] sm:$0xff] %vm1492, %v1387
    %1537 = vst.msk [vmem:[#allocation3 + $0x2c0] sm:$0xff] %vm1492, %v1389
    %1538 = vst.msk [vmem:[#allocation3 + $0x2d0] sm:$0xff] %vm1492, %v1391
    %1539 = vst.msk [vmem:[#allocation3 + $0x2e0] sm:$0xff] %vm1492, %v1393
    %1540 = vst.msk [vmem:[#allocation3 + $0x2f0] sm:$0xff] %vm1492, %v1395
    %1541 = vst.msk [vmem:[#allocation3 + $0x300] sm:$0xff] %vm1492, %v1397
    %1542 = vst.msk [vmem:[#allocation3 + $0x310] sm:$0xff] %vm1492, %v1399
    %1543 = vst.msk [vmem:[#allocation3 + $0x320] sm:$0xff] %vm1492, %v1401
    %1544 = vst.msk [vmem:[#allocation3 + $0x330] sm:$0xff] %vm1492, %v1403
    %1545 = vst.msk [vmem:[#allocation3 + $0x340] sm:$0xff] %vm1492, %v1405
    %1546 = vst.msk [vmem:[#allocation3 + $0x350] sm:$0xff] %vm1492, %v1407
    %1547 = vst.msk [vmem:[#allocation3 + $0x360] sm:$0xff] %vm1492, %v1409
    %1548 = vst.msk [vmem:[#allocation3 + $0x370] sm:$0xff] %vm1492, %v1411
    %1549 = vst.msk [vmem:[#allocation3 + $0x380] sm:$0xff] %vm1492, %v1413
    %1550 = vst.msk [vmem:[#allocation3 + $0x390] sm:$0xff] %vm1492, %v1415
    %1551 = vst.msk [vmem:[#allocation3 + $0x3a0] sm:$0xff] %vm1492, %v1417
    %1552 = vst.msk [vmem:[#allocation3 + $0x3b0] sm:$0xff] %vm1492, %v1419
    %1553 = vst.msk [vmem:[#allocation3 + $0x3c0] sm:$0xff] %vm1492, %v1421
    %1554 = vst.msk [vmem:[#allocation3 + $0x3d0] sm:$0xff] %vm1492, %v1423
    %1555 = vst.msk [vmem:[#allocation3 + $0x3e0] sm:$0xff] %vm1492, %v1425
    %1556 = vst.msk [vmem:[#allocation3 + $0x3f0] sm:$0xff] %vm1492, %v1427
    %v1557 = vld [vmem:[%s208 + $0x1] sm:$0xff]
    %v1558 = vld [vmem:[%s208 + $0x9] sm:$0xff]
    %v1559 = vld [vmem:[%s208 + $0x19] sm:$0xff]
    %v1560 = vld [vmem:[%s208 + $0x21] sm:$0xff]
    %v1561 = vld [vmem:[%s208 + $0x31] sm:$0xff]
    %v1562 = vld [vmem:[%s208 + $0x39] sm:$0xff]
    %v1563 = vld [vmem:[%s208 + $0x49] sm:$0xff]
    %v1564 = vld [vmem:[%s208 + $0x51] sm:$0xff]
    %v1565 = vld [vmem:[%s208 + $0x61] sm:$0xff]
    %v1566 = vld [vmem:[%s208 + $0x69] sm:$0xff]
    %v1567 = vld [vmem:[%s208 + $0x79] sm:$0xff]
    %v1568 = vld [vmem:[%s208 + $0x81] sm:$0xff]
    %v1569 = vld [vmem:[%s208 + $0x91] sm:$0xff]
    %v1570 = vld [vmem:[%s208 + $0x99] sm:$0xff]
    %v1571 = vld [vmem:[%s208 + $0xa9] sm:$0xff]
    %v1572 = vld [vmem:[%s208 + $0xb1] sm:$0xff]
    %v1573 = vld [vmem:[%s208 + $0xc1] sm:$0xff]
    %v1574 = vld [vmem:[%s208 + $0xc9] sm:$0xff]
    %v1575 = vld [vmem:[%s208 + $0xd9] sm:$0xff]
    %v1576 = vld [vmem:[%s208 + $0xe1] sm:$0xff]
    %v1577 = vld [vmem:[%s208 + $0xf1] sm:$0xff]
    %v1578 = vld [vmem:[%s208 + $0xf9] sm:$0xff]
    %v1579 = vld [vmem:[%s208 + $0x109] sm:$0xff]
    %v1580 = vld [vmem:[%s208 + $0x111] sm:$0xff]
    %v1581 = vld [vmem:[%s208 + $0x121] sm:$0xff]
    %v1582 = vld [vmem:[%s208 + $0x129] sm:$0xff]
    %v1583 = vld [vmem:[%s208 + $0x139] sm:$0xff]
    %v1584 = vld [vmem:[%s208 + $0x141] sm:$0xff]
    %v1585 = vld [vmem:[%s208 + $0x151] sm:$0xff]
    %v1586 = vld [vmem:[%s208 + $0x159] sm:$0xff]
    %v1587 = vld [vmem:[%s208 + $0x169] sm:$0xff]
    %v1588 = vld [vmem:[%s208 + $0x171] sm:$0xff]
    %v1589 = vld [vmem:[%s208 + $0x1b1] sm:$0xff]
    %v1590 = vld [vmem:[%s208 + $0x1b9] sm:$0xff]
    %v1591 = vld [vmem:[%s208 + $0x1c9] sm:$0xff]
    %v1592 = vld [vmem:[%s208 + $0x1d1] sm:$0xff]
    %v1593 = vld [vmem:[%s208 + $0x1e1] sm:$0xff]
    %v1594 = vld [vmem:[%s208 + $0x1e9] sm:$0xff]
    %v1595 = vld [vmem:[%s208 + $0x1f9] sm:$0xff]
    %v1596 = vld [vmem:[%s208 + $0x201] sm:$0xff]
    %v1597 = vld [vmem:[%s208 + $0x211] sm:$0xff]
    %v1598 = vld [vmem:[%s208 + $0x219] sm:$0xff]
    %v1599 = vld [vmem:[%s208 + $0x229] sm:$0xff]
    %v1600 = vld [vmem:[%s208 + $0x231] sm:$0xff]
    %v1601 = vld [vmem:[%s208 + $0x241] sm:$0xff]
    %v1602 = vld [vmem:[%s208 + $0x249] sm:$0xff]
    %v1603 = vld [vmem:[%s208 + $0x259] sm:$0xff]
    %v1604 = vld [vmem:[%s208 + $0x261] sm:$0xff]
    %v1605 = vld [vmem:[%s208 + $0x271] sm:$0xff]
    %v1606 = vld [vmem:[%s208 + $0x279] sm:$0xff]
    %v1607 = vld [vmem:[%s208 + $0x289] sm:$0xff]
    %v1608 = vld [vmem:[%s208 + $0x291] sm:$0xff]
    %v1609 = vld [vmem:[%s208 + $0x2a1] sm:$0xff]
    %v1610 = vld [vmem:[%s208 + $0x2a9] sm:$0xff]
    %v1611 = vld [vmem:[%s208 + $0x2b9] sm:$0xff]
    %v1612 = vld [vmem:[%s208 + $0x2c1] sm:$0xff]
    %v1613 = vld [vmem:[%s208 + $0x2d1] sm:$0xff]
    %v1614 = vld [vmem:[%s208 + $0x2d9] sm:$0xff]
    %v1615 = vld [vmem:[%s208 + $0x2e9] sm:$0xff]
    %v1616 = vld [vmem:[%s208 + $0x2f1] sm:$0xff]
    %v1617 = vld [vmem:[%s208 + $0x301] sm:$0xff]
    %v1618 = vld [vmem:[%s208 + $0x309] sm:$0xff]
    %v1619 = vld [vmem:[%s208 + $0x319] sm:$0xff]
    %v1620 = vld [vmem:[%s208 + $0x321] sm:$0xff]
    %1685 = vrot.lane.b32.xlu0 %v1557, 16
    %v1686 = vpop.permute.xlu0 %1685
    %1687 = vrot.lane.b32.xlu0 %v1558, 16
    %v1688 = vpop.permute.xlu0 %1687
    %1689 = vrot.lane.b32.xlu0 %v1559, 16
    %v1690 = vpop.permute.xlu0 %1689
    %1691 = vrot.lane.b32.xlu0 %v1560, 16
    %v1692 = vpop.permute.xlu0 %1691
    %1693 = vrot.lane.b32.xlu0 %v1561, 16
    %v1694 = vpop.permute.xlu0 %1693
    %1695 = vrot.lane.b32.xlu0 %v1562, 16
    %v1696 = vpop.permute.xlu0 %1695
    %1697 = vrot.lane.b32.xlu0 %v1563, 16
    %v1698 = vpop.permute.xlu0 %1697
    %1699 = vrot.lane.b32.xlu0 %v1564, 16
    %v1700 = vpop.permute.xlu0 %1699
    %1701 = vrot.lane.b32.xlu0 %v1565, 16
    %v1702 = vpop.permute.xlu0 %1701
    %1703 = vrot.lane.b32.xlu0 %v1566, 16
    %v1704 = vpop.permute.xlu0 %1703
    %1705 = vrot.lane.b32.xlu0 %v1567, 16
    %v1706 = vpop.permute.xlu0 %1705
    %1707 = vrot.lane.b32.xlu0 %v1568, 16
    %v1708 = vpop.permute.xlu0 %1707
    %1709 = vrot.lane.b32.xlu0 %v1569, 16
    %v1710 = vpop.permute.xlu0 %1709
    %1711 = vrot.lane.b32.xlu0 %v1570, 16
    %v1712 = vpop.permute.xlu0 %1711
    %1713 = vrot.lane.b32.xlu0 %v1571, 16
    %v1714 = vpop.permute.xlu0 %1713
    %1715 = vrot.lane.b32.xlu0 %v1572, 16
    %v1716 = vpop.permute.xlu0 %1715
    %1717 = vrot.lane.b32.xlu0 %v1573, 16
    %v1718 = vpop.permute.xlu0 %1717
    %1719 = vrot.lane.b32.xlu0 %v1574, 16
    %v1720 = vpop.permute.xlu0 %1719
    %1721 = vrot.lane.b32.xlu0 %v1575, 16
    %v1722 = vpop.permute.xlu0 %1721
    %1723 = vrot.lane.b32.xlu0 %v1576, 16
    %v1724 = vpop.permute.xlu0 %1723
    %1725 = vrot.lane.b32.xlu0 %v1577, 16
    %v1726 = vpop.permute.xlu0 %1725
    %1727 = vrot.lane.b32.xlu0 %v1578, 16
    %v1728 = vpop.permute.xlu0 %1727
    %1729 = vrot.lane.b32.xlu0 %v1579, 16
    %v1730 = vpop.permute.xlu0 %1729
    %1731 = vrot.lane.b32.xlu0 %v1580, 16
    %v1732 = vpop.permute.xlu0 %1731
    %1733 = vrot.lane.b32.xlu0 %v1581, 16
    %v1734 = vpop.permute.xlu0 %1733
    %1735 = vrot.lane.b32.xlu0 %v1582, 16
    %v1736 = vpop.permute.xlu0 %1735
    %1737 = vrot.lane.b32.xlu0 %v1583, 16
    %v1738 = vpop.permute.xlu0 %1737
    %1739 = vrot.lane.b32.xlu0 %v1584, 16
    %v1740 = vpop.permute.xlu0 %1739
    %1741 = vrot.lane.b32.xlu0 %v1585, 16
    %v1742 = vpop.permute.xlu0 %1741
    %1743 = vrot.lane.b32.xlu0 %v1586, 16
    %v1744 = vpop.permute.xlu0 %1743
    %1745 = vrot.lane.b32.xlu0 %v1587, 16
    %v1746 = vpop.permute.xlu0 %1745
    %1747 = vrot.lane.b32.xlu0 %v1588, 16
    %v1748 = vpop.permute.xlu0 %1747
    %1749 = vrot.lane.b32.xlu0 %v1589, 16
    %v1750 = vpop.permute.xlu0 %1749
    %1751 = vrot.lane.b32.xlu0 %v1590, 16
    %v1752 = vpop.permute.xlu0 %1751
    %1753 = vrot.lane.b32.xlu0 %v1591, 16
    %v1754 = vpop.permute.xlu0 %1753
    %1755 = vrot.lane.b32.xlu0 %v1592, 16
    %v1756 = vpop.permute.xlu0 %1755
    %1757 = vrot.lane.b32.xlu0 %v1593, 16
    %v1758 = vpop.permute.xlu0 %1757
    %1759 = vrot.lane.b32.xlu0 %v1594, 16
    %v1760 = vpop.permute.xlu0 %1759
    %1761 = vrot.lane.b32.xlu0 %v1595, 16
    %v1762 = vpop.permute.xlu0 %1761
    %1763 = vrot.lane.b32.xlu0 %v1596, 16
    %v1764 = vpop.permute.xlu0 %1763
    %1765 = vrot.lane.b32.xlu0 %v1597, 16
    %v1766 = vpop.permute.xlu0 %1765
    %1767 = vrot.lane.b32.xlu0 %v1598, 16
    %v1768 = vpop.permute.xlu0 %1767
    %1769 = vrot.lane.b32.xlu0 %v1599, 16
    %v1770 = vpop.permute.xlu0 %1769
    %1771 = vrot.lane.b32.xlu0 %v1600, 16
    %v1772 = vpop.permute.xlu0 %1771
    %1773 = vrot.lane.b32.xlu0 %v1601, 16
    %v1774 = vpop.permute.xlu0 %1773
    %1775 = vrot.lane.b32.xlu0 %v1602, 16
    %v1776 = vpop.permute.xlu0 %1775
    %1777 = vrot.lane.b32.xlu0 %v1603, 16
    %v1778 = vpop.permute.xlu0 %1777
    %1779 = vrot.lane.b32.xlu0 %v1604, 16
    %v1780 = vpop.permute.xlu0 %1779
    %1781 = vrot.lane.b32.xlu0 %v1605, 16
    %v1782 = vpop.permute.xlu0 %1781
    %1783 = vrot.lane.b32.xlu0 %v1606, 16
    %v1784 = vpop.permute.xlu0 %1783
    %1785 = vrot.lane.b32.xlu0 %v1607, 16
    %v1786 = vpop.permute.xlu0 %1785
    %1787 = vrot.lane.b32.xlu0 %v1608, 16
    %v1788 = vpop.permute.xlu0 %1787
    %1789 = vrot.lane.b32.xlu0 %v1609, 16
    %v1790 = vpop.permute.xlu0 %1789
    %1791 = vrot.lane.b32.xlu0 %v1610, 16
    %v1792 = vpop.permute.xlu0 %1791
    %1793 = vrot.lane.b32.xlu0 %v1611, 16
    %v1794 = vpop.permute.xlu0 %1793
    %1795 = vrot.lane.b32.xlu0 %v1612, 16
    %v1796 = vpop.permute.xlu0 %1795
    %1797 = vrot.lane.b32.xlu0 %v1613, 16
    %v1798 = vpop.permute.xlu0 %1797
    %1799 = vrot.lane.b32.xlu0 %v1614, 16
    %v1800 = vpop.permute.xlu0 %1799
    %1801 = vrot.lane.b32.xlu0 %v1615, 16
    %v1802 = vpop.permute.xlu0 %1801
    %1803 = vrot.lane.b32.xlu0 %v1616, 16
    %v1804 = vpop.permute.xlu0 %1803
    %1805 = vrot.lane.b32.xlu0 %v1617, 16
    %v1806 = vpop.permute.xlu0 %1805
    %1807 = vrot.lane.b32.xlu0 %v1618, 16
    %v1808 = vpop.permute.xlu0 %1807
    %1809 = vrot.lane.b32.xlu0 %v1619, 16
    %v1810 = vpop.permute.xlu0 %1809
    %1811 = vrot.lane.b32.xlu0 %v1620, 16
    %v1812 = vpop.permute.xlu0 %1811
    %vm1877 = vcmask 162944
    %1878 = vst.msk [vmem:[#allocation3] sm:$0xff] %vm1877, %v1686
    %1879 = vst.msk [vmem:[#allocation3 + $0x10] sm:$0xff] %vm1877, %v1688
    %1880 = vst.msk [vmem:[#allocation3 + $0x20] sm:$0xff] %vm1877, %v1690
    %1881 = vst.msk [vmem:[#allocation3 + $0x30] sm:$0xff] %vm1877, %v1692
    %1882 = vst.msk [vmem:[#allocation3 + $0x40] sm:$0xff] %vm1877, %v1694
    %1883 = vst.msk [vmem:[#allocation3 + $0x50] sm:$0xff] %vm1877, %v1696
    %1884 = vst.msk [vmem:[#allocation3 + $0x60] sm:$0xff] %vm1877, %v1698
    %1885 = vst.msk [vmem:[#allocation3 + $0x70] sm:$0xff] %vm1877, %v1700
    %1886 = vst.msk [vmem:[#allocation3 + $0x80] sm:$0xff] %vm1877, %v1702
    %1887 = vst.msk [vmem:[#allocation3 + $0x90] sm:$0xff] %vm1877, %v1704
    %1888 = vst.msk [vmem:[#allocation3 + $0xa0] sm:$0xff] %vm1877, %v1706
    %1889 = vst.msk [vmem:[#allocation3 + $0xb0] sm:$0xff] %vm1877, %v1708
    %1890 = vst.msk [vmem:[#allocation3 + $0xc0] sm:$0xff] %vm1877, %v1710
    %1891 = vst.msk [vmem:[#allocation3 + $0xd0] sm:$0xff] %vm1877, %v1712
    %1892 = vst.msk [vmem:[#allocation3 + $0xe0] sm:$0xff] %vm1877, %v1714
    %1893 = vst.msk [vmem:[#allocation3 + $0xf0] sm:$0xff] %vm1877, %v1716
    %1894 = vst.msk [vmem:[#allocation3 + $0x100] sm:$0xff] %vm1877, %v1718
    %1895 = vst.msk [vmem:[#allocation3 + $0x110] sm:$0xff] %vm1877, %v1720
    %1896 = vst.msk [vmem:[#allocation3 + $0x120] sm:$0xff] %vm1877, %v1722
    %1897 = vst.msk [vmem:[#allocation3 + $0x130] sm:$0xff] %vm1877, %v1724
    %1898 = vst.msk [vmem:[#allocation3 + $0x140] sm:$0xff] %vm1877, %v1726
    %1899 = vst.msk [vmem:[#allocation3 + $0x150] sm:$0xff] %vm1877, %v1728
    %1900 = vst.msk [vmem:[#allocation3 + $0x160] sm:$0xff] %vm1877, %v1730
    %1901 = vst.msk [vmem:[#allocation3 + $0x170] sm:$0xff] %vm1877, %v1732
    %1902 = vst.msk [vmem:[#allocation3 + $0x180] sm:$0xff] %vm1877, %v1734
    %1903 = vst.msk [vmem:[#allocation3 + $0x190] sm:$0xff] %vm1877, %v1736
    %1904 = vst.msk [vmem:[#allocation3 + $0x1a0] sm:$0xff] %vm1877, %v1738
    %1905 = vst.msk [vmem:[#allocation3 + $0x1b0] sm:$0xff] %vm1877, %v1740
    %1906 = vst.msk [vmem:[#allocation3 + $0x1c0] sm:$0xff] %vm1877, %v1742
    %1907 = vst.msk [vmem:[#allocation3 + $0x1d0] sm:$0xff] %vm1877, %v1744
    %1908 = vst.msk [vmem:[#allocation3 + $0x1e0] sm:$0xff] %vm1877, %v1746
    %1909 = vst.msk [vmem:[#allocation3 + $0x1f0] sm:$0xff] %vm1877, %v1748
    %1910 = vst.msk [vmem:[#allocation3 + $0x200] sm:$0xff] %vm1877, %v1750
    %1911 = vst.msk [vmem:[#allocation3 + $0x210] sm:$0xff] %vm1877, %v1752
    %1912 = vst.msk [vmem:[#allocation3 + $0x220] sm:$0xff] %vm1877, %v1754
    %1913 = vst.msk [vmem:[#allocation3 + $0x230] sm:$0xff] %vm1877, %v1756
    %1914 = vst.msk [vmem:[#allocation3 + $0x240] sm:$0xff] %vm1877, %v1758
    %1915 = vst.msk [vmem:[#allocation3 + $0x250] sm:$0xff] %vm1877, %v1760
    %1916 = vst.msk [vmem:[#allocation3 + $0x260] sm:$0xff] %vm1877, %v1762
    %1917 = vst.msk [vmem:[#allocation3 + $0x270] sm:$0xff] %vm1877, %v1764
    %1918 = vst.msk [vmem:[#allocation3 + $0x280] sm:$0xff] %vm1877, %v1766
    %1919 = vst.msk [vmem:[#allocation3 + $0x290] sm:$0xff] %vm1877, %v1768
    %1920 = vst.msk [vmem:[#allocation3 + $0x2a0] sm:$0xff] %vm1877, %v1770
    %1921 = vst.msk [vmem:[#allocation3 + $0x2b0] sm:$0xff] %vm1877, %v1772
    %1922 = vst.msk [vmem:[#allocation3 + $0x2c0] sm:$0xff] %vm1877, %v1774
    %1923 = vst.msk [vmem:[#allocation3 + $0x2d0] sm:$0xff] %vm1877, %v1776
    %1924 = vst.msk [vmem:[#allocation3 + $0x2e0] sm:$0xff] %vm1877, %v1778
    %1925 = vst.msk [vmem:[#allocation3 + $0x2f0] sm:$0xff] %vm1877, %v1780
    %1926 = vst.msk [vmem:[#allocation3 + $0x300] sm:$0xff] %vm1877, %v1782
    %1927 = vst.msk [vmem:[#allocation3 + $0x310] sm:$0xff] %vm1877, %v1784
    %1928 = vst.msk [vmem:[#allocation3 + $0x320] sm:$0xff] %vm1877, %v1786
    %1929 = vst.msk [vmem:[#allocation3 + $0x330] sm:$0xff] %vm1877, %v1788
    %1930 = vst.msk [vmem:[#allocation3 + $0x340] sm:$0xff] %vm1877, %v1790
    %1931 = vst.msk [vmem:[#allocation3 + $0x350] sm:$0xff] %vm1877, %v1792
    %1932 = vst.msk [vmem:[#allocation3 + $0x360] sm:$0xff] %vm1877, %v1794
    %1933 = vst.msk [vmem:[#allocation3 + $0x370] sm:$0xff] %vm1877, %v1796
    %1934 = vst.msk [vmem:[#allocation3 + $0x380] sm:$0xff] %vm1877, %v1798
    %1935 = vst.msk [vmem:[#allocation3 + $0x390] sm:$0xff] %vm1877, %v1800
    %1936 = vst.msk [vmem:[#allocation3 + $0x3a0] sm:$0xff] %vm1877, %v1802
    %1937 = vst.msk [vmem:[#allocation3 + $0x3b0] sm:$0xff] %vm1877, %v1804
    %1938 = vst.msk [vmem:[#allocation3 + $0x3c0] sm:$0xff] %vm1877, %v1806
    %1939 = vst.msk [vmem:[#allocation3 + $0x3d0] sm:$0xff] %vm1877, %v1808
    %1940 = vst.msk [vmem:[#allocation3 + $0x3e0] sm:$0xff] %vm1877, %v1810
    %1941 = vst.msk [vmem:[#allocation3 + $0x3f0] sm:$0xff] %vm1877, %v1812
    %v1942 = vld [vmem:[%s208 + $0x2] sm:$0xff]
    %v1943 = vld [vmem:[%s208 + $0xa] sm:$0xff]
    %v1944 = vld [vmem:[%s208 + $0x1a] sm:$0xff]
    %v1945 = vld [vmem:[%s208 + $0x22] sm:$0xff]
    %v1946 = vld [vmem:[%s208 + $0x32] sm:$0xff]
    %v1947 = vld [vmem:[%s208 + $0x3a] sm:$0xff]
    %v1948 = vld [vmem:[%s208 + $0x4a] sm:$0xff]
    %v1949 = vld [vmem:[%s208 + $0x52] sm:$0xff]
    %v1950 = vld [vmem:[%s208 + $0x62] sm:$0xff]
    %v1951 = vld [vmem:[%s208 + $0x6a] sm:$0xff]
    %v1952 = vld [vmem:[%s208 + $0x7a] sm:$0xff]
    %v1953 = vld [vmem:[%s208 + $0x82] sm:$0xff]
    %v1954 = vld [vmem:[%s208 + $0x92] sm:$0xff]
    %v1955 = vld [vmem:[%s208 + $0x9a] sm:$0xff]
    %v1956 = vld [vmem:[%s208 + $0xaa] sm:$0xff]
    %v1957 = vld [vmem:[%s208 + $0xb2] sm:$0xff]
    %v1958 = vld [vmem:[%s208 + $0xc2] sm:$0xff]
    %v1959 = vld [vmem:[%s208 + $0xca] sm:$0xff]
    %v1960 = vld [vmem:[%s208 + $0xda] sm:$0xff]
    %v1961 = vld [vmem:[%s208 + $0xe2] sm:$0xff]
    %v1962 = vld [vmem:[%s208 + $0xf2] sm:$0xff]
    %v1963 = vld [vmem:[%s208 + $0xfa] sm:$0xff]
    %v1964 = vld [vmem:[%s208 + $0x10a] sm:$0xff]
    %v1965 = vld [vmem:[%s208 + $0x112] sm:$0xff]
    %v1966 = vld [vmem:[%s208 + $0x122] sm:$0xff]
    %v1967 = vld [vmem:[%s208 + $0x12a] sm:$0xff]
    %v1968 = vld [vmem:[%s208 + $0x13a] sm:$0xff]
    %v1969 = vld [vmem:[%s208 + $0x142] sm:$0xff]
    %v1970 = vld [vmem:[%s208 + $0x152] sm:$0xff]
    %v1971 = vld [vmem:[%s208 + $0x15a] sm:$0xff]
    %v1972 = vld [vmem:[%s208 + $0x16a] sm:$0xff]
    %v1973 = vld [vmem:[%s208 + $0x172] sm:$0xff]
    %v1974 = vld [vmem:[%s208 + $0x1b2] sm:$0xff]
    %v1975 = vld [vmem:[%s208 + $0x1ba] sm:$0xff]
    %v1976 = vld [vmem:[%s208 + $0x1ca] sm:$0xff]
    %v1977 = vld [vmem:[%s208 + $0x1d2] sm:$0xff]
    %v1978 = vld [vmem:[%s208 + $0x1e2] sm:$0xff]
    %v1979 = vld [vmem:[%s208 + $0x1ea] sm:$0xff]
    %v1980 = vld [vmem:[%s208 + $0x1fa] sm:$0xff]
    %v1981 = vld [vmem:[%s208 + $0x202] sm:$0xff]
    %v1982 = vld [vmem:[%s208 + $0x212] sm:$0xff]
    %v1983 = vld [vmem:[%s208 + $0x21a] sm:$0xff]
    %v1984 = vld [vmem:[%s208 + $0x22a] sm:$0xff]
    %v1985 = vld [vmem:[%s208 + $0x232] sm:$0xff]
    %v1986 = vld [vmem:[%s208 + $0x242] sm:$0xff]
    %v1987 = vld [vmem:[%s208 + $0x24a] sm:$0xff]
    %v1988 = vld [vmem:[%s208 + $0x25a] sm:$0xff]
    %v1989 = vld [vmem:[%s208 + $0x262] sm:$0xff]
    %v1990 = vld [vmem:[%s208 + $0x272] sm:$0xff]
    %v1991 = vld [vmem:[%s208 + $0x27a] sm:$0xff]
    %v1992 = vld [vmem:[%s208 + $0x28a] sm:$0xff]
    %v1993 = vld [vmem:[%s208 + $0x292] sm:$0xff]
    %v1994 = vld [vmem:[%s208 + $0x2a2] sm:$0xff]
    %v1995 = vld [vmem:[%s208 + $0x2aa] sm:$0xff]
    %v1996 = vld [vmem:[%s208 + $0x2ba] sm:$0xff]
    %v1997 = vld [vmem:[%s208 + $0x2c2] sm:$0xff]
    %v1998 = vld [vmem:[%s208 + $0x2d2] sm:$0xff]
    %v1999 = vld [vmem:[%s208 + $0x2da] sm:$0xff]
    %v2000 = vld [vmem:[%s208 + $0x2ea] sm:$0xff]
    %v2001 = vld [vmem:[%s208 + $0x2f2] sm:$0xff]
    %v2002 = vld [vmem:[%s208 + $0x302] sm:$0xff]
    %v2003 = vld [vmem:[%s208 + $0x30a] sm:$0xff]
    %v2004 = vld [vmem:[%s208 + $0x31a] sm:$0xff]
    %v2005 = vld [vmem:[%s208 + $0x322] sm:$0xff]
    %2070 = vrot.lane.b32.xlu0 %v1942, 20
    %v2071 = vpop.permute.xlu0 %2070
    %2072 = vrot.lane.b32.xlu0 %v1943, 20
    %v2073 = vpop.permute.xlu0 %2072
    %2074 = vrot.lane.b32.xlu0 %v1944, 20
    %v2075 = vpop.permute.xlu0 %2074
    %2076 = vrot.lane.b32.xlu0 %v1945, 20
    %v2077 = vpop.permute.xlu0 %2076
    %2078 = vrot.lane.b32.xlu0 %v1946, 20
    %v2079 = vpop.permute.xlu0 %2078
    %2080 = vrot.lane.b32.xlu0 %v1947, 20
    %v2081 = vpop.permute.xlu0 %2080
    %2082 = vrot.lane.b32.xlu0 %v1948, 20
    %v2083 = vpop.permute.xlu0 %2082
    %2084 = vrot.lane.b32.xlu0 %v1949, 20
    %v2085 = vpop.permute.xlu0 %2084
    %2086 = vrot.lane.b32.xlu0 %v1950, 20
    %v2087 = vpop.permute.xlu0 %2086
    %2088 = vrot.lane.b32.xlu0 %v1951, 20
    %v2089 = vpop.permute.xlu0 %2088
    %2090 = vrot.lane.b32.xlu0 %v1952, 20
    %v2091 = vpop.permute.xlu0 %2090
    %2092 = vrot.lane.b32.xlu0 %v1953, 20
    %v2093 = vpop.permute.xlu0 %2092
    %2094 = vrot.lane.b32.xlu0 %v1954, 20
    %v2095 = vpop.permute.xlu0 %2094
    %2096 = vrot.lane.b32.xlu0 %v1955, 20
    %v2097 = vpop.permute.xlu0 %2096
    %2098 = vrot.lane.b32.xlu0 %v1956, 20
    %v2099 = vpop.permute.xlu0 %2098
    %2100 = vrot.lane.b32.xlu0 %v1957, 20
    %v2101 = vpop.permute.xlu0 %2100
    %2102 = vrot.lane.b32.xlu0 %v1958, 20
    %v2103 = vpop.permute.xlu0 %2102
    %2104 = vrot.lane.b32.xlu0 %v1959, 20
    %v2105 = vpop.permute.xlu0 %2104
    %2106 = vrot.lane.b32.xlu0 %v1960, 20
    %v2107 = vpop.permute.xlu0 %2106
    %2108 = vrot.lane.b32.xlu0 %v1961, 20
    %v2109 = vpop.permute.xlu0 %2108
    %2110 = vrot.lane.b32.xlu0 %v1962, 20
    %v2111 = vpop.permute.xlu0 %2110
    %2112 = vrot.lane.b32.xlu0 %v1963, 20
    %v2113 = vpop.permute.xlu0 %2112
    %2114 = vrot.lane.b32.xlu0 %v1964, 20
    %v2115 = vpop.permute.xlu0 %2114
    %2116 = vrot.lane.b32.xlu0 %v1965, 20
    %v2117 = vpop.permute.xlu0 %2116
    %2118 = vrot.lane.b32.xlu0 %v1966, 20
    %v2119 = vpop.permute.xlu0 %2118
    %2120 = vrot.lane.b32.xlu0 %v1967, 20
    %v2121 = vpop.permute.xlu0 %2120
    %2122 = vrot.lane.b32.xlu0 %v1968, 20
    %v2123 = vpop.permute.xlu0 %2122
    %2124 = vrot.lane.b32.xlu0 %v1969, 20
    %v2125 = vpop.permute.xlu0 %2124
    %2126 = vrot.lane.b32.xlu0 %v1970, 20
    %v2127 = vpop.permute.xlu0 %2126
    %2128 = vrot.lane.b32.xlu0 %v1971, 20
    %v2129 = vpop.permute.xlu0 %2128
    %2130 = vrot.lane.b32.xlu0 %v1972, 20
    %v2131 = vpop.permute.xlu0 %2130
    %2132 = vrot.lane.b32.xlu0 %v1973, 20
    %v2133 = vpop.permute.xlu0 %2132
    %2134 = vrot.lane.b32.xlu0 %v1974, 20
    %v2135 = vpop.permute.xlu0 %2134
    %2136 = vrot.lane.b32.xlu0 %v1975, 20
    %v2137 = vpop.permute.xlu0 %2136
    %2138 = vrot.lane.b32.xlu0 %v1976, 20
    %v2139 = vpop.permute.xlu0 %2138
    %2140 = vrot.lane.b32.xlu0 %v1977, 20
    %v2141 = vpop.permute.xlu0 %2140
    %2142 = vrot.lane.b32.xlu0 %v1978, 20
    %v2143 = vpop.permute.xlu0 %2142
    %2144 = vrot.lane.b32.xlu0 %v1979, 20
    %v2145 = vpop.permute.xlu0 %2144
    %2146 = vrot.lane.b32.xlu0 %v1980, 20
    %v2147 = vpop.permute.xlu0 %2146
    %2148 = vrot.lane.b32.xlu0 %v1981, 20
    %v2149 = vpop.permute.xlu0 %2148
    %2150 = vrot.lane.b32.xlu0 %v1982, 20
    %v2151 = vpop.permute.xlu0 %2150
    %2152 = vrot.lane.b32.xlu0 %v1983, 20
    %v2153 = vpop.permute.xlu0 %2152
    %2154 = vrot.lane.b32.xlu0 %v1984, 20
    %v2155 = vpop.permute.xlu0 %2154
    %2156 = vrot.lane.b32.xlu0 %v1985, 20
    %v2157 = vpop.permute.xlu0 %2156
    %2158 = vrot.lane.b32.xlu0 %v1986, 20
    %v2159 = vpop.permute.xlu0 %2158
    %2160 = vrot.lane.b32.xlu0 %v1987, 20
    %v2161 = vpop.permute.xlu0 %2160
    %2162 = vrot.lane.b32.xlu0 %v1988, 20
    %v2163 = vpop.permute.xlu0 %2162
    %2164 = vrot.lane.b32.xlu0 %v1989, 20
    %v2165 = vpop.permute.xlu0 %2164
    %2166 = vrot.lane.b32.xlu0 %v1990, 20
    %v2167 = vpop.permute.xlu0 %2166
    %2168 = vrot.lane.b32.xlu0 %v1991, 20
    %v2169 = vpop.permute.xlu0 %2168
    %2170 = vrot.lane.b32.xlu0 %v1992, 20
    %v2171 = vpop.permute.xlu0 %2170
    %2172 = vrot.lane.b32.xlu0 %v1993, 20
    %v2173 = vpop.permute.xlu0 %2172
    %2174 = vrot.lane.b32.xlu0 %v1994, 20
    %v2175 = vpop.permute.xlu0 %2174
    %2176 = vrot.lane.b32.xlu0 %v1995, 20
    %v2177 = vpop.permute.xlu0 %2176
    %2178 = vrot.lane.b32.xlu0 %v1996, 20
    %v2179 = vpop.permute.xlu0 %2178
    %2180 = vrot.lane.b32.xlu0 %v1997, 20
    %v2181 = vpop.permute.xlu0 %2180
    %2182 = vrot.lane.b32.xlu0 %v1998, 20
    %v2183 = vpop.permute.xlu0 %2182
    %2184 = vrot.lane.b32.xlu0 %v1999, 20
    %v2185 = vpop.permute.xlu0 %2184
    %2186 = vrot.lane.b32.xlu0 %v2000, 20
    %v2187 = vpop.permute.xlu0 %2186
    %2188 = vrot.lane.b32.xlu0 %v2001, 20
    %v2189 = vpop.permute.xlu0 %2188
    %2190 = vrot.lane.b32.xlu0 %v2002, 20
    %v2191 = vpop.permute.xlu0 %2190
    %2192 = vrot.lane.b32.xlu0 %v2003, 20
    %v2193 = vpop.permute.xlu0 %2192
    %2194 = vrot.lane.b32.xlu0 %v2004, 20
    %v2195 = vpop.permute.xlu0 %2194
    %2196 = vrot.lane.b32.xlu0 %v2005, 20
    %v2197 = vpop.permute.xlu0 %2196
    %vm2262 = vcmask 195744
    %2263 = vst.msk [vmem:[#allocation3] sm:$0xff] %vm2262, %v2071
    %2264 = vst.msk [vmem:[#allocation3 + $0x10] sm:$0xff] %vm2262, %v2073
    %2265 = vst.msk [vmem:[#allocation3 + $0x20] sm:$0xff] %vm2262, %v2075
    %2266 = vst.msk [vmem:[#allocation3 + $0x30] sm:$0xff] %vm2262, %v2077
    %2267 = vst.msk [vmem:[#allocation3 + $0x40] sm:$0xff] %vm2262, %v2079
    %2268 = vst.msk [vmem:[#allocation3 + $0x50] sm:$0xff] %vm2262, %v2081
    %2269 = vst.msk [vmem:[#allocation3 + $0x60] sm:$0xff] %vm2262, %v2083
    %2270 = vst.msk [vmem:[#allocation3 + $0x70] sm:$0xff] %vm2262, %v2085
    %2271 = vst.msk [vmem:[#allocation3 + $0x80] sm:$0xff] %vm2262, %v2087
    %2272 = vst.msk [vmem:[#allocation3 + $0x90] sm:$0xff] %vm2262, %v2089
    %2273 = vst.msk [vmem:[#allocation3 + $0xa0] sm:$0xff] %vm2262, %v2091
    %2274 = vst.msk [vmem:[#allocation3 + $0xb0] sm:$0xff] %vm2262, %v2093
    %2275 = vst.msk [vmem:[#allocation3 + $0xc0] sm:$0xff] %vm2262, %v2095
    %2276 = vst.msk [vmem:[#allocation3 + $0xd0] sm:$0xff] %vm2262, %v2097
    %2277 = vst.msk [vmem:[#allocation3 + $0xe0] sm:$0xff] %vm2262, %v2099
    %2278 = vst.msk [vmem:[#allocation3 + $0xf0] sm:$0xff] %vm2262, %v2101
    %2279 = vst.msk [vmem:[#allocation3 + $0x100] sm:$0xff] %vm2262, %v2103
    %2280 = vst.msk [vmem:[#allocation3 + $0x110] sm:$0xff] %vm2262, %v2105
    %2281 = vst.msk [vmem:[#allocation3 + $0x120] sm:$0xff] %vm2262, %v2107
    %2282 = vst.msk [vmem:[#allocation3 + $0x130] sm:$0xff] %vm2262, %v2109
    %2283 = vst.msk [vmem:[#allocation3 + $0x140] sm:$0xff] %vm2262, %v2111
    %2284 = vst.msk [vmem:[#allocation3 + $0x150] sm:$0xff] %vm2262, %v2113
    %2285 = vst.msk [vmem:[#allocation3 + $0x160] sm:$0xff] %vm2262, %v2115
    %2286 = vst.msk [vmem:[#allocation3 + $0x170] sm:$0xff] %vm2262, %v2117
    %2287 = vst.msk [vmem:[#allocation3 + $0x180] sm:$0xff] %vm2262, %v2119
    %2288 = vst.msk [vmem:[#allocation3 + $0x190] sm:$0xff] %vm2262, %v2121
    %2289 = vst.msk [vmem:[#allocation3 + $0x1a0] sm:$0xff] %vm2262, %v2123
    %2290 = vst.msk [vmem:[#allocation3 + $0x1b0] sm:$0xff] %vm2262, %v2125
    %2291 = vst.msk [vmem:[#allocation3 + $0x1c0] sm:$0xff] %vm2262, %v2127
    %2292 = vst.msk [vmem:[#allocation3 + $0x1d0] sm:$0xff] %vm2262, %v2129
    %2293 = vst.msk [vmem:[#allocation3 + $0x1e0] sm:$0xff] %vm2262, %v2131
    %2294 = vst.msk [vmem:[#allocation3 + $0x1f0] sm:$0xff] %vm2262, %v2133
    %2295 = vst.msk [vmem:[#allocation3 + $0x200] sm:$0xff] %vm2262, %v2135
    %2296 = vst.msk [vmem:[#allocation3 + $0x210] sm:$0xff] %vm2262, %v2137
    %2297 = vst.msk [vmem:[#allocation3 + $0x220] sm:$0xff] %vm2262, %v2139
    %2298 = vst.msk [vmem:[#allocation3 + $0x230] sm:$0xff] %vm2262, %v2141
    %2299 = vst.msk [vmem:[#allocation3 + $0x240] sm:$0xff] %vm2262, %v2143
    %2300 = vst.msk [vmem:[#allocation3 + $0x250] sm:$0xff] %vm2262, %v2145
    %2301 = vst.msk [vmem:[#allocation3 + $0x260] sm:$0xff] %vm2262, %v2147
    %2302 = vst.msk [vmem:[#allocation3 + $0x270] sm:$0xff] %vm2262, %v2149
    %2303 = vst.msk [vmem:[#allocation3 + $0x280] sm:$0xff] %vm2262, %v2151
    %2304 = vst.msk [vmem:[#allocation3 + $0x290] sm:$0xff] %vm2262, %v2153
    %2305 = vst.msk [vmem:[#allocation3 + $0x2a0] sm:$0xff] %vm2262, %v2155
    %2306 = vst.msk [vmem:[#allocation3 + $0x2b0] sm:$0xff] %vm2262, %v2157
    %2307 = vst.msk [vmem:[#allocation3 + $0x2c0] sm:$0xff] %vm2262, %v2159
    %2308 = vst.msk [vmem:[#allocation3 + $0x2d0] sm:$0xff] %vm2262, %v2161
    %2309 = vst.msk [vmem:[#allocation3 + $0x2e0] sm:$0xff] %vm2262, %v2163
    %2310 = vst.msk [vmem:[#allocation3 + $0x2f0] sm:$0xff] %vm2262, %v2165
    %2311 = vst.msk [vmem:[#allocation3 + $0x300] sm:$0xff] %vm2262, %v2167
    %2312 = vst.msk [vmem:[#allocation3 + $0x310] sm:$0xff] %vm2262, %v2169
    %2313 = vst.msk [vmem:[#allocation3 + $0x320] sm:$0xff] %vm2262, %v2171
    %2314 = vst.msk [vmem:[#allocation3 + $0x330] sm:$0xff] %vm2262, %v2173
    %2315 = vst.msk [vmem:[#allocation3 + $0x340] sm:$0xff] %vm2262, %v2175
    %2316 = vst.msk [vmem:[#allocation3 + $0x350] sm:$0xff] %vm2262, %v2177
    %2317 = vst.msk [vmem:[#allocation3 + $0x360] sm:$0xff] %vm2262, %v2179
    %2318 = vst.msk [vmem:[#allocation3 + $0x370] sm:$0xff] %vm2262, %v2181
    %2319 = vst.msk [vmem:[#allocation3 + $0x380] sm:$0xff] %vm2262, %v2183
    %2320 = vst.msk [vmem:[#allocation3 + $0x390] sm:$0xff] %vm2262, %v2185
    %2321 = vst.msk [vmem:[#allocation3 + $0x3a0] sm:$0xff] %vm2262, %v2187
    %2322 = vst.msk [vmem:[#allocation3 + $0x3b0] sm:$0xff] %vm2262, %v2189
    %2323 = vst.msk [vmem:[#allocation3 + $0x3c0] sm:$0xff] %vm2262, %v2191
    %2324 = vst.msk [vmem:[#allocation3 + $0x3d0] sm:$0xff] %vm2262, %v2193
    %2325 = vst.msk [vmem:[#allocation3 + $0x3e0] sm:$0xff] %vm2262, %v2195
    %2326 = vst.msk [vmem:[#allocation3 + $0x3f0] sm:$0xff] %vm2262, %v2197
    %s2327 = scalar_lea.vmem [#allocation2], 48
    %v2328 = vld [vmem:[%s2327] sm:$0xff]
    %v2329 = vld [vmem:[%s2327 + $0x8] sm:$0xff]
    %v2330 = vld [vmem:[%s2327 + $0x18] sm:$0xff]
    %v2331 = vld [vmem:[%s2327 + $0x20] sm:$0xff]
    %v2332 = vld [vmem:[%s2327 + $0x30] sm:$0xff]
    %v2333 = vld [vmem:[%s2327 + $0x38] sm:$0xff]
    %v2334 = vld [vmem:[%s2327 + $0x48] sm:$0xff]
    %v2335 = vld [vmem:[%s2327 + $0x50] sm:$0xff]
    %v2336 = vld [vmem:[%s2327 + $0x60] sm:$0xff]
    %v2337 = vld [vmem:[%s2327 + $0x68] sm:$0xff]
    %v2338 = vld [vmem:[%s2327 + $0x78] sm:$0xff]
    %v2339 = vld [vmem:[%s2327 + $0x80] sm:$0xff]
    %v2340 = vld [vmem:[%s2327 + $0x90] sm:$0xff]
    %v2341 = vld [vmem:[%s2327 + $0x98] sm:$0xff]
    %v2342 = vld [vmem:[%s2327 + $0xa8] sm:$0xff]
    %v2343 = vld [vmem:[%s2327 + $0xb0] sm:$0xff]
    %v2344 = vld [vmem:[%s2327 + $0xc0] sm:$0xff]
    %v2345 = vld [vmem:[%s2327 + $0xc8] sm:$0xff]
    %v2346 = vld [vmem:[%s2327 + $0xd8] sm:$0xff]
    %v2347 = vld [vmem:[%s2327 + $0xe0] sm:$0xff]
    %v2348 = vld [vmem:[%s2327 + $0xf0] sm:$0xff]
    %v2349 = vld [vmem:[%s2327 + $0xf8] sm:$0xff]
    %v2350 = vld [vmem:[%s2327 + $0x108] sm:$0xff]
    %v2351 = vld [vmem:[%s2327 + $0x110] sm:$0xff]
    %v2352 = vld [vmem:[%s2327 + $0x120] sm:$0xff]
    %v2353 = vld [vmem:[%s2327 + $0x128] sm:$0xff]
    %v2354 = vld [vmem:[%s2327 + $0x138] sm:$0xff]
    %v2355 = vld [vmem:[%s2327 + $0x140] sm:$0xff]
    %v2356 = vld [vmem:[%s2327 + $0x150] sm:$0xff]
    %v2357 = vld [vmem:[%s2327 + $0x158] sm:$0xff]
    %v2358 = vld [vmem:[%s2327 + $0x168] sm:$0xff]
    %v2359 = vld [vmem:[%s2327 + $0x170] sm:$0xff]
    %v2360 = vld [vmem:[%s2327 + $0x1b0] sm:$0xff]
    %v2361 = vld [vmem:[%s2327 + $0x1b8] sm:$0xff]
    %v2362 = vld [vmem:[%s2327 + $0x1c8] sm:$0xff]
    %v2363 = vld [vmem:[%s2327 + $0x1d0] sm:$0xff]
    %v2364 = vld [vmem:[%s2327 + $0x1e0] sm:$0xff]
    %v2365 = vld [vmem:[%s2327 + $0x1e8] sm:$0xff]
    %v2366 = vld [vmem:[%s2327 + $0x1f8] sm:$0xff]
    %v2367 = vld [vmem:[%s2327 + $0x200] sm:$0xff]
    %v2368 = vld [vmem:[%s2327 + $0x210] sm:$0xff]
    %v2369 = vld [vmem:[%s2327 + $0x218] sm:$0xff]
    %v2370 = vld [vmem:[%s2327 + $0x228] sm:$0xff]
    %v2371 = vld [vmem:[%s2327 + $0x230] sm:$0xff]
    %v2372 = vld [vmem:[%s2327 + $0x240] sm:$0xff]
    %v2373 = vld [vmem:[%s2327 + $0x248] sm:$0xff]
    %v2374 = vld [vmem:[%s2327 + $0x258] sm:$0xff]
    %v2375 = vld [vmem:[%s2327 + $0x260] sm:$0xff]
    %v2376 = vld [vmem:[%s2327 + $0x270] sm:$0xff]
    %v2377 = vld [vmem:[%s2327 + $0x278] sm:$0xff]
    %v2378 = vld [vmem:[%s2327 + $0x288] sm:$0xff]
    %v2379 = vld [vmem:[%s2327 + $0x290] sm:$0xff]
    %v2380 = vld [vmem:[%s2327 + $0x2a0] sm:$0xff]
    %v2381 = vld [vmem:[%s2327 + $0x2a8] sm:$0xff]
    %v2382 = vld [vmem:[%s2327 + $0x2b8] sm:$0xff]
    %v2383 = vld [vmem:[%s2327 + $0x2c0] sm:$0xff]
    %v2384 = vld [vmem:[%s2327 + $0x2d0] sm:$0xff]
    %v2385 = vld [vmem:[%s2327 + $0x2d8] sm:$0xff]
    %v2386 = vld [vmem:[%s2327 + $0x2e8] sm:$0xff]
    %v2387 = vld [vmem:[%s2327 + $0x2f0] sm:$0xff]
    %v2388 = vld [vmem:[%s2327 + $0x300] sm:$0xff]
    %v2389 = vld [vmem:[%s2327 + $0x308] sm:$0xff]
    %v2390 = vld [vmem:[%s2327 + $0x318] sm:$0xff]
    %v2391 = vld [vmem:[%s2327 + $0x320] sm:$0xff]
    %2456 = vrot.lane.b32.xlu0 %v2328, 24
    %v2457 = vpop.permute.xlu0 %2456
    %2458 = vrot.lane.b32.xlu0 %v2329, 24
    %v2459 = vpop.permute.xlu0 %2458
    %2460 = vrot.lane.b32.xlu0 %v2330, 24
    %v2461 = vpop.permute.xlu0 %2460
    %2462 = vrot.lane.b32.xlu0 %v2331, 24
    %v2463 = vpop.permute.xlu0 %2462
    %2464 = vrot.lane.b32.xlu0 %v2332, 24
    %v2465 = vpop.permute.xlu0 %2464
    %2466 = vrot.lane.b32.xlu0 %v2333, 24
    %v2467 = vpop.permute.xlu0 %2466
    %2468 = vrot.lane.b32.xlu0 %v2334, 24
    %v2469 = vpop.permute.xlu0 %2468
    %2470 = vrot.lane.b32.xlu0 %v2335, 24
    %v2471 = vpop.permute.xlu0 %2470
    %2472 = vrot.lane.b32.xlu0 %v2336, 24
    %v2473 = vpop.permute.xlu0 %2472
    %2474 = vrot.lane.b32.xlu0 %v2337, 24
    %v2475 = vpop.permute.xlu0 %2474
    %2476 = vrot.lane.b32.xlu0 %v2338, 24
    %v2477 = vpop.permute.xlu0 %2476
    %2478 = vrot.lane.b32.xlu0 %v2339, 24
    %v2479 = vpop.permute.xlu0 %2478
    %2480 = vrot.lane.b32.xlu0 %v2340, 24
    %v2481 = vpop.permute.xlu0 %2480
    %2482 = vrot.lane.b32.xlu0 %v2341, 24
    %v2483 = vpop.permute.xlu0 %2482
    %2484 = vrot.lane.b32.xlu0 %v2342, 24
    %v2485 = vpop.permute.xlu0 %2484
    %2486 = vrot.lane.b32.xlu0 %v2343, 24
    %v2487 = vpop.permute.xlu0 %2486
    %2488 = vrot.lane.b32.xlu0 %v2344, 24
    %v2489 = vpop.permute.xlu0 %2488
    %2490 = vrot.lane.b32.xlu0 %v2345, 24
    %v2491 = vpop.permute.xlu0 %2490
    %2492 = vrot.lane.b32.xlu0 %v2346, 24
    %v2493 = vpop.permute.xlu0 %2492
    %2494 = vrot.lane.b32.xlu0 %v2347, 24
    %v2495 = vpop.permute.xlu0 %2494
    %2496 = vrot.lane.b32.xlu0 %v2348, 24
    %v2497 = vpop.permute.xlu0 %2496
    %2498 = vrot.lane.b32.xlu0 %v2349, 24
    %v2499 = vpop.permute.xlu0 %2498
    %2500 = vrot.lane.b32.xlu0 %v2350, 24
    %v2501 = vpop.permute.xlu0 %2500
    %2502 = vrot.lane.b32.xlu0 %v2351, 24
    %v2503 = vpop.permute.xlu0 %2502
    %2504 = vrot.lane.b32.xlu0 %v2352, 24
    %v2505 = vpop.permute.xlu0 %2504
    %2506 = vrot.lane.b32.xlu0 %v2353, 24
    %v2507 = vpop.permute.xlu0 %2506
    %2508 = vrot.lane.b32.xlu0 %v2354, 24
    %v2509 = vpop.permute.xlu0 %2508
    %2510 = vrot.lane.b32.xlu0 %v2355, 24
    %v2511 = vpop.permute.xlu0 %2510
    %2512 = vrot.lane.b32.xlu0 %v2356, 24
    %v2513 = vpop.permute.xlu0 %2512
    %2514 = vrot.lane.b32.xlu0 %v2357, 24
    %v2515 = vpop.permute.xlu0 %2514
    %2516 = vrot.lane.b32.xlu0 %v2358, 24
    %v2517 = vpop.permute.xlu0 %2516
    %2518 = vrot.lane.b32.xlu0 %v2359, 24
    %v2519 = vpop.permute.xlu0 %2518
    %2520 = vrot.lane.b32.xlu0 %v2360, 24
    %v2521 = vpop.permute.xlu0 %2520
    %2522 = vrot.lane.b32.xlu0 %v2361, 24
    %v2523 = vpop.permute.xlu0 %2522
    %2524 = vrot.lane.b32.xlu0 %v2362, 24
    %v2525 = vpop.permute.xlu0 %2524
    %2526 = vrot.lane.b32.xlu0 %v2363, 24
    %v2527 = vpop.permute.xlu0 %2526
    %2528 = vrot.lane.b32.xlu0 %v2364, 24
    %v2529 = vpop.permute.xlu0 %2528
    %2530 = vrot.lane.b32.xlu0 %v2365, 24
    %v2531 = vpop.permute.xlu0 %2530
    %2532 = vrot.lane.b32.xlu0 %v2366, 24
    %v2533 = vpop.permute.xlu0 %2532
    %2534 = vrot.lane.b32.xlu0 %v2367, 24
    %v2535 = vpop.permute.xlu0 %2534
    %2536 = vrot.lane.b32.xlu0 %v2368, 24
    %v2537 = vpop.permute.xlu0 %2536
    %2538 = vrot.lane.b32.xlu0 %v2369, 24
    %v2539 = vpop.permute.xlu0 %2538
    %2540 = vrot.lane.b32.xlu0 %v2370, 24
    %v2541 = vpop.permute.xlu0 %2540
    %2542 = vrot.lane.b32.xlu0 %v2371, 24
    %v2543 = vpop.permute.xlu0 %2542
    %2544 = vrot.lane.b32.xlu0 %v2372, 24
    %v2545 = vpop.permute.xlu0 %2544
    %2546 = vrot.lane.b32.xlu0 %v2373, 24
    %v2547 = vpop.permute.xlu0 %2546
    %2548 = vrot.lane.b32.xlu0 %v2374, 24
    %v2549 = vpop.permute.xlu0 %2548
    %2550 = vrot.lane.b32.xlu0 %v2375, 24
    %v2551 = vpop.permute.xlu0 %2550
    %2552 = vrot.lane.b32.xlu0 %v2376, 24
    %v2553 = vpop.permute.xlu0 %2552
    %2554 = vrot.lane.b32.xlu0 %v2377, 24
    %v2555 = vpop.permute.xlu0 %2554
    %2556 = vrot.lane.b32.xlu0 %v2378, 24
    %v2557 = vpop.permute.xlu0 %2556
    %2558 = vrot.lane.b32.xlu0 %v2379, 24
    %v2559 = vpop.permute.xlu0 %2558
    %2560 = vrot.lane.b32.xlu0 %v2380, 24
    %v2561 = vpop.permute.xlu0 %2560
    %2562 = vrot.lane.b32.xlu0 %v2381, 24
    %v2563 = vpop.permute.xlu0 %2562
    %2564 = vrot.lane.b32.xlu0 %v2382, 24
    %v2565 = vpop.permute.xlu0 %2564
    %2566 = vrot.lane.b32.xlu0 %v2383, 24
    %v2567 = vpop.permute.xlu0 %2566
    %2568 = vrot.lane.b32.xlu0 %v2384, 24
    %v2569 = vpop.permute.xlu0 %2568
    %2570 = vrot.lane.b32.xlu0 %v2385, 24
    %v2571 = vpop.permute.xlu0 %2570
    %2572 = vrot.lane.b32.xlu0 %v2386, 24
    %v2573 = vpop.permute.xlu0 %2572
    %2574 = vrot.lane.b32.xlu0 %v2387, 24
    %v2575 = vpop.permute.xlu0 %2574
    %2576 = vrot.lane.b32.xlu0 %v2388, 24
    %v2577 = vpop.permute.xlu0 %2576
    %2578 = vrot.lane.b32.xlu0 %v2389, 24
    %v2579 = vpop.permute.xlu0 %2578
    %2580 = vrot.lane.b32.xlu0 %v2390, 24
    %v2581 = vpop.permute.xlu0 %2580
    %2582 = vrot.lane.b32.xlu0 %v2391, 24
    %v2583 = vpop.permute.xlu0 %2582
    %vm2648 = vcmask 228544
    %2649 = vst.msk [vmem:[#allocation3] sm:$0xff] %vm2648, %v2457
    %2650 = vst.msk [vmem:[#allocation3 + $0x10] sm:$0xff] %vm2648, %v2459
    %2651 = vst.msk [vmem:[#allocation3 + $0x20] sm:$0xff] %vm2648, %v2461
    %2652 = vst.msk [vmem:[#allocation3 + $0x30] sm:$0xff] %vm2648, %v2463
    %2653 = vst.msk [vmem:[#allocation3 + $0x40] sm:$0xff] %vm2648, %v2465
    %2654 = vst.msk [vmem:[#allocation3 + $0x50] sm:$0xff] %vm2648, %v2467
    %2655 = vst.msk [vmem:[#allocation3 + $0x60] sm:$0xff] %vm2648, %v2469
    %2656 = vst.msk [vmem:[#allocation3 + $0x70] sm:$0xff] %vm2648, %v2471
    %2657 = vst.msk [vmem:[#allocation3 + $0x80] sm:$0xff] %vm2648, %v2473
    %2658 = vst.msk [vmem:[#allocation3 + $0x90] sm:$0xff] %vm2648, %v2475
    %2659 = vst.msk [vmem:[#allocation3 + $0xa0] sm:$0xff] %vm2648, %v2477
    %2660 = vst.msk [vmem:[#allocation3 + $0xb0] sm:$0xff] %vm2648, %v2479
    %2661 = vst.msk [vmem:[#allocation3 + $0xc0] sm:$0xff] %vm2648, %v2481
    %2662 = vst.msk [vmem:[#allocation3 + $0xd0] sm:$0xff] %vm2648, %v2483
    %2663 = vst.msk [vmem:[#allocation3 + $0xe0] sm:$0xff] %vm2648, %v2485
    %2664 = vst.msk [vmem:[#allocation3 + $0xf0] sm:$0xff] %vm2648, %v2487
    %2665 = vst.msk [vmem:[#allocation3 + $0x100] sm:$0xff] %vm2648, %v2489
    %2666 = vst.msk [vmem:[#allocation3 + $0x110] sm:$0xff] %vm2648, %v2491
    %2667 = vst.msk [vmem:[#allocation3 + $0x120] sm:$0xff] %vm2648, %v2493
    %2668 = vst.msk [vmem:[#allocation3 + $0x130] sm:$0xff] %vm2648, %v2495
    %2669 = vst.msk [vmem:[#allocation3 + $0x140] sm:$0xff] %vm2648, %v2497
    %2670 = vst.msk [vmem:[#allocation3 + $0x150] sm:$0xff] %vm2648, %v2499
    %2671 = vst.msk [vmem:[#allocation3 + $0x160] sm:$0xff] %vm2648, %v2501
    %2672 = vst.msk [vmem:[#allocation3 + $0x170] sm:$0xff] %vm2648, %v2503
    %2673 = vst.msk [vmem:[#allocation3 + $0x180] sm:$0xff] %vm2648, %v2505
    %2674 = vst.msk [vmem:[#allocation3 + $0x190] sm:$0xff] %vm2648, %v2507
    %2675 = vst.msk [vmem:[#allocation3 + $0x1a0] sm:$0xff] %vm2648, %v2509
    %2676 = vst.msk [vmem:[#allocation3 + $0x1b0] sm:$0xff] %vm2648, %v2511
    %2677 = vst.msk [vmem:[#allocation3 + $0x1c0] sm:$0xff] %vm2648, %v2513
    %2678 = vst.msk [vmem:[#allocation3 + $0x1d0] sm:$0xff] %vm2648, %v2515
    %2679 = vst.msk [vmem:[#allocation3 + $0x1e0] sm:$0xff] %vm2648, %v2517
    %2680 = vst.msk [vmem:[#allocation3 + $0x1f0] sm:$0xff] %vm2648, %v2519
    %2681 = vst.msk [vmem:[#allocation3 + $0x200] sm:$0xff] %vm2648, %v2521
    %2682 = vst.msk [vmem:[#allocation3 + $0x210] sm:$0xff] %vm2648, %v2523
    %2683 = vst.msk [vmem:[#allocation3 + $0x220] sm:$0xff] %vm2648, %v2525
    %2684 = vst.msk [vmem:[#allocation3 + $0x230] sm:$0xff] %vm2648, %v2527
    %2685 = vst.msk [vmem:[#allocation3 + $0x240] sm:$0xff] %vm2648, %v2529
    %2686 = vst.msk [vmem:[#allocation3 + $0x250] sm:$0xff] %vm2648, %v2531
    %2687 = vst.msk [vmem:[#allocation3 + $0x260] sm:$0xff] %vm2648, %v2533
    %2688 = vst.msk [vmem:[#allocation3 + $0x270] sm:$0xff] %vm2648, %v2535
    %2689 = vst.msk [vmem:[#allocation3 + $0x280] sm:$0xff] %vm2648, %v2537
    %2690 = vst.msk [vmem:[#allocation3 + $0x290] sm:$0xff] %vm2648, %v2539
    %2691 = vst.msk [vmem:[#allocation3 + $0x2a0] sm:$0xff] %vm2648, %v2541
    %2692 = vst.msk [vmem:[#allocation3 + $0x2b0] sm:$0xff] %vm2648, %v2543
    %2693 = vst.msk [vmem:[#allocation3 + $0x2c0] sm:$0xff] %vm2648, %v2545
    %2694 = vst.msk [vmem:[#allocation3 + $0x2d0] sm:$0xff] %vm2648, %v2547
    %2695 = vst.msk [vmem:[#allocation3 + $0x2e0] sm:$0xff] %vm2648, %v2549
    %2696 = vst.msk [vmem:[#allocation3 + $0x2f0] sm:$0xff] %vm2648, %v2551
    %2697 = vst.msk [vmem:[#allocation3 + $0x300] sm:$0xff] %vm2648, %v2553
    %2698 = vst.msk [vmem:[#allocation3 + $0x310] sm:$0xff] %vm2648, %v2555
    %2699 = vst.msk [vmem:[#allocation3 + $0x320] sm:$0xff] %vm2648, %v2557
    %2700 = vst.msk [vmem:[#allocation3 + $0x330] sm:$0xff] %vm2648, %v2559
    %2701 = vst.msk [vmem:[#allocation3 + $0x340] sm:$0xff] %vm2648, %v2561
    %2702 = vst.msk [vmem:[#allocation3 + $0x350] sm:$0xff] %vm2648, %v2563
    %2703 = vst.msk [vmem:[#allocation3 + $0x360] sm:$0xff] %vm2648, %v2565
    %2704 = vst.msk [vmem:[#allocation3 + $0x370] sm:$0xff] %vm2648, %v2567
    %2705 = vst.msk [vmem:[#allocation3 + $0x380] sm:$0xff] %vm2648, %v2569
    %2706 = vst.msk [vmem:[#allocation3 + $0x390] sm:$0xff] %vm2648, %v2571
    %2707 = vst.msk [vmem:[#allocation3 + $0x3a0] sm:$0xff] %vm2648, %v2573
    %2708 = vst.msk [vmem:[#allocation3 + $0x3b0] sm:$0xff] %vm2648, %v2575
    %2709 = vst.msk [vmem:[#allocation3 + $0x3c0] sm:$0xff] %vm2648, %v2577
    %2710 = vst.msk [vmem:[#allocation3 + $0x3d0] sm:$0xff] %vm2648, %v2579
    %2711 = vst.msk [vmem:[#allocation3 + $0x3e0] sm:$0xff] %vm2648, %v2581
    %2712 = vst.msk [vmem:[#allocation3 + $0x3f0] sm:$0xff] %vm2648, %v2583
    %v2713 = vld [vmem:[%s2327 + $0x1] sm:$0xff]
    %v2714 = vld [vmem:[%s2327 + $0x9] sm:$0xff]
    %v2715 = vld [vmem:[%s2327 + $0x19] sm:$0xff]
    %v2716 = vld [vmem:[%s2327 + $0x21] sm:$0xff]
    %v2717 = vld [vmem:[%s2327 + $0x31] sm:$0xff]
    %v2718 = vld [vmem:[%s2327 + $0x39] sm:$0xff]
    %v2719 = vld [vmem:[%s2327 + $0x49] sm:$0xff]
    %v2720 = vld [vmem:[%s2327 + $0x51] sm:$0xff]
    %v2721 = vld [vmem:[%s2327 + $0x61] sm:$0xff]
    %v2722 = vld [vmem:[%s2327 + $0x69] sm:$0xff]
    %v2723 = vld [vmem:[%s2327 + $0x79] sm:$0xff]
    %v2724 = vld [vmem:[%s2327 + $0x81] sm:$0xff]
    %v2725 = vld [vmem:[%s2327 + $0x91] sm:$0xff]
    %v2726 = vld [vmem:[%s2327 + $0x99] sm:$0xff]
    %v2727 = vld [vmem:[%s2327 + $0xa9] sm:$0xff]
    %v2728 = vld [vmem:[%s2327 + $0xb1] sm:$0xff]
    %v2729 = vld [vmem:[%s2327 + $0xc1] sm:$0xff]
    %v2730 = vld [vmem:[%s2327 + $0xc9] sm:$0xff]
    %v2731 = vld [vmem:[%s2327 + $0xd9] sm:$0xff]
    %v2732 = vld [vmem:[%s2327 + $0xe1] sm:$0xff]
    %v2733 = vld [vmem:[%s2327 + $0xf1] sm:$0xff]
    %v2734 = vld [vmem:[%s2327 + $0xf9] sm:$0xff]
    %v2735 = vld [vmem:[%s2327 + $0x109] sm:$0xff]
    %v2736 = vld [vmem:[%s2327 + $0x111] sm:$0xff]
    %v2737 = vld [vmem:[%s2327 + $0x121] sm:$0xff]
    %v2738 = vld [vmem:[%s2327 + $0x129] sm:$0xff]
    %v2739 = vld [vmem:[%s2327 + $0x139] sm:$0xff]
    %v2740 = vld [vmem:[%s2327 + $0x141] sm:$0xff]
    %v2741 = vld [vmem:[%s2327 + $0x151] sm:$0xff]
    %v2742 = vld [vmem:[%s2327 + $0x159] sm:$0xff]
    %v2743 = vld [vmem:[%s2327 + $0x169] sm:$0xff]
    %v2744 = vld [vmem:[%s2327 + $0x171] sm:$0xff]
    %v2745 = vld [vmem:[%s2327 + $0x1b1] sm:$0xff]
    %v2746 = vld [vmem:[%s2327 + $0x1b9] sm:$0xff]
    %v2747 = vld [vmem:[%s2327 + $0x1c9] sm:$0xff]
    %v2748 = vld [vmem:[%s2327 + $0x1d1] sm:$0xff]
    %v2749 = vld [vmem:[%s2327 + $0x1e1] sm:$0xff]
    %v2750 = vld [vmem:[%s2327 + $0x1e9] sm:$0xff]
    %v2751 = vld [vmem:[%s2327 + $0x1f9] sm:$0xff]
    %v2752 = vld [vmem:[%s2327 + $0x201] sm:$0xff]
    %v2753 = vld [vmem:[%s2327 + $0x211] sm:$0xff]
    %v2754 = vld [vmem:[%s2327 + $0x219] sm:$0xff]
    %v2755 = vld [vmem:[%s2327 + $0x229] sm:$0xff]
    %v2756 = vld [vmem:[%s2327 + $0x231] sm:$0xff]
    %v2757 = vld [vmem:[%s2327 + $0x241] sm:$0xff]
    %v2758 = vld [vmem:[%s2327 + $0x249] sm:$0xff]
    %v2759 = vld [vmem:[%s2327 + $0x259] sm:$0xff]
    %v2760 = vld [vmem:[%s2327 + $0x261] sm:$0xff]
    %v2761 = vld [vmem:[%s2327 + $0x271] sm:$0xff]
    %v2762 = vld [vmem:[%s2327 + $0x279] sm:$0xff]
    %v2763 = vld [vmem:[%s2327 + $0x289] sm:$0xff]
    %v2764 = vld [vmem:[%s2327 + $0x291] sm:$0xff]
    %v2765 = vld [vmem:[%s2327 + $0x2a1] sm:$0xff]
    %v2766 = vld [vmem:[%s2327 + $0x2a9] sm:$0xff]
    %v2767 = vld [vmem:[%s2327 + $0x2b9] sm:$0xff]
    %v2768 = vld [vmem:[%s2327 + $0x2c1] sm:$0xff]
    %v2769 = vld [vmem:[%s2327 + $0x2d1] sm:$0xff]
    %v2770 = vld [vmem:[%s2327 + $0x2d9] sm:$0xff]
    %v2771 = vld [vmem:[%s2327 + $0x2e9] sm:$0xff]
    %v2772 = vld [vmem:[%s2327 + $0x2f1] sm:$0xff]
    %v2773 = vld [vmem:[%s2327 + $0x301] sm:$0xff]
    %v2774 = vld [vmem:[%s2327 + $0x309] sm:$0xff]
    %v2775 = vld [vmem:[%s2327 + $0x319] sm:$0xff]
    %v2776 = vld [vmem:[%s2327 + $0x321] sm:$0xff]
    %2841 = vrot.lane.b32.xlu0 %v2713, 28
    %v2842 = vpop.permute.xlu0 %2841
    %2843 = vrot.lane.b32.xlu0 %v2714, 28
    %v2844 = vpop.permute.xlu0 %2843
    %2845 = vrot.lane.b32.xlu0 %v2715, 28
    %v2846 = vpop.permute.xlu0 %2845
    %2847 = vrot.lane.b32.xlu0 %v2716, 28
    %v2848 = vpop.permute.xlu0 %2847
    %2849 = vrot.lane.b32.xlu0 %v2717, 28
    %v2850 = vpop.permute.xlu0 %2849
    %2851 = vrot.lane.b32.xlu0 %v2718, 28
    %v2852 = vpop.permute.xlu0 %2851
    %2853 = vrot.lane.b32.xlu0 %v2719, 28
    %v2854 = vpop.permute.xlu0 %2853
    %2855 = vrot.lane.b32.xlu0 %v2720, 28
    %v2856 = vpop.permute.xlu0 %2855
    %2857 = vrot.lane.b32.xlu0 %v2721, 28
    %v2858 = vpop.permute.xlu0 %2857
    %2859 = vrot.lane.b32.xlu0 %v2722, 28
    %v2860 = vpop.permute.xlu0 %2859
    %2861 = vrot.lane.b32.xlu0 %v2723, 28
    %v2862 = vpop.permute.xlu0 %2861
    %2863 = vrot.lane.b32.xlu0 %v2724, 28
    %v2864 = vpop.permute.xlu0 %2863
    %2865 = vrot.lane.b32.xlu0 %v2725, 28
    %v2866 = vpop.permute.xlu0 %2865
    %2867 = vrot.lane.b32.xlu0 %v2726, 28
    %v2868 = vpop.permute.xlu0 %2867
    %2869 = vrot.lane.b32.xlu0 %v2727, 28
    %v2870 = vpop.permute.xlu0 %2869
    %2871 = vrot.lane.b32.xlu0 %v2728, 28
    %v2872 = vpop.permute.xlu0 %2871
    %2873 = vrot.lane.b32.xlu0 %v2729, 28
    %v2874 = vpop.permute.xlu0 %2873
    %2875 = vrot.lane.b32.xlu0 %v2730, 28
    %v2876 = vpop.permute.xlu0 %2875
    %2877 = vrot.lane.b32.xlu0 %v2731, 28
    %v2878 = vpop.permute.xlu0 %2877
    %2879 = vrot.lane.b32.xlu0 %v2732, 28
    %v2880 = vpop.permute.xlu0 %2879
    %2881 = vrot.lane.b32.xlu0 %v2733, 28
    %v2882 = vpop.permute.xlu0 %2881
    %2883 = vrot.lane.b32.xlu0 %v2734, 28
    %v2884 = vpop.permute.xlu0 %2883
    %2885 = vrot.lane.b32.xlu0 %v2735, 28
    %v2886 = vpop.permute.xlu0 %2885
    %2887 = vrot.lane.b32.xlu0 %v2736, 28
    %v2888 = vpop.permute.xlu0 %2887
    %2889 = vrot.lane.b32.xlu0 %v2737, 28
    %v2890 = vpop.permute.xlu0 %2889
    %2891 = vrot.lane.b32.xlu0 %v2738, 28
    %v2892 = vpop.permute.xlu0 %2891
    %2893 = vrot.lane.b32.xlu0 %v2739, 28
    %v2894 = vpop.permute.xlu0 %2893
    %2895 = vrot.lane.b32.xlu0 %v2740, 28
    %v2896 = vpop.permute.xlu0 %2895
    %2897 = vrot.lane.b32.xlu0 %v2741, 28
    %v2898 = vpop.permute.xlu0 %2897
    %2899 = vrot.lane.b32.xlu0 %v2742, 28
    %v2900 = vpop.permute.xlu0 %2899
    %2901 = vrot.lane.b32.xlu0 %v2743, 28
    %v2902 = vpop.permute.xlu0 %2901
    %2903 = vrot.lane.b32.xlu0 %v2744, 28
    %v2904 = vpop.permute.xlu0 %2903
    %2905 = vrot.lane.b32.xlu0 %v2745, 28
    %v2906 = vpop.permute.xlu0 %2905
    %2907 = vrot.lane.b32.xlu0 %v2746, 28
    %v2908 = vpop.permute.xlu0 %2907
    %2909 = vrot.lane.b32.xlu0 %v2747, 28
    %v2910 = vpop.permute.xlu0 %2909
    %2911 = vrot.lane.b32.xlu0 %v2748, 28
    %v2912 = vpop.permute.xlu0 %2911
    %2913 = vrot.lane.b32.xlu0 %v2749, 28
    %v2914 = vpop.permute.xlu0 %2913
    %2915 = vrot.lane.b32.xlu0 %v2750, 28
    %v2916 = vpop.permute.xlu0 %2915
    %2917 = vrot.lane.b32.xlu0 %v2751, 28
    %v2918 = vpop.permute.xlu0 %2917
    %2919 = vrot.lane.b32.xlu0 %v2752, 28
    %v2920 = vpop.permute.xlu0 %2919
    %2921 = vrot.lane.b32.xlu0 %v2753, 28
    %v2922 = vpop.permute.xlu0 %2921
    %2923 = vrot.lane.b32.xlu0 %v2754, 28
    %v2924 = vpop.permute.xlu0 %2923
    %2925 = vrot.lane.b32.xlu0 %v2755, 28
    %v2926 = vpop.permute.xlu0 %2925
    %2927 = vrot.lane.b32.xlu0 %v2756, 28
    %v2928 = vpop.permute.xlu0 %2927
    %2929 = vrot.lane.b32.xlu0 %v2757, 28
    %v2930 = vpop.permute.xlu0 %2929
    %2931 = vrot.lane.b32.xlu0 %v2758, 28
    %v2932 = vpop.permute.xlu0 %2931
    %2933 = vrot.lane.b32.xlu0 %v2759, 28
    %v2934 = vpop.permute.xlu0 %2933
    %2935 = vrot.lane.b32.xlu0 %v2760, 28
    %v2936 = vpop.permute.xlu0 %2935
    %2937 = vrot.lane.b32.xlu0 %v2761, 28
    %v2938 = vpop.permute.xlu0 %2937
    %2939 = vrot.lane.b32.xlu0 %v2762, 28
    %v2940 = vpop.permute.xlu0 %2939
    %2941 = vrot.lane.b32.xlu0 %v2763, 28
    %v2942 = vpop.permute.xlu0 %2941
    %2943 = vrot.lane.b32.xlu0 %v2764, 28
    %v2944 = vpop.permute.xlu0 %2943
    %2945 = vrot.lane.b32.xlu0 %v2765, 28
    %v2946 = vpop.permute.xlu0 %2945
    %2947 = vrot.lane.b32.xlu0 %v2766, 28
    %v2948 = vpop.permute.xlu0 %2947
    %2949 = vrot.lane.b32.xlu0 %v2767, 28
    %v2950 = vpop.permute.xlu0 %2949
    %2951 = vrot.lane.b32.xlu0 %v2768, 28
    %v2952 = vpop.permute.xlu0 %2951
    %2953 = vrot.lane.b32.xlu0 %v2769, 28
    %v2954 = vpop.permute.xlu0 %2953
    %2955 = vrot.lane.b32.xlu0 %v2770, 28
    %v2956 = vpop.permute.xlu0 %2955
    %2957 = vrot.lane.b32.xlu0 %v2771, 28
    %v2958 = vpop.permute.xlu0 %2957
    %2959 = vrot.lane.b32.xlu0 %v2772, 28
    %v2960 = vpop.permute.xlu0 %2959
    %2961 = vrot.lane.b32.xlu0 %v2773, 28
    %v2962 = vpop.permute.xlu0 %2961
    %2963 = vrot.lane.b32.xlu0 %v2774, 28
    %v2964 = vpop.permute.xlu0 %2963
    %2965 = vrot.lane.b32.xlu0 %v2775, 28
    %v2966 = vpop.permute.xlu0 %2965
    %2967 = vrot.lane.b32.xlu0 %v2776, 28
    %v2968 = vpop.permute.xlu0 %2967
    %vm3033 = vcmask 261344
    %3034 = vst.msk [vmem:[#allocation3] sm:$0xff] %vm3033, %v2842
    %3035 = vst.msk [vmem:[#allocation3 + $0x10] sm:$0xff] %vm3033, %v2844
    %3036 = vst.msk [vmem:[#allocation3 + $0x20] sm:$0xff] %vm3033, %v2846
    %3037 = vst.msk [vmem:[#allocation3 + $0x30] sm:$0xff] %vm3033, %v2848
    %3038 = vst.msk [vmem:[#allocation3 + $0x40] sm:$0xff] %vm3033, %v2850
    %3039 = vst.msk [vmem:[#allocation3 + $0x50] sm:$0xff] %vm3033, %v2852
    %3040 = vst.msk [vmem:[#allocation3 + $0x60] sm:$0xff] %vm3033, %v2854
    %3041 = vst.msk [vmem:[#allocation3 + $0x70] sm:$0xff] %vm3033, %v2856
    %3042 = vst.msk [vmem:[#allocation3 + $0x80] sm:$0xff] %vm3033, %v2858
    %3043 = vst.msk [vmem:[#allocation3 + $0x90] sm:$0xff] %vm3033, %v2860
    %3044 = vst.msk [vmem:[#allocation3 + $0xa0] sm:$0xff] %vm3033, %v2862
    %3045 = vst.msk [vmem:[#allocation3 + $0xb0] sm:$0xff] %vm3033, %v2864
    %3046 = vst.msk [vmem:[#allocation3 + $0xc0] sm:$0xff] %vm3033, %v2866
    %3047 = vst.msk [vmem:[#allocation3 + $0xd0] sm:$0xff] %vm3033, %v2868
    %3048 = vst.msk [vmem:[#allocation3 + $0xe0] sm:$0xff] %vm3033, %v2870
    %3049 = vst.msk [vmem:[#allocation3 + $0xf0] sm:$0xff] %vm3033, %v2872
    %3050 = vst.msk [vmem:[#allocation3 + $0x100] sm:$0xff] %vm3033, %v2874
    %3051 = vst.msk [vmem:[#allocation3 + $0x110] sm:$0xff] %vm3033, %v2876
    %3052 = vst.msk [vmem:[#allocation3 + $0x120] sm:$0xff] %vm3033, %v2878
    %3053 = vst.msk [vmem:[#allocation3 + $0x130] sm:$0xff] %vm3033, %v2880
    %3054 = vst.msk [vmem:[#allocation3 + $0x140] sm:$0xff] %vm3033, %v2882
    %3055 = vst.msk [vmem:[#allocation3 + $0x150] sm:$0xff] %vm3033, %v2884
    %3056 = vst.msk [vmem:[#allocation3 + $0x160] sm:$0xff] %vm3033, %v2886
    %3057 = vst.msk [vmem:[#allocation3 + $0x170] sm:$0xff] %vm3033, %v2888
    %3058 = vst.msk [vmem:[#allocation3 + $0x180] sm:$0xff] %vm3033, %v2890
    %3059 = vst.msk [vmem:[#allocation3 + $0x190] sm:$0xff] %vm3033, %v2892
    %3060 = vst.msk [vmem:[#allocation3 + $0x1a0] sm:$0xff] %vm3033, %v2894
    %3061 = vst.msk [vmem:[#allocation3 + $0x1b0] sm:$0xff] %vm3033, %v2896
    %3062 = vst.msk [vmem:[#allocation3 + $0x1c0] sm:$0xff] %vm3033, %v2898
    %3063 = vst.msk [vmem:[#allocation3 + $0x1d0] sm:$0xff] %vm3033, %v2900
    %3064 = vst.msk [vmem:[#allocation3 + $0x1e0] sm:$0xff] %vm3033, %v2902
    %3065 = vst.msk [vmem:[#allocation3 + $0x1f0] sm:$0xff] %vm3033, %v2904
    %3066 = vst.msk [vmem:[#allocation3 + $0x200] sm:$0xff] %vm3033, %v2906
    %3067 = vst.msk [vmem:[#allocation3 + $0x210] sm:$0xff] %vm3033, %v2908
    %3068 = vst.msk [vmem:[#allocation3 + $0x220] sm:$0xff] %vm3033, %v2910
    %3069 = vst.msk [vmem:[#allocation3 + $0x230] sm:$0xff] %vm3033, %v2912
    %3070 = vst.msk [vmem:[#allocation3 + $0x240] sm:$0xff] %vm3033, %v2914
    %3071 = vst.msk [vmem:[#allocation3 + $0x250] sm:$0xff] %vm3033, %v2916
    %3072 = vst.msk [vmem:[#allocation3 + $0x260] sm:$0xff] %vm3033, %v2918
    %3073 = vst.msk [vmem:[#allocation3 + $0x270] sm:$0xff] %vm3033, %v2920
    %3074 = vst.msk [vmem:[#allocation3 + $0x280] sm:$0xff] %vm3033, %v2922
    %3075 = vst.msk [vmem:[#allocation3 + $0x290] sm:$0xff] %vm3033, %v2924
    %3076 = vst.msk [vmem:[#allocation3 + $0x2a0] sm:$0xff] %vm3033, %v2926
    %3077 = vst.msk [vmem:[#allocation3 + $0x2b0] sm:$0xff] %vm3033, %v2928
    %3078 = vst.msk [vmem:[#allocation3 + $0x2c0] sm:$0xff] %vm3033, %v2930
    %3079 = vst.msk [vmem:[#allocation3 + $0x2d0] sm:$0xff] %vm3033, %v2932
    %3080 = vst.msk [vmem:[#allocation3 + $0x2e0] sm:$0xff] %vm3033, %v2934
    %3081 = vst.msk [vmem:[#allocation3 + $0x2f0] sm:$0xff] %vm3033, %v2936
    %3082 = vst.msk [vmem:[#allocation3 + $0x300] sm:$0xff] %vm3033, %v2938
    %3083 = vst.msk [vmem:[#allocation3 + $0x310] sm:$0xff] %vm3033, %v2940
    %3084 = vst.msk [vmem:[#allocation3 + $0x320] sm:$0xff] %vm3033, %v2942
    %3085 = vst.msk [vmem:[#allocation3 + $0x330] sm:$0xff] %vm3033, %v2944
    %3086 = vst.msk [vmem:[#allocation3 + $0x340] sm:$0xff] %vm3033, %v2946
    %3087 = vst.msk [vmem:[#allocation3 + $0x350] sm:$0xff] %vm3033, %v2948
    %3088 = vst.msk [vmem:[#allocation3 + $0x360] sm:$0xff] %vm3033, %v2950
    %3089 = vst.msk [vmem:[#allocation3 + $0x370] sm:$0xff] %vm3033, %v2952
    %3090 = vst.msk [vmem:[#allocation3 + $0x380] sm:$0xff] %vm3033, %v2954
    %3091 = vst.msk [vmem:[#allocation3 + $0x390] sm:$0xff] %vm3033, %v2956
    %3092 = vst.msk [vmem:[#allocation3 + $0x3a0] sm:$0xff] %vm3033, %v2958
    %3093 = vst.msk [vmem:[#allocation3 + $0x3b0] sm:$0xff] %vm3033, %v2960
    %3094 = vst.msk [vmem:[#allocation3 + $0x3c0] sm:$0xff] %vm3033, %v2962
    %3095 = vst.msk [vmem:[#allocation3 + $0x3d0] sm:$0xff] %vm3033, %v2964
    %3096 = vst.msk [vmem:[#allocation3 + $0x3e0] sm:$0xff] %vm3033, %v2966
    %3097 = vst.msk [vmem:[#allocation3 + $0x3f0] sm:$0xff] %vm3033, %v2968
    %v3098 = vld [vmem:[%s2327 + $0x2] sm:$0xff]
    %v3099 = vld [vmem:[%s2327 + $0xa] sm:$0xff]
    %v3100 = vld [vmem:[%s2327 + $0x1a] sm:$0xff]
    %v3101 = vld [vmem:[%s2327 + $0x22] sm:$0xff]
    %v3102 = vld [vmem:[%s2327 + $0x32] sm:$0xff]
    %v3103 = vld [vmem:[%s2327 + $0x3a] sm:$0xff]
    %v3104 = vld [vmem:[%s2327 + $0x4a] sm:$0xff]
    %v3105 = vld [vmem:[%s2327 + $0x52] sm:$0xff]
    %v3106 = vld [vmem:[%s2327 + $0x62] sm:$0xff]
    %v3107 = vld [vmem:[%s2327 + $0x6a] sm:$0xff]
    %v3108 = vld [vmem:[%s2327 + $0x7a] sm:$0xff]
    %v3109 = vld [vmem:[%s2327 + $0x82] sm:$0xff]
    %v3110 = vld [vmem:[%s2327 + $0x92] sm:$0xff]
    %v3111 = vld [vmem:[%s2327 + $0x9a] sm:$0xff]
    %v3112 = vld [vmem:[%s2327 + $0xaa] sm:$0xff]
    %v3113 = vld [vmem:[%s2327 + $0xb2] sm:$0xff]
    %v3114 = vld [vmem:[%s2327 + $0xc2] sm:$0xff]
    %v3115 = vld [vmem:[%s2327 + $0xca] sm:$0xff]
    %v3116 = vld [vmem:[%s2327 + $0xda] sm:$0xff]
    %v3117 = vld [vmem:[%s2327 + $0xe2] sm:$0xff]
    %v3118 = vld [vmem:[%s2327 + $0xf2] sm:$0xff]
    %v3119 = vld [vmem:[%s2327 + $0xfa] sm:$0xff]
    %v3120 = vld [vmem:[%s2327 + $0x10a] sm:$0xff]
    %v3121 = vld [vmem:[%s2327 + $0x112] sm:$0xff]
    %v3122 = vld [vmem:[%s2327 + $0x122] sm:$0xff]
    %v3123 = vld [vmem:[%s2327 + $0x12a] sm:$0xff]
    %v3124 = vld [vmem:[%s2327 + $0x13a] sm:$0xff]
    %v3125 = vld [vmem:[%s2327 + $0x142] sm:$0xff]
    %v3126 = vld [vmem:[%s2327 + $0x152] sm:$0xff]
    %v3127 = vld [vmem:[%s2327 + $0x15a] sm:$0xff]
    %v3128 = vld [vmem:[%s2327 + $0x16a] sm:$0xff]
    %v3129 = vld [vmem:[%s2327 + $0x172] sm:$0xff]
    %v3130 = vld [vmem:[%s2327 + $0x1b2] sm:$0xff]
    %v3131 = vld [vmem:[%s2327 + $0x1ba] sm:$0xff]
    %v3132 = vld [vmem:[%s2327 + $0x1ca] sm:$0xff]
    %v3133 = vld [vmem:[%s2327 + $0x1d2] sm:$0xff]
    %v3134 = vld [vmem:[%s2327 + $0x1e2] sm:$0xff]
    %v3135 = vld [vmem:[%s2327 + $0x1ea] sm:$0xff]
    %v3136 = vld [vmem:[%s2327 + $0x1fa] sm:$0xff]
    %v3137 = vld [vmem:[%s2327 + $0x202] sm:$0xff]
    %v3138 = vld [vmem:[%s2327 + $0x212] sm:$0xff]
    %v3139 = vld [vmem:[%s2327 + $0x21a] sm:$0xff]
    %v3140 = vld [vmem:[%s2327 + $0x22a] sm:$0xff]
    %v3141 = vld [vmem:[%s2327 + $0x232] sm:$0xff]
    %v3142 = vld [vmem:[%s2327 + $0x242] sm:$0xff]
    %v3143 = vld [vmem:[%s2327 + $0x24a] sm:$0xff]
    %v3144 = vld [vmem:[%s2327 + $0x25a] sm:$0xff]
    %v3145 = vld [vmem:[%s2327 + $0x262] sm:$0xff]
    %v3146 = vld [vmem:[%s2327 + $0x272] sm:$0xff]
    %v3147 = vld [vmem:[%s2327 + $0x27a] sm:$0xff]
    %v3148 = vld [vmem:[%s2327 + $0x28a] sm:$0xff]
    %v3149 = vld [vmem:[%s2327 + $0x292] sm:$0xff]
    %v3150 = vld [vmem:[%s2327 + $0x2a2] sm:$0xff]
    %v3151 = vld [vmem:[%s2327 + $0x2aa] sm:$0xff]
    %v3152 = vld [vmem:[%s2327 + $0x2ba] sm:$0xff]
    %v3153 = vld [vmem:[%s2327 + $0x2c2] sm:$0xff]
    %v3154 = vld [vmem:[%s2327 + $0x2d2] sm:$0xff]
    %v3155 = vld [vmem:[%s2327 + $0x2da] sm:$0xff]
    %v3156 = vld [vmem:[%s2327 + $0x2ea] sm:$0xff]
    %v3157 = vld [vmem:[%s2327 + $0x2f2] sm:$0xff]
    %v3158 = vld [vmem:[%s2327 + $0x302] sm:$0xff]
    %v3159 = vld [vmem:[%s2327 + $0x30a] sm:$0xff]
    %v3160 = vld [vmem:[%s2327 + $0x31a] sm:$0xff]
    %v3161 = vld [vmem:[%s2327 + $0x322] sm:$0xff]
    %3226 = vrot.lane.b32.xlu0 %v3098, 32
    %v3227 = vpop.permute.xlu0 %3226
    %3228 = vrot.lane.b32.xlu0 %v3099, 32
    %v3229 = vpop.permute.xlu0 %3228
    %3230 = vrot.lane.b32.xlu0 %v3100, 32
    %v3231 = vpop.permute.xlu0 %3230
    %3232 = vrot.lane.b32.xlu0 %v3101, 32
    %v3233 = vpop.permute.xlu0 %3232
    %3234 = vrot.lane.b32.xlu0 %v3102, 32
    %v3235 = vpop.permute.xlu0 %3234
    %3236 = vrot.lane.b32.xlu0 %v3103, 32
    %v3237 = vpop.permute.xlu0 %3236
    %3238 = vrot.lane.b32.xlu0 %v3104, 32
    %v3239 = vpop.permute.xlu0 %3238
    %3240 = vrot.lane.b32.xlu0 %v3105, 32
    %v3241 = vpop.permute.xlu0 %3240
    %3242 = vrot.lane.b32.xlu0 %v3106, 32
    %v3243 = vpop.permute.xlu0 %3242
    %3244 = vrot.lane.b32.xlu0 %v3107, 32
    %v3245 = vpop.permute.xlu0 %3244
    %3246 = vrot.lane.b32.xlu0 %v3108, 32
    %v3247 = vpop.permute.xlu0 %3246
    %3248 = vrot.lane.b32.xlu0 %v3109, 32
    %v3249 = vpop.permute.xlu0 %3248
    %3250 = vrot.lane.b32.xlu0 %v3110, 32
    %v3251 = vpop.permute.xlu0 %3250
    %3252 = vrot.lane.b32.xlu0 %v3111, 32
    %v3253 = vpop.permute.xlu0 %3252
    %3254 = vrot.lane.b32.xlu0 %v3112, 32
    %v3255 = vpop.permute.xlu0 %3254
    %3256 = vrot.lane.b32.xlu0 %v3113, 32
    %v3257 = vpop.permute.xlu0 %3256
    %3258 = vrot.lane.b32.xlu0 %v3114, 32
    %v3259 = vpop.permute.xlu0 %3258
    %3260 = vrot.lane.b32.xlu0 %v3115, 32
    %v3261 = vpop.permute.xlu0 %3260
    %3262 = vrot.lane.b32.xlu0 %v3116, 32
    %v3263 = vpop.permute.xlu0 %3262
    %3264 = vrot.lane.b32.xlu0 %v3117, 32
    %v3265 = vpop.permute.xlu0 %3264
    %3266 = vrot.lane.b32.xlu0 %v3118, 32
    %v3267 = vpop.permute.xlu0 %3266
    %3268 = vrot.lane.b32.xlu0 %v3119, 32
    %v3269 = vpop.permute.xlu0 %3268
    %3270 = vrot.lane.b32.xlu0 %v3120, 32
    %v3271 = vpop.permute.xlu0 %3270
    %3272 = vrot.lane.b32.xlu0 %v3121, 32
    %v3273 = vpop.permute.xlu0 %3272
    %3274 = vrot.lane.b32.xlu0 %v3122, 32
    %v3275 = vpop.permute.xlu0 %3274
    %3276 = vrot.lane.b32.xlu0 %v3123, 32
    %v3277 = vpop.permute.xlu0 %3276
    %3278 = vrot.lane.b32.xlu0 %v3124, 32
    %v3279 = vpop.permute.xlu0 %3278
    %3280 = vrot.lane.b32.xlu0 %v3125, 32
    %v3281 = vpop.permute.xlu0 %3280
    %3282 = vrot.lane.b32.xlu0 %v3126, 32
    %v3283 = vpop.permute.xlu0 %3282
    %3284 = vrot.lane.b32.xlu0 %v3127, 32
    %v3285 = vpop.permute.xlu0 %3284
    %3286 = vrot.lane.b32.xlu0 %v3128, 32
    %v3287 = vpop.permute.xlu0 %3286
    %3288 = vrot.lane.b32.xlu0 %v3129, 32
    %v3289 = vpop.permute.xlu0 %3288
    %3290 = vrot.lane.b32.xlu0 %v3130, 32
    %v3291 = vpop.permute.xlu0 %3290
    %3292 = vrot.lane.b32.xlu0 %v3131, 32
    %v3293 = vpop.permute.xlu0 %3292
    %3294 = vrot.lane.b32.xlu0 %v3132, 32
    %v3295 = vpop.permute.xlu0 %3294
    %3296 = vrot.lane.b32.xlu0 %v3133, 32
    %v3297 = vpop.permute.xlu0 %3296
    %3298 = vrot.lane.b32.xlu0 %v3134, 32
    %v3299 = vpop.permute.xlu0 %3298
    %3300 = vrot.lane.b32.xlu0 %v3135, 32
    %v3301 = vpop.permute.xlu0 %3300
    %3302 = vrot.lane.b32.xlu0 %v3136, 32
    %v3303 = vpop.permute.xlu0 %3302
    %3304 = vrot.lane.b32.xlu0 %v3137, 32
    %v3305 = vpop.permute.xlu0 %3304
    %3306 = vrot.lane.b32.xlu0 %v3138, 32
    %v3307 = vpop.permute.xlu0 %3306
    %3308 = vrot.lane.b32.xlu0 %v3139, 32
    %v3309 = vpop.permute.xlu0 %3308
    %3310 = vrot.lane.b32.xlu0 %v3140, 32
    %v3311 = vpop.permute.xlu0 %3310
    %3312 = vrot.lane.b32.xlu0 %v3141, 32
    %v3313 = vpop.permute.xlu0 %3312
    %3314 = vrot.lane.b32.xlu0 %v3142, 32
    %v3315 = vpop.permute.xlu0 %3314
    %3316 = vrot.lane.b32.xlu0 %v3143, 32
    %v3317 = vpop.permute.xlu0 %3316
    %3318 = vrot.lane.b32.xlu0 %v3144, 32
    %v3319 = vpop.permute.xlu0 %3318
    %3320 = vrot.lane.b32.xlu0 %v3145, 32
    %v3321 = vpop.permute.xlu0 %3320
    %3322 = vrot.lane.b32.xlu0 %v3146, 32
    %v3323 = vpop.permute.xlu0 %3322
    %3324 = vrot.lane.b32.xlu0 %v3147, 32
    %v3325 = vpop.permute.xlu0 %3324
    %3326 = vrot.lane.b32.xlu0 %v3148, 32
    %v3327 = vpop.permute.xlu0 %3326
    %3328 = vrot.lane.b32.xlu0 %v3149, 32
    %v3329 = vpop.permute.xlu0 %3328
    %3330 = vrot.lane.b32.xlu0 %v3150, 32
    %v3331 = vpop.permute.xlu0 %3330
    %3332 = vrot.lane.b32.xlu0 %v3151, 32
    %v3333 = vpop.permute.xlu0 %3332
    %3334 = vrot.lane.b32.xlu0 %v3152, 32
    %v3335 = vpop.permute.xlu0 %3334
    %3336 = vrot.lane.b32.xlu0 %v3153, 32
    %v3337 = vpop.permute.xlu0 %3336
    %3338 = vrot.lane.b32.xlu0 %v3154, 32
    %v3339 = vpop.permute.xlu0 %3338
    %3340 = vrot.lane.b32.xlu0 %v3155, 32
    %v3341 = vpop.permute.xlu0 %3340
    %3342 = vrot.lane.b32.xlu0 %v3156, 32
    %v3343 = vpop.permute.xlu0 %3342
    %3344 = vrot.lane.b32.xlu0 %v3157, 32
    %v3345 = vpop.permute.xlu0 %3344
    %3346 = vrot.lane.b32.xlu0 %v3158, 32
    %v3347 = vpop.permute.xlu0 %3346
    %3348 = vrot.lane.b32.xlu0 %v3159, 32
    %v3349 = vpop.permute.xlu0 %3348
    %3350 = vrot.lane.b32.xlu0 %v3160, 32
    %v3351 = vpop.permute.xlu0 %3350
    %3352 = vrot.lane.b32.xlu0 %v3161, 32
    %v3353 = vpop.permute.xlu0 %3352
    %vm3418 = vcmask 294144
    %3419 = vst.msk [vmem:[#allocation3] sm:$0xff] %vm3418, %v3227
    %3420 = vst.msk [vmem:[#allocation3 + $0x10] sm:$0xff] %vm3418, %v3229
    %3421 = vst.msk [vmem:[#allocation3 + $0x20] sm:$0xff] %vm3418, %v3231
    %3422 = vst.msk [vmem:[#allocation3 + $0x30] sm:$0xff] %vm3418, %v3233
    %3423 = vst.msk [vmem:[#allocation3 + $0x40] sm:$0xff] %vm3418, %v3235
    %3424 = vst.msk [vmem:[#allocation3 + $0x50] sm:$0xff] %vm3418, %v3237
    %3425 = vst.msk [vmem:[#allocation3 + $0x60] sm:$0xff] %vm3418, %v3239
    %3426 = vst.msk [vmem:[#allocation3 + $0x70] sm:$0xff] %vm3418, %v3241
    %3427 = vst.msk [vmem:[#allocation3 + $0x80] sm:$0xff] %vm3418, %v3243
    %3428 = vst.msk [vmem:[#allocation3 + $0x90] sm:$0xff] %vm3418, %v3245
    %3429 = vst.msk [vmem:[#allocation3 + $0xa0] sm:$0xff] %vm3418, %v3247
    %3430 = vst.msk [vmem:[#allocation3 + $0xb0] sm:$0xff] %vm3418, %v3249
    %3431 = vst.msk [vmem:[#allocation3 + $0xc0] sm:$0xff] %vm3418, %v3251
    %3432 = vst.msk [vmem:[#allocation3 + $0xd0] sm:$0xff] %vm3418, %v3253
    %3433 = vst.msk [vmem:[#allocation3 + $0xe0] sm:$0xff] %vm3418, %v3255
    %3434 = vst.msk [vmem:[#allocation3 + $0xf0] sm:$0xff] %vm3418, %v3257
    %3435 = vst.msk [vmem:[#allocation3 + $0x100] sm:$0xff] %vm3418, %v3259
    %3436 = vst.msk [vmem:[#allocation3 + $0x110] sm:$0xff] %vm3418, %v3261
    %3437 = vst.msk [vmem:[#allocation3 + $0x120] sm:$0xff] %vm3418, %v3263
    %3438 = vst.msk [vmem:[#allocation3 + $0x130] sm:$0xff] %vm3418, %v3265
    %3439 = vst.msk [vmem:[#allocation3 + $0x140] sm:$0xff] %vm3418, %v3267
    %3440 = vst.msk [vmem:[#allocation3 + $0x150] sm:$0xff] %vm3418, %v3269
    %3441 = vst.msk [vmem:[#allocation3 + $0x160] sm:$0xff] %vm3418, %v3271
    %3442 = vst.msk [vmem:[#allocation3 + $0x170] sm:$0xff] %vm3418, %v3273
    %3443 = vst.msk [vmem:[#allocation3 + $0x180] sm:$0xff] %vm3418, %v3275
    %3444 = vst.msk [vmem:[#allocation3 + $0x190] sm:$0xff] %vm3418, %v3277
    %3445 = vst.msk [vmem:[#allocation3 + $0x1a0] sm:$0xff] %vm3418, %v3279
    %3446 = vst.msk [vmem:[#allocation3 + $0x1b0] sm:$0xff] %vm3418, %v3281
    %3447 = vst.msk [vmem:[#allocation3 + $0x1c0] sm:$0xff] %vm3418, %v3283
    %3448 = vst.msk [vmem:[#allocation3 + $0x1d0] sm:$0xff] %vm3418, %v3285
    %3449 = vst.msk [vmem:[#allocation3 + $0x1e0] sm:$0xff] %vm3418, %v3287
    %3450 = vst.msk [vmem:[#allocation3 + $0x1f0] sm:$0xff] %vm3418, %v3289
    %3451 = vst.msk [vmem:[#allocation3 + $0x200] sm:$0xff] %vm3418, %v3291
    %3452 = vst.msk [vmem:[#allocation3 + $0x210] sm:$0xff] %vm3418, %v3293
    %3453 = vst.msk [vmem:[#allocation3 + $0x220] sm:$0xff] %vm3418, %v3295
    %3454 = vst.msk [vmem:[#allocation3 + $0x230] sm:$0xff] %vm3418, %v3297
    %3455 = vst.msk [vmem:[#allocation3 + $0x240] sm:$0xff] %vm3418, %v3299
    %3456 = vst.msk [vmem:[#allocation3 + $0x250] sm:$0xff] %vm3418, %v3301
    %3457 = vst.msk [vmem:[#allocation3 + $0x260] sm:$0xff] %vm3418, %v3303
    %3458 = vst.msk [vmem:[#allocation3 + $0x270] sm:$0xff] %vm3418, %v3305
    %3459 = vst.msk [vmem:[#allocation3 + $0x280] sm:$0xff] %vm3418, %v3307
    %3460 = vst.msk [vmem:[#allocation3 + $0x290] sm:$0xff] %vm3418, %v3309
    %3461 = vst.msk [vmem:[#allocation3 + $0x2a0] sm:$0xff] %vm3418, %v3311
    %3462 = vst.msk [vmem:[#allocation3 + $0x2b0] sm:$0xff] %vm3418, %v3313
    %3463 = vst.msk [vmem:[#allocation3 + $0x2c0] sm:$0xff] %vm3418, %v3315
    %3464 = vst.msk [vmem:[#allocation3 + $0x2d0] sm:$0xff] %vm3418, %v3317
    %3465 = vst.msk [vmem:[#allocation3 + $0x2e0] sm:$0xff] %vm3418, %v3319
    %3466 = vst.msk [vmem:[#allocation3 + $0x2f0] sm:$0xff] %vm3418, %v3321
    %3467 = vst.msk [vmem:[#allocation3 + $0x300] sm:$0xff] %vm3418, %v3323
    %3468 = vst.msk [vmem:[#allocation3 + $0x310] sm:$0xff] %vm3418, %v3325
    %3469 = vst.msk [vmem:[#allocation3 + $0x320] sm:$0xff] %vm3418, %v3327
    %3470 = vst.msk [vmem:[#allocation3 + $0x330] sm:$0xff] %vm3418, %v3329
    %3471 = vst.msk [vmem:[#allocation3 + $0x340] sm:$0xff] %vm3418, %v3331
    %3472 = vst.msk [vmem:[#allocation3 + $0x350] sm:$0xff] %vm3418, %v3333
    %3473 = vst.msk [vmem:[#allocation3 + $0x360] sm:$0xff] %vm3418, %v3335
    %3474 = vst.msk [vmem:[#allocation3 + $0x370] sm:$0xff] %vm3418, %v3337
    %3475 = vst.msk [vmem:[#allocation3 + $0x380] sm:$0xff] %vm3418, %v3339
    %3476 = vst.msk [vmem:[#allocation3 + $0x390] sm:$0xff] %vm3418, %v3341
    %3477 = vst.msk [vmem:[#allocation3 + $0x3a0] sm:$0xff] %vm3418, %v3343
    %3478 = vst.msk [vmem:[#allocation3 + $0x3b0] sm:$0xff] %vm3418, %v3345
    %3479 = vst.msk [vmem:[#allocation3 + $0x3c0] sm:$0xff] %vm3418, %v3347
    %3480 = vst.msk [vmem:[#allocation3 + $0x3d0] sm:$0xff] %vm3418, %v3349
    %3481 = vst.msk [vmem:[#allocation3 + $0x3e0] sm:$0xff] %vm3418, %v3351
    %3482 = vst.msk [vmem:[#allocation3 + $0x3f0] sm:$0xff] %vm3418, %v3353
    %v3483 = vld [vmem:[#allocation3] sm:$0xff]
    %v3484 = vld [vmem:[#allocation3 + $0x10] sm:$0xff]
    %v3485 = vld [vmem:[#allocation3 + $0x20] sm:$0xff]
    %v3486 = vld [vmem:[#allocation3 + $0x30] sm:$0xff]
    %v3487 = vld [vmem:[#allocation3 + $0x40] sm:$0xff]
    %v3488 = vld [vmem:[#allocation3 + $0x50] sm:$0xff]
    %v3489 = vld [vmem:[#allocation3 + $0x60] sm:$0xff]
    %v3490 = vld [vmem:[#allocation3 + $0x70] sm:$0xff]
    %v3491 = vld [vmem:[#allocation3 + $0x80] sm:$0xff]
    %v3492 = vld [vmem:[#allocation3 + $0x90] sm:$0xff]
    %v3493 = vld [vmem:[#allocation3 + $0xa0] sm:$0xff]
    %v3494 = vld [vmem:[#allocation3 + $0xb0] sm:$0xff]
    %v3495 = vld [vmem:[#allocation3 + $0xc0] sm:$0xff]
    %v3496 = vld [vmem:[#allocation3 + $0xd0] sm:$0xff]
    %v3497 = vld [vmem:[#allocation3 + $0xe0] sm:$0xff]
    %v3498 = vld [vmem:[#allocation3 + $0xf0] sm:$0xff]
    %v3499 = vld [vmem:[#allocation3 + $0x100] sm:$0xff]
    %v3500 = vld [vmem:[#allocation3 + $0x110] sm:$0xff]
    %v3501 = vld [vmem:[#allocation3 + $0x120] sm:$0xff]
    %v3502 = vld [vmem:[#allocation3 + $0x130] sm:$0xff]
    %v3503 = vld [vmem:[#allocation3 + $0x140] sm:$0xff]
    %v3504 = vld [vmem:[#allocation3 + $0x150] sm:$0xff]
    %v3505 = vld [vmem:[#allocation3 + $0x160] sm:$0xff]
    %v3506 = vld [vmem:[#allocation3 + $0x170] sm:$0xff]
    %v3507 = vld [vmem:[#allocation3 + $0x180] sm:$0xff]
    %v3508 = vld [vmem:[#allocation3 + $0x190] sm:$0xff]
    %v3509 = vld [vmem:[#allocation3 + $0x1a0] sm:$0xff]
    %v3510 = vld [vmem:[#allocation3 + $0x1b0] sm:$0xff]
    %v3511 = vld [vmem:[#allocation3 + $0x1c0] sm:$0xff]
    %v3512 = vld [vmem:[#allocation3 + $0x1d0] sm:$0xff]
    %v3513 = vld [vmem:[#allocation3 + $0x1e0] sm:$0xff]
    %v3514 = vld [vmem:[#allocation3 + $0x1f0] sm:$0xff]
    %v3515 = vld [vmem:[#allocation3 + $0x200] sm:$0xff]
    %v3516 = vld [vmem:[#allocation3 + $0x210] sm:$0xff]
    %v3517 = vld [vmem:[#allocation3 + $0x220] sm:$0xff]
    %v3518 = vld [vmem:[#allocation3 + $0x230] sm:$0xff]
    %v3519 = vld [vmem:[#allocation3 + $0x240] sm:$0xff]
    %v3520 = vld [vmem:[#allocation3 + $0x250] sm:$0xff]
    %v3521 = vld [vmem:[#allocation3 + $0x260] sm:$0xff]
    %v3522 = vld [vmem:[#allocation3 + $0x270] sm:$0xff]
    %v3523 = vld [vmem:[#allocation3 + $0x280] sm:$0xff]
    %v3524 = vld [vmem:[#allocation3 + $0x290] sm:$0xff]
    %v3525 = vld [vmem:[#allocation3 + $0x2a0] sm:$0xff]
    %v3526 = vld [vmem:[#allocation3 + $0x2b0] sm:$0xff]
    %v3527 = vld [vmem:[#allocation3 + $0x2c0] sm:$0xff]
    %v3528 = vld [vmem:[#allocation3 + $0x2d0] sm:$0xff]
    %v3529 = vld [vmem:[#allocation3 + $0x2e0] sm:$0xff]
    %v3530 = vld [vmem:[#allocation3 + $0x2f0] sm:$0xff]
    %v3531 = vld [vmem:[#allocation3 + $0x300] sm:$0xff]
    %v3532 = vld [vmem:[#allocation3 + $0x310] sm:$0xff]
    %v3533 = vld [vmem:[#allocation3 + $0x320] sm:$0xff]
    %v3534 = vld [vmem:[#allocation3 + $0x330] sm:$0xff]
    %v3535 = vld [vmem:[#allocation3 + $0x340] sm:$0xff]
    %v3536 = vld [vmem:[#allocation3 + $0x350] sm:$0xff]
    %v3537 = vld [vmem:[#allocation3 + $0x360] sm:$0xff]
    %v3538 = vld [vmem:[#allocation3 + $0x370] sm:$0xff]
    %v3539 = vld [vmem:[#allocation3 + $0x380] sm:$0xff]
    %v3540 = vld [vmem:[#allocation3 + $0x390] sm:$0xff]
    %v3541 = vld [vmem:[#allocation3 + $0x3a0] sm:$0xff]
    %v3542 = vld [vmem:[#allocation3 + $0x3b0] sm:$0xff]
    %v3543 = vld [vmem:[#allocation3 + $0x3c0] sm:$0xff]
    %v3544 = vld [vmem:[#allocation3 + $0x3d0] sm:$0xff]
    %v3545 = vld [vmem:[#allocation3 + $0x3e0] sm:$0xff]
    %v3546 = vld [vmem:[#allocation3 + $0x3f0] sm:$0xff]
    %v3547 = vpack.c.bf16 %v3484, %v3483
    %v3548 = vpack.c.bf16 %v3486, %v3485
    %v3549 = vpack.c.bf16 %v3488, %v3487
    %v3550 = vpack.c.bf16 %v3490, %v3489
    %v3551 = vpack.c.bf16 %v3492, %v3491
    %v3552 = vpack.c.bf16 %v3494, %v3493
    %v3553 = vpack.c.bf16 %v3496, %v3495
    %v3554 = vpack.c.bf16 %v3498, %v3497
    %v3555 = vpack.c.bf16 %v3500, %v3499
    %v3556 = vpack.c.bf16 %v3502, %v3501
    %v3557 = vpack.c.bf16 %v3504, %v3503
    %v3558 = vpack.c.bf16 %v3506, %v3505
    %v3559 = vpack.c.bf16 %v3508, %v3507
    %v3560 = vpack.c.bf16 %v3510, %v3509
    %v3561 = vpack.c.bf16 %v3512, %v3511
    %v3562 = vpack.c.bf16 %v3514, %v3513
    %v3563 = vpack.c.bf16 %v3516, %v3515
    %v3564 = vpack.c.bf16 %v3518, %v3517
    %v3565 = vpack.c.bf16 %v3520, %v3519
    %v3566 = vpack.c.bf16 %v3522, %v3521
    %v3567 = vpack.c.bf16 %v3524, %v3523
    %v3568 = vpack.c.bf16 %v3526, %v3525
    %v3569 = vpack.c.bf16 %v3528, %v3527
    %v3570 = vpack.c.bf16 %v3530, %v3529
    %v3571 = vpack.c.bf16 %v3532, %v3531
    %v3572 = vpack.c.bf16 %v3534, %v3533
    %v3573 = vpack.c.bf16 %v3536, %v3535
    %v3574 = vpack.c.bf16 %v3538, %v3537
    %v3575 = vpack.c.bf16 %v3540, %v3539
    %v3576 = vpack.c.bf16 %v3542, %v3541
    %v3577 = vpack.c.bf16 %v3544, %v3543
    %v3578 = vpack.c.bf16 %v3546, %v3545
    %v3579 = vld [vmem:[%s1] sm:$0xf]
    %v3580 = vld [vmem:[%s1 + $0x4] sm:$0xf]
    %v3581 = vld [vmem:[%s1 + $0x8] sm:$0xf]
    %v3582 = vld [vmem:[%s1 + $0xc] sm:$0xf]
    %v3583 = vld [vmem:[%s1 + $0x10] sm:$0x3]
    %v3584 = vld [vmem:[%s2] sm:$0x1]
    %v3586 = vlaneseq
    %v3587 = vshrl.u32 %v3586, 7
    %v3588 = vsub.s32 0, %v3587
    %v3589 = vrot.slane %v3584, %v3588
    %v3596 = vunpack.c.l.b16 %v3579
    %v3597 = vunpack.c.l.b16 %v3580
    %v3598 = vunpack.c.l.b16 %v3581
    %v3599 = vunpack.c.l.b16 %v3582
    %v3600 = vunpack.c.l.b16 %v3583
    %v3601 = vpack.c.b16 %v3597, %v3596
    %v3602 = vpack.c.b16 %v3599, %v3598
    %v3603 = vpack.c.b16 %v3600, %v3600
    %vm3606 = vcmask 293888
    %v3608 = vsel %vm3606, %v3547, 0
    %v3611 = vsel %vm3606, %v3548, 0
    %v3614 = vsel %vm3606, %v3549, 0
    %v3617 = vsel %vm3606, %v3550, 0
    %v3620 = vsel %vm3606, %v3551, 0
    %v3623 = vsel %vm3606, %v3552, 0
    %v3626 = vsel %vm3606, %v3553, 0
    %v3629 = vsel %vm3606, %v3554, 0
    %v3632 = vsel %vm3606, %v3555, 0
    %v3635 = vsel %vm3606, %v3556, 0
    %v3638 = vsel %vm3606, %v3557, 0
    %v3641 = vsel %vm3606, %v3558, 0
    %v3644 = vsel %vm3606, %v3559, 0
    %v3647 = vsel %vm3606, %v3560, 0
    %v3650 = vsel %vm3606, %v3561, 0
    %v3653 = vsel %vm3606, %v3562, 0
    %v3656 = vsel %vm3606, %v3563, 0
    %v3659 = vsel %vm3606, %v3564, 0
    %v3662 = vsel %vm3606, %v3565, 0
    %v3665 = vsel %vm3606, %v3566, 0
    %v3668 = vsel %vm3606, %v3567, 0
    %v3671 = vsel %vm3606, %v3568, 0
    %v3674 = vsel %vm3606, %v3569, 0
    %v3677 = vsel %vm3606, %v3570, 0
    %v3680 = vsel %vm3606, %v3571, 0
    %v3683 = vsel %vm3606, %v3572, 0
    %v3686 = vsel %vm3606, %v3573, 0
    %v3689 = vsel %vm3606, %v3574, 0
    %v3692 = vsel %vm3606, %v3575, 0
    %v3695 = vsel %vm3606, %v3576, 0
    %v3698 = vsel %vm3606, %v3577, 0
    %v3701 = vsel %vm3606, %v3578, 0
    %vm3703 = vcmask 1041408
    %v3705 = vsel %vm3703, %v3603, 0
    %3707 = vmatprep.subr.bf16.mxu0 0
    %3708 = vmatpush1.bf16.msra.mxu0 0
    %3709 = vmatprep.subr.bf16.mxu0 0
    %3710 = vmatpush1.bf16.msra.mxu0 0
    %3711 = vmatprep.subr.bf16.mxu0 0
    %3712 = vmatpush1.bf16.msra.mxu0 0
    %3713 = vmatprep.subr.bf16.mxu0 0
    %3714 = vmatpush1.bf16.msra.mxu0 0
    %3715 = vmatprep.subr.bf16.mxu0 0
    %3716 = vmatpush1.bf16.msra.mxu0 0
    %3717 = vmatprep.subr.bf16.mxu0 0
    %3718 = vmatpush1.bf16.msra.mxu0 %v3705
    %3719 = vmatprep.subr.bf16.mxu0 0
    %3720 = vmatpush1.bf16.msra.mxu0 %v3602
    %3721 = vmatprep.subr.bf16.mxu0 0
    %3722 = vmatpush1.bf16.msra.mxu0 %v3601
    %3723 = vmatprep.subr.bf16.mxu0 0
    %3724 = vmatpush2.bf16.msra.mxu0 0
    %3725 = vmatprep.subr.bf16.mxu0 0
    %3726 = vmatpush2.bf16.msra.mxu0 0
    %3727 = vmatprep.subr.bf16.mxu0 0
    %3728 = vmatpush2.bf16.msra.mxu0 0
    %3729 = vmatprep.subr.bf16.mxu0 0
    %3730 = vmatpush2.bf16.msra.mxu0 0
    %3731 = vmatprep.subr.bf16.mxu0 0
    %3732 = vmatpush2.bf16.msra.mxu0 0
    %3733 = vmatprep.subr.bf16.mxu0 0
    %3734 = vmatpush2.bf16.msra.mxu0 0
    %3735 = vmatprep.subr.bf16.mxu0 0
    %3736 = vmatpush2.bf16.msra.mxu0 0
    %3737 = vmatprep.subr.bf16.mxu0 0
    %3738 = vmatpush2.bf16.msra.mxu0 0
    %3739 = vmatprep.mubr.bf16.mxu0 0
    %3740 = vmatmul.mubr.bf16.gmra.mxu0 %v3608
    %v3741 = vpop.f32.mrf.mxu0
    %v3742 = vadd.f32 %v3589, %v3741
    %v3743 = vpop.f32.mrf.mxu0
    %v3744 = vpop.f32.mrf.mxu0
    %v3745 = vadd.f32 %v3589, %v3744
    %v3746 = vpop.f32.mrf.mxu0
    %3747 = vmatprep.mubr.bf16.mxu0 0
    %3748 = vmatmul.mubr.bf16.gmra.mxu0 %v3611
    %v3749 = vpop.f32.mrf.mxu0
    %v3750 = vadd.f32 %v3589, %v3749
    %v3751 = vpop.f32.mrf.mxu0
    %v3752 = vpop.f32.mrf.mxu0
    %v3753 = vadd.f32 %v3589, %v3752
    %v3754 = vpop.f32.mrf.mxu0
    %3755 = vmatprep.mubr.bf16.mxu0 0
    %3756 = vmatmul.mubr.bf16.gmra.mxu0 %v3614
    %v3757 = vpop.f32.mrf.mxu0
    %v3758 = vadd.f32 %v3589, %v3757
    %v3759 = vpop.f32.mrf.mxu0
    %v3760 = vpop.f32.mrf.mxu0
    %v3761 = vadd.f32 %v3589, %v3760
    %v3762 = vpop.f32.mrf.mxu0
    %3763 = vmatprep.mubr.bf16.mxu0 0
    %3764 = vmatmul.mubr.bf16.gmra.mxu0 %v3617
    %v3765 = vpop.f32.mrf.mxu0
    %v3766 = vadd.f32 %v3589, %v3765
    %v3767 = vpop.f32.mrf.mxu0
    %v3768 = vpop.f32.mrf.mxu0
    %v3769 = vadd.f32 %v3589, %v3768
    %v3770 = vpop.f32.mrf.mxu0
    %3771 = vmatprep.mubr.bf16.mxu0 0
    %3772 = vmatmul.mubr.bf16.gmra.mxu0 %v3620
    %v3773 = vpop.f32.mrf.mxu0
    %v3774 = vadd.f32 %v3589, %v3773
    %v3775 = vpop.f32.mrf.mxu0
    %v3776 = vpop.f32.mrf.mxu0
    %v3777 = vadd.f32 %v3589, %v3776
    %v3778 = vpop.f32.mrf.mxu0
    %3779 = vmatprep.mubr.bf16.mxu0 0
    %3780 = vmatmul.mubr.bf16.gmra.mxu0 %v3623
    %v3781 = vpop.f32.mrf.mxu0
    %v3782 = vadd.f32 %v3589, %v3781
    %v3783 = vpop.f32.mrf.mxu0
    %v3784 = vpop.f32.mrf.mxu0
    %v3785 = vadd.f32 %v3589, %v3784
    %v3786 = vpop.f32.mrf.mxu0
    %3787 = vmatprep.mubr.bf16.mxu0 0
    %3788 = vmatmul.mubr.bf16.gmra.mxu0 %v3626
    %v3789 = vpop.f32.mrf.mxu0
    %v3790 = vadd.f32 %v3589, %v3789
    %v3791 = vpop.f32.mrf.mxu0
    %v3792 = vpop.f32.mrf.mxu0
    %v3793 = vadd.f32 %v3589, %v3792
    %v3794 = vpop.f32.mrf.mxu0
    %3795 = vmatprep.mubr.bf16.mxu0 0
    %3796 = vmatmul.mubr.bf16.gmra.mxu0 %v3629
    %v3797 = vpop.f32.mrf.mxu0
    %v3798 = vadd.f32 %v3589, %v3797
    %v3799 = vpop.f32.mrf.mxu0
    %v3800 = vpop.f32.mrf.mxu0
    %v3801 = vadd.f32 %v3589, %v3800
    %v3802 = vpop.f32.mrf.mxu0
    %3803 = vmatprep.mubr.bf16.mxu0 0
    %3804 = vmatmul.mubr.bf16.gmra.mxu0 %v3632
    %v3805 = vpop.f32.mrf.mxu0
    %v3806 = vadd.f32 %v3589, %v3805
    %v3807 = vpop.f32.mrf.mxu0
    %v3808 = vpop.f32.mrf.mxu0
    %v3809 = vadd.f32 %v3589, %v3808
    %v3810 = vpop.f32.mrf.mxu0
    %3811 = vmatprep.mubr.bf16.mxu0 0
    %3812 = vmatmul.mubr.bf16.gmra.mxu0 %v3635
    %v3813 = vpop.f32.mrf.mxu0
    %v3814 = vadd.f32 %v3589, %v3813
    %v3815 = vpop.f32.mrf.mxu0
    %v3816 = vpop.f32.mrf.mxu0
    %v3817 = vadd.f32 %v3589, %v3816
    %v3818 = vpop.f32.mrf.mxu0
    %3819 = vmatprep.mubr.bf16.mxu0 0
    %3820 = vmatmul.mubr.bf16.gmra.mxu0 %v3638
    %v3821 = vpop.f32.mrf.mxu0
    %v3822 = vadd.f32 %v3589, %v3821
    %v3823 = vpop.f32.mrf.mxu0
    %v3824 = vpop.f32.mrf.mxu0
    %v3825 = vadd.f32 %v3589, %v3824
    %v3826 = vpop.f32.mrf.mxu0
    %3827 = vmatprep.mubr.bf16.mxu0 0
    %3828 = vmatmul.mubr.bf16.gmra.mxu0 %v3641
    %v3829 = vpop.f32.mrf.mxu0
    %v3830 = vadd.f32 %v3589, %v3829
    %v3831 = vpop.f32.mrf.mxu0
    %v3832 = vpop.f32.mrf.mxu0
    %v3833 = vadd.f32 %v3589, %v3832
    %v3834 = vpop.f32.mrf.mxu0
    %3835 = vmatprep.mubr.bf16.mxu0 0
    %3836 = vmatmul.mubr.bf16.gmra.mxu0 %v3644
    %v3837 = vpop.f32.mrf.mxu0
    %v3838 = vadd.f32 %v3589, %v3837
    %v3839 = vpop.f32.mrf.mxu0
    %v3840 = vpop.f32.mrf.mxu0
    %v3841 = vadd.f32 %v3589, %v3840
    %v3842 = vpop.f32.mrf.mxu0
    %3843 = vmatprep.mubr.bf16.mxu0 0
    %3844 = vmatmul.mubr.bf16.gmra.mxu0 %v3647
    %v3845 = vpop.f32.mrf.mxu0
    %v3846 = vadd.f32 %v3589, %v3845
    %v3847 = vpop.f32.mrf.mxu0
    %v3848 = vpop.f32.mrf.mxu0
    %v3849 = vadd.f32 %v3589, %v3848
    %v3850 = vpop.f32.mrf.mxu0
    %3851 = vmatprep.mubr.bf16.mxu0 0
    %3852 = vmatmul.mubr.bf16.gmra.mxu0 %v3650
    %v3853 = vpop.f32.mrf.mxu0
    %v3854 = vadd.f32 %v3589, %v3853
    %v3855 = vpop.f32.mrf.mxu0
    %v3856 = vpop.f32.mrf.mxu0
    %v3857 = vadd.f32 %v3589, %v3856
    %v3858 = vpop.f32.mrf.mxu0
    %3859 = vmatprep.mubr.bf16.mxu0 0
    %3860 = vmatmul.mubr.bf16.gmra.mxu0 %v3653
    %v3861 = vpop.f32.mrf.mxu0
    %v3862 = vadd.f32 %v3589, %v3861
    %v3863 = vpop.f32.mrf.mxu0
    %v3864 = vpop.f32.mrf.mxu0
    %v3865 = vadd.f32 %v3589, %v3864
    %v3866 = vpop.f32.mrf.mxu0
    %3867 = vmatprep.mubr.bf16.mxu0 0
    %3868 = vmatmul.mubr.bf16.gmra.mxu0 %v3656
    %v3869 = vpop.f32.mrf.mxu0
    %v3870 = vadd.f32 %v3589, %v3869
    %v3871 = vpop.f32.mrf.mxu0
    %v3872 = vpop.f32.mrf.mxu0
    %v3873 = vadd.f32 %v3589, %v3872
    %v3874 = vpop.f32.mrf.mxu0
    %3875 = vmatprep.mubr.bf16.mxu0 0
    %3876 = vmatmul.mubr.bf16.gmra.mxu0 %v3659
    %v3877 = vpop.f32.mrf.mxu0
    %v3878 = vadd.f32 %v3589, %v3877
    %v3879 = vpop.f32.mrf.mxu0
    %v3880 = vpop.f32.mrf.mxu0
    %v3881 = vadd.f32 %v3589, %v3880
    %v3882 = vpop.f32.mrf.mxu0
    %3883 = vmatprep.mubr.bf16.mxu0 0
    %3884 = vmatmul.mubr.bf16.gmra.mxu0 %v3662
    %v3885 = vpop.f32.mrf.mxu0
    %v3886 = vadd.f32 %v3589, %v3885
    %v3887 = vpop.f32.mrf.mxu0
    %v3888 = vpop.f32.mrf.mxu0
    %v3889 = vadd.f32 %v3589, %v3888
    %v3890 = vpop.f32.mrf.mxu0
    %3891 = vmatprep.mubr.bf16.mxu0 0
    %3892 = vmatmul.mubr.bf16.gmra.mxu0 %v3665
    %v3893 = vpop.f32.mrf.mxu0
    %v3894 = vadd.f32 %v3589, %v3893
    %v3895 = vpop.f32.mrf.mxu0
    %v3896 = vpop.f32.mrf.mxu0
    %v3897 = vadd.f32 %v3589, %v3896
    %v3898 = vpop.f32.mrf.mxu0
    %3899 = vmatprep.mubr.bf16.mxu0 0
    %3900 = vmatmul.mubr.bf16.gmra.mxu0 %v3668
    %v3901 = vpop.f32.mrf.mxu0
    %v3902 = vadd.f32 %v3589, %v3901
    %v3903 = vpop.f32.mrf.mxu0
    %v3904 = vpop.f32.mrf.mxu0
    %v3905 = vadd.f32 %v3589, %v3904
    %v3906 = vpop.f32.mrf.mxu0
    %3907 = vmatprep.mubr.bf16.mxu0 0
    %3908 = vmatmul.mubr.bf16.gmra.mxu0 %v3671
    %v3909 = vpop.f32.mrf.mxu0
    %v3910 = vadd.f32 %v3589, %v3909
    %v3911 = vpop.f32.mrf.mxu0
    %v3912 = vpop.f32.mrf.mxu0
    %v3913 = vadd.f32 %v3589, %v3912
    %v3914 = vpop.f32.mrf.mxu0
    %3915 = vmatprep.mubr.bf16.mxu0 0
    %3916 = vmatmul.mubr.bf16.gmra.mxu0 %v3674
    %v3917 = vpop.f32.mrf.mxu0
    %v3918 = vadd.f32 %v3589, %v3917
    %v3919 = vpop.f32.mrf.mxu0
    %v3920 = vpop.f32.mrf.mxu0
    %v3921 = vadd.f32 %v3589, %v3920
    %v3922 = vpop.f32.mrf.mxu0
    %3923 = vmatprep.mubr.bf16.mxu0 0
    %3924 = vmatmul.mubr.bf16.gmra.mxu0 %v3677
    %v3925 = vpop.f32.mrf.mxu0
    %v3926 = vadd.f32 %v3589, %v3925
    %v3927 = vpop.f32.mrf.mxu0
    %v3928 = vpop.f32.mrf.mxu0
    %v3929 = vadd.f32 %v3589, %v3928
    %v3930 = vpop.f32.mrf.mxu0
    %3931 = vmatprep.mubr.bf16.mxu0 0
    %3932 = vmatmul.mubr.bf16.gmra.mxu0 %v3680
    %v3933 = vpop.f32.mrf.mxu0
    %v3934 = vadd.f32 %v3589, %v3933
    %v3935 = vpop.f32.mrf.mxu0
    %v3936 = vpop.f32.mrf.mxu0
    %v3937 = vadd.f32 %v3589, %v3936
    %v3938 = vpop.f32.mrf.mxu0
    %3939 = vmatprep.mubr.bf16.mxu0 0
    %3940 = vmatmul.mubr.bf16.gmra.mxu0 %v3683
    %v3941 = vpop.f32.mrf.mxu0
    %v3942 = vadd.f32 %v3589, %v3941
    %v3943 = vpop.f32.mrf.mxu0
    %v3944 = vpop.f32.mrf.mxu0
    %v3945 = vadd.f32 %v3589, %v3944
    %v3946 = vpop.f32.mrf.mxu0
    %3947 = vmatprep.mubr.bf16.mxu0 0
    %3948 = vmatmul.mubr.bf16.gmra.mxu0 %v3686
    %v3949 = vpop.f32.mrf.mxu0
    %v3950 = vadd.f32 %v3589, %v3949
    %v3951 = vpop.f32.mrf.mxu0
    %v3952 = vpop.f32.mrf.mxu0
    %v3953 = vadd.f32 %v3589, %v3952
    %v3954 = vpop.f32.mrf.mxu0
    %3955 = vmatprep.mubr.bf16.mxu0 0
    %3956 = vmatmul.mubr.bf16.gmra.mxu0 %v3689
    %v3957 = vpop.f32.mrf.mxu0
    %v3958 = vadd.f32 %v3589, %v3957
    %v3959 = vpop.f32.mrf.mxu0
    %v3960 = vpop.f32.mrf.mxu0
    %v3961 = vadd.f32 %v3589, %v3960
    %v3962 = vpop.f32.mrf.mxu0
    %3963 = vmatprep.mubr.bf16.mxu0 0
    %3964 = vmatmul.mubr.bf16.gmra.mxu0 %v3692
    %v3965 = vpop.f32.mrf.mxu0
    %v3966 = vadd.f32 %v3589, %v3965
    %v3967 = vpop.f32.mrf.mxu0
    %v3968 = vpop.f32.mrf.mxu0
    %v3969 = vadd.f32 %v3589, %v3968
    %v3970 = vpop.f32.mrf.mxu0
    %3971 = vmatprep.mubr.bf16.mxu0 0
    %3972 = vmatmul.mubr.bf16.gmra.mxu0 %v3695
    %v3973 = vpop.f32.mrf.mxu0
    %v3974 = vadd.f32 %v3589, %v3973
    %v3975 = vpop.f32.mrf.mxu0
    %v3976 = vpop.f32.mrf.mxu0
    %v3977 = vadd.f32 %v3589, %v3976
    %v3978 = vpop.f32.mrf.mxu0
    %3979 = vmatprep.mubr.bf16.mxu0 0
    %3980 = vmatmul.mubr.bf16.gmra.mxu0 %v3698
    %v3981 = vpop.f32.mrf.mxu0
    %v3982 = vadd.f32 %v3589, %v3981
    %v3983 = vpop.f32.mrf.mxu0
    %v3984 = vpop.f32.mrf.mxu0
    %v3985 = vadd.f32 %v3589, %v3984
    %v3986 = vpop.f32.mrf.mxu0
    %3987 = vmatprep.mubr.bf16.mxu0 0
    %3988 = vmatmul.mubr.bf16.gmra.mxu0 %v3701
    %v3989 = vpop.f32.mrf.mxu0
    %v3990 = vadd.f32 %v3589, %v3989
    %v3991 = vpop.f32.mrf.mxu0
    %v3992 = vpop.f32.mrf.mxu0
    %v3993 = vadd.f32 %v3589, %v3992
    %v3994 = vpop.f32.mrf.mxu0
    %3995 = vdwg.mxu0
    %v3996 = vmax.f32 %v3742, 0.0
    %v3997 = vmax.f32 %v3745, 0.0
    %v3998 = vmax.f32 %v3750, 0.0
    %v3999 = vmax.f32 %v3753, 0.0
    %v4000 = vmax.f32 %v3758, 0.0
    %v4001 = vmax.f32 %v3761, 0.0
    %v4002 = vmax.f32 %v3766, 0.0
    %v4003 = vmax.f32 %v3769, 0.0
    %v4004 = vmax.f32 %v3774, 0.0
    %v4005 = vmax.f32 %v3777, 0.0
    %v4006 = vmax.f32 %v3782, 0.0
    %v4007 = vmax.f32 %v3785, 0.0
    %v4008 = vmax.f32 %v3790, 0.0
    %v4009 = vmax.f32 %v3793, 0.0
    %v4010 = vmax.f32 %v3798, 0.0
    %v4011 = vmax.f32 %v3801, 0.0
    %v4012 = vmax.f32 %v3806, 0.0
    %v4013 = vmax.f32 %v3809, 0.0
    %v4014 = vmax.f32 %v3814, 0.0
    %v4015 = vmax.f32 %v3817, 0.0
    %v4016 = vmax.f32 %v3822, 0.0
    %v4017 = vmax.f32 %v3825, 0.0
    %v4018 = vmax.f32 %v3830, 0.0
    %v4019 = vmax.f32 %v3833, 0.0
    %v4020 = vmax.f32 %v3838, 0.0
    %v4021 = vmax.f32 %v3841, 0.0
    %v4022 = vmax.f32 %v3846, 0.0
    %v4023 = vmax.f32 %v3849, 0.0
    %v4024 = vmax.f32 %v3854, 0.0
    %v4025 = vmax.f32 %v3857, 0.0
    %v4026 = vmax.f32 %v3862, 0.0
    %v4027 = vmax.f32 %v3865, 0.0
    %v4028 = vmax.f32 %v3870, 0.0
    %v4029 = vmax.f32 %v3873, 0.0
    %v4030 = vmax.f32 %v3878, 0.0
    %v4031 = vmax.f32 %v3881, 0.0
    %v4032 = vmax.f32 %v3886, 0.0
    %v4033 = vmax.f32 %v3889, 0.0
    %v4034 = vmax.f32 %v3894, 0.0
    %v4035 = vmax.f32 %v3897, 0.0
    %v4036 = vmax.f32 %v3902, 0.0
    %v4037 = vmax.f32 %v3905, 0.0
    %v4038 = vmax.f32 %v3910, 0.0
    %v4039 = vmax.f32 %v3913, 0.0
    %v4040 = vmax.f32 %v3918, 0.0
    %v4041 = vmax.f32 %v3921, 0.0
    %v4042 = vmax.f32 %v3926, 0.0
    %v4043 = vmax.f32 %v3929, 0.0
    %v4044 = vmax.f32 %v3934, 0.0
    %v4045 = vmax.f32 %v3937, 0.0
    %v4046 = vmax.f32 %v3942, 0.0
    %v4047 = vmax.f32 %v3945, 0.0
    %v4048 = vmax.f32 %v3950, 0.0
    %v4049 = vmax.f32 %v3953, 0.0
    %v4050 = vmax.f32 %v3958, 0.0
    %v4051 = vmax.f32 %v3961, 0.0
    %v4052 = vmax.f32 %v3966, 0.0
    %v4053 = vmax.f32 %v3969, 0.0
    %v4054 = vmax.f32 %v3974, 0.0
    %v4055 = vmax.f32 %v3977, 0.0
    %v4056 = vmax.f32 %v3982, 0.0
    %v4057 = vmax.f32 %v3985, 0.0
    %v4058 = vmax.f32 %v3990, 0.0
    %v4059 = vmax.f32 %v3993, 0.0
    %4060 = vst.msk [vmem:[%s208 + $0x1] sm:$0xff] %vm34, %v3996
    %4061 = vst.msk [vmem:[%s208 + $0x9] sm:$0xff] %vm34, %v3997
    %4062 = vst.msk [vmem:[%s208 + $0x19] sm:$0xff] %vm34, %v3998
    %4063 = vst.msk [vmem:[%s208 + $0x21] sm:$0xff] %vm34, %v3999
    %4064 = vst.msk [vmem:[%s208 + $0x31] sm:$0xff] %vm34, %v4000
    %4065 = vst.msk [vmem:[%s208 + $0x39] sm:$0xff] %vm34, %v4001
    %4066 = vst.msk [vmem:[%s208 + $0x49] sm:$0xff] %vm34, %v4002
    %4067 = vst.msk [vmem:[%s208 + $0x51] sm:$0xff] %vm34, %v4003
    %4068 = vst.msk [vmem:[%s208 + $0x61] sm:$0xff] %vm34, %v4004
    %4069 = vst.msk [vmem:[%s208 + $0x69] sm:$0xff] %vm34, %v4005
    %4070 = vst.msk [vmem:[%s208 + $0x79] sm:$0xff] %vm34, %v4006
    %4071 = vst.msk [vmem:[%s208 + $0x81] sm:$0xff] %vm34, %v4007
    %4072 = vst.msk [vmem:[%s208 + $0x91] sm:$0xff] %vm34, %v4008
    %4073 = vst.msk [vmem:[%s208 + $0x99] sm:$0xff] %vm34, %v4009
    %4074 = vst.msk [vmem:[%s208 + $0xa9] sm:$0xff] %vm34, %v4010
    %4075 = vst.msk [vmem:[%s208 + $0xb1] sm:$0xff] %vm34, %v4011
    %4076 = vst.msk [vmem:[%s208 + $0xc1] sm:$0xff] %vm34, %v4012
    %4077 = vst.msk [vmem:[%s208 + $0xc9] sm:$0xff] %vm34, %v4013
    %4078 = vst.msk [vmem:[%s208 + $0xd9] sm:$0xff] %vm34, %v4014
    %4079 = vst.msk [vmem:[%s208 + $0xe1] sm:$0xff] %vm34, %v4015
    %4080 = vst.msk [vmem:[%s208 + $0xf1] sm:$0xff] %vm34, %v4016
    %4081 = vst.msk [vmem:[%s208 + $0xf9] sm:$0xff] %vm34, %v4017
    %4082 = vst.msk [vmem:[%s208 + $0x109] sm:$0xff] %vm34, %v4018
    %4083 = vst.msk [vmem:[%s208 + $0x111] sm:$0xff] %vm34, %v4019
    %4084 = vst.msk [vmem:[%s208 + $0x121] sm:$0xff] %vm34, %v4020
    %4085 = vst.msk [vmem:[%s208 + $0x129] sm:$0xff] %vm34, %v4021
    %4086 = vst.msk [vmem:[%s208 + $0x139] sm:$0xff] %vm34, %v4022
    %4087 = vst.msk [vmem:[%s208 + $0x141] sm:$0xff] %vm34, %v4023
    %4088 = vst.msk [vmem:[%s208 + $0x151] sm:$0xff] %vm34, %v4024
    %4089 = vst.msk [vmem:[%s208 + $0x159] sm:$0xff] %vm34, %v4025
    %4090 = vst.msk [vmem:[%s208 + $0x169] sm:$0xff] %vm34, %v4026
    %4091 = vst.msk [vmem:[%s208 + $0x171] sm:$0xff] %vm34, %v4027
    %4092 = vst.msk [vmem:[%s208 + $0x1b1] sm:$0xff] %vm34, %v4028
    %4093 = vst.msk [vmem:[%s208 + $0x1b9] sm:$0xff] %vm34, %v4029
    %4094 = vst.msk [vmem:[%s208 + $0x1c9] sm:$0xff] %vm34, %v4030
    %4095 = vst.msk [vmem:[%s208 + $0x1d1] sm:$0xff] %vm34, %v4031
    %4096 = vst.msk [vmem:[%s208 + $0x1e1] sm:$0xff] %vm34, %v4032
    %4097 = vst.msk [vmem:[%s208 + $0x1e9] sm:$0xff] %vm34, %v4033
    %4098 = vst.msk [vmem:[%s208 + $0x1f9] sm:$0xff] %vm34, %v4034
    %4099 = vst.msk [vmem:[%s208 + $0x201] sm:$0xff] %vm34, %v4035
    %4100 = vst.msk [vmem:[%s208 + $0x211] sm:$0xff] %vm34, %v4036
    %4101 = vst.msk [vmem:[%s208 + $0x219] sm:$0xff] %vm34, %v4037
    %4102 = vst.msk [vmem:[%s208 + $0x229] sm:$0xff] %vm34, %v4038
    %4103 = vst.msk [vmem:[%s208 + $0x231] sm:$0xff] %vm34, %v4039
    %4104 = vst.msk [vmem:[%s208 + $0x241] sm:$0xff] %vm34, %v4040
    %4105 = vst.msk [vmem:[%s208 + $0x249] sm:$0xff] %vm34, %v4041
    %4106 = vst.msk [vmem:[%s208 + $0x259] sm:$0xff] %vm34, %v4042
    %4107 = vst.msk [vmem:[%s208 + $0x261] sm:$0xff] %vm34, %v4043
    %4108 = vst.msk [vmem:[%s208 + $0x271] sm:$0xff] %vm34, %v4044
    %4109 = vst.msk [vmem:[%s208 + $0x279] sm:$0xff] %vm34, %v4045
    %4110 = vst.msk [vmem:[%s208 + $0x289] sm:$0xff] %vm34, %v4046
    %4111 = vst.msk [vmem:[%s208 + $0x291] sm:$0xff] %vm34, %v4047
    %4112 = vst.msk [vmem:[%s208 + $0x2a1] sm:$0xff] %vm34, %v4048
    %4113 = vst.msk [vmem:[%s208 + $0x2a9] sm:$0xff] %vm34, %v4049
    %4114 = vst.msk [vmem:[%s208 + $0x2b9] sm:$0xff] %vm34, %v4050
    %4115 = vst.msk [vmem:[%s208 + $0x2c1] sm:$0xff] %vm34, %v4051
    %4116 = vst.msk [vmem:[%s208 + $0x2d1] sm:$0xff] %vm34, %v4052
    %4117 = vst.msk [vmem:[%s208 + $0x2d9] sm:$0xff] %vm34, %v4053
    %4118 = vst.msk [vmem:[%s208 + $0x2e9] sm:$0xff] %vm34, %v4054
    %4119 = vst.msk [vmem:[%s208 + $0x2f1] sm:$0xff] %vm34, %v4055
    %4120 = vst.msk [vmem:[%s208 + $0x301] sm:$0xff] %vm34, %v4056
    %4121 = vst.msk [vmem:[%s208 + $0x309] sm:$0xff] %vm34, %v4057
    %4122 = vst.msk [vmem:[%s208 + $0x319] sm:$0xff] %vm34, %v4058
    %4123 = vst.msk [vmem:[%s208 + $0x321] sm:$0xff] %vm34, %v4059
    %v4124 = vld [vmem:[#allocation2] sm:$0xff]
    %v4125 = vld [vmem:[#allocation2 + $0x8] sm:$0xff]
    %v4126 = vld [vmem:[#allocation2 + $0x18] sm:$0xff]
    %v4127 = vld [vmem:[#allocation2 + $0x20] sm:$0xff]
    %v4128 = vld [vmem:[#allocation2 + $0x30] sm:$0xff]
    %v4129 = vld [vmem:[#allocation2 + $0x38] sm:$0xff]
    %v4130 = vld [vmem:[#allocation2 + $0x48] sm:$0xff]
    %v4131 = vld [vmem:[#allocation2 + $0x50] sm:$0xff]
    %v4132 = vld [vmem:[#allocation2 + $0x60] sm:$0xff]
    %v4133 = vld [vmem:[#allocation2 + $0x68] sm:$0xff]
    %v4134 = vld [vmem:[#allocation2 + $0x78] sm:$0xff]
    %v4135 = vld [vmem:[#allocation2 + $0x80] sm:$0xff]
    %v4136 = vld [vmem:[#allocation2 + $0x90] sm:$0xff]
    %v4137 = vld [vmem:[#allocation2 + $0x98] sm:$0xff]
    %v4138 = vld [vmem:[#allocation2 + $0xa8] sm:$0xff]
    %v4139 = vld [vmem:[#allocation2 + $0xb0] sm:$0xff]
    %v4140 = vld [vmem:[#allocation2 + $0xc0] sm:$0xff]
    %v4141 = vld [vmem:[#allocation2 + $0xc8] sm:$0xff]
    %v4142 = vld [vmem:[#allocation2 + $0xd8] sm:$0xff]
    %v4143 = vld [vmem:[#allocation2 + $0xe0] sm:$0xff]
    %v4144 = vld [vmem:[#allocation2 + $0xf0] sm:$0xff]
    %v4145 = vld [vmem:[#allocation2 + $0xf8] sm:$0xff]
    %v4146 = vld [vmem:[#allocation2 + $0x108] sm:$0xff]
    %v4147 = vld [vmem:[#allocation2 + $0x110] sm:$0xff]
    %v4148 = vld [vmem:[#allocation2 + $0x120] sm:$0xff]
    %v4149 = vld [vmem:[#allocation2 + $0x128] sm:$0xff]
    %v4150 = vld [vmem:[#allocation2 + $0x138] sm:$0xff]
    %v4151 = vld [vmem:[#allocation2 + $0x140] sm:$0xff]
    %v4152 = vld [vmem:[#allocation2 + $0x150] sm:$0xff]
    %v4153 = vld [vmem:[#allocation2 + $0x158] sm:$0xff]
    %v4154 = vld [vmem:[#allocation2 + $0x168] sm:$0xff]
    %v4155 = vld [vmem:[#allocation2 + $0x170] sm:$0xff]
    %v4156 = vld [vmem:[#allocation2 + $0x1b0] sm:$0xff]
    %v4157 = vld [vmem:[#allocation2 + $0x1b8] sm:$0xff]
    %v4158 = vld [vmem:[#allocation2 + $0x1c8] sm:$0xff]
    %v4159 = vld [vmem:[#allocation2 + $0x1d0] sm:$0xff]
    %v4160 = vld [vmem:[#allocation2 + $0x1e0] sm:$0xff]
    %v4161 = vld [vmem:[#allocation2 + $0x1e8] sm:$0xff]
    %v4162 = vld [vmem:[#allocation2 + $0x1f8] sm:$0xff]
    %v4163 = vld [vmem:[#allocation2 + $0x200] sm:$0xff]
    %v4164 = vld [vmem:[#allocation2 + $0x210] sm:$0xff]
    %v4165 = vld [vmem:[#allocation2 + $0x218] sm:$0xff]
    %v4166 = vld [vmem:[#allocation2 + $0x228] sm:$0xff]
    %v4167 = vld [vmem:[#allocation2 + $0x230] sm:$0xff]
    %v4168 = vld [vmem:[#allocation2 + $0x240] sm:$0xff]
    %v4169 = vld [vmem:[#allocation2 + $0x248] sm:$0xff]
    %v4170 = vld [vmem:[#allocation2 + $0x258] sm:$0xff]
    %v4171 = vld [vmem:[#allocation2 + $0x260] sm:$0xff]
    %v4172 = vld [vmem:[#allocation2 + $0x270] sm:$0xff]
    %v4173 = vld [vmem:[#allocation2 + $0x278] sm:$0xff]
    %v4174 = vld [vmem:[#allocation2 + $0x288] sm:$0xff]
    %v4175 = vld [vmem:[#allocation2 + $0x290] sm:$0xff]
    %v4176 = vld [vmem:[#allocation2 + $0x2a0] sm:$0xff]
    %v4177 = vld [vmem:[#allocation2 + $0x2a8] sm:$0xff]
    %v4178 = vld [vmem:[#allocation2 + $0x2b8] sm:$0xff]
    %v4179 = vld [vmem:[#allocation2 + $0x2c0] sm:$0xff]
    %v4180 = vld [vmem:[#allocation2 + $0x2d0] sm:$0xff]
    %v4181 = vld [vmem:[#allocation2 + $0x2d8] sm:$0xff]
    %v4182 = vld [vmem:[#allocation2 + $0x2e8] sm:$0xff]
    %v4183 = vld [vmem:[#allocation2 + $0x2f0] sm:$0xff]
    %v4184 = vld [vmem:[#allocation2 + $0x300] sm:$0xff]
    %v4185 = vld [vmem:[#allocation2 + $0x308] sm:$0xff]
    %v4186 = vld [vmem:[#allocation2 + $0x318] sm:$0xff]
    %v4187 = vld [vmem:[#allocation2 + $0x320] sm:$0xff]
    %4188 = vst.msk [vmem:[#allocation3] sm:$0xff] %vm34, %v4124
    %4189 = vst.msk [vmem:[#allocation3 + $0x10] sm:$0xff] %vm34, %v4125
    %4190 = vst.msk [vmem:[#allocation3 + $0x20] sm:$0xff] %vm34, %v4126
    %4191 = vst.msk [vmem:[#allocation3 + $0x30] sm:$0xff] %vm34, %v4127
    %4192 = vst.msk [vmem:[#allocation3 + $0x40] sm:$0xff] %vm34, %v4128
    %4193 = vst.msk [vmem:[#allocation3 + $0x50] sm:$0xff] %vm34, %v4129
    %4194 = vst.msk [vmem:[#allocation3 + $0x60] sm:$0xff] %vm34, %v4130
    %4195 = vst.msk [vmem:[#allocation3 + $0x70] sm:$0xff] %vm34, %v4131
    %4196 = vst.msk [vmem:[#allocation3 + $0x80] sm:$0xff] %vm34, %v4132
    %4197 = vst.msk [vmem:[#allocation3 + $0x90] sm:$0xff] %vm34, %v4133
    %4198 = vst.msk [vmem:[#allocation3 + $0xa0] sm:$0xff] %vm34, %v4134
    %4199 = vst.msk [vmem:[#allocation3 + $0xb0] sm:$0xff] %vm34, %v4135
    %4200 = vst.msk [vmem:[#allocation3 + $0xc0] sm:$0xff] %vm34, %v4136
    %4201 = vst.msk [vmem:[#allocation3 + $0xd0] sm:$0xff] %vm34, %v4137
    %4202 = vst.msk [vmem:[#allocation3 + $0xe0] sm:$0xff] %vm34, %v4138
    %4203 = vst.msk [vmem:[#allocation3 + $0xf0] sm:$0xff] %vm34, %v4139
    %4204 = vst.msk [vmem:[#allocation3 + $0x100] sm:$0xff] %vm34, %v4140
    %4205 = vst.msk [vmem:[#allocation3 + $0x110] sm:$0xff] %vm34, %v4141
    %4206 = vst.msk [vmem:[#allocation3 + $0x120] sm:$0xff] %vm34, %v4142
    %4207 = vst.msk [vmem:[#allocation3 + $0x130] sm:$0xff] %vm34, %v4143
    %4208 = vst.msk [vmem:[#allocation3 + $0x140] sm:$0xff] %vm34, %v4144
    %4209 = vst.msk [vmem:[#allocation3 + $0x150] sm:$0xff] %vm34, %v4145
    %4210 = vst.msk [vmem:[#allocation3 + $0x160] sm:$0xff] %vm34, %v4146
    %4211 = vst.msk [vmem:[#allocation3 + $0x170] sm:$0xff] %vm34, %v4147
    %4212 = vst.msk [vmem:[#allocation3 + $0x180] sm:$0xff] %vm34, %v4148
    %4213 = vst.msk [vmem:[#allocation3 + $0x190] sm:$0xff] %vm34, %v4149
    %4214 = vst.msk [vmem:[#allocation3 + $0x1a0] sm:$0xff] %vm34, %v4150
    %4215 = vst.msk [vmem:[#allocation3 + $0x1b0] sm:$0xff] %vm34, %v4151
    %4216 = vst.msk [vmem:[#allocation3 + $0x1c0] sm:$0xff] %vm34, %v4152
    %4217 = vst.msk [vmem:[#allocation3 + $0x1d0] sm:$0xff] %vm34, %v4153
    %4218 = vst.msk [vmem:[#allocation3 + $0x1e0] sm:$0xff] %vm34, %v4154
    %4219 = vst.msk [vmem:[#allocation3 + $0x1f0] sm:$0xff] %vm34, %v4155
    %4220 = vst.msk [vmem:[#allocation3 + $0x200] sm:$0xff] %vm34, %v4156
    %4221 = vst.msk [vmem:[#allocation3 + $0x210] sm:$0xff] %vm34, %v4157
    %4222 = vst.msk [vmem:[#allocation3 + $0x220] sm:$0xff] %vm34, %v4158
    %4223 = vst.msk [vmem:[#allocation3 + $0x230] sm:$0xff] %vm34, %v4159
    %4224 = vst.msk [vmem:[#allocation3 + $0x240] sm:$0xff] %vm34, %v4160
    %4225 = vst.msk [vmem:[#allocation3 + $0x250] sm:$0xff] %vm34, %v4161
    %4226 = vst.msk [vmem:[#allocation3 + $0x260] sm:$0xff] %vm34, %v4162
    %4227 = vst.msk [vmem:[#allocation3 + $0x270] sm:$0xff] %vm34, %v4163
    %4228 = vst.msk [vmem:[#allocation3 + $0x280] sm:$0xff] %vm34, %v4164
    %4229 = vst.msk [vmem:[#allocation3 + $0x290] sm:$0xff] %vm34, %v4165
    %4230 = vst.msk [vmem:[#allocation3 + $0x2a0] sm:$0xff] %vm34, %v4166
    %4231 = vst.msk [vmem:[#allocation3 + $0x2b0] sm:$0xff] %vm34, %v4167
    %4232 = vst.msk [vmem:[#allocation3 + $0x2c0] sm:$0xff] %vm34, %v4168
    %4233 = vst.msk [vmem:[#allocation3 + $0x2d0] sm:$0xff] %vm34, %v4169
    %4234 = vst.msk [vmem:[#allocation3 + $0x2e0] sm:$0xff] %vm34, %v4170
    %4235 = vst.msk [vmem:[#allocation3 + $0x2f0] sm:$0xff] %vm34, %v4171
    %4236 = vst.msk [vmem:[#allocation3 + $0x300] sm:$0xff] %vm34, %v4172
    %4237 = vst.msk [vmem:[#allocation3 + $0x310] sm:$0xff] %vm34, %v4173
    %4238 = vst.msk [vmem:[#allocation3 + $0x320] sm:$0xff] %vm34, %v4174
    %4239 = vst.msk [vmem:[#allocation3 + $0x330] sm:$0xff] %vm34, %v4175
    %4240 = vst.msk [vmem:[#allocation3 + $0x340] sm:$0xff] %vm34, %v4176
    %4241 = vst.msk [vmem:[#allocation3 + $0x350] sm:$0xff] %vm34, %v4177
    %4242 = vst.msk [vmem:[#allocation3 + $0x360] sm:$0xff] %vm34, %v4178
    %4243 = vst.msk [vmem:[#allocation3 + $0x370] sm:$0xff] %vm34, %v4179
    %4244 = vst.msk [vmem:[#allocation3 + $0x380] sm:$0xff] %vm34, %v4180
    %4245 = vst.msk [vmem:[#allocation3 + $0x390] sm:$0xff] %vm34, %v4181
    %4246 = vst.msk [vmem:[#allocation3 + $0x3a0] sm:$0xff] %vm34, %v4182
    %4247 = vst.msk [vmem:[#allocation3 + $0x3b0] sm:$0xff] %vm34, %v4183
    %4248 = vst.msk [vmem:[#allocation3 + $0x3c0] sm:$0xff] %vm34, %v4184
    %4249 = vst.msk [vmem:[#allocation3 + $0x3d0] sm:$0xff] %vm34, %v4185
    %4250 = vst.msk [vmem:[#allocation3 + $0x3e0] sm:$0xff] %vm34, %v4186
    %4251 = vst.msk [vmem:[#allocation3 + $0x3f0] sm:$0xff] %vm34, %v4187
    %v4252 = vld [vmem:[#allocation2 + $0x1] sm:$0xff]
    %v4253 = vld [vmem:[#allocation2 + $0x9] sm:$0xff]
    %v4254 = vld [vmem:[#allocation2 + $0x19] sm:$0xff]
    %v4255 = vld [vmem:[#allocation2 + $0x21] sm:$0xff]
    %v4256 = vld [vmem:[#allocation2 + $0x31] sm:$0xff]
    %v4257 = vld [vmem:[#allocation2 + $0x39] sm:$0xff]
    %v4258 = vld [vmem:[#allocation2 + $0x49] sm:$0xff]
    %v4259 = vld [vmem:[#allocation2 + $0x51] sm:$0xff]
    %v4260 = vld [vmem:[#allocation2 + $0x61] sm:$0xff]
    %v4261 = vld [vmem:[#allocation2 + $0x69] sm:$0xff]
    %v4262 = vld [vmem:[#allocation2 + $0x79] sm:$0xff]
    %v4263 = vld [vmem:[#allocation2 + $0x81] sm:$0xff]
    %v4264 = vld [vmem:[#allocation2 + $0x91] sm:$0xff]
    %v4265 = vld [vmem:[#allocation2 + $0x99] sm:$0xff]
    %v4266 = vld [vmem:[#allocation2 + $0xa9] sm:$0xff]
    %v4267 = vld [vmem:[#allocation2 + $0xb1] sm:$0xff]
    %v4268 = vld [vmem:[#allocation2 + $0xc1] sm:$0xff]
    %v4269 = vld [vmem:[#allocation2 + $0xc9] sm:$0xff]
    %v4270 = vld [vmem:[#allocation2 + $0xd9] sm:$0xff]
    %v4271 = vld [vmem:[#allocation2 + $0xe1] sm:$0xff]
    %v4272 = vld [vmem:[#allocation2 + $0xf1] sm:$0xff]
    %v4273 = vld [vmem:[#allocation2 + $0xf9] sm:$0xff]
    %v4274 = vld [vmem:[#allocation2 + $0x109] sm:$0xff]
    %v4275 = vld [vmem:[#allocation2 + $0x111] sm:$0xff]
    %v4276 = vld [vmem:[#allocation2 + $0x121] sm:$0xff]
    %v4277 = vld [vmem:[#allocation2 + $0x129] sm:$0xff]
    %v4278 = vld [vmem:[#allocation2 + $0x139] sm:$0xff]
    %v4279 = vld [vmem:[#allocation2 + $0x141] sm:$0xff]
    %v4280 = vld [vmem:[#allocation2 + $0x151] sm:$0xff]
    %v4281 = vld [vmem:[#allocation2 + $0x159] sm:$0xff]
    %v4282 = vld [vmem:[#allocation2 + $0x169] sm:$0xff]
    %v4283 = vld [vmem:[#allocation2 + $0x171] sm:$0xff]
    %v4284 = vld [vmem:[#allocation2 + $0x1b1] sm:$0xff]
    %v4285 = vld [vmem:[#allocation2 + $0x1b9] sm:$0xff]
    %v4286 = vld [vmem:[#allocation2 + $0x1c9] sm:$0xff]
    %v4287 = vld [vmem:[#allocation2 + $0x1d1] sm:$0xff]
    %v4288 = vld [vmem:[#allocation2 + $0x1e1] sm:$0xff]
    %v4289 = vld [vmem:[#allocation2 + $0x1e9] sm:$0xff]
    %v4290 = vld [vmem:[#allocation2 + $0x1f9] sm:$0xff]
    %v4291 = vld [vmem:[#allocation2 + $0x201] sm:$0xff]
    %v4292 = vld [vmem:[#allocation2 + $0x211] sm:$0xff]
    %v4293 = vld [vmem:[#allocation2 + $0x219] sm:$0xff]
    %v4294 = vld [vmem:[#allocation2 + $0x229] sm:$0xff]
    %v4295 = vld [vmem:[#allocation2 + $0x231] sm:$0xff]
    %v4296 = vld [vmem:[#allocation2 + $0x241] sm:$0xff]
    %v4297 = vld [vmem:[#allocation2 + $0x249] sm:$0xff]
    %v4298 = vld [vmem:[#allocation2 + $0x259] sm:$0xff]
    %v4299 = vld [vmem:[#allocation2 + $0x261] sm:$0xff]
    %v4300 = vld [vmem:[#allocation2 + $0x271] sm:$0xff]
    %v4301 = vld [vmem:[#allocation2 + $0x279] sm:$0xff]
    %v4302 = vld [vmem:[#allocation2 + $0x289] sm:$0xff]
    %v4303 = vld [vmem:[#allocation2 + $0x291] sm:$0xff]
    %v4304 = vld [vmem:[#allocation2 + $0x2a1] sm:$0xff]
    %v4305 = vld [vmem:[#allocation2 + $0x2a9] sm:$0xff]
    %v4306 = vld [vmem:[#allocation2 + $0x2b9] sm:$0xff]
    %v4307 = vld [vmem:[#allocation2 + $0x2c1] sm:$0xff]
    %v4308 = vld [vmem:[#allocation2 + $0x2d1] sm:$0xff]
    %v4309 = vld [vmem:[#allocation2 + $0x2d9] sm:$0xff]
    %v4310 = vld [vmem:[#allocation2 + $0x2e9] sm:$0xff]
    %v4311 = vld [vmem:[#allocation2 + $0x2f1] sm:$0xff]
    %v4312 = vld [vmem:[#allocation2 + $0x301] sm:$0xff]
    %v4313 = vld [vmem:[#allocation2 + $0x309] sm:$0xff]
    %v4314 = vld [vmem:[#allocation2 + $0x319] sm:$0xff]
    %v4315 = vld [vmem:[#allocation2 + $0x321] sm:$0xff]
    %4380 = vrot.lane.b32.xlu0 %v4252, 16
    %v4381 = vpop.permute.xlu0 %4380
    %4382 = vrot.lane.b32.xlu0 %v4253, 16
    %v4383 = vpop.permute.xlu0 %4382
    %4384 = vrot.lane.b32.xlu0 %v4254, 16
    %v4385 = vpop.permute.xlu0 %4384
    %4386 = vrot.lane.b32.xlu0 %v4255, 16
    %v4387 = vpop.permute.xlu0 %4386
    %4388 = vrot.lane.b32.xlu0 %v4256, 16
    %v4389 = vpop.permute.xlu0 %4388
    %4390 = vrot.lane.b32.xlu0 %v4257, 16
    %v4391 = vpop.permute.xlu0 %4390
    %4392 = vrot.lane.b32.xlu0 %v4258, 16
    %v4393 = vpop.permute.xlu0 %4392
    %4394 = vrot.lane.b32.xlu0 %v4259, 16
    %v4395 = vpop.permute.xlu0 %4394
    %4396 = vrot.lane.b32.xlu0 %v4260, 16
    %v4397 = vpop.permute.xlu0 %4396
    %4398 = vrot.lane.b32.xlu0 %v4261, 16
    %v4399 = vpop.permute.xlu0 %4398
    %4400 = vrot.lane.b32.xlu0 %v4262, 16
    %v4401 = vpop.permute.xlu0 %4400
    %4402 = vrot.lane.b32.xlu0 %v4263, 16
    %v4403 = vpop.permute.xlu0 %4402
    %4404 = vrot.lane.b32.xlu0 %v4264, 16
    %v4405 = vpop.permute.xlu0 %4404
    %4406 = vrot.lane.b32.xlu0 %v4265, 16
    %v4407 = vpop.permute.xlu0 %4406
    %4408 = vrot.lane.b32.xlu0 %v4266, 16
    %v4409 = vpop.permute.xlu0 %4408
    %4410 = vrot.lane.b32.xlu0 %v4267, 16
    %v4411 = vpop.permute.xlu0 %4410
    %4412 = vrot.lane.b32.xlu0 %v4268, 16
    %v4413 = vpop.permute.xlu0 %4412
    %4414 = vrot.lane.b32.xlu0 %v4269, 16
    %v4415 = vpop.permute.xlu0 %4414
    %4416 = vrot.lane.b32.xlu0 %v4270, 16
    %v4417 = vpop.permute.xlu0 %4416
    %4418 = vrot.lane.b32.xlu0 %v4271, 16
    %v4419 = vpop.permute.xlu0 %4418
    %4420 = vrot.lane.b32.xlu0 %v4272, 16
    %v4421 = vpop.permute.xlu0 %4420
    %4422 = vrot.lane.b32.xlu0 %v4273, 16
    %v4423 = vpop.permute.xlu0 %4422
    %4424 = vrot.lane.b32.xlu0 %v4274, 16
    %v4425 = vpop.permute.xlu0 %4424
    %4426 = vrot.lane.b32.xlu0 %v4275, 16
    %v4427 = vpop.permute.xlu0 %4426
    %4428 = vrot.lane.b32.xlu0 %v4276, 16
    %v4429 = vpop.permute.xlu0 %4428
    %4430 = vrot.lane.b32.xlu0 %v4277, 16
    %v4431 = vpop.permute.xlu0 %4430
    %4432 = vrot.lane.b32.xlu0 %v4278, 16
    %v4433 = vpop.permute.xlu0 %4432
    %4434 = vrot.lane.b32.xlu0 %v4279, 16
    %v4435 = vpop.permute.xlu0 %4434
    %4436 = vrot.lane.b32.xlu0 %v4280, 16
    %v4437 = vpop.permute.xlu0 %4436
    %4438 = vrot.lane.b32.xlu0 %v4281, 16
    %v4439 = vpop.permute.xlu0 %4438
    %4440 = vrot.lane.b32.xlu0 %v4282, 16
    %v4441 = vpop.permute.xlu0 %4440
    %4442 = vrot.lane.b32.xlu0 %v4283, 16
    %v4443 = vpop.permute.xlu0 %4442
    %4444 = vrot.lane.b32.xlu0 %v4284, 16
    %v4445 = vpop.permute.xlu0 %4444
    %4446 = vrot.lane.b32.xlu0 %v4285, 16
    %v4447 = vpop.permute.xlu0 %4446
    %4448 = vrot.lane.b32.xlu0 %v4286, 16
    %v4449 = vpop.permute.xlu0 %4448
    %4450 = vrot.lane.b32.xlu0 %v4287, 16
    %v4451 = vpop.permute.xlu0 %4450
    %4452 = vrot.lane.b32.xlu0 %v4288, 16
    %v4453 = vpop.permute.xlu0 %4452
    %4454 = vrot.lane.b32.xlu0 %v4289, 16
    %v4455 = vpop.permute.xlu0 %4454
    %4456 = vrot.lane.b32.xlu0 %v4290, 16
    %v4457 = vpop.permute.xlu0 %4456
    %4458 = vrot.lane.b32.xlu0 %v4291, 16
    %v4459 = vpop.permute.xlu0 %4458
    %4460 = vrot.lane.b32.xlu0 %v4292, 16
    %v4461 = vpop.permute.xlu0 %4460
    %4462 = vrot.lane.b32.xlu0 %v4293, 16
    %v4463 = vpop.permute.xlu0 %4462
    %4464 = vrot.lane.b32.xlu0 %v4294, 16
    %v4465 = vpop.permute.xlu0 %4464
    %4466 = vrot.lane.b32.xlu0 %v4295, 16
    %v4467 = vpop.permute.xlu0 %4466
    %4468 = vrot.lane.b32.xlu0 %v4296, 16
    %v4469 = vpop.permute.xlu0 %4468
    %4470 = vrot.lane.b32.xlu0 %v4297, 16
    %v4471 = vpop.permute.xlu0 %4470
    %4472 = vrot.lane.b32.xlu0 %v4298, 16
    %v4473 = vpop.permute.xlu0 %4472
    %4474 = vrot.lane.b32.xlu0 %v4299, 16
    %v4475 = vpop.permute.xlu0 %4474
    %4476 = vrot.lane.b32.xlu0 %v4300, 16
    %v4477 = vpop.permute.xlu0 %4476
    %4478 = vrot.lane.b32.xlu0 %v4301, 16
    %v4479 = vpop.permute.xlu0 %4478
    %4480 = vrot.lane.b32.xlu0 %v4302, 16
    %v4481 = vpop.permute.xlu0 %4480
    %4482 = vrot.lane.b32.xlu0 %v4303, 16
    %v4483 = vpop.permute.xlu0 %4482
    %4484 = vrot.lane.b32.xlu0 %v4304, 16
    %v4485 = vpop.permute.xlu0 %4484
    %4486 = vrot.lane.b32.xlu0 %v4305, 16
    %v4487 = vpop.permute.xlu0 %4486
    %4488 = vrot.lane.b32.xlu0 %v4306, 16
    %v4489 = vpop.permute.xlu0 %4488
    %4490 = vrot.lane.b32.xlu0 %v4307, 16
    %v4491 = vpop.permute.xlu0 %4490
    %4492 = vrot.lane.b32.xlu0 %v4308, 16
    %v4493 = vpop.permute.xlu0 %4492
    %4494 = vrot.lane.b32.xlu0 %v4309, 16
    %v4495 = vpop.permute.xlu0 %4494
    %4496 = vrot.lane.b32.xlu0 %v4310, 16
    %v4497 = vpop.permute.xlu0 %4496
    %4498 = vrot.lane.b32.xlu0 %v4311, 16
    %v4499 = vpop.permute.xlu0 %4498
    %4500 = vrot.lane.b32.xlu0 %v4312, 16
    %v4501 = vpop.permute.xlu0 %4500
    %4502 = vrot.lane.b32.xlu0 %v4313, 16
    %v4503 = vpop.permute.xlu0 %4502
    %4504 = vrot.lane.b32.xlu0 %v4314, 16
    %v4505 = vpop.permute.xlu0 %4504
    %4506 = vrot.lane.b32.xlu0 %v4315, 16
    %v4507 = vpop.permute.xlu0 %4506
    %vm4572 = vcmask 261248
    %4573 = vst.msk [vmem:[#allocation3] sm:$0xff] %vm4572, %v4381
    %4574 = vst.msk [vmem:[#allocation3 + $0x10] sm:$0xff] %vm4572, %v4383
    %4575 = vst.msk [vmem:[#allocation3 + $0x20] sm:$0xff] %vm4572, %v4385
    %4576 = vst.msk [vmem:[#allocation3 + $0x30] sm:$0xff] %vm4572, %v4387
    %4577 = vst.msk [vmem:[#allocation3 + $0x40] sm:$0xff] %vm4572, %v4389
    %4578 = vst.msk [vmem:[#allocation3 + $0x50] sm:$0xff] %vm4572, %v4391
    %4579 = vst.msk [vmem:[#allocation3 + $0x60] sm:$0xff] %vm4572, %v4393
    %4580 = vst.msk [vmem:[#allocation3 + $0x70] sm:$0xff] %vm4572, %v4395
    %4581 = vst.msk [vmem:[#allocation3 + $0x80] sm:$0xff] %vm4572, %v4397
    %4582 = vst.msk [vmem:[#allocation3 + $0x90] sm:$0xff] %vm4572, %v4399
    %4583 = vst.msk [vmem:[#allocation3 + $0xa0] sm:$0xff] %vm4572, %v4401
    %4584 = vst.msk [vmem:[#allocation3 + $0xb0] sm:$0xff] %vm4572, %v4403
    %4585 = vst.msk [vmem:[#allocation3 + $0xc0] sm:$0xff] %vm4572, %v4405
    %4586 = vst.msk [vmem:[#allocation3 + $0xd0] sm:$0xff] %vm4572, %v4407
    %4587 = vst.msk [vmem:[#allocation3 + $0xe0] sm:$0xff] %vm4572, %v4409
    %4588 = vst.msk [vmem:[#allocation3 + $0xf0] sm:$0xff] %vm4572, %v4411
    %4589 = vst.msk [vmem:[#allocation3 + $0x100] sm:$0xff] %vm4572, %v4413
    %4590 = vst.msk [vmem:[#allocation3 + $0x110] sm:$0xff] %vm4572, %v4415
    %4591 = vst.msk [vmem:[#allocation3 + $0x120] sm:$0xff] %vm4572, %v4417
    %4592 = vst.msk [vmem:[#allocation3 + $0x130] sm:$0xff] %vm4572, %v4419
    %4593 = vst.msk [vmem:[#allocation3 + $0x140] sm:$0xff] %vm4572, %v4421
    %4594 = vst.msk [vmem:[#allocation3 + $0x150] sm:$0xff] %vm4572, %v4423
    %4595 = vst.msk [vmem:[#allocation3 + $0x160] sm:$0xff] %vm4572, %v4425
    %4596 = vst.msk [vmem:[#allocation3 + $0x170] sm:$0xff] %vm4572, %v4427
    %4597 = vst.msk [vmem:[#allocation3 + $0x180] sm:$0xff] %vm4572, %v4429
    %4598 = vst.msk [vmem:[#allocation3 + $0x190] sm:$0xff] %vm4572, %v4431
    %4599 = vst.msk [vmem:[#allocation3 + $0x1a0] sm:$0xff] %vm4572, %v4433
    %4600 = vst.msk [vmem:[#allocation3 + $0x1b0] sm:$0xff] %vm4572, %v4435
    %4601 = vst.msk [vmem:[#allocation3 + $0x1c0] sm:$0xff] %vm4572, %v4437
    %4602 = vst.msk [vmem:[#allocation3 + $0x1d0] sm:$0xff] %vm4572, %v4439
    %4603 = vst.msk [vmem:[#allocation3 + $0x1e0] sm:$0xff] %vm4572, %v4441
    %4604 = vst.msk [vmem:[#allocation3 + $0x1f0] sm:$0xff] %vm4572, %v4443
    %4605 = vst.msk [vmem:[#allocation3 + $0x200] sm:$0xff] %vm4572, %v4445
    %4606 = vst.msk [vmem:[#allocation3 + $0x210] sm:$0xff] %vm4572, %v4447
    %4607 = vst.msk [vmem:[#allocation3 + $0x220] sm:$0xff] %vm4572, %v4449
    %4608 = vst.msk [vmem:[#allocation3 + $0x230] sm:$0xff] %vm4572, %v4451
    %4609 = vst.msk [vmem:[#allocation3 + $0x240] sm:$0xff] %vm4572, %v4453
    %4610 = vst.msk [vmem:[#allocation3 + $0x250] sm:$0xff] %vm4572, %v4455
    %4611 = vst.msk [vmem:[#allocation3 + $0x260] sm:$0xff] %vm4572, %v4457
    %4612 = vst.msk [vmem:[#allocation3 + $0x270] sm:$0xff] %vm4572, %v4459
    %4613 = vst.msk [vmem:[#allocation3 + $0x280] sm:$0xff] %vm4572, %v4461
    %4614 = vst.msk [vmem:[#allocation3 + $0x290] sm:$0xff] %vm4572, %v4463
    %4615 = vst.msk [vmem:[#allocation3 + $0x2a0] sm:$0xff] %vm4572, %v4465
    %4616 = vst.msk [vmem:[#allocation3 + $0x2b0] sm:$0xff] %vm4572, %v4467
    %4617 = vst.msk [vmem:[#allocation3 + $0x2c0] sm:$0xff] %vm4572, %v4469
    %4618 = vst.msk [vmem:[#allocation3 + $0x2d0] sm:$0xff] %vm4572, %v4471
    %4619 = vst.msk [vmem:[#allocation3 + $0x2e0] sm:$0xff] %vm4572, %v4473
    %4620 = vst.msk [vmem:[#allocation3 + $0x2f0] sm:$0xff] %vm4572, %v4475
    %4621 = vst.msk [vmem:[#allocation3 + $0x300] sm:$0xff] %vm4572, %v4477
    %4622 = vst.msk [vmem:[#allocation3 + $0x310] sm:$0xff] %vm4572, %v4479
    %4623 = vst.msk [vmem:[#allocation3 + $0x320] sm:$0xff] %vm4572, %v4481
    %4624 = vst.msk [vmem:[#allocation3 + $0x330] sm:$0xff] %vm4572, %v4483
    %4625 = vst.msk [vmem:[#allocation3 + $0x340] sm:$0xff] %vm4572, %v4485
    %4626 = vst.msk [vmem:[#allocation3 + $0x350] sm:$0xff] %vm4572, %v4487
    %4627 = vst.msk [vmem:[#allocation3 + $0x360] sm:$0xff] %vm4572, %v4489
    %4628 = vst.msk [vmem:[#allocation3 + $0x370] sm:$0xff] %vm4572, %v4491
    %4629 = vst.msk [vmem:[#allocation3 + $0x380] sm:$0xff] %vm4572, %v4493
    %4630 = vst.msk [vmem:[#allocation3 + $0x390] sm:$0xff] %vm4572, %v4495
    %4631 = vst.msk [vmem:[#allocation3 + $0x3a0] sm:$0xff] %vm4572, %v4497
    %4632 = vst.msk [vmem:[#allocation3 + $0x3b0] sm:$0xff] %vm4572, %v4499
    %4633 = vst.msk [vmem:[#allocation3 + $0x3c0] sm:$0xff] %vm4572, %v4501
    %4634 = vst.msk [vmem:[#allocation3 + $0x3d0] sm:$0xff] %vm4572, %v4503
    %4635 = vst.msk [vmem:[#allocation3 + $0x3e0] sm:$0xff] %vm4572, %v4505
    %4636 = vst.msk [vmem:[#allocation3 + $0x3f0] sm:$0xff] %vm4572, %v4507
    %v4637 = vld [vmem:[#allocation2 + $0x2] sm:$0xff]
    %v4638 = vld [vmem:[#allocation2 + $0xa] sm:$0xff]
    %v4639 = vld [vmem:[#allocation2 + $0x1a] sm:$0xff]
    %v4640 = vld [vmem:[#allocation2 + $0x22] sm:$0xff]
    %v4641 = vld [vmem:[#allocation2 + $0x32] sm:$0xff]
    %v4642 = vld [vmem:[#allocation2 + $0x3a] sm:$0xff]
    %v4643 = vld [vmem:[#allocation2 + $0x4a] sm:$0xff]
    %v4644 = vld [vmem:[#allocation2 + $0x52] sm:$0xff]
    %v4645 = vld [vmem:[#allocation2 + $0x62] sm:$0xff]
    %v4646 = vld [vmem:[#allocation2 + $0x6a] sm:$0xff]
    %v4647 = vld [vmem:[#allocation2 + $0x7a] sm:$0xff]
    %v4648 = vld [vmem:[#allocation2 + $0x82] sm:$0xff]
    %v4649 = vld [vmem:[#allocation2 + $0x92] sm:$0xff]
    %v4650 = vld [vmem:[#allocation2 + $0x9a] sm:$0xff]
    %v4651 = vld [vmem:[#allocation2 + $0xaa] sm:$0xff]
    %v4652 = vld [vmem:[#allocation2 + $0xb2] sm:$0xff]
    %v4653 = vld [vmem:[#allocation2 + $0xc2] sm:$0xff]
    %v4654 = vld [vmem:[#allocation2 + $0xca] sm:$0xff]
    %v4655 = vld [vmem:[#allocation2 + $0xda] sm:$0xff]
    %v4656 = vld [vmem:[#allocation2 + $0xe2] sm:$0xff]
    %v4657 = vld [vmem:[#allocation2 + $0xf2] sm:$0xff]
    %v4658 = vld [vmem:[#allocation2 + $0xfa] sm:$0xff]
    %v4659 = vld [vmem:[#allocation2 + $0x10a] sm:$0xff]
    %v4660 = vld [vmem:[#allocation2 + $0x112] sm:$0xff]
    %v4661 = vld [vmem:[#allocation2 + $0x122] sm:$0xff]
    %v4662 = vld [vmem:[#allocation2 + $0x12a] sm:$0xff]
    %v4663 = vld [vmem:[#allocation2 + $0x13a] sm:$0xff]
    %v4664 = vld [vmem:[#allocation2 + $0x142] sm:$0xff]
    %v4665 = vld [vmem:[#allocation2 + $0x152] sm:$0xff]
    %v4666 = vld [vmem:[#allocation2 + $0x15a] sm:$0xff]
    %v4667 = vld [vmem:[#allocation2 + $0x16a] sm:$0xff]
    %v4668 = vld [vmem:[#allocation2 + $0x172] sm:$0xff]
    %v4669 = vld [vmem:[#allocation2 + $0x1b2] sm:$0xff]
    %v4670 = vld [vmem:[#allocation2 + $0x1ba] sm:$0xff]
    %v4671 = vld [vmem:[#allocation2 + $0x1ca] sm:$0xff]
    %v4672 = vld [vmem:[#allocation2 + $0x1d2] sm:$0xff]
    %v4673 = vld [vmem:[#allocation2 + $0x1e2] sm:$0xff]
    %v4674 = vld [vmem:[#allocation2 + $0x1ea] sm:$0xff]
    %v4675 = vld [vmem:[#allocation2 + $0x1fa] sm:$0xff]
    %v4676 = vld [vmem:[#allocation2 + $0x202] sm:$0xff]
    %v4677 = vld [vmem:[#allocation2 + $0x212] sm:$0xff]
    %v4678 = vld [vmem:[#allocation2 + $0x21a] sm:$0xff]
    %v4679 = vld [vmem:[#allocation2 + $0x22a] sm:$0xff]
    %v4680 = vld [vmem:[#allocation2 + $0x232] sm:$0xff]
    %v4681 = vld [vmem:[#allocation2 + $0x242] sm:$0xff]
    %v4682 = vld [vmem:[#allocation2 + $0x24a] sm:$0xff]
    %v4683 = vld [vmem:[#allocation2 + $0x25a] sm:$0xff]
    %v4684 = vld [vmem:[#allocation2 + $0x262] sm:$0xff]
    %v4685 = vld [vmem:[#allocation2 + $0x272] sm:$0xff]
    %v4686 = vld [vmem:[#allocation2 + $0x27a] sm:$0xff]
    %v4687 = vld [vmem:[#allocation2 + $0x28a] sm:$0xff]
    %v4688 = vld [vmem:[#allocation2 + $0x292] sm:$0xff]
    %v4689 = vld [vmem:[#allocation2 + $0x2a2] sm:$0xff]
    %v4690 = vld [vmem:[#allocation2 + $0x2aa] sm:$0xff]
    %v4691 = vld [vmem:[#allocation2 + $0x2ba] sm:$0xff]
    %v4692 = vld [vmem:[#allocation2 + $0x2c2] sm:$0xff]
    %v4693 = vld [vmem:[#allocation2 + $0x2d2] sm:$0xff]
    %v4694 = vld [vmem:[#allocation2 + $0x2da] sm:$0xff]
    %v4695 = vld [vmem:[#allocation2 + $0x2ea] sm:$0xff]
    %v4696 = vld [vmem:[#allocation2 + $0x2f2] sm:$0xff]
    %v4697 = vld [vmem:[#allocation2 + $0x302] sm:$0xff]
    %v4698 = vld [vmem:[#allocation2 + $0x30a] sm:$0xff]
    %v4699 = vld [vmem:[#allocation2 + $0x31a] sm:$0xff]
    %v4700 = vld [vmem:[#allocation2 + $0x322] sm:$0xff]
    %4765 = vrot.lane.b32.xlu0 %v4637, 32
    %v4766 = vpop.permute.xlu0 %4765
    %4767 = vrot.lane.b32.xlu0 %v4638, 32
    %v4768 = vpop.permute.xlu0 %4767
    %4769 = vrot.lane.b32.xlu0 %v4639, 32
    %v4770 = vpop.permute.xlu0 %4769
    %4771 = vrot.lane.b32.xlu0 %v4640, 32
    %v4772 = vpop.permute.xlu0 %4771
    %4773 = vrot.lane.b32.xlu0 %v4641, 32
    %v4774 = vpop.permute.xlu0 %4773
    %4775 = vrot.lane.b32.xlu0 %v4642, 32
    %v4776 = vpop.permute.xlu0 %4775
    %4777 = vrot.lane.b32.xlu0 %v4643, 32
    %v4778 = vpop.permute.xlu0 %4777
    %4779 = vrot.lane.b32.xlu0 %v4644, 32
    %v4780 = vpop.permute.xlu0 %4779
    %4781 = vrot.lane.b32.xlu0 %v4645, 32
    %v4782 = vpop.permute.xlu0 %4781
    %4783 = vrot.lane.b32.xlu0 %v4646, 32
    %v4784 = vpop.permute.xlu0 %4783
    %4785 = vrot.lane.b32.xlu0 %v4647, 32
    %v4786 = vpop.permute.xlu0 %4785
    %4787 = vrot.lane.b32.xlu0 %v4648, 32
    %v4788 = vpop.permute.xlu0 %4787
    %4789 = vrot.lane.b32.xlu0 %v4649, 32
    %v4790 = vpop.permute.xlu0 %4789
    %4791 = vrot.lane.b32.xlu0 %v4650, 32
    %v4792 = vpop.permute.xlu0 %4791
    %4793 = vrot.lane.b32.xlu0 %v4651, 32
    %v4794 = vpop.permute.xlu0 %4793
    %4795 = vrot.lane.b32.xlu0 %v4652, 32
    %v4796 = vpop.permute.xlu0 %4795
    %4797 = vrot.lane.b32.xlu0 %v4653, 32
    %v4798 = vpop.permute.xlu0 %4797
    %4799 = vrot.lane.b32.xlu0 %v4654, 32
    %v4800 = vpop.permute.xlu0 %4799
    %4801 = vrot.lane.b32.xlu0 %v4655, 32
    %v4802 = vpop.permute.xlu0 %4801
    %4803 = vrot.lane.b32.xlu0 %v4656, 32
    %v4804 = vpop.permute.xlu0 %4803
    %4805 = vrot.lane.b32.xlu0 %v4657, 32
    %v4806 = vpop.permute.xlu0 %4805
    %4807 = vrot.lane.b32.xlu0 %v4658, 32
    %v4808 = vpop.permute.xlu0 %4807
    %4809 = vrot.lane.b32.xlu0 %v4659, 32
    %v4810 = vpop.permute.xlu0 %4809
    %4811 = vrot.lane.b32.xlu0 %v4660, 32
    %v4812 = vpop.permute.xlu0 %4811
    %4813 = vrot.lane.b32.xlu0 %v4661, 32
    %v4814 = vpop.permute.xlu0 %4813
    %4815 = vrot.lane.b32.xlu0 %v4662, 32
    %v4816 = vpop.permute.xlu0 %4815
    %4817 = vrot.lane.b32.xlu0 %v4663, 32
    %v4818 = vpop.permute.xlu0 %4817
    %4819 = vrot.lane.b32.xlu0 %v4664, 32
    %v4820 = vpop.permute.xlu0 %4819
    %4821 = vrot.lane.b32.xlu0 %v4665, 32
    %v4822 = vpop.permute.xlu0 %4821
    %4823 = vrot.lane.b32.xlu0 %v4666, 32
    %v4824 = vpop.permute.xlu0 %4823
    %4825 = vrot.lane.b32.xlu0 %v4667, 32
    %v4826 = vpop.permute.xlu0 %4825
    %4827 = vrot.lane.b32.xlu0 %v4668, 32
    %v4828 = vpop.permute.xlu0 %4827
    %4829 = vrot.lane.b32.xlu0 %v4669, 32
    %v4830 = vpop.permute.xlu0 %4829
    %4831 = vrot.lane.b32.xlu0 %v4670, 32
    %v4832 = vpop.permute.xlu0 %4831
    %4833 = vrot.lane.b32.xlu0 %v4671, 32
    %v4834 = vpop.permute.xlu0 %4833
    %4835 = vrot.lane.b32.xlu0 %v4672, 32
    %v4836 = vpop.permute.xlu0 %4835
    %4837 = vrot.lane.b32.xlu0 %v4673, 32
    %v4838 = vpop.permute.xlu0 %4837
    %4839 = vrot.lane.b32.xlu0 %v4674, 32
    %v4840 = vpop.permute.xlu0 %4839
    %4841 = vrot.lane.b32.xlu0 %v4675, 32
    %v4842 = vpop.permute.xlu0 %4841
    %4843 = vrot.lane.b32.xlu0 %v4676, 32
    %v4844 = vpop.permute.xlu0 %4843
    %4845 = vrot.lane.b32.xlu0 %v4677, 32
    %v4846 = vpop.permute.xlu0 %4845
    %4847 = vrot.lane.b32.xlu0 %v4678, 32
    %v4848 = vpop.permute.xlu0 %4847
    %4849 = vrot.lane.b32.xlu0 %v4679, 32
    %v4850 = vpop.permute.xlu0 %4849
    %4851 = vrot.lane.b32.xlu0 %v4680, 32
    %v4852 = vpop.permute.xlu0 %4851
    %4853 = vrot.lane.b32.xlu0 %v4681, 32
    %v4854 = vpop.permute.xlu0 %4853
    %4855 = vrot.lane.b32.xlu0 %v4682, 32
    %v4856 = vpop.permute.xlu0 %4855
    %4857 = vrot.lane.b32.xlu0 %v4683, 32
    %v4858 = vpop.permute.xlu0 %4857
    %4859 = vrot.lane.b32.xlu0 %v4684, 32
    %v4860 = vpop.permute.xlu0 %4859
    %4861 = vrot.lane.b32.xlu0 %v4685, 32
    %v4862 = vpop.permute.xlu0 %4861
    %4863 = vrot.lane.b32.xlu0 %v4686, 32
    %v4864 = vpop.permute.xlu0 %4863
    %4865 = vrot.lane.b32.xlu0 %v4687, 32
    %v4866 = vpop.permute.xlu0 %4865
    %4867 = vrot.lane.b32.xlu0 %v4688, 32
    %v4868 = vpop.permute.xlu0 %4867
    %4869 = vrot.lane.b32.xlu0 %v4689, 32
    %v4870 = vpop.permute.xlu0 %4869
    %4871 = vrot.lane.b32.xlu0 %v4690, 32
    %v4872 = vpop.permute.xlu0 %4871
    %4873 = vrot.lane.b32.xlu0 %v4691, 32
    %v4874 = vpop.permute.xlu0 %4873
    %4875 = vrot.lane.b32.xlu0 %v4692, 32
    %v4876 = vpop.permute.xlu0 %4875
    %4877 = vrot.lane.b32.xlu0 %v4693, 32
    %v4878 = vpop.permute.xlu0 %4877
    %4879 = vrot.lane.b32.xlu0 %v4694, 32
    %v4880 = vpop.permute.xlu0 %4879
    %4881 = vrot.lane.b32.xlu0 %v4695, 32
    %v4882 = vpop.permute.xlu0 %4881
    %4883 = vrot.lane.b32.xlu0 %v4696, 32
    %v4884 = vpop.permute.xlu0 %4883
    %4885 = vrot.lane.b32.xlu0 %v4697, 32
    %v4886 = vpop.permute.xlu0 %4885
    %4887 = vrot.lane.b32.xlu0 %v4698, 32
    %v4888 = vpop.permute.xlu0 %4887
    %4889 = vrot.lane.b32.xlu0 %v4699, 32
    %v4890 = vpop.permute.xlu0 %4889
    %4891 = vrot.lane.b32.xlu0 %v4700, 32
    %v4892 = vpop.permute.xlu0 %4891
    %vm4957 = vcmask 392448
    %4958 = vst.msk [vmem:[#allocation3] sm:$0xff] %vm4957, %v4766
    %4959 = vst.msk [vmem:[#allocation3 + $0x10] sm:$0xff] %vm4957, %v4768
    %4960 = vst.msk [vmem:[#allocation3 + $0x20] sm:$0xff] %vm4957, %v4770
    %4961 = vst.msk [vmem:[#allocation3 + $0x30] sm:$0xff] %vm4957, %v4772
    %4962 = vst.msk [vmem:[#allocation3 + $0x40] sm:$0xff] %vm4957, %v4774
    %4963 = vst.msk [vmem:[#allocation3 + $0x50] sm:$0xff] %vm4957, %v4776
    %4964 = vst.msk [vmem:[#allocation3 + $0x60] sm:$0xff] %vm4957, %v4778
    %4965 = vst.msk [vmem:[#allocation3 + $0x70] sm:$0xff] %vm4957, %v4780
    %4966 = vst.msk [vmem:[#allocation3 + $0x80] sm:$0xff] %vm4957, %v4782
    %4967 = vst.msk [vmem:[#allocation3 + $0x90] sm:$0xff] %vm4957, %v4784
    %4968 = vst.msk [vmem:[#allocation3 + $0xa0] sm:$0xff] %vm4957, %v4786
    %4969 = vst.msk [vmem:[#allocation3 + $0xb0] sm:$0xff] %vm4957, %v4788
    %4970 = vst.msk [vmem:[#allocation3 + $0xc0] sm:$0xff] %vm4957, %v4790
    %4971 = vst.msk [vmem:[#allocation3 + $0xd0] sm:$0xff] %vm4957, %v4792
    %4972 = vst.msk [vmem:[#allocation3 + $0xe0] sm:$0xff] %vm4957, %v4794
    %4973 = vst.msk [vmem:[#allocation3 + $0xf0] sm:$0xff] %vm4957, %v4796
    %4974 = vst.msk [vmem:[#allocation3 + $0x100] sm:$0xff] %vm4957, %v4798
    %4975 = vst.msk [vmem:[#allocation3 + $0x110] sm:$0xff] %vm4957, %v4800
    %4976 = vst.msk [vmem:[#allocation3 + $0x120] sm:$0xff] %vm4957, %v4802
    %4977 = vst.msk [vmem:[#allocation3 + $0x130] sm:$0xff] %vm4957, %v4804
    %4978 = vst.msk [vmem:[#allocation3 + $0x140] sm:$0xff] %vm4957, %v4806
    %4979 = vst.msk [vmem:[#allocation3 + $0x150] sm:$0xff] %vm4957, %v4808
    %4980 = vst.msk [vmem:[#allocation3 + $0x160] sm:$0xff] %vm4957, %v4810
    %4981 = vst.msk [vmem:[#allocation3 + $0x170] sm:$0xff] %vm4957, %v4812
    %4982 = vst.msk [vmem:[#allocation3 + $0x180] sm:$0xff] %vm4957, %v4814
    %4983 = vst.msk [vmem:[#allocation3 + $0x190] sm:$0xff] %vm4957, %v4816
    %4984 = vst.msk [vmem:[#allocation3 + $0x1a0] sm:$0xff] %vm4957, %v4818
    %4985 = vst.msk [vmem:[#allocation3 + $0x1b0] sm:$0xff] %vm4957, %v4820
    %4986 = vst.msk [vmem:[#allocation3 + $0x1c0] sm:$0xff] %vm4957, %v4822
    %4987 = vst.msk [vmem:[#allocation3 + $0x1d0] sm:$0xff] %vm4957, %v4824
    %4988 = vst.msk [vmem:[#allocation3 + $0x1e0] sm:$0xff] %vm4957, %v4826
    %4989 = vst.msk [vmem:[#allocation3 + $0x1f0] sm:$0xff] %vm4957, %v4828
    %4990 = vst.msk [vmem:[#allocation3 + $0x200] sm:$0xff] %vm4957, %v4830
    %4991 = vst.msk [vmem:[#allocation3 + $0x210] sm:$0xff] %vm4957, %v4832
    %4992 = vst.msk [vmem:[#allocation3 + $0x220] sm:$0xff] %vm4957, %v4834
    %4993 = vst.msk [vmem:[#allocation3 + $0x230] sm:$0xff] %vm4957, %v4836
    %4994 = vst.msk [vmem:[#allocation3 + $0x240] sm:$0xff] %vm4957, %v4838
    %4995 = vst.msk [vmem:[#allocation3 + $0x250] sm:$0xff] %vm4957, %v4840
    %4996 = vst.msk [vmem:[#allocation3 + $0x260] sm:$0xff] %vm4957, %v4842
    %4997 = vst.msk [vmem:[#allocation3 + $0x270] sm:$0xff] %vm4957, %v4844
    %4998 = vst.msk [vmem:[#allocation3 + $0x280] sm:$0xff] %vm4957, %v4846
    %4999 = vst.msk [vmem:[#allocation3 + $0x290] sm:$0xff] %vm4957, %v4848
    %5000 = vst.msk [vmem:[#allocation3 + $0x2a0] sm:$0xff] %vm4957, %v4850
    %5001 = vst.msk [vmem:[#allocation3 + $0x2b0] sm:$0xff] %vm4957, %v4852
    %5002 = vst.msk [vmem:[#allocation3 + $0x2c0] sm:$0xff] %vm4957, %v4854
    %5003 = vst.msk [vmem:[#allocation3 + $0x2d0] sm:$0xff] %vm4957, %v4856
    %5004 = vst.msk [vmem:[#allocation3 + $0x2e0] sm:$0xff] %vm4957, %v4858
    %5005 = vst.msk [vmem:[#allocation3 + $0x2f0] sm:$0xff] %vm4957, %v4860
    %5006 = vst.msk [vmem:[#allocation3 + $0x300] sm:$0xff] %vm4957, %v4862
    %5007 = vst.msk [vmem:[#allocation3 + $0x310] sm:$0xff] %vm4957, %v4864
    %5008 = vst.msk [vmem:[#allocation3 + $0x320] sm:$0xff] %vm4957, %v4866
    %5009 = vst.msk [vmem:[#allocation3 + $0x330] sm:$0xff] %vm4957, %v4868
    %5010 = vst.msk [vmem:[#allocation3 + $0x340] sm:$0xff] %vm4957, %v4870
    %5011 = vst.msk [vmem:[#allocation3 + $0x350] sm:$0xff] %vm4957, %v4872
    %5012 = vst.msk [vmem:[#allocation3 + $0x360] sm:$0xff] %vm4957, %v4874
    %5013 = vst.msk [vmem:[#allocation3 + $0x370] sm:$0xff] %vm4957, %v4876
    %5014 = vst.msk [vmem:[#allocation3 + $0x380] sm:$0xff] %vm4957, %v4878
    %5015 = vst.msk [vmem:[#allocation3 + $0x390] sm:$0xff] %vm4957, %v4880
    %5016 = vst.msk [vmem:[#allocation3 + $0x3a0] sm:$0xff] %vm4957, %v4882
    %5017 = vst.msk [vmem:[#allocation3 + $0x3b0] sm:$0xff] %vm4957, %v4884
    %5018 = vst.msk [vmem:[#allocation3 + $0x3c0] sm:$0xff] %vm4957, %v4886
    %5019 = vst.msk [vmem:[#allocation3 + $0x3d0] sm:$0xff] %vm4957, %v4888
    %5020 = vst.msk [vmem:[#allocation3 + $0x3e0] sm:$0xff] %vm4957, %v4890
    %5021 = vst.msk [vmem:[#allocation3 + $0x3f0] sm:$0xff] %vm4957, %v4892
    %v5022 = vld [vmem:[%s208] sm:$0xff]
    %v5023 = vld [vmem:[%s208 + $0x8] sm:$0xff]
    %v5024 = vld [vmem:[%s208 + $0x18] sm:$0xff]
    %v5025 = vld [vmem:[%s208 + $0x20] sm:$0xff]
    %v5026 = vld [vmem:[%s208 + $0x30] sm:$0xff]
    %v5027 = vld [vmem:[%s208 + $0x38] sm:$0xff]
    %v5028 = vld [vmem:[%s208 + $0x48] sm:$0xff]
    %v5029 = vld [vmem:[%s208 + $0x50] sm:$0xff]
    %v5030 = vld [vmem:[%s208 + $0x60] sm:$0xff]
    %v5031 = vld [vmem:[%s208 + $0x68] sm:$0xff]
    %v5032 = vld [vmem:[%s208 + $0x78] sm:$0xff]
    %v5033 = vld [vmem:[%s208 + $0x80] sm:$0xff]
    %v5034 = vld [vmem:[%s208 + $0x90] sm:$0xff]
    %v5035 = vld [vmem:[%s208 + $0x98] sm:$0xff]
    %v5036 = vld [vmem:[%s208 + $0xa8] sm:$0xff]
    %v5037 = vld [vmem:[%s208 + $0xb0] sm:$0xff]
    %v5038 = vld [vmem:[%s208 + $0xc0] sm:$0xff]
    %v5039 = vld [vmem:[%s208 + $0xc8] sm:$0xff]
    %v5040 = vld [vmem:[%s208 + $0xd8] sm:$0xff]
    %v5041 = vld [vmem:[%s208 + $0xe0] sm:$0xff]
    %v5042 = vld [vmem:[%s208 + $0xf0] sm:$0xff]
    %v5043 = vld [vmem:[%s208 + $0xf8] sm:$0xff]
    %v5044 = vld [vmem:[%s208 + $0x108] sm:$0xff]
    %v5045 = vld [vmem:[%s208 + $0x110] sm:$0xff]
    %v5046 = vld [vmem:[%s208 + $0x120] sm:$0xff]
    %v5047 = vld [vmem:[%s208 + $0x128] sm:$0xff]
    %v5048 = vld [vmem:[%s208 + $0x138] sm:$0xff]
    %v5049 = vld [vmem:[%s208 + $0x140] sm:$0xff]
    %v5050 = vld [vmem:[%s208 + $0x150] sm:$0xff]
    %v5051 = vld [vmem:[%s208 + $0x158] sm:$0xff]
    %v5052 = vld [vmem:[%s208 + $0x168] sm:$0xff]
    %v5053 = vld [vmem:[%s208 + $0x170] sm:$0xff]
    %v5054 = vld [vmem:[%s208 + $0x1b0] sm:$0xff]
    %v5055 = vld [vmem:[%s208 + $0x1b8] sm:$0xff]
    %v5056 = vld [vmem:[%s208 + $0x1c8] sm:$0xff]
    %v5057 = vld [vmem:[%s208 + $0x1d0] sm:$0xff]
    %v5058 = vld [vmem:[%s208 + $0x1e0] sm:$0xff]
    %v5059 = vld [vmem:[%s208 + $0x1e8] sm:$0xff]
    %v5060 = vld [vmem:[%s208 + $0x1f8] sm:$0xff]
    %v5061 = vld [vmem:[%s208 + $0x200] sm:$0xff]
    %v5062 = vld [vmem:[%s208 + $0x210] sm:$0xff]
    %v5063 = vld [vmem:[%s208 + $0x218] sm:$0xff]
    %v5064 = vld [vmem:[%s208 + $0x228] sm:$0xff]
    %v5065 = vld [vmem:[%s208 + $0x230] sm:$0xff]
    %v5066 = vld [vmem:[%s208 + $0x240] sm:$0xff]
    %v5067 = vld [vmem:[%s208 + $0x248] sm:$0xff]
    %v5068 = vld [vmem:[%s208 + $0x258] sm:$0xff]
    %v5069 = vld [vmem:[%s208 + $0x260] sm:$0xff]
    %v5070 = vld [vmem:[%s208 + $0x270] sm:$0xff]
    %v5071 = vld [vmem:[%s208 + $0x278] sm:$0xff]
    %v5072 = vld [vmem:[%s208 + $0x288] sm:$0xff]
    %v5073 = vld [vmem:[%s208 + $0x290] sm:$0xff]
    %v5074 = vld [vmem:[%s208 + $0x2a0] sm:$0xff]
    %v5075 = vld [vmem:[%s208 + $0x2a8] sm:$0xff]
    %v5076 = vld [vmem:[%s208 + $0x2b8] sm:$0xff]
    %v5077 = vld [vmem:[%s208 + $0x2c0] sm:$0xff]
    %v5078 = vld [vmem:[%s208 + $0x2d0] sm:$0xff]
    %v5079 = vld [vmem:[%s208 + $0x2d8] sm:$0xff]
    %v5080 = vld [vmem:[%s208 + $0x2e8] sm:$0xff]
    %v5081 = vld [vmem:[%s208 + $0x2f0] sm:$0xff]
    %v5082 = vld [vmem:[%s208 + $0x300] sm:$0xff]
    %v5083 = vld [vmem:[%s208 + $0x308] sm:$0xff]
    %v5084 = vld [vmem:[%s208 + $0x318] sm:$0xff]
    %v5085 = vld [vmem:[%s208 + $0x320] sm:$0xff]
    %5150 = vrot.lane.b32.xlu0 %v5022, 48
    %v5151 = vpop.permute.xlu0 %5150
    %5152 = vrot.lane.b32.xlu0 %v5023, 48
    %v5153 = vpop.permute.xlu0 %5152
    %5154 = vrot.lane.b32.xlu0 %v5024, 48
    %v5155 = vpop.permute.xlu0 %5154
    %5156 = vrot.lane.b32.xlu0 %v5025, 48
    %v5157 = vpop.permute.xlu0 %5156
    %5158 = vrot.lane.b32.xlu0 %v5026, 48
    %v5159 = vpop.permute.xlu0 %5158
    %5160 = vrot.lane.b32.xlu0 %v5027, 48
    %v5161 = vpop.permute.xlu0 %5160
    %5162 = vrot.lane.b32.xlu0 %v5028, 48
    %v5163 = vpop.permute.xlu0 %5162
    %5164 = vrot.lane.b32.xlu0 %v5029, 48
    %v5165 = vpop.permute.xlu0 %5164
    %5166 = vrot.lane.b32.xlu0 %v5030, 48
    %v5167 = vpop.permute.xlu0 %5166
    %5168 = vrot.lane.b32.xlu0 %v5031, 48
    %v5169 = vpop.permute.xlu0 %5168
    %5170 = vrot.lane.b32.xlu0 %v5032, 48
    %v5171 = vpop.permute.xlu0 %5170
    %5172 = vrot.lane.b32.xlu0 %v5033, 48
    %v5173 = vpop.permute.xlu0 %5172
    %5174 = vrot.lane.b32.xlu0 %v5034, 48
    %v5175 = vpop.permute.xlu0 %5174
    %5176 = vrot.lane.b32.xlu0 %v5035, 48
    %v5177 = vpop.permute.xlu0 %5176
    %5178 = vrot.lane.b32.xlu0 %v5036, 48
    %v5179 = vpop.permute.xlu0 %5178
    %5180 = vrot.lane.b32.xlu0 %v5037, 48
    %v5181 = vpop.permute.xlu0 %5180
    %5182 = vrot.lane.b32.xlu0 %v5038, 48
    %v5183 = vpop.permute.xlu0 %5182
    %5184 = vrot.lane.b32.xlu0 %v5039, 48
    %v5185 = vpop.permute.xlu0 %5184
    %5186 = vrot.lane.b32.xlu0 %v5040, 48
    %v5187 = vpop.permute.xlu0 %5186
    %5188 = vrot.lane.b32.xlu0 %v5041, 48
    %v5189 = vpop.permute.xlu0 %5188
    %5190 = vrot.lane.b32.xlu0 %v5042, 48
    %v5191 = vpop.permute.xlu0 %5190
    %5192 = vrot.lane.b32.xlu0 %v5043, 48
    %v5193 = vpop.permute.xlu0 %5192
    %5194 = vrot.lane.b32.xlu0 %v5044, 48
    %v5195 = vpop.permute.xlu0 %5194
    %5196 = vrot.lane.b32.xlu0 %v5045, 48
    %v5197 = vpop.permute.xlu0 %5196
    %5198 = vrot.lane.b32.xlu0 %v5046, 48
    %v5199 = vpop.permute.xlu0 %5198
    %5200 = vrot.lane.b32.xlu0 %v5047, 48
    %v5201 = vpop.permute.xlu0 %5200
    %5202 = vrot.lane.b32.xlu0 %v5048, 48
    %v5203 = vpop.permute.xlu0 %5202
    %5204 = vrot.lane.b32.xlu0 %v5049, 48
    %v5205 = vpop.permute.xlu0 %5204
    %5206 = vrot.lane.b32.xlu0 %v5050, 48
    %v5207 = vpop.permute.xlu0 %5206
    %5208 = vrot.lane.b32.xlu0 %v5051, 48
    %v5209 = vpop.permute.xlu0 %5208
    %5210 = vrot.lane.b32.xlu0 %v5052, 48
    %v5211 = vpop.permute.xlu0 %5210
    %5212 = vrot.lane.b32.xlu0 %v5053, 48
    %v5213 = vpop.permute.xlu0 %5212
    %5214 = vrot.lane.b32.xlu0 %v5054, 48
    %v5215 = vpop.permute.xlu0 %5214
    %5216 = vrot.lane.b32.xlu0 %v5055, 48
    %v5217 = vpop.permute.xlu0 %5216
    %5218 = vrot.lane.b32.xlu0 %v5056, 48
    %v5219 = vpop.permute.xlu0 %5218
    %5220 = vrot.lane.b32.xlu0 %v5057, 48
    %v5221 = vpop.permute.xlu0 %5220
    %5222 = vrot.lane.b32.xlu0 %v5058, 48
    %v5223 = vpop.permute.xlu0 %5222
    %5224 = vrot.lane.b32.xlu0 %v5059, 48
    %v5225 = vpop.permute.xlu0 %5224
    %5226 = vrot.lane.b32.xlu0 %v5060, 48
    %v5227 = vpop.permute.xlu0 %5226
    %5228 = vrot.lane.b32.xlu0 %v5061, 48
    %v5229 = vpop.permute.xlu0 %5228
    %5230 = vrot.lane.b32.xlu0 %v5062, 48
    %v5231 = vpop.permute.xlu0 %5230
    %5232 = vrot.lane.b32.xlu0 %v5063, 48
    %v5233 = vpop.permute.xlu0 %5232
    %5234 = vrot.lane.b32.xlu0 %v5064, 48
    %v5235 = vpop.permute.xlu0 %5234
    %5236 = vrot.lane.b32.xlu0 %v5065, 48
    %v5237 = vpop.permute.xlu0 %5236
    %5238 = vrot.lane.b32.xlu0 %v5066, 48
    %v5239 = vpop.permute.xlu0 %5238
    %5240 = vrot.lane.b32.xlu0 %v5067, 48
    %v5241 = vpop.permute.xlu0 %5240
    %5242 = vrot.lane.b32.xlu0 %v5068, 48
    %v5243 = vpop.permute.xlu0 %5242
    %5244 = vrot.lane.b32.xlu0 %v5069, 48
    %v5245 = vpop.permute.xlu0 %5244
    %5246 = vrot.lane.b32.xlu0 %v5070, 48
    %v5247 = vpop.permute.xlu0 %5246
    %5248 = vrot.lane.b32.xlu0 %v5071, 48
    %v5249 = vpop.permute.xlu0 %5248
    %5250 = vrot.lane.b32.xlu0 %v5072, 48
    %v5251 = vpop.permute.xlu0 %5250
    %5252 = vrot.lane.b32.xlu0 %v5073, 48
    %v5253 = vpop.permute.xlu0 %5252
    %5254 = vrot.lane.b32.xlu0 %v5074, 48
    %v5255 = vpop.permute.xlu0 %5254
    %5256 = vrot.lane.b32.xlu0 %v5075, 48
    %v5257 = vpop.permute.xlu0 %5256
    %5258 = vrot.lane.b32.xlu0 %v5076, 48
    %v5259 = vpop.permute.xlu0 %5258
    %5260 = vrot.lane.b32.xlu0 %v5077, 48
    %v5261 = vpop.permute.xlu0 %5260
    %5262 = vrot.lane.b32.xlu0 %v5078, 48
    %v5263 = vpop.permute.xlu0 %5262
    %5264 = vrot.lane.b32.xlu0 %v5079, 48
    %v5265 = vpop.permute.xlu0 %5264
    %5266 = vrot.lane.b32.xlu0 %v5080, 48
    %v5267 = vpop.permute.xlu0 %5266
    %5268 = vrot.lane.b32.xlu0 %v5081, 48
    %v5269 = vpop.permute.xlu0 %5268
    %5270 = vrot.lane.b32.xlu0 %v5082, 48
    %v5271 = vpop.permute.xlu0 %5270
    %5272 = vrot.lane.b32.xlu0 %v5083, 48
    %v5273 = vpop.permute.xlu0 %5272
    %5274 = vrot.lane.b32.xlu0 %v5084, 48
    %v5275 = vpop.permute.xlu0 %5274
    %5276 = vrot.lane.b32.xlu0 %v5085, 48
    %v5277 = vpop.permute.xlu0 %5276
    %vm5342 = vcmask 523648
    %5343 = vst.msk [vmem:[#allocation3] sm:$0xff] %vm5342, %v5151
    %5344 = vst.msk [vmem:[#allocation3 + $0x10] sm:$0xff] %vm5342, %v5153
    %5345 = vst.msk [vmem:[#allocation3 + $0x20] sm:$0xff] %vm5342, %v5155
    %5346 = vst.msk [vmem:[#allocation3 + $0x30] sm:$0xff] %vm5342, %v5157
    %5347 = vst.msk [vmem:[#allocation3 + $0x40] sm:$0xff] %vm5342, %v5159
    %5348 = vst.msk [vmem:[#allocation3 + $0x50] sm:$0xff] %vm5342, %v5161
    %5349 = vst.msk [vmem:[#allocation3 + $0x60] sm:$0xff] %vm5342, %v5163
    %5350 = vst.msk [vmem:[#allocation3 + $0x70] sm:$0xff] %vm5342, %v5165
    %5351 = vst.msk [vmem:[#allocation3 + $0x80] sm:$0xff] %vm5342, %v5167
    %5352 = vst.msk [vmem:[#allocation3 + $0x90] sm:$0xff] %vm5342, %v5169
    %5353 = vst.msk [vmem:[#allocation3 + $0xa0] sm:$0xff] %vm5342, %v5171
    %5354 = vst.msk [vmem:[#allocation3 + $0xb0] sm:$0xff] %vm5342, %v5173
    %5355 = vst.msk [vmem:[#allocation3 + $0xc0] sm:$0xff] %vm5342, %v5175
    %5356 = vst.msk [vmem:[#allocation3 + $0xd0] sm:$0xff] %vm5342, %v5177
    %5357 = vst.msk [vmem:[#allocation3 + $0xe0] sm:$0xff] %vm5342, %v5179
    %5358 = vst.msk [vmem:[#allocation3 + $0xf0] sm:$0xff] %vm5342, %v5181
    %5359 = vst.msk [vmem:[#allocation3 + $0x100] sm:$0xff] %vm5342, %v5183
    %5360 = vst.msk [vmem:[#allocation3 + $0x110] sm:$0xff] %vm5342, %v5185
    %5361 = vst.msk [vmem:[#allocation3 + $0x120] sm:$0xff] %vm5342, %v5187
    %5362 = vst.msk [vmem:[#allocation3 + $0x130] sm:$0xff] %vm5342, %v5189
    %5363 = vst.msk [vmem:[#allocation3 + $0x140] sm:$0xff] %vm5342, %v5191
    %5364 = vst.msk [vmem:[#allocation3 + $0x150] sm:$0xff] %vm5342, %v5193
    %5365 = vst.msk [vmem:[#allocation3 + $0x160] sm:$0xff] %vm5342, %v5195
    %5366 = vst.msk [vmem:[#allocation3 + $0x170] sm:$0xff] %vm5342, %v5197
    %5367 = vst.msk [vmem:[#allocation3 + $0x180] sm:$0xff] %vm5342, %v5199
    %5368 = vst.msk [vmem:[#allocation3 + $0x190] sm:$0xff] %vm5342, %v5201
    %5369 = vst.msk [vmem:[#allocation3 + $0x1a0] sm:$0xff] %vm5342, %v5203
    %5370 = vst.msk [vmem:[#allocation3 + $0x1b0] sm:$0xff] %vm5342, %v5205
    %5371 = vst.msk [vmem:[#allocation3 + $0x1c0] sm:$0xff] %vm5342, %v5207
    %5372 = vst.msk [vmem:[#allocation3 + $0x1d0] sm:$0xff] %vm5342, %v5209
    %5373 = vst.msk [vmem:[#allocation3 + $0x1e0] sm:$0xff] %vm5342, %v5211
    %5374 = vst.msk [vmem:[#allocation3 + $0x1f0] sm:$0xff] %vm5342, %v5213
    %5375 = vst.msk [vmem:[#allocation3 + $0x200] sm:$0xff] %vm5342, %v5215
    %5376 = vst.msk [vmem:[#allocation3 + $0x210] sm:$0xff] %vm5342, %v5217
    %5377 = vst.msk [vmem:[#allocation3 + $0x220] sm:$0xff] %vm5342, %v5219
    %5378 = vst.msk [vmem:[#allocation3 + $0x230] sm:$0xff] %vm5342, %v5221
    %5379 = vst.msk [vmem:[#allocation3 + $0x240] sm:$0xff] %vm5342, %v5223
    %5380 = vst.msk [vmem:[#allocation3 + $0x250] sm:$0xff] %vm5342, %v5225
    %5381 = vst.msk [vmem:[#allocation3 + $0x260] sm:$0xff] %vm5342, %v5227
    %5382 = vst.msk [vmem:[#allocation3 + $0x270] sm:$0xff] %vm5342, %v5229
    %5383 = vst.msk [vmem:[#allocation3 + $0x280] sm:$0xff] %vm5342, %v5231
    %5384 = vst.msk [vmem:[#allocation3 + $0x290] sm:$0xff] %vm5342, %v5233
    %5385 = vst.msk [vmem:[#allocation3 + $0x2a0] sm:$0xff] %vm5342, %v5235
    %5386 = vst.msk [vmem:[#allocation3 + $0x2b0] sm:$0xff] %vm5342, %v5237
    %5387 = vst.msk [vmem:[#allocation3 + $0x2c0] sm:$0xff] %vm5342, %v5239
    %5388 = vst.msk [vmem:[#allocation3 + $0x2d0] sm:$0xff] %vm5342, %v5241
    %5389 = vst.msk [vmem:[#allocation3 + $0x2e0] sm:$0xff] %vm5342, %v5243
    %5390 = vst.msk [vmem:[#allocation3 + $0x2f0] sm:$0xff] %vm5342, %v5245
    %5391 = vst.msk [vmem:[#allocation3 + $0x300] sm:$0xff] %vm5342, %v5247
    %5392 = vst.msk [vmem:[#allocation3 + $0x310] sm:$0xff] %vm5342, %v5249
    %5393 = vst.msk [vmem:[#allocation3 + $0x320] sm:$0xff] %vm5342, %v5251
    %5394 = vst.msk [vmem:[#allocation3 + $0x330] sm:$0xff] %vm5342, %v5253
    %5395 = vst.msk [vmem:[#allocation3 + $0x340] sm:$0xff] %vm5342, %v5255
    %5396 = vst.msk [vmem:[#allocation3 + $0x350] sm:$0xff] %vm5342, %v5257
    %5397 = vst.msk [vmem:[#allocation3 + $0x360] sm:$0xff] %vm5342, %v5259
    %5398 = vst.msk [vmem:[#allocation3 + $0x370] sm:$0xff] %vm5342, %v5261
    %5399 = vst.msk [vmem:[#allocation3 + $0x380] sm:$0xff] %vm5342, %v5263
    %5400 = vst.msk [vmem:[#allocation3 + $0x390] sm:$0xff] %vm5342, %v5265
    %5401 = vst.msk [vmem:[#allocation3 + $0x3a0] sm:$0xff] %vm5342, %v5267
    %5402 = vst.msk [vmem:[#allocation3 + $0x3b0] sm:$0xff] %vm5342, %v5269
    %5403 = vst.msk [vmem:[#allocation3 + $0x3c0] sm:$0xff] %vm5342, %v5271
    %5404 = vst.msk [vmem:[#allocation3 + $0x3d0] sm:$0xff] %vm5342, %v5273
    %5405 = vst.msk [vmem:[#allocation3 + $0x3e0] sm:$0xff] %vm5342, %v5275
    %5406 = vst.msk [vmem:[#allocation3 + $0x3f0] sm:$0xff] %vm5342, %v5277
    %v5407 = vld [vmem:[%s208 + $0x1] sm:$0xff]
    %v5408 = vld [vmem:[%s208 + $0x9] sm:$0xff]
    %v5409 = vld [vmem:[%s208 + $0x19] sm:$0xff]
    %v5410 = vld [vmem:[%s208 + $0x21] sm:$0xff]
    %v5411 = vld [vmem:[%s208 + $0x31] sm:$0xff]
    %v5412 = vld [vmem:[%s208 + $0x39] sm:$0xff]
    %v5413 = vld [vmem:[%s208 + $0x49] sm:$0xff]
    %v5414 = vld [vmem:[%s208 + $0x51] sm:$0xff]
    %v5415 = vld [vmem:[%s208 + $0x61] sm:$0xff]
    %v5416 = vld [vmem:[%s208 + $0x69] sm:$0xff]
    %v5417 = vld [vmem:[%s208 + $0x79] sm:$0xff]
    %v5418 = vld [vmem:[%s208 + $0x81] sm:$0xff]
    %v5419 = vld [vmem:[%s208 + $0x91] sm:$0xff]
    %v5420 = vld [vmem:[%s208 + $0x99] sm:$0xff]
    %v5421 = vld [vmem:[%s208 + $0xa9] sm:$0xff]
    %v5422 = vld [vmem:[%s208 + $0xb1] sm:$0xff]
    %v5423 = vld [vmem:[%s208 + $0xc1] sm:$0xff]
    %v5424 = vld [vmem:[%s208 + $0xc9] sm:$0xff]
    %v5425 = vld [vmem:[%s208 + $0xd9] sm:$0xff]
    %v5426 = vld [vmem:[%s208 + $0xe1] sm:$0xff]
    %v5427 = vld [vmem:[%s208 + $0xf1] sm:$0xff]
    %v5428 = vld [vmem:[%s208 + $0xf9] sm:$0xff]
    %v5429 = vld [vmem:[%s208 + $0x109] sm:$0xff]
    %v5430 = vld [vmem:[%s208 + $0x111] sm:$0xff]
    %v5431 = vld [vmem:[%s208 + $0x121] sm:$0xff]
    %v5432 = vld [vmem:[%s208 + $0x129] sm:$0xff]
    %v5433 = vld [vmem:[%s208 + $0x139] sm:$0xff]
    %v5434 = vld [vmem:[%s208 + $0x141] sm:$0xff]
    %v5435 = vld [vmem:[%s208 + $0x151] sm:$0xff]
    %v5436 = vld [vmem:[%s208 + $0x159] sm:$0xff]
    %v5437 = vld [vmem:[%s208 + $0x169] sm:$0xff]
    %v5438 = vld [vmem:[%s208 + $0x171] sm:$0xff]
    %v5439 = vld [vmem:[%s208 + $0x1b1] sm:$0xff]
    %v5440 = vld [vmem:[%s208 + $0x1b9] sm:$0xff]
    %v5441 = vld [vmem:[%s208 + $0x1c9] sm:$0xff]
    %v5442 = vld [vmem:[%s208 + $0x1d1] sm:$0xff]
    %v5443 = vld [vmem:[%s208 + $0x1e1] sm:$0xff]
    %v5444 = vld [vmem:[%s208 + $0x1e9] sm:$0xff]
    %v5445 = vld [vmem:[%s208 + $0x1f9] sm:$0xff]
    %v5446 = vld [vmem:[%s208 + $0x201] sm:$0xff]
    %v5447 = vld [vmem:[%s208 + $0x211] sm:$0xff]
    %v5448 = vld [vmem:[%s208 + $0x219] sm:$0xff]
    %v5449 = vld [vmem:[%s208 + $0x229] sm:$0xff]
    %v5450 = vld [vmem:[%s208 + $0x231] sm:$0xff]
    %v5451 = vld [vmem:[%s208 + $0x241] sm:$0xff]
    %v5452 = vld [vmem:[%s208 + $0x249] sm:$0xff]
    %v5453 = vld [vmem:[%s208 + $0x259] sm:$0xff]
    %v5454 = vld [vmem:[%s208 + $0x261] sm:$0xff]
    %v5455 = vld [vmem:[%s208 + $0x271] sm:$0xff]
    %v5456 = vld [vmem:[%s208 + $0x279] sm:$0xff]
    %v5457 = vld [vmem:[%s208 + $0x289] sm:$0xff]
    %v5458 = vld [vmem:[%s208 + $0x291] sm:$0xff]
    %v5459 = vld [vmem:[%s208 + $0x2a1] sm:$0xff]
    %v5460 = vld [vmem:[%s208 + $0x2a9] sm:$0xff]
    %v5461 = vld [vmem:[%s208 + $0x2b9] sm:$0xff]
    %v5462 = vld [vmem:[%s208 + $0x2c1] sm:$0xff]
    %v5463 = vld [vmem:[%s208 + $0x2d1] sm:$0xff]
    %v5464 = vld [vmem:[%s208 + $0x2d9] sm:$0xff]
    %v5465 = vld [vmem:[%s208 + $0x2e9] sm:$0xff]
    %v5466 = vld [vmem:[%s208 + $0x2f1] sm:$0xff]
    %v5467 = vld [vmem:[%s208 + $0x301] sm:$0xff]
    %v5468 = vld [vmem:[%s208 + $0x309] sm:$0xff]
    %v5469 = vld [vmem:[%s208 + $0x319] sm:$0xff]
    %v5470 = vld [vmem:[%s208 + $0x321] sm:$0xff]
    %5535 = vrot.lane.b32.xlu0 %v5407, 64
    %v5536 = vpop.permute.xlu0 %5535
    %5537 = vrot.lane.b32.xlu0 %v5408, 64
    %v5538 = vpop.permute.xlu0 %5537
    %5539 = vrot.lane.b32.xlu0 %v5409, 64
    %v5540 = vpop.permute.xlu0 %5539
    %5541 = vrot.lane.b32.xlu0 %v5410, 64
    %v5542 = vpop.permute.xlu0 %5541
    %5543 = vrot.lane.b32.xlu0 %v5411, 64
    %v5544 = vpop.permute.xlu0 %5543
    %5545 = vrot.lane.b32.xlu0 %v5412, 64
    %v5546 = vpop.permute.xlu0 %5545
    %5547 = vrot.lane.b32.xlu0 %v5413, 64
    %v5548 = vpop.permute.xlu0 %5547
    %5549 = vrot.lane.b32.xlu0 %v5414, 64
    %v5550 = vpop.permute.xlu0 %5549
    %5551 = vrot.lane.b32.xlu0 %v5415, 64
    %v5552 = vpop.permute.xlu0 %5551
    %5553 = vrot.lane.b32.xlu0 %v5416, 64
    %v5554 = vpop.permute.xlu0 %5553
    %5555 = vrot.lane.b32.xlu0 %v5417, 64
    %v5556 = vpop.permute.xlu0 %5555
    %5557 = vrot.lane.b32.xlu0 %v5418, 64
    %v5558 = vpop.permute.xlu0 %5557
    %5559 = vrot.lane.b32.xlu0 %v5419, 64
    %v5560 = vpop.permute.xlu0 %5559
    %5561 = vrot.lane.b32.xlu0 %v5420, 64
    %v5562 = vpop.permute.xlu0 %5561
    %5563 = vrot.lane.b32.xlu0 %v5421, 64
    %v5564 = vpop.permute.xlu0 %5563
    %5565 = vrot.lane.b32.xlu0 %v5422, 64
    %v5566 = vpop.permute.xlu0 %5565
    %5567 = vrot.lane.b32.xlu0 %v5423, 64
    %v5568 = vpop.permute.xlu0 %5567
    %5569 = vrot.lane.b32.xlu0 %v5424, 64
    %v5570 = vpop.permute.xlu0 %5569
    %5571 = vrot.lane.b32.xlu0 %v5425, 64
    %v5572 = vpop.permute.xlu0 %5571
    %5573 = vrot.lane.b32.xlu0 %v5426, 64
    %v5574 = vpop.permute.xlu0 %5573
    %5575 = vrot.lane.b32.xlu0 %v5427, 64
    %v5576 = vpop.permute.xlu0 %5575
    %5577 = vrot.lane.b32.xlu0 %v5428, 64
    %v5578 = vpop.permute.xlu0 %5577
    %5579 = vrot.lane.b32.xlu0 %v5429, 64
    %v5580 = vpop.permute.xlu0 %5579
    %5581 = vrot.lane.b32.xlu0 %v5430, 64
    %v5582 = vpop.permute.xlu0 %5581
    %5583 = vrot.lane.b32.xlu0 %v5431, 64
    %v5584 = vpop.permute.xlu0 %5583
    %5585 = vrot.lane.b32.xlu0 %v5432, 64
    %v5586 = vpop.permute.xlu0 %5585
    %5587 = vrot.lane.b32.xlu0 %v5433, 64
    %v5588 = vpop.permute.xlu0 %5587
    %5589 = vrot.lane.b32.xlu0 %v5434, 64
    %v5590 = vpop.permute.xlu0 %5589
    %5591 = vrot.lane.b32.xlu0 %v5435, 64
    %v5592 = vpop.permute.xlu0 %5591
    %5593 = vrot.lane.b32.xlu0 %v5436, 64
    %v5594 = vpop.permute.xlu0 %5593
    %5595 = vrot.lane.b32.xlu0 %v5437, 64
    %v5596 = vpop.permute.xlu0 %5595
    %5597 = vrot.lane.b32.xlu0 %v5438, 64
    %v5598 = vpop.permute.xlu0 %5597
    %5599 = vrot.lane.b32.xlu0 %v5439, 64
    %v5600 = vpop.permute.xlu0 %5599
    %5601 = vrot.lane.b32.xlu0 %v5440, 64
    %v5602 = vpop.permute.xlu0 %5601
    %5603 = vrot.lane.b32.xlu0 %v5441, 64
    %v5604 = vpop.permute.xlu0 %5603
    %5605 = vrot.lane.b32.xlu0 %v5442, 64
    %v5606 = vpop.permute.xlu0 %5605
    %5607 = vrot.lane.b32.xlu0 %v5443, 64
    %v5608 = vpop.permute.xlu0 %5607
    %5609 = vrot.lane.b32.xlu0 %v5444, 64
    %v5610 = vpop.permute.xlu0 %5609
    %5611 = vrot.lane.b32.xlu0 %v5445, 64
    %v5612 = vpop.permute.xlu0 %5611
    %5613 = vrot.lane.b32.xlu0 %v5446, 64
    %v5614 = vpop.permute.xlu0 %5613
    %5615 = vrot.lane.b32.xlu0 %v5447, 64
    %v5616 = vpop.permute.xlu0 %5615
    %5617 = vrot.lane.b32.xlu0 %v5448, 64
    %v5618 = vpop.permute.xlu0 %5617
    %5619 = vrot.lane.b32.xlu0 %v5449, 64
    %v5620 = vpop.permute.xlu0 %5619
    %5621 = vrot.lane.b32.xlu0 %v5450, 64
    %v5622 = vpop.permute.xlu0 %5621
    %5623 = vrot.lane.b32.xlu0 %v5451, 64
    %v5624 = vpop.permute.xlu0 %5623
    %5625 = vrot.lane.b32.xlu0 %v5452, 64
    %v5626 = vpop.permute.xlu0 %5625
    %5627 = vrot.lane.b32.xlu0 %v5453, 64
    %v5628 = vpop.permute.xlu0 %5627
    %5629 = vrot.lane.b32.xlu0 %v5454, 64
    %v5630 = vpop.permute.xlu0 %5629
    %5631 = vrot.lane.b32.xlu0 %v5455, 64
    %v5632 = vpop.permute.xlu0 %5631
    %5633 = vrot.lane.b32.xlu0 %v5456, 64
    %v5634 = vpop.permute.xlu0 %5633
    %5635 = vrot.lane.b32.xlu0 %v5457, 64
    %v5636 = vpop.permute.xlu0 %5635
    %5637 = vrot.lane.b32.xlu0 %v5458, 64
    %v5638 = vpop.permute.xlu0 %5637
    %5639 = vrot.lane.b32.xlu0 %v5459, 64
    %v5640 = vpop.permute.xlu0 %5639
    %5641 = vrot.lane.b32.xlu0 %v5460, 64
    %v5642 = vpop.permute.xlu0 %5641
    %5643 = vrot.lane.b32.xlu0 %v5461, 64
    %v5644 = vpop.permute.xlu0 %5643
    %5645 = vrot.lane.b32.xlu0 %v5462, 64
    %v5646 = vpop.permute.xlu0 %5645
    %5647 = vrot.lane.b32.xlu0 %v5463, 64
    %v5648 = vpop.permute.xlu0 %5647
    %5649 = vrot.lane.b32.xlu0 %v5464, 64
    %v5650 = vpop.permute.xlu0 %5649
    %5651 = vrot.lane.b32.xlu0 %v5465, 64
    %v5652 = vpop.permute.xlu0 %5651
    %5653 = vrot.lane.b32.xlu0 %v5466, 64
    %v5654 = vpop.permute.xlu0 %5653
    %5655 = vrot.lane.b32.xlu0 %v5467, 64
    %v5656 = vpop.permute.xlu0 %5655
    %5657 = vrot.lane.b32.xlu0 %v5468, 64
    %v5658 = vpop.permute.xlu0 %5657
    %5659 = vrot.lane.b32.xlu0 %v5469, 64
    %v5660 = vpop.permute.xlu0 %5659
    %5661 = vrot.lane.b32.xlu0 %v5470, 64
    %v5662 = vpop.permute.xlu0 %5661
    %vm5727 = vcmask 654848
    %5728 = vst.msk [vmem:[#allocation3] sm:$0xff] %vm5727, %v5536
    %5729 = vst.msk [vmem:[#allocation3 + $0x10] sm:$0xff] %vm5727, %v5538
    %5730 = vst.msk [vmem:[#allocation3 + $0x20] sm:$0xff] %vm5727, %v5540
    %5731 = vst.msk [vmem:[#allocation3 + $0x30] sm:$0xff] %vm5727, %v5542
    %5732 = vst.msk [vmem:[#allocation3 + $0x40] sm:$0xff] %vm5727, %v5544
    %5733 = vst.msk [vmem:[#allocation3 + $0x50] sm:$0xff] %vm5727, %v5546
    %5734 = vst.msk [vmem:[#allocation3 + $0x60] sm:$0xff] %vm5727, %v5548
    %5735 = vst.msk [vmem:[#allocation3 + $0x70] sm:$0xff] %vm5727, %v5550
    %5736 = vst.msk [vmem:[#allocation3 + $0x80] sm:$0xff] %vm5727, %v5552
    %5737 = vst.msk [vmem:[#allocation3 + $0x90] sm:$0xff] %vm5727, %v5554
    %5738 = vst.msk [vmem:[#allocation3 + $0xa0] sm:$0xff] %vm5727, %v5556
    %5739 = vst.msk [vmem:[#allocation3 + $0xb0] sm:$0xff] %vm5727, %v5558
    %5740 = vst.msk [vmem:[#allocation3 + $0xc0] sm:$0xff] %vm5727, %v5560
    %5741 = vst.msk [vmem:[#allocation3 + $0xd0] sm:$0xff] %vm5727, %v5562
    %5742 = vst.msk [vmem:[#allocation3 + $0xe0] sm:$0xff] %vm5727, %v5564
    %5743 = vst.msk [vmem:[#allocation3 + $0xf0] sm:$0xff] %vm5727, %v5566
    %5744 = vst.msk [vmem:[#allocation3 + $0x100] sm:$0xff] %vm5727, %v5568
    %5745 = vst.msk [vmem:[#allocation3 + $0x110] sm:$0xff] %vm5727, %v5570
    %5746 = vst.msk [vmem:[#allocation3 + $0x120] sm:$0xff] %vm5727, %v5572
    %5747 = vst.msk [vmem:[#allocation3 + $0x130] sm:$0xff] %vm5727, %v5574
    %5748 = vst.msk [vmem:[#allocation3 + $0x140] sm:$0xff] %vm5727, %v5576
    %5749 = vst.msk [vmem:[#allocation3 + $0x150] sm:$0xff] %vm5727, %v5578
    %5750 = vst.msk [vmem:[#allocation3 + $0x160] sm:$0xff] %vm5727, %v5580
    %5751 = vst.msk [vmem:[#allocation3 + $0x170] sm:$0xff] %vm5727, %v5582
    %5752 = vst.msk [vmem:[#allocation3 + $0x180] sm:$0xff] %vm5727, %v5584
    %5753 = vst.msk [vmem:[#allocation3 + $0x190] sm:$0xff] %vm5727, %v5586
    %5754 = vst.msk [vmem:[#allocation3 + $0x1a0] sm:$0xff] %vm5727, %v5588
    %5755 = vst.msk [vmem:[#allocation3 + $0x1b0] sm:$0xff] %vm5727, %v5590
    %5756 = vst.msk [vmem:[#allocation3 + $0x1c0] sm:$0xff] %vm5727, %v5592
    %5757 = vst.msk [vmem:[#allocation3 + $0x1d0] sm:$0xff] %vm5727, %v5594
    %5758 = vst.msk [vmem:[#allocation3 + $0x1e0] sm:$0xff] %vm5727, %v5596
    %5759 = vst.msk [vmem:[#allocation3 + $0x1f0] sm:$0xff] %vm5727, %v5598
    %5760 = vst.msk [vmem:[#allocation3 + $0x200] sm:$0xff] %vm5727, %v5600
    %5761 = vst.msk [vmem:[#allocation3 + $0x210] sm:$0xff] %vm5727, %v5602
    %5762 = vst.msk [vmem:[#allocation3 + $0x220] sm:$0xff] %vm5727, %v5604
    %5763 = vst.msk [vmem:[#allocation3 + $0x230] sm:$0xff] %vm5727, %v5606
    %5764 = vst.msk [vmem:[#allocation3 + $0x240] sm:$0xff] %vm5727, %v5608
    %5765 = vst.msk [vmem:[#allocation3 + $0x250] sm:$0xff] %vm5727, %v5610
    %5766 = vst.msk [vmem:[#allocation3 + $0x260] sm:$0xff] %vm5727, %v5612
    %5767 = vst.msk [vmem:[#allocation3 + $0x270] sm:$0xff] %vm5727, %v5614
    %5768 = vst.msk [vmem:[#allocation3 + $0x280] sm:$0xff] %vm5727, %v5616
    %5769 = vst.msk [vmem:[#allocation3 + $0x290] sm:$0xff] %vm5727, %v5618
    %5770 = vst.msk [vmem:[#allocation3 + $0x2a0] sm:$0xff] %vm5727, %v5620
    %5771 = vst.msk [vmem:[#allocation3 + $0x2b0] sm:$0xff] %vm5727, %v5622
    %5772 = vst.msk [vmem:[#allocation3 + $0x2c0] sm:$0xff] %vm5727, %v5624
    %5773 = vst.msk [vmem:[#allocation3 + $0x2d0] sm:$0xff] %vm5727, %v5626
    %5774 = vst.msk [vmem:[#allocation3 + $0x2e0] sm:$0xff] %vm5727, %v5628
    %5775 = vst.msk [vmem:[#allocation3 + $0x2f0] sm:$0xff] %vm5727, %v5630
    %5776 = vst.msk [vmem:[#allocation3 + $0x300] sm:$0xff] %vm5727, %v5632
    %5777 = vst.msk [vmem:[#allocation3 + $0x310] sm:$0xff] %vm5727, %v5634
    %5778 = vst.msk [vmem:[#allocation3 + $0x320] sm:$0xff] %vm5727, %v5636
    %5779 = vst.msk [vmem:[#allocation3 + $0x330] sm:$0xff] %vm5727, %v5638
    %5780 = vst.msk [vmem:[#allocation3 + $0x340] sm:$0xff] %vm5727, %v5640
    %5781 = vst.msk [vmem:[#allocation3 + $0x350] sm:$0xff] %vm5727, %v5642
    %5782 = vst.msk [vmem:[#allocation3 + $0x360] sm:$0xff] %vm5727, %v5644
    %5783 = vst.msk [vmem:[#allocation3 + $0x370] sm:$0xff] %vm5727, %v5646
    %5784 = vst.msk [vmem:[#allocation3 + $0x380] sm:$0xff] %vm5727, %v5648
    %5785 = vst.msk [vmem:[#allocation3 + $0x390] sm:$0xff] %vm5727, %v5650
    %5786 = vst.msk [vmem:[#allocation3 + $0x3a0] sm:$0xff] %vm5727, %v5652
    %5787 = vst.msk [vmem:[#allocation3 + $0x3b0] sm:$0xff] %vm5727, %v5654
    %5788 = vst.msk [vmem:[#allocation3 + $0x3c0] sm:$0xff] %vm5727, %v5656
    %5789 = vst.msk [vmem:[#allocation3 + $0x3d0] sm:$0xff] %vm5727, %v5658
    %5790 = vst.msk [vmem:[#allocation3 + $0x3e0] sm:$0xff] %vm5727, %v5660
    %5791 = vst.msk [vmem:[#allocation3 + $0x3f0] sm:$0xff] %vm5727, %v5662
    %v5792 = vld [vmem:[%s208 + $0x2] sm:$0xff]
    %v5793 = vld [vmem:[%s208 + $0xa] sm:$0xff]
    %v5794 = vld [vmem:[%s208 + $0x1a] sm:$0xff]
    %v5795 = vld [vmem:[%s208 + $0x22] sm:$0xff]
    %v5796 = vld [vmem:[%s208 + $0x32] sm:$0xff]
    %v5797 = vld [vmem:[%s208 + $0x3a] sm:$0xff]
    %v5798 = vld [vmem:[%s208 + $0x4a] sm:$0xff]
    %v5799 = vld [vmem:[%s208 + $0x52] sm:$0xff]
    %v5800 = vld [vmem:[%s208 + $0x62] sm:$0xff]
    %v5801 = vld [vmem:[%s208 + $0x6a] sm:$0xff]
    %v5802 = vld [vmem:[%s208 + $0x7a] sm:$0xff]
    %v5803 = vld [vmem:[%s208 + $0x82] sm:$0xff]
    %v5804 = vld [vmem:[%s208 + $0x92] sm:$0xff]
    %v5805 = vld [vmem:[%s208 + $0x9a] sm:$0xff]
    %v5806 = vld [vmem:[%s208 + $0xaa] sm:$0xff]
    %v5807 = vld [vmem:[%s208 + $0xb2] sm:$0xff]
    %v5808 = vld [vmem:[%s208 + $0xc2] sm:$0xff]
    %v5809 = vld [vmem:[%s208 + $0xca] sm:$0xff]
    %v5810 = vld [vmem:[%s208 + $0xda] sm:$0xff]
    %v5811 = vld [vmem:[%s208 + $0xe2] sm:$0xff]
    %v5812 = vld [vmem:[%s208 + $0xf2] sm:$0xff]
    %v5813 = vld [vmem:[%s208 + $0xfa] sm:$0xff]
    %v5814 = vld [vmem:[%s208 + $0x10a] sm:$0xff]
    %v5815 = vld [vmem:[%s208 + $0x112] sm:$0xff]
    %v5816 = vld [vmem:[%s208 + $0x122] sm:$0xff]
    %v5817 = vld [vmem:[%s208 + $0x12a] sm:$0xff]
    %v5818 = vld [vmem:[%s208 + $0x13a] sm:$0xff]
    %v5819 = vld [vmem:[%s208 + $0x142] sm:$0xff]
    %v5820 = vld [vmem:[%s208 + $0x152] sm:$0xff]
    %v5821 = vld [vmem:[%s208 + $0x15a] sm:$0xff]
    %v5822 = vld [vmem:[%s208 + $0x16a] sm:$0xff]
    %v5823 = vld [vmem:[%s208 + $0x172] sm:$0xff]
    %v5824 = vld [vmem:[%s208 + $0x1b2] sm:$0xff]
    %v5825 = vld [vmem:[%s208 + $0x1ba] sm:$0xff]
    %v5826 = vld [vmem:[%s208 + $0x1ca] sm:$0xff]
    %v5827 = vld [vmem:[%s208 + $0x1d2] sm:$0xff]
    %v5828 = vld [vmem:[%s208 + $0x1e2] sm:$0xff]
    %v5829 = vld [vmem:[%s208 + $0x1ea] sm:$0xff]
    %v5830 = vld [vmem:[%s208 + $0x1fa] sm:$0xff]
    %v5831 = vld [vmem:[%s208 + $0x202] sm:$0xff]
    %v5832 = vld [vmem:[%s208 + $0x212] sm:$0xff]
    %v5833 = vld [vmem:[%s208 + $0x21a] sm:$0xff]
    %v5834 = vld [vmem:[%s208 + $0x22a] sm:$0xff]
    %v5835 = vld [vmem:[%s208 + $0x232] sm:$0xff]
    %v5836 = vld [vmem:[%s208 + $0x242] sm:$0xff]
    %v5837 = vld [vmem:[%s208 + $0x24a] sm:$0xff]
    %v5838 = vld [vmem:[%s208 + $0x25a] sm:$0xff]
    %v5839 = vld [vmem:[%s208 + $0x262] sm:$0xff]
    %v5840 = vld [vmem:[%s208 + $0x272] sm:$0xff]
    %v5841 = vld [vmem:[%s208 + $0x27a] sm:$0xff]
    %v5842 = vld [vmem:[%s208 + $0x28a] sm:$0xff]
    %v5843 = vld [vmem:[%s208 + $0x292] sm:$0xff]
    %v5844 = vld [vmem:[%s208 + $0x2a2] sm:$0xff]
    %v5845 = vld [vmem:[%s208 + $0x2aa] sm:$0xff]
    %v5846 = vld [vmem:[%s208 + $0x2ba] sm:$0xff]
    %v5847 = vld [vmem:[%s208 + $0x2c2] sm:$0xff]
    %v5848 = vld [vmem:[%s208 + $0x2d2] sm:$0xff]
    %v5849 = vld [vmem:[%s208 + $0x2da] sm:$0xff]
    %v5850 = vld [vmem:[%s208 + $0x2ea] sm:$0xff]
    %v5851 = vld [vmem:[%s208 + $0x2f2] sm:$0xff]
    %v5852 = vld [vmem:[%s208 + $0x302] sm:$0xff]
    %v5853 = vld [vmem:[%s208 + $0x30a] sm:$0xff]
    %v5854 = vld [vmem:[%s208 + $0x31a] sm:$0xff]
    %v5855 = vld [vmem:[%s208 + $0x322] sm:$0xff]
    %5920 = vrot.lane.b32.xlu0 %v5792, 80
    %v5921 = vpop.permute.xlu0 %5920
    %5922 = vrot.lane.b32.xlu0 %v5793, 80
    %v5923 = vpop.permute.xlu0 %5922
    %5924 = vrot.lane.b32.xlu0 %v5794, 80
    %v5925 = vpop.permute.xlu0 %5924
    %5926 = vrot.lane.b32.xlu0 %v5795, 80
    %v5927 = vpop.permute.xlu0 %5926
    %5928 = vrot.lane.b32.xlu0 %v5796, 80
    %v5929 = vpop.permute.xlu0 %5928
    %5930 = vrot.lane.b32.xlu0 %v5797, 80
    %v5931 = vpop.permute.xlu0 %5930
    %5932 = vrot.lane.b32.xlu0 %v5798, 80
    %v5933 = vpop.permute.xlu0 %5932
    %5934 = vrot.lane.b32.xlu0 %v5799, 80
    %v5935 = vpop.permute.xlu0 %5934
    %5936 = vrot.lane.b32.xlu0 %v5800, 80
    %v5937 = vpop.permute.xlu0 %5936
    %5938 = vrot.lane.b32.xlu0 %v5801, 80
    %v5939 = vpop.permute.xlu0 %5938
    %5940 = vrot.lane.b32.xlu0 %v5802, 80
    %v5941 = vpop.permute.xlu0 %5940
    %5942 = vrot.lane.b32.xlu0 %v5803, 80
    %v5943 = vpop.permute.xlu0 %5942
    %5944 = vrot.lane.b32.xlu0 %v5804, 80
    %v5945 = vpop.permute.xlu0 %5944
    %5946 = vrot.lane.b32.xlu0 %v5805, 80
    %v5947 = vpop.permute.xlu0 %5946
    %5948 = vrot.lane.b32.xlu0 %v5806, 80
    %v5949 = vpop.permute.xlu0 %5948
    %5950 = vrot.lane.b32.xlu0 %v5807, 80
    %v5951 = vpop.permute.xlu0 %5950
    %5952 = vrot.lane.b32.xlu0 %v5808, 80
    %v5953 = vpop.permute.xlu0 %5952
    %5954 = vrot.lane.b32.xlu0 %v5809, 80
    %v5955 = vpop.permute.xlu0 %5954
    %5956 = vrot.lane.b32.xlu0 %v5810, 80
    %v5957 = vpop.permute.xlu0 %5956
    %5958 = vrot.lane.b32.xlu0 %v5811, 80
    %v5959 = vpop.permute.xlu0 %5958
    %5960 = vrot.lane.b32.xlu0 %v5812, 80
    %v5961 = vpop.permute.xlu0 %5960
    %5962 = vrot.lane.b32.xlu0 %v5813, 80
    %v5963 = vpop.permute.xlu0 %5962
    %5964 = vrot.lane.b32.xlu0 %v5814, 80
    %v5965 = vpop.permute.xlu0 %5964
    %5966 = vrot.lane.b32.xlu0 %v5815, 80
    %v5967 = vpop.permute.xlu0 %5966
    %5968 = vrot.lane.b32.xlu0 %v5816, 80
    %v5969 = vpop.permute.xlu0 %5968
    %5970 = vrot.lane.b32.xlu0 %v5817, 80
    %v5971 = vpop.permute.xlu0 %5970
    %5972 = vrot.lane.b32.xlu0 %v5818, 80
    %v5973 = vpop.permute.xlu0 %5972
    %5974 = vrot.lane.b32.xlu0 %v5819, 80
    %v5975 = vpop.permute.xlu0 %5974
    %5976 = vrot.lane.b32.xlu0 %v5820, 80
    %v5977 = vpop.permute.xlu0 %5976
    %5978 = vrot.lane.b32.xlu0 %v5821, 80
    %v5979 = vpop.permute.xlu0 %5978
    %5980 = vrot.lane.b32.xlu0 %v5822, 80
    %v5981 = vpop.permute.xlu0 %5980
    %5982 = vrot.lane.b32.xlu0 %v5823, 80
    %v5983 = vpop.permute.xlu0 %5982
    %5984 = vrot.lane.b32.xlu0 %v5824, 80
    %v5985 = vpop.permute.xlu0 %5984
    %5986 = vrot.lane.b32.xlu0 %v5825, 80
    %v5987 = vpop.permute.xlu0 %5986
    %5988 = vrot.lane.b32.xlu0 %v5826, 80
    %v5989 = vpop.permute.xlu0 %5988
    %5990 = vrot.lane.b32.xlu0 %v5827, 80
    %v5991 = vpop.permute.xlu0 %5990
    %5992 = vrot.lane.b32.xlu0 %v5828, 80
    %v5993 = vpop.permute.xlu0 %5992
    %5994 = vrot.lane.b32.xlu0 %v5829, 80
    %v5995 = vpop.permute.xlu0 %5994
    %5996 = vrot.lane.b32.xlu0 %v5830, 80
    %v5997 = vpop.permute.xlu0 %5996
    %5998 = vrot.lane.b32.xlu0 %v5831, 80
    %v5999 = vpop.permute.xlu0 %5998
    %6000 = vrot.lane.b32.xlu0 %v5832, 80
    %v6001 = vpop.permute.xlu0 %6000
    %6002 = vrot.lane.b32.xlu0 %v5833, 80
    %v6003 = vpop.permute.xlu0 %6002
    %6004 = vrot.lane.b32.xlu0 %v5834, 80
    %v6005 = vpop.permute.xlu0 %6004
    %6006 = vrot.lane.b32.xlu0 %v5835, 80
    %v6007 = vpop.permute.xlu0 %6006
    %6008 = vrot.lane.b32.xlu0 %v5836, 80
    %v6009 = vpop.permute.xlu0 %6008
    %6010 = vrot.lane.b32.xlu0 %v5837, 80
    %v6011 = vpop.permute.xlu0 %6010
    %6012 = vrot.lane.b32.xlu0 %v5838, 80
    %v6013 = vpop.permute.xlu0 %6012
    %6014 = vrot.lane.b32.xlu0 %v5839, 80
    %v6015 = vpop.permute.xlu0 %6014
    %6016 = vrot.lane.b32.xlu0 %v5840, 80
    %v6017 = vpop.permute.xlu0 %6016
    %6018 = vrot.lane.b32.xlu0 %v5841, 80
    %v6019 = vpop.permute.xlu0 %6018
    %6020 = vrot.lane.b32.xlu0 %v5842, 80
    %v6021 = vpop.permute.xlu0 %6020
    %6022 = vrot.lane.b32.xlu0 %v5843, 80
    %v6023 = vpop.permute.xlu0 %6022
    %6024 = vrot.lane.b32.xlu0 %v5844, 80
    %v6025 = vpop.permute.xlu0 %6024
    %6026 = vrot.lane.b32.xlu0 %v5845, 80
    %v6027 = vpop.permute.xlu0 %6026
    %6028 = vrot.lane.b32.xlu0 %v5846, 80
    %v6029 = vpop.permute.xlu0 %6028
    %6030 = vrot.lane.b32.xlu0 %v5847, 80
    %v6031 = vpop.permute.xlu0 %6030
    %6032 = vrot.lane.b32.xlu0 %v5848, 80
    %v6033 = vpop.permute.xlu0 %6032
    %6034 = vrot.lane.b32.xlu0 %v5849, 80
    %v6035 = vpop.permute.xlu0 %6034
    %6036 = vrot.lane.b32.xlu0 %v5850, 80
    %v6037 = vpop.permute.xlu0 %6036
    %6038 = vrot.lane.b32.xlu0 %v5851, 80
    %v6039 = vpop.permute.xlu0 %6038
    %6040 = vrot.lane.b32.xlu0 %v5852, 80
    %v6041 = vpop.permute.xlu0 %6040
    %6042 = vrot.lane.b32.xlu0 %v5853, 80
    %v6043 = vpop.permute.xlu0 %6042
    %6044 = vrot.lane.b32.xlu0 %v5854, 80
    %v6045 = vpop.permute.xlu0 %6044
    %6046 = vrot.lane.b32.xlu0 %v5855, 80
    %v6047 = vpop.permute.xlu0 %6046
    %vm6112 = vcmask 786048
    %6113 = vst.msk [vmem:[#allocation3] sm:$0xff] %vm6112, %v5921
    %6114 = vst.msk [vmem:[#allocation3 + $0x10] sm:$0xff] %vm6112, %v5923
    %6115 = vst.msk [vmem:[#allocation3 + $0x20] sm:$0xff] %vm6112, %v5925
    %6116 = vst.msk [vmem:[#allocation3 + $0x30] sm:$0xff] %vm6112, %v5927
    %6117 = vst.msk [vmem:[#allocation3 + $0x40] sm:$0xff] %vm6112, %v5929
    %6118 = vst.msk [vmem:[#allocation3 + $0x50] sm:$0xff] %vm6112, %v5931
    %6119 = vst.msk [vmem:[#allocation3 + $0x60] sm:$0xff] %vm6112, %v5933
    %6120 = vst.msk [vmem:[#allocation3 + $0x70] sm:$0xff] %vm6112, %v5935
    %6121 = vst.msk [vmem:[#allocation3 + $0x80] sm:$0xff] %vm6112, %v5937
    %6122 = vst.msk [vmem:[#allocation3 + $0x90] sm:$0xff] %vm6112, %v5939
    %6123 = vst.msk [vmem:[#allocation3 + $0xa0] sm:$0xff] %vm6112, %v5941
    %6124 = vst.msk [vmem:[#allocation3 + $0xb0] sm:$0xff] %vm6112, %v5943
    %6125 = vst.msk [vmem:[#allocation3 + $0xc0] sm:$0xff] %vm6112, %v5945
    %6126 = vst.msk [vmem:[#allocation3 + $0xd0] sm:$0xff] %vm6112, %v5947
    %6127 = vst.msk [vmem:[#allocation3 + $0xe0] sm:$0xff] %vm6112, %v5949
    %6128 = vst.msk [vmem:[#allocation3 + $0xf0] sm:$0xff] %vm6112, %v5951
    %6129 = vst.msk [vmem:[#allocation3 + $0x100] sm:$0xff] %vm6112, %v5953
    %6130 = vst.msk [vmem:[#allocation3 + $0x110] sm:$0xff] %vm6112, %v5955
    %6131 = vst.msk [vmem:[#allocation3 + $0x120] sm:$0xff] %vm6112, %v5957
    %6132 = vst.msk [vmem:[#allocation3 + $0x130] sm:$0xff] %vm6112, %v5959
    %6133 = vst.msk [vmem:[#allocation3 + $0x140] sm:$0xff] %vm6112, %v5961
    %6134 = vst.msk [vmem:[#allocation3 + $0x150] sm:$0xff] %vm6112, %v5963
    %6135 = vst.msk [vmem:[#allocation3 + $0x160] sm:$0xff] %vm6112, %v5965
    %6136 = vst.msk [vmem:[#allocation3 + $0x170] sm:$0xff] %vm6112, %v5967
    %6137 = vst.msk [vmem:[#allocation3 + $0x180] sm:$0xff] %vm6112, %v5969
    %6138 = vst.msk [vmem:[#allocation3 + $0x190] sm:$0xff] %vm6112, %v5971
    %6139 = vst.msk [vmem:[#allocation3 + $0x1a0] sm:$0xff] %vm6112, %v5973
    %6140 = vst.msk [vmem:[#allocation3 + $0x1b0] sm:$0xff] %vm6112, %v5975
    %6141 = vst.msk [vmem:[#allocation3 + $0x1c0] sm:$0xff] %vm6112, %v5977
    %6142 = vst.msk [vmem:[#allocation3 + $0x1d0] sm:$0xff] %vm6112, %v5979
    %6143 = vst.msk [vmem:[#allocation3 + $0x1e0] sm:$0xff] %vm6112, %v5981
    %6144 = vst.msk [vmem:[#allocation3 + $0x1f0] sm:$0xff] %vm6112, %v5983
    %6145 = vst.msk [vmem:[#allocation3 + $0x200] sm:$0xff] %vm6112, %v5985
    %6146 = vst.msk [vmem:[#allocation3 + $0x210] sm:$0xff] %vm6112, %v5987
    %6147 = vst.msk [vmem:[#allocation3 + $0x220] sm:$0xff] %vm6112, %v5989
    %6148 = vst.msk [vmem:[#allocation3 + $0x230] sm:$0xff] %vm6112, %v5991
    %6149 = vst.msk [vmem:[#allocation3 + $0x240] sm:$0xff] %vm6112, %v5993
    %6150 = vst.msk [vmem:[#allocation3 + $0x250] sm:$0xff] %vm6112, %v5995
    %6151 = vst.msk [vmem:[#allocation3 + $0x260] sm:$0xff] %vm6112, %v5997
    %6152 = vst.msk [vmem:[#allocation3 + $0x270] sm:$0xff] %vm6112, %v5999
    %6153 = vst.msk [vmem:[#allocation3 + $0x280] sm:$0xff] %vm6112, %v6001
    %6154 = vst.msk [vmem:[#allocation3 + $0x290] sm:$0xff] %vm6112, %v6003
    %6155 = vst.msk [vmem:[#allocation3 + $0x2a0] sm:$0xff] %vm6112, %v6005
    %6156 = vst.msk [vmem:[#allocation3 + $0x2b0] sm:$0xff] %vm6112, %v6007
    %6157 = vst.msk [vmem:[#allocation3 + $0x2c0] sm:$0xff] %vm6112, %v6009
    %6158 = vst.msk [vmem:[#allocation3 + $0x2d0] sm:$0xff] %vm6112, %v6011
    %6159 = vst.msk [vmem:[#allocation3 + $0x2e0] sm:$0xff] %vm6112, %v6013
    %6160 = vst.msk [vmem:[#allocation3 + $0x2f0] sm:$0xff] %vm6112, %v6015
    %6161 = vst.msk [vmem:[#allocation3 + $0x300] sm:$0xff] %vm6112, %v6017
    %6162 = vst.msk [vmem:[#allocation3 + $0x310] sm:$0xff] %vm6112, %v6019
    %6163 = vst.msk [vmem:[#allocation3 + $0x320] sm:$0xff] %vm6112, %v6021
    %6164 = vst.msk [vmem:[#allocation3 + $0x330] sm:$0xff] %vm6112, %v6023
    %6165 = vst.msk [vmem:[#allocation3 + $0x340] sm:$0xff] %vm6112, %v6025
    %6166 = vst.msk [vmem:[#allocation3 + $0x350] sm:$0xff] %vm6112, %v6027
    %6167 = vst.msk [vmem:[#allocation3 + $0x360] sm:$0xff] %vm6112, %v6029
    %6168 = vst.msk [vmem:[#allocation3 + $0x370] sm:$0xff] %vm6112, %v6031
    %6169 = vst.msk [vmem:[#allocation3 + $0x380] sm:$0xff] %vm6112, %v6033
    %6170 = vst.msk [vmem:[#allocation3 + $0x390] sm:$0xff] %vm6112, %v6035
    %6171 = vst.msk [vmem:[#allocation3 + $0x3a0] sm:$0xff] %vm6112, %v6037
    %6172 = vst.msk [vmem:[#allocation3 + $0x3b0] sm:$0xff] %vm6112, %v6039
    %6173 = vst.msk [vmem:[#allocation3 + $0x3c0] sm:$0xff] %vm6112, %v6041
    %6174 = vst.msk [vmem:[#allocation3 + $0x3d0] sm:$0xff] %vm6112, %v6043
    %6175 = vst.msk [vmem:[#allocation3 + $0x3e0] sm:$0xff] %vm6112, %v6045
    %6176 = vst.msk [vmem:[#allocation3 + $0x3f0] sm:$0xff] %vm6112, %v6047
    %v6177 = vld [vmem:[%s2327] sm:$0xff]
    %v6178 = vld [vmem:[%s2327 + $0x8] sm:$0xff]
    %v6179 = vld [vmem:[%s2327 + $0x18] sm:$0xff]
    %v6180 = vld [vmem:[%s2327 + $0x20] sm:$0xff]
    %v6181 = vld [vmem:[%s2327 + $0x30] sm:$0xff]
    %v6182 = vld [vmem:[%s2327 + $0x38] sm:$0xff]
    %v6183 = vld [vmem:[%s2327 + $0x48] sm:$0xff]
    %v6184 = vld [vmem:[%s2327 + $0x50] sm:$0xff]
    %v6185 = vld [vmem:[%s2327 + $0x60] sm:$0xff]
    %v6186 = vld [vmem:[%s2327 + $0x68] sm:$0xff]
    %v6187 = vld [vmem:[%s2327 + $0x78] sm:$0xff]
    %v6188 = vld [vmem:[%s2327 + $0x80] sm:$0xff]
    %v6189 = vld [vmem:[%s2327 + $0x90] sm:$0xff]
    %v6190 = vld [vmem:[%s2327 + $0x98] sm:$0xff]
    %v6191 = vld [vmem:[%s2327 + $0xa8] sm:$0xff]
    %v6192 = vld [vmem:[%s2327 + $0xb0] sm:$0xff]
    %v6193 = vld [vmem:[%s2327 + $0xc0] sm:$0xff]
    %v6194 = vld [vmem:[%s2327 + $0xc8] sm:$0xff]
    %v6195 = vld [vmem:[%s2327 + $0xd8] sm:$0xff]
    %v6196 = vld [vmem:[%s2327 + $0xe0] sm:$0xff]
    %v6197 = vld [vmem:[%s2327 + $0xf0] sm:$0xff]
    %v6198 = vld [vmem:[%s2327 + $0xf8] sm:$0xff]
    %v6199 = vld [vmem:[%s2327 + $0x108] sm:$0xff]
    %v6200 = vld [vmem:[%s2327 + $0x110] sm:$0xff]
    %v6201 = vld [vmem:[%s2327 + $0x120] sm:$0xff]
    %v6202 = vld [vmem:[%s2327 + $0x128] sm:$0xff]
    %v6203 = vld [vmem:[%s2327 + $0x138] sm:$0xff]
    %v6204 = vld [vmem:[%s2327 + $0x140] sm:$0xff]
    %v6205 = vld [vmem:[%s2327 + $0x150] sm:$0xff]
    %v6206 = vld [vmem:[%s2327 + $0x158] sm:$0xff]
    %v6207 = vld [vmem:[%s2327 + $0x168] sm:$0xff]
    %v6208 = vld [vmem:[%s2327 + $0x170] sm:$0xff]
    %v6209 = vld [vmem:[%s2327 + $0x1b0] sm:$0xff]
    %v6210 = vld [vmem:[%s2327 + $0x1b8] sm:$0xff]
    %v6211 = vld [vmem:[%s2327 + $0x1c8] sm:$0xff]
    %v6212 = vld [vmem:[%s2327 + $0x1d0] sm:$0xff]
    %v6213 = vld [vmem:[%s2327 + $0x1e0] sm:$0xff]
    %v6214 = vld [vmem:[%s2327 + $0x1e8] sm:$0xff]
    %v6215 = vld [vmem:[%s2327 + $0x1f8] sm:$0xff]
    %v6216 = vld [vmem:[%s2327 + $0x200] sm:$0xff]
    %v6217 = vld [vmem:[%s2327 + $0x210] sm:$0xff]
    %v6218 = vld [vmem:[%s2327 + $0x218] sm:$0xff]
    %v6219 = vld [vmem:[%s2327 + $0x228] sm:$0xff]
    %v6220 = vld [vmem:[%s2327 + $0x230] sm:$0xff]
    %v6221 = vld [vmem:[%s2327 + $0x240] sm:$0xff]
    %v6222 = vld [vmem:[%s2327 + $0x248] sm:$0xff]
    %v6223 = vld [vmem:[%s2327 + $0x258] sm:$0xff]
    %v6224 = vld [vmem:[%s2327 + $0x260] sm:$0xff]
    %v6225 = vld [vmem:[%s2327 + $0x270] sm:$0xff]
    %v6226 = vld [vmem:[%s2327 + $0x278] sm:$0xff]
    %v6227 = vld [vmem:[%s2327 + $0x288] sm:$0xff]
    %v6228 = vld [vmem:[%s2327 + $0x290] sm:$0xff]
    %v6229 = vld [vmem:[%s2327 + $0x2a0] sm:$0xff]
    %v6230 = vld [vmem:[%s2327 + $0x2a8] sm:$0xff]
    %v6231 = vld [vmem:[%s2327 + $0x2b8] sm:$0xff]
    %v6232 = vld [vmem:[%s2327 + $0x2c0] sm:$0xff]
    %v6233 = vld [vmem:[%s2327 + $0x2d0] sm:$0xff]
    %v6234 = vld [vmem:[%s2327 + $0x2d8] sm:$0xff]
    %v6235 = vld [vmem:[%s2327 + $0x2e8] sm:$0xff]
    %v6236 = vld [vmem:[%s2327 + $0x2f0] sm:$0xff]
    %v6237 = vld [vmem:[%s2327 + $0x300] sm:$0xff]
    %v6238 = vld [vmem:[%s2327 + $0x308] sm:$0xff]
    %v6239 = vld [vmem:[%s2327 + $0x318] sm:$0xff]
    %v6240 = vld [vmem:[%s2327 + $0x320] sm:$0xff]
    %6305 = vrot.lane.b32.xlu0 %v6177, 96
    %v6306 = vpop.permute.xlu0 %6305
    %6307 = vrot.lane.b32.xlu0 %v6178, 96
    %v6308 = vpop.permute.xlu0 %6307
    %6309 = vrot.lane.b32.xlu0 %v6179, 96
    %v6310 = vpop.permute.xlu0 %6309
    %6311 = vrot.lane.b32.xlu0 %v6180, 96
    %v6312 = vpop.permute.xlu0 %6311
    %6313 = vrot.lane.b32.xlu0 %v6181, 96
    %v6314 = vpop.permute.xlu0 %6313
    %6315 = vrot.lane.b32.xlu0 %v6182, 96
    %v6316 = vpop.permute.xlu0 %6315
    %6317 = vrot.lane.b32.xlu0 %v6183, 96
    %v6318 = vpop.permute.xlu0 %6317
    %6319 = vrot.lane.b32.xlu0 %v6184, 96
    %v6320 = vpop.permute.xlu0 %6319
    %6321 = vrot.lane.b32.xlu0 %v6185, 96
    %v6322 = vpop.permute.xlu0 %6321
    %6323 = vrot.lane.b32.xlu0 %v6186, 96
    %v6324 = vpop.permute.xlu0 %6323
    %6325 = vrot.lane.b32.xlu0 %v6187, 96
    %v6326 = vpop.permute.xlu0 %6325
    %6327 = vrot.lane.b32.xlu0 %v6188, 96
    %v6328 = vpop.permute.xlu0 %6327
    %6329 = vrot.lane.b32.xlu0 %v6189, 96
    %v6330 = vpop.permute.xlu0 %6329
    %6331 = vrot.lane.b32.xlu0 %v6190, 96
    %v6332 = vpop.permute.xlu0 %6331
    %6333 = vrot.lane.b32.xlu0 %v6191, 96
    %v6334 = vpop.permute.xlu0 %6333
    %6335 = vrot.lane.b32.xlu0 %v6192, 96
    %v6336 = vpop.permute.xlu0 %6335
    %6337 = vrot.lane.b32.xlu0 %v6193, 96
    %v6338 = vpop.permute.xlu0 %6337
    %6339 = vrot.lane.b32.xlu0 %v6194, 96
    %v6340 = vpop.permute.xlu0 %6339
    %6341 = vrot.lane.b32.xlu0 %v6195, 96
    %v6342 = vpop.permute.xlu0 %6341
    %6343 = vrot.lane.b32.xlu0 %v6196, 96
    %v6344 = vpop.permute.xlu0 %6343
    %6345 = vrot.lane.b32.xlu0 %v6197, 96
    %v6346 = vpop.permute.xlu0 %6345
    %6347 = vrot.lane.b32.xlu0 %v6198, 96
    %v6348 = vpop.permute.xlu0 %6347
    %6349 = vrot.lane.b32.xlu0 %v6199, 96
    %v6350 = vpop.permute.xlu0 %6349
    %6351 = vrot.lane.b32.xlu0 %v6200, 96
    %v6352 = vpop.permute.xlu0 %6351
    %6353 = vrot.lane.b32.xlu0 %v6201, 96
    %v6354 = vpop.permute.xlu0 %6353
    %6355 = vrot.lane.b32.xlu0 %v6202, 96
    %v6356 = vpop.permute.xlu0 %6355
    %6357 = vrot.lane.b32.xlu0 %v6203, 96
    %v6358 = vpop.permute.xlu0 %6357
    %6359 = vrot.lane.b32.xlu0 %v6204, 96
    %v6360 = vpop.permute.xlu0 %6359
    %6361 = vrot.lane.b32.xlu0 %v6205, 96
    %v6362 = vpop.permute.xlu0 %6361
    %6363 = vrot.lane.b32.xlu0 %v6206, 96
    %v6364 = vpop.permute.xlu0 %6363
    %6365 = vrot.lane.b32.xlu0 %v6207, 96
    %v6366 = vpop.permute.xlu0 %6365
    %6367 = vrot.lane.b32.xlu0 %v6208, 96
    %v6368 = vpop.permute.xlu0 %6367
    %6369 = vrot.lane.b32.xlu0 %v6209, 96
    %v6370 = vpop.permute.xlu0 %6369
    %6371 = vrot.lane.b32.xlu0 %v6210, 96
    %v6372 = vpop.permute.xlu0 %6371
    %6373 = vrot.lane.b32.xlu0 %v6211, 96
    %v6374 = vpop.permute.xlu0 %6373
    %6375 = vrot.lane.b32.xlu0 %v6212, 96
    %v6376 = vpop.permute.xlu0 %6375
    %6377 = vrot.lane.b32.xlu0 %v6213, 96
    %v6378 = vpop.permute.xlu0 %6377
    %6379 = vrot.lane.b32.xlu0 %v6214, 96
    %v6380 = vpop.permute.xlu0 %6379
    %6381 = vrot.lane.b32.xlu0 %v6215, 96
    %v6382 = vpop.permute.xlu0 %6381
    %6383 = vrot.lane.b32.xlu0 %v6216, 96
    %v6384 = vpop.permute.xlu0 %6383
    %6385 = vrot.lane.b32.xlu0 %v6217, 96
    %v6386 = vpop.permute.xlu0 %6385
    %6387 = vrot.lane.b32.xlu0 %v6218, 96
    %v6388 = vpop.permute.xlu0 %6387
    %6389 = vrot.lane.b32.xlu0 %v6219, 96
    %v6390 = vpop.permute.xlu0 %6389
    %6391 = vrot.lane.b32.xlu0 %v6220, 96
    %v6392 = vpop.permute.xlu0 %6391
    %6393 = vrot.lane.b32.xlu0 %v6221, 96
    %v6394 = vpop.permute.xlu0 %6393
    %6395 = vrot.lane.b32.xlu0 %v6222, 96
    %v6396 = vpop.permute.xlu0 %6395
    %6397 = vrot.lane.b32.xlu0 %v6223, 96
    %v6398 = vpop.permute.xlu0 %6397
    %6399 = vrot.lane.b32.xlu0 %v6224, 96
    %v6400 = vpop.permute.xlu0 %6399
    %6401 = vrot.lane.b32.xlu0 %v6225, 96
    %v6402 = vpop.permute.xlu0 %6401
    %6403 = vrot.lane.b32.xlu0 %v6226, 96
    %v6404 = vpop.permute.xlu0 %6403
    %6405 = vrot.lane.b32.xlu0 %v6227, 96
    %v6406 = vpop.permute.xlu0 %6405
    %6407 = vrot.lane.b32.xlu0 %v6228, 96
    %v6408 = vpop.permute.xlu0 %6407
    %6409 = vrot.lane.b32.xlu0 %v6229, 96
    %v6410 = vpop.permute.xlu0 %6409
    %6411 = vrot.lane.b32.xlu0 %v6230, 96
    %v6412 = vpop.permute.xlu0 %6411
    %6413 = vrot.lane.b32.xlu0 %v6231, 96
    %v6414 = vpop.permute.xlu0 %6413
    %6415 = vrot.lane.b32.xlu0 %v6232, 96
    %v6416 = vpop.permute.xlu0 %6415
    %6417 = vrot.lane.b32.xlu0 %v6233, 96
    %v6418 = vpop.permute.xlu0 %6417
    %6419 = vrot.lane.b32.xlu0 %v6234, 96
    %v6420 = vpop.permute.xlu0 %6419
    %6421 = vrot.lane.b32.xlu0 %v6235, 96
    %v6422 = vpop.permute.xlu0 %6421
    %6423 = vrot.lane.b32.xlu0 %v6236, 96
    %v6424 = vpop.permute.xlu0 %6423
    %6425 = vrot.lane.b32.xlu0 %v6237, 96
    %v6426 = vpop.permute.xlu0 %6425
    %6427 = vrot.lane.b32.xlu0 %v6238, 96
    %v6428 = vpop.permute.xlu0 %6427
    %6429 = vrot.lane.b32.xlu0 %v6239, 96
    %v6430 = vpop.permute.xlu0 %6429
    %6431 = vrot.lane.b32.xlu0 %v6240, 96
    %v6432 = vpop.permute.xlu0 %6431
    %vm6497 = vcmask 917248
    %6498 = vst.msk [vmem:[#allocation3] sm:$0xff] %vm6497, %v6306
    %6499 = vst.msk [vmem:[#allocation3 + $0x10] sm:$0xff] %vm6497, %v6308
    %6500 = vst.msk [vmem:[#allocation3 + $0x20] sm:$0xff] %vm6497, %v6310
    %6501 = vst.msk [vmem:[#allocation3 + $0x30] sm:$0xff] %vm6497, %v6312
    %6502 = vst.msk [vmem:[#allocation3 + $0x40] sm:$0xff] %vm6497, %v6314
    %6503 = vst.msk [vmem:[#allocation3 + $0x50] sm:$0xff] %vm6497, %v6316
    %6504 = vst.msk [vmem:[#allocation3 + $0x60] sm:$0xff] %vm6497, %v6318
    %6505 = vst.msk [vmem:[#allocation3 + $0x70] sm:$0xff] %vm6497, %v6320
    %6506 = vst.msk [vmem:[#allocation3 + $0x80] sm:$0xff] %vm6497, %v6322
    %6507 = vst.msk [vmem:[#allocation3 + $0x90] sm:$0xff] %vm6497, %v6324
    %6508 = vst.msk [vmem:[#allocation3 + $0xa0] sm:$0xff] %vm6497, %v6326
    %6509 = vst.msk [vmem:[#allocation3 + $0xb0] sm:$0xff] %vm6497, %v6328
    %6510 = vst.msk [vmem:[#allocation3 + $0xc0] sm:$0xff] %vm6497, %v6330
    %6511 = vst.msk [vmem:[#allocation3 + $0xd0] sm:$0xff] %vm6497, %v6332
    %6512 = vst.msk [vmem:[#allocation3 + $0xe0] sm:$0xff] %vm6497, %v6334
    %6513 = vst.msk [vmem:[#allocation3 + $0xf0] sm:$0xff] %vm6497, %v6336
    %6514 = vst.msk [vmem:[#allocation3 + $0x100] sm:$0xff] %vm6497, %v6338
    %6515 = vst.msk [vmem:[#allocation3 + $0x110] sm:$0xff] %vm6497, %v6340
    %6516 = vst.msk [vmem:[#allocation3 + $0x120] sm:$0xff] %vm6497, %v6342
    %6517 = vst.msk [vmem:[#allocation3 + $0x130] sm:$0xff] %vm6497, %v6344
    %6518 = vst.msk [vmem:[#allocation3 + $0x140] sm:$0xff] %vm6497, %v6346
    %6519 = vst.msk [vmem:[#allocation3 + $0x150] sm:$0xff] %vm6497, %v6348
    %6520 = vst.msk [vmem:[#allocation3 + $0x160] sm:$0xff] %vm6497, %v6350
    %6521 = vst.msk [vmem:[#allocation3 + $0x170] sm:$0xff] %vm6497, %v6352
    %6522 = vst.msk [vmem:[#allocation3 + $0x180] sm:$0xff] %vm6497, %v6354
    %6523 = vst.msk [vmem:[#allocation3 + $0x190] sm:$0xff] %vm6497, %v6356
    %6524 = vst.msk [vmem:[#allocation3 + $0x1a0] sm:$0xff] %vm6497, %v6358
    %6525 = vst.msk [vmem:[#allocation3 + $0x1b0] sm:$0xff] %vm6497, %v6360
    %6526 = vst.msk [vmem:[#allocation3 + $0x1c0] sm:$0xff] %vm6497, %v6362
    %6527 = vst.msk [vmem:[#allocation3 + $0x1d0] sm:$0xff] %vm6497, %v6364
    %6528 = vst.msk [vmem:[#allocation3 + $0x1e0] sm:$0xff] %vm6497, %v6366
    %6529 = vst.msk [vmem:[#allocation3 + $0x1f0] sm:$0xff] %vm6497, %v6368
    %6530 = vst.msk [vmem:[#allocation3 + $0x200] sm:$0xff] %vm6497, %v6370
    %6531 = vst.msk [vmem:[#allocation3 + $0x210] sm:$0xff] %vm6497, %v6372
    %6532 = vst.msk [vmem:[#allocation3 + $0x220] sm:$0xff] %vm6497, %v6374
    %6533 = vst.msk [vmem:[#allocation3 + $0x230] sm:$0xff] %vm6497, %v6376
    %6534 = vst.msk [vmem:[#allocation3 + $0x240] sm:$0xff] %vm6497, %v6378
    %6535 = vst.msk [vmem:[#allocation3 + $0x250] sm:$0xff] %vm6497, %v6380
    %6536 = vst.msk [vmem:[#allocation3 + $0x260] sm:$0xff] %vm6497, %v6382
    %6537 = vst.msk [vmem:[#allocation3 + $0x270] sm:$0xff] %vm6497, %v6384
    %6538 = vst.msk [vmem:[#allocation3 + $0x280] sm:$0xff] %vm6497, %v6386
    %6539 = vst.msk [vmem:[#allocation3 + $0x290] sm:$0xff] %vm6497, %v6388
    %6540 = vst.msk [vmem:[#allocation3 + $0x2a0] sm:$0xff] %vm6497, %v6390
    %6541 = vst.msk [vmem:[#allocation3 + $0x2b0] sm:$0xff] %vm6497, %v6392
    %6542 = vst.msk [vmem:[#allocation3 + $0x2c0] sm:$0xff] %vm6497, %v6394
    %6543 = vst.msk [vmem:[#allocation3 + $0x2d0] sm:$0xff] %vm6497, %v6396
    %6544 = vst.msk [vmem:[#allocation3 + $0x2e0] sm:$0xff] %vm6497, %v6398
    %6545 = vst.msk [vmem:[#allocation3 + $0x2f0] sm:$0xff] %vm6497, %v6400
    %6546 = vst.msk [vmem:[#allocation3 + $0x300] sm:$0xff] %vm6497, %v6402
    %6547 = vst.msk [vmem:[#allocation3 + $0x310] sm:$0xff] %vm6497, %v6404
    %6548 = vst.msk [vmem:[#allocation3 + $0x320] sm:$0xff] %vm6497, %v6406
    %6549 = vst.msk [vmem:[#allocation3 + $0x330] sm:$0xff] %vm6497, %v6408
    %6550 = vst.msk [vmem:[#allocation3 + $0x340] sm:$0xff] %vm6497, %v6410
    %6551 = vst.msk [vmem:[#allocation3 + $0x350] sm:$0xff] %vm6497, %v6412
    %6552 = vst.msk [vmem:[#allocation3 + $0x360] sm:$0xff] %vm6497, %v6414
    %6553 = vst.msk [vmem:[#allocation3 + $0x370] sm:$0xff] %vm6497, %v6416
    %6554 = vst.msk [vmem:[#allocation3 + $0x380] sm:$0xff] %vm6497, %v6418
    %6555 = vst.msk [vmem:[#allocation3 + $0x390] sm:$0xff] %vm6497, %v6420
    %6556 = vst.msk [vmem:[#allocation3 + $0x3a0] sm:$0xff] %vm6497, %v6422
    %6557 = vst.msk [vmem:[#allocation3 + $0x3b0] sm:$0xff] %vm6497, %v6424
    %6558 = vst.msk [vmem:[#allocation3 + $0x3c0] sm:$0xff] %vm6497, %v6426
    %6559 = vst.msk [vmem:[#allocation3 + $0x3d0] sm:$0xff] %vm6497, %v6428
    %6560 = vst.msk [vmem:[#allocation3 + $0x3e0] sm:$0xff] %vm6497, %v6430
    %6561 = vst.msk [vmem:[#allocation3 + $0x3f0] sm:$0xff] %vm6497, %v6432
    %v6562 = vld [vmem:[%s2327 + $0x1] sm:$0xff]
    %v6563 = vld [vmem:[%s2327 + $0x9] sm:$0xff]
    %v6564 = vld [vmem:[%s2327 + $0x19] sm:$0xff]
    %v6565 = vld [vmem:[%s2327 + $0x21] sm:$0xff]
    %v6566 = vld [vmem:[%s2327 + $0x31] sm:$0xff]
    %v6567 = vld [vmem:[%s2327 + $0x39] sm:$0xff]
    %v6568 = vld [vmem:[%s2327 + $0x49] sm:$0xff]
    %v6569 = vld [vmem:[%s2327 + $0x51] sm:$0xff]
    %v6570 = vld [vmem:[%s2327 + $0x61] sm:$0xff]
    %v6571 = vld [vmem:[%s2327 + $0x69] sm:$0xff]
    %v6572 = vld [vmem:[%s2327 + $0x79] sm:$0xff]
    %v6573 = vld [vmem:[%s2327 + $0x81] sm:$0xff]
    %v6574 = vld [vmem:[%s2327 + $0x91] sm:$0xff]
    %v6575 = vld [vmem:[%s2327 + $0x99] sm:$0xff]
    %v6576 = vld [vmem:[%s2327 + $0xa9] sm:$0xff]
    %v6577 = vld [vmem:[%s2327 + $0xb1] sm:$0xff]
    %v6578 = vld [vmem:[%s2327 + $0xc1] sm:$0xff]
    %v6579 = vld [vmem:[%s2327 + $0xc9] sm:$0xff]
    %v6580 = vld [vmem:[%s2327 + $0xd9] sm:$0xff]
    %v6581 = vld [vmem:[%s2327 + $0xe1] sm:$0xff]
    %v6582 = vld [vmem:[%s2327 + $0xf1] sm:$0xff]
    %v6583 = vld [vmem:[%s2327 + $0xf9] sm:$0xff]
    %v6584 = vld [vmem:[%s2327 + $0x109] sm:$0xff]
    %v6585 = vld [vmem:[%s2327 + $0x111] sm:$0xff]
    %v6586 = vld [vmem:[%s2327 + $0x121] sm:$0xff]
    %v6587 = vld [vmem:[%s2327 + $0x129] sm:$0xff]
    %v6588 = vld [vmem:[%s2327 + $0x139] sm:$0xff]
    %v6589 = vld [vmem:[%s2327 + $0x141] sm:$0xff]
    %v6590 = vld [vmem:[%s2327 + $0x151] sm:$0xff]
    %v6591 = vld [vmem:[%s2327 + $0x159] sm:$0xff]
    %v6592 = vld [vmem:[%s2327 + $0x169] sm:$0xff]
    %v6593 = vld [vmem:[%s2327 + $0x171] sm:$0xff]
    %v6594 = vld [vmem:[%s2327 + $0x1b1] sm:$0xff]
    %v6595 = vld [vmem:[%s2327 + $0x1b9] sm:$0xff]
    %v6596 = vld [vmem:[%s2327 + $0x1c9] sm:$0xff]
    %v6597 = vld [vmem:[%s2327 + $0x1d1] sm:$0xff]
    %v6598 = vld [vmem:[%s2327 + $0x1e1] sm:$0xff]
    %v6599 = vld [vmem:[%s2327 + $0x1e9] sm:$0xff]
    %v6600 = vld [vmem:[%s2327 + $0x1f9] sm:$0xff]
    %v6601 = vld [vmem:[%s2327 + $0x201] sm:$0xff]
    %v6602 = vld [vmem:[%s2327 + $0x211] sm:$0xff]
    %v6603 = vld [vmem:[%s2327 + $0x219] sm:$0xff]
    %v6604 = vld [vmem:[%s2327 + $0x229] sm:$0xff]
    %v6605 = vld [vmem:[%s2327 + $0x231] sm:$0xff]
    %v6606 = vld [vmem:[%s2327 + $0x241] sm:$0xff]
    %v6607 = vld [vmem:[%s2327 + $0x249] sm:$0xff]
    %v6608 = vld [vmem:[%s2327 + $0x259] sm:$0xff]
    %v6609 = vld [vmem:[%s2327 + $0x261] sm:$0xff]
    %v6610 = vld [vmem:[%s2327 + $0x271] sm:$0xff]
    %v6611 = vld [vmem:[%s2327 + $0x279] sm:$0xff]
    %v6612 = vld [vmem:[%s2327 + $0x289] sm:$0xff]
    %v6613 = vld [vmem:[%s2327 + $0x291] sm:$0xff]
    %v6614 = vld [vmem:[%s2327 + $0x2a1] sm:$0xff]
    %v6615 = vld [vmem:[%s2327 + $0x2a9] sm:$0xff]
    %v6616 = vld [vmem:[%s2327 + $0x2b9] sm:$0xff]
    %v6617 = vld [vmem:[%s2327 + $0x2c1] sm:$0xff]
    %v6618 = vld [vmem:[%s2327 + $0x2d1] sm:$0xff]
    %v6619 = vld [vmem:[%s2327 + $0x2d9] sm:$0xff]
    %v6620 = vld [vmem:[%s2327 + $0x2e9] sm:$0xff]
    %v6621 = vld [vmem:[%s2327 + $0x2f1] sm:$0xff]
    %v6622 = vld [vmem:[%s2327 + $0x301] sm:$0xff]
    %v6623 = vld [vmem:[%s2327 + $0x309] sm:$0xff]
    %v6624 = vld [vmem:[%s2327 + $0x319] sm:$0xff]
    %v6625 = vld [vmem:[%s2327 + $0x321] sm:$0xff]
    %6690 = vrot.lane.b32.xlu0 %v6562, 112
    %v6691 = vpop.permute.xlu0 %6690
    %6692 = vrot.lane.b32.xlu0 %v6563, 112
    %v6693 = vpop.permute.xlu0 %6692
    %6694 = vrot.lane.b32.xlu0 %v6564, 112
    %v6695 = vpop.permute.xlu0 %6694
    %6696 = vrot.lane.b32.xlu0 %v6565, 112
    %v6697 = vpop.permute.xlu0 %6696
    %6698 = vrot.lane.b32.xlu0 %v6566, 112
    %v6699 = vpop.permute.xlu0 %6698
    %6700 = vrot.lane.b32.xlu0 %v6567, 112
    %v6701 = vpop.permute.xlu0 %6700
    %6702 = vrot.lane.b32.xlu0 %v6568, 112
    %v6703 = vpop.permute.xlu0 %6702
    %6704 = vrot.lane.b32.xlu0 %v6569, 112
    %v6705 = vpop.permute.xlu0 %6704
    %6706 = vrot.lane.b32.xlu0 %v6570, 112
    %v6707 = vpop.permute.xlu0 %6706
    %6708 = vrot.lane.b32.xlu0 %v6571, 112
    %v6709 = vpop.permute.xlu0 %6708
    %6710 = vrot.lane.b32.xlu0 %v6572, 112
    %v6711 = vpop.permute.xlu0 %6710
    %6712 = vrot.lane.b32.xlu0 %v6573, 112
    %v6713 = vpop.permute.xlu0 %6712
    %6714 = vrot.lane.b32.xlu0 %v6574, 112
    %v6715 = vpop.permute.xlu0 %6714
    %6716 = vrot.lane.b32.xlu0 %v6575, 112
    %v6717 = vpop.permute.xlu0 %6716
    %6718 = vrot.lane.b32.xlu0 %v6576, 112
    %v6719 = vpop.permute.xlu0 %6718
    %6720 = vrot.lane.b32.xlu0 %v6577, 112
    %v6721 = vpop.permute.xlu0 %6720
    %6722 = vrot.lane.b32.xlu0 %v6578, 112
    %v6723 = vpop.permute.xlu0 %6722
    %6724 = vrot.lane.b32.xlu0 %v6579, 112
    %v6725 = vpop.permute.xlu0 %6724
    %6726 = vrot.lane.b32.xlu0 %v6580, 112
    %v6727 = vpop.permute.xlu0 %6726
    %6728 = vrot.lane.b32.xlu0 %v6581, 112
    %v6729 = vpop.permute.xlu0 %6728
    %6730 = vrot.lane.b32.xlu0 %v6582, 112
    %v6731 = vpop.permute.xlu0 %6730
    %6732 = vrot.lane.b32.xlu0 %v6583, 112
    %v6733 = vpop.permute.xlu0 %6732
    %6734 = vrot.lane.b32.xlu0 %v6584, 112
    %v6735 = vpop.permute.xlu0 %6734
    %6736 = vrot.lane.b32.xlu0 %v6585, 112
    %v6737 = vpop.permute.xlu0 %6736
    %6738 = vrot.lane.b32.xlu0 %v6586, 112
    %v6739 = vpop.permute.xlu0 %6738
    %6740 = vrot.lane.b32.xlu0 %v6587, 112
    %v6741 = vpop.permute.xlu0 %6740
    %6742 = vrot.lane.b32.xlu0 %v6588, 112
    %v6743 = vpop.permute.xlu0 %6742
    %6744 = vrot.lane.b32.xlu0 %v6589, 112
    %v6745 = vpop.permute.xlu0 %6744
    %6746 = vrot.lane.b32.xlu0 %v6590, 112
    %v6747 = vpop.permute.xlu0 %6746
    %6748 = vrot.lane.b32.xlu0 %v6591, 112
    %v6749 = vpop.permute.xlu0 %6748
    %6750 = vrot.lane.b32.xlu0 %v6592, 112
    %v6751 = vpop.permute.xlu0 %6750
    %6752 = vrot.lane.b32.xlu0 %v6593, 112
    %v6753 = vpop.permute.xlu0 %6752
    %6754 = vrot.lane.b32.xlu0 %v6594, 112
    %v6755 = vpop.permute.xlu0 %6754
    %6756 = vrot.lane.b32.xlu0 %v6595, 112
    %v6757 = vpop.permute.xlu0 %6756
    %6758 = vrot.lane.b32.xlu0 %v6596, 112
    %v6759 = vpop.permute.xlu0 %6758
    %6760 = vrot.lane.b32.xlu0 %v6597, 112
    %v6761 = vpop.permute.xlu0 %6760
    %6762 = vrot.lane.b32.xlu0 %v6598, 112
    %v6763 = vpop.permute.xlu0 %6762
    %6764 = vrot.lane.b32.xlu0 %v6599, 112
    %v6765 = vpop.permute.xlu0 %6764
    %6766 = vrot.lane.b32.xlu0 %v6600, 112
    %v6767 = vpop.permute.xlu0 %6766
    %6768 = vrot.lane.b32.xlu0 %v6601, 112
    %v6769 = vpop.permute.xlu0 %6768
    %6770 = vrot.lane.b32.xlu0 %v6602, 112
    %v6771 = vpop.permute.xlu0 %6770
    %6772 = vrot.lane.b32.xlu0 %v6603, 112
    %v6773 = vpop.permute.xlu0 %6772
    %6774 = vrot.lane.b32.xlu0 %v6604, 112
    %v6775 = vpop.permute.xlu0 %6774
    %6776 = vrot.lane.b32.xlu0 %v6605, 112
    %v6777 = vpop.permute.xlu0 %6776
    %6778 = vrot.lane.b32.xlu0 %v6606, 112
    %v6779 = vpop.permute.xlu0 %6778
    %6780 = vrot.lane.b32.xlu0 %v6607, 112
    %v6781 = vpop.permute.xlu0 %6780
    %6782 = vrot.lane.b32.xlu0 %v6608, 112
    %v6783 = vpop.permute.xlu0 %6782
    %6784 = vrot.lane.b32.xlu0 %v6609, 112
    %v6785 = vpop.permute.xlu0 %6784
    %6786 = vrot.lane.b32.xlu0 %v6610, 112
    %v6787 = vpop.permute.xlu0 %6786
    %6788 = vrot.lane.b32.xlu0 %v6611, 112
    %v6789 = vpop.permute.xlu0 %6788
    %6790 = vrot.lane.b32.xlu0 %v6612, 112
    %v6791 = vpop.permute.xlu0 %6790
    %6792 = vrot.lane.b32.xlu0 %v6613, 112
    %v6793 = vpop.permute.xlu0 %6792
    %6794 = vrot.lane.b32.xlu0 %v6614, 112
    %v6795 = vpop.permute.xlu0 %6794
    %6796 = vrot.lane.b32.xlu0 %v6615, 112
    %v6797 = vpop.permute.xlu0 %6796
    %6798 = vrot.lane.b32.xlu0 %v6616, 112
    %v6799 = vpop.permute.xlu0 %6798
    %6800 = vrot.lane.b32.xlu0 %v6617, 112
    %v6801 = vpop.permute.xlu0 %6800
    %6802 = vrot.lane.b32.xlu0 %v6618, 112
    %v6803 = vpop.permute.xlu0 %6802
    %6804 = vrot.lane.b32.xlu0 %v6619, 112
    %v6805 = vpop.permute.xlu0 %6804
    %6806 = vrot.lane.b32.xlu0 %v6620, 112
    %v6807 = vpop.permute.xlu0 %6806
    %6808 = vrot.lane.b32.xlu0 %v6621, 112
    %v6809 = vpop.permute.xlu0 %6808
    %6810 = vrot.lane.b32.xlu0 %v6622, 112
    %v6811 = vpop.permute.xlu0 %6810
    %6812 = vrot.lane.b32.xlu0 %v6623, 112
    %v6813 = vpop.permute.xlu0 %6812
    %6814 = vrot.lane.b32.xlu0 %v6624, 112
    %v6815 = vpop.permute.xlu0 %6814
    %6816 = vrot.lane.b32.xlu0 %v6625, 112
    %v6817 = vpop.permute.xlu0 %6816
    %vm6882 = vcmask 1048448
    %6883 = vst.msk [vmem:[#allocation3] sm:$0xff] %vm6882, %v6691
    %6884 = vst.msk [vmem:[#allocation3 + $0x10] sm:$0xff] %vm6882, %v6693
    %6885 = vst.msk [vmem:[#allocation3 + $0x20] sm:$0xff] %vm6882, %v6695
    %6886 = vst.msk [vmem:[#allocation3 + $0x30] sm:$0xff] %vm6882, %v6697
    %6887 = vst.msk [vmem:[#allocation3 + $0x40] sm:$0xff] %vm6882, %v6699
    %6888 = vst.msk [vmem:[#allocation3 + $0x50] sm:$0xff] %vm6882, %v6701
    %6889 = vst.msk [vmem:[#allocation3 + $0x60] sm:$0xff] %vm6882, %v6703
    %6890 = vst.msk [vmem:[#allocation3 + $0x70] sm:$0xff] %vm6882, %v6705
    %6891 = vst.msk [vmem:[#allocation3 + $0x80] sm:$0xff] %vm6882, %v6707
    %6892 = vst.msk [vmem:[#allocation3 + $0x90] sm:$0xff] %vm6882, %v6709
    %6893 = vst.msk [vmem:[#allocation3 + $0xa0] sm:$0xff] %vm6882, %v6711
    %6894 = vst.msk [vmem:[#allocation3 + $0xb0] sm:$0xff] %vm6882, %v6713
    %6895 = vst.msk [vmem:[#allocation3 + $0xc0] sm:$0xff] %vm6882, %v6715
    %6896 = vst.msk [vmem:[#allocation3 + $0xd0] sm:$0xff] %vm6882, %v6717
    %6897 = vst.msk [vmem:[#allocation3 + $0xe0] sm:$0xff] %vm6882, %v6719
    %6898 = vst.msk [vmem:[#allocation3 + $0xf0] sm:$0xff] %vm6882, %v6721
    %6899 = vst.msk [vmem:[#allocation3 + $0x100] sm:$0xff] %vm6882, %v6723
    %6900 = vst.msk [vmem:[#allocation3 + $0x110] sm:$0xff] %vm6882, %v6725
    %6901 = vst.msk [vmem:[#allocation3 + $0x120] sm:$0xff] %vm6882, %v6727
    %6902 = vst.msk [vmem:[#allocation3 + $0x130] sm:$0xff] %vm6882, %v6729
    %6903 = vst.msk [vmem:[#allocation3 + $0x140] sm:$0xff] %vm6882, %v6731
    %6904 = vst.msk [vmem:[#allocation3 + $0x150] sm:$0xff] %vm6882, %v6733
    %6905 = vst.msk [vmem:[#allocation3 + $0x160] sm:$0xff] %vm6882, %v6735
    %6906 = vst.msk [vmem:[#allocation3 + $0x170] sm:$0xff] %vm6882, %v6737
    %6907 = vst.msk [vmem:[#allocation3 + $0x180] sm:$0xff] %vm6882, %v6739
    %6908 = vst.msk [vmem:[#allocation3 + $0x190] sm:$0xff] %vm6882, %v6741
    %6909 = vst.msk [vmem:[#allocation3 + $0x1a0] sm:$0xff] %vm6882, %v6743
    %6910 = vst.msk [vmem:[#allocation3 + $0x1b0] sm:$0xff] %vm6882, %v6745
    %6911 = vst.msk [vmem:[#allocation3 + $0x1c0] sm:$0xff] %vm6882, %v6747
    %6912 = vst.msk [vmem:[#allocation3 + $0x1d0] sm:$0xff] %vm6882, %v6749
    %6913 = vst.msk [vmem:[#allocation3 + $0x1e0] sm:$0xff] %vm6882, %v6751
    %6914 = vst.msk [vmem:[#allocation3 + $0x1f0] sm:$0xff] %vm6882, %v6753
    %6915 = vst.msk [vmem:[#allocation3 + $0x200] sm:$0xff] %vm6882, %v6755
    %6916 = vst.msk [vmem:[#allocation3 + $0x210] sm:$0xff] %vm6882, %v6757
    %6917 = vst.msk [vmem:[#allocation3 + $0x220] sm:$0xff] %vm6882, %v6759
    %6918 = vst.msk [vmem:[#allocation3 + $0x230] sm:$0xff] %vm6882, %v6761
    %6919 = vst.msk [vmem:[#allocation3 + $0x240] sm:$0xff] %vm6882, %v6763
    %6920 = vst.msk [vmem:[#allocation3 + $0x250] sm:$0xff] %vm6882, %v6765
    %6921 = vst.msk [vmem:[#allocation3 + $0x260] sm:$0xff] %vm6882, %v6767
    %6922 = vst.msk [vmem:[#allocation3 + $0x270] sm:$0xff] %vm6882, %v6769
    %6923 = vst.msk [vmem:[#allocation3 + $0x280] sm:$0xff] %vm6882, %v6771
    %6924 = vst.msk [vmem:[#allocation3 + $0x290] sm:$0xff] %vm6882, %v6773
    %6925 = vst.msk [vmem:[#allocation3 + $0x2a0] sm:$0xff] %vm6882, %v6775
    %6926 = vst.msk [vmem:[#allocation3 + $0x2b0] sm:$0xff] %vm6882, %v6777
    %6927 = vst.msk [vmem:[#allocation3 + $0x2c0] sm:$0xff] %vm6882, %v6779
    %6928 = vst.msk [vmem:[#allocation3 + $0x2d0] sm:$0xff] %vm6882, %v6781
    %6929 = vst.msk [vmem:[#allocation3 + $0x2e0] sm:$0xff] %vm6882, %v6783
    %6930 = vst.msk [vmem:[#allocation3 + $0x2f0] sm:$0xff] %vm6882, %v6785
    %6931 = vst.msk [vmem:[#allocation3 + $0x300] sm:$0xff] %vm6882, %v6787
    %6932 = vst.msk [vmem:[#allocation3 + $0x310] sm:$0xff] %vm6882, %v6789
    %6933 = vst.msk [vmem:[#allocation3 + $0x320] sm:$0xff] %vm6882, %v6791
    %6934 = vst.msk [vmem:[#allocation3 + $0x330] sm:$0xff] %vm6882, %v6793
    %6935 = vst.msk [vmem:[#allocation3 + $0x340] sm:$0xff] %vm6882, %v6795
    %6936 = vst.msk [vmem:[#allocation3 + $0x350] sm:$0xff] %vm6882, %v6797
    %6937 = vst.msk [vmem:[#allocation3 + $0x360] sm:$0xff] %vm6882, %v6799
    %6938 = vst.msk [vmem:[#allocation3 + $0x370] sm:$0xff] %vm6882, %v6801
    %6939 = vst.msk [vmem:[#allocation3 + $0x380] sm:$0xff] %vm6882, %v6803
    %6940 = vst.msk [vmem:[#allocation3 + $0x390] sm:$0xff] %vm6882, %v6805
    %6941 = vst.msk [vmem:[#allocation3 + $0x3a0] sm:$0xff] %vm6882, %v6807
    %6942 = vst.msk [vmem:[#allocation3 + $0x3b0] sm:$0xff] %vm6882, %v6809
    %6943 = vst.msk [vmem:[#allocation3 + $0x3c0] sm:$0xff] %vm6882, %v6811
    %6944 = vst.msk [vmem:[#allocation3 + $0x3d0] sm:$0xff] %vm6882, %v6813
    %6945 = vst.msk [vmem:[#allocation3 + $0x3e0] sm:$0xff] %vm6882, %v6815
    %6946 = vst.msk [vmem:[#allocation3 + $0x3f0] sm:$0xff] %vm6882, %v6817
    %v6947 = vld [vmem:[%s2327 + $0x2] sm:$0xff]
    %v6948 = vld [vmem:[%s2327 + $0xa] sm:$0xff]
    %v6949 = vld [vmem:[%s2327 + $0x1a] sm:$0xff]
    %v6950 = vld [vmem:[%s2327 + $0x22] sm:$0xff]
    %v6951 = vld [vmem:[%s2327 + $0x32] sm:$0xff]
    %v6952 = vld [vmem:[%s2327 + $0x3a] sm:$0xff]
    %v6953 = vld [vmem:[%s2327 + $0x4a] sm:$0xff]
    %v6954 = vld [vmem:[%s2327 + $0x52] sm:$0xff]
    %v6955 = vld [vmem:[%s2327 + $0x62] sm:$0xff]
    %v6956 = vld [vmem:[%s2327 + $0x6a] sm:$0xff]
    %v6957 = vld [vmem:[%s2327 + $0x7a] sm:$0xff]
    %v6958 = vld [vmem:[%s2327 + $0x82] sm:$0xff]
    %v6959 = vld [vmem:[%s2327 + $0x92] sm:$0xff]
    %v6960 = vld [vmem:[%s2327 + $0x9a] sm:$0xff]
    %v6961 = vld [vmem:[%s2327 + $0xaa] sm:$0xff]
    %v6962 = vld [vmem:[%s2327 + $0xb2] sm:$0xff]
    %v6963 = vld [vmem:[%s2327 + $0xc2] sm:$0xff]
    %v6964 = vld [vmem:[%s2327 + $0xca] sm:$0xff]
    %v6965 = vld [vmem:[%s2327 + $0xda] sm:$0xff]
    %v6966 = vld [vmem:[%s2327 + $0xe2] sm:$0xff]
    %v6967 = vld [vmem:[%s2327 + $0xf2] sm:$0xff]
    %v6968 = vld [vmem:[%s2327 + $0xfa] sm:$0xff]
    %v6969 = vld [vmem:[%s2327 + $0x10a] sm:$0xff]
    %v6970 = vld [vmem:[%s2327 + $0x112] sm:$0xff]
    %v6971 = vld [vmem:[%s2327 + $0x122] sm:$0xff]
    %v6972 = vld [vmem:[%s2327 + $0x12a] sm:$0xff]
    %v6973 = vld [vmem:[%s2327 + $0x13a] sm:$0xff]
    %v6974 = vld [vmem:[%s2327 + $0x142] sm:$0xff]
    %v6975 = vld [vmem:[%s2327 + $0x152] sm:$0xff]
    %v6976 = vld [vmem:[%s2327 + $0x15a] sm:$0xff]
    %v6977 = vld [vmem:[%s2327 + $0x16a] sm:$0xff]
    %v6978 = vld [vmem:[%s2327 + $0x172] sm:$0xff]
    %v6979 = vld [vmem:[%s2327 + $0x1b2] sm:$0xff]
    %v6980 = vld [vmem:[%s2327 + $0x1ba] sm:$0xff]
    %v6981 = vld [vmem:[%s2327 + $0x1ca] sm:$0xff]
    %v6982 = vld [vmem:[%s2327 + $0x1d2] sm:$0xff]
    %v6983 = vld [vmem:[%s2327 + $0x1e2] sm:$0xff]
    %v6984 = vld [vmem:[%s2327 + $0x1ea] sm:$0xff]
    %v6985 = vld [vmem:[%s2327 + $0x1fa] sm:$0xff]
    %v6986 = vld [vmem:[%s2327 + $0x202] sm:$0xff]
    %v6987 = vld [vmem:[%s2327 + $0x212] sm:$0xff]
    %v6988 = vld [vmem:[%s2327 + $0x21a] sm:$0xff]
    %v6989 = vld [vmem:[%s2327 + $0x22a] sm:$0xff]
    %v6990 = vld [vmem:[%s2327 + $0x232] sm:$0xff]
    %v6991 = vld [vmem:[%s2327 + $0x242] sm:$0xff]
    %v6992 = vld [vmem:[%s2327 + $0x24a] sm:$0xff]
    %v6993 = vld [vmem:[%s2327 + $0x25a] sm:$0xff]
    %v6994 = vld [vmem:[%s2327 + $0x262] sm:$0xff]
    %v6995 = vld [vmem:[%s2327 + $0x272] sm:$0xff]
    %v6996 = vld [vmem:[%s2327 + $0x27a] sm:$0xff]
    %v6997 = vld [vmem:[%s2327 + $0x28a] sm:$0xff]
    %v6998 = vld [vmem:[%s2327 + $0x292] sm:$0xff]
    %v6999 = vld [vmem:[%s2327 + $0x2a2] sm:$0xff]
    %v7000 = vld [vmem:[%s2327 + $0x2aa] sm:$0xff]
    %v7001 = vld [vmem:[%s2327 + $0x2ba] sm:$0xff]
    %v7002 = vld [vmem:[%s2327 + $0x2c2] sm:$0xff]
    %v7003 = vld [vmem:[%s2327 + $0x2d2] sm:$0xff]
    %v7004 = vld [vmem:[%s2327 + $0x2da] sm:$0xff]
    %v7005 = vld [vmem:[%s2327 + $0x2ea] sm:$0xff]
    %v7006 = vld [vmem:[%s2327 + $0x2f2] sm:$0xff]
    %v7007 = vld [vmem:[%s2327 + $0x302] sm:$0xff]
    %v7008 = vld [vmem:[%s2327 + $0x30a] sm:$0xff]
    %v7009 = vld [vmem:[%s2327 + $0x31a] sm:$0xff]
    %v7010 = vld [vmem:[%s2327 + $0x322] sm:$0xff]
    %7011 = vst.msk [vmem:[#allocation3 + $0x8] sm:$0xff] %vm34, %v6947
    %7012 = vst.msk [vmem:[#allocation3 + $0x18] sm:$0xff] %vm34, %v6948
    %7013 = vst.msk [vmem:[#allocation3 + $0x28] sm:$0xff] %vm34, %v6949
    %7014 = vst.msk [vmem:[#allocation3 + $0x38] sm:$0xff] %vm34, %v6950
    %7015 = vst.msk [vmem:[#allocation3 + $0x48] sm:$0xff] %vm34, %v6951
    %7016 = vst.msk [vmem:[#allocation3 + $0x58] sm:$0xff] %vm34, %v6952
    %7017 = vst.msk [vmem:[#allocation3 + $0x68] sm:$0xff] %vm34, %v6953
    %7018 = vst.msk [vmem:[#allocation3 + $0x78] sm:$0xff] %vm34, %v6954
    %7019 = vst.msk [vmem:[#allocation3 + $0x88] sm:$0xff] %vm34, %v6955
    %7020 = vst.msk [vmem:[#allocation3 + $0x98] sm:$0xff] %vm34, %v6956
    %7021 = vst.msk [vmem:[#allocation3 + $0xa8] sm:$0xff] %vm34, %v6957
    %7022 = vst.msk [vmem:[#allocation3 + $0xb8] sm:$0xff] %vm34, %v6958
    %7023 = vst.msk [vmem:[#allocation3 + $0xc8] sm:$0xff] %vm34, %v6959
    %7024 = vst.msk [vmem:[#allocation3 + $0xd8] sm:$0xff] %vm34, %v6960
    %7025 = vst.msk [vmem:[#allocation3 + $0xe8] sm:$0xff] %vm34, %v6961
    %7026 = vst.msk [vmem:[#allocation3 + $0xf8] sm:$0xff] %vm34, %v6962
    %7027 = vst.msk [vmem:[#allocation3 + $0x108] sm:$0xff] %vm34, %v6963
    %7028 = vst.msk [vmem:[#allocation3 + $0x118] sm:$0xff] %vm34, %v6964
    %7029 = vst.msk [vmem:[#allocation3 + $0x128] sm:$0xff] %vm34, %v6965
    %7030 = vst.msk [vmem:[#allocation3 + $0x138] sm:$0xff] %vm34, %v6966
    %7031 = vst.msk [vmem:[#allocation3 + $0x148] sm:$0xff] %vm34, %v6967
    %7032 = vst.msk [vmem:[#allocation3 + $0x158] sm:$0xff] %vm34, %v6968
    %7033 = vst.msk [vmem:[#allocation3 + $0x168] sm:$0xff] %vm34, %v6969
    %7034 = vst.msk [vmem:[#allocation3 + $0x178] sm:$0xff] %vm34, %v6970
    %7035 = vst.msk [vmem:[#allocation3 + $0x188] sm:$0xff] %vm34, %v6971
    %7036 = vst.msk [vmem:[#allocation3 + $0x198] sm:$0xff] %vm34, %v6972
    %7037 = vst.msk [vmem:[#allocation3 + $0x1a8] sm:$0xff] %vm34, %v6973
    %7038 = vst.msk [vmem:[#allocation3 + $0x1b8] sm:$0xff] %vm34, %v6974
    %7039 = vst.msk [vmem:[#allocation3 + $0x1c8] sm:$0xff] %vm34, %v6975
    %7040 = vst.msk [vmem:[#allocation3 + $0x1d8] sm:$0xff] %vm34, %v6976
    %7041 = vst.msk [vmem:[#allocation3 + $0x1e8] sm:$0xff] %vm34, %v6977
    %7042 = vst.msk [vmem:[#allocation3 + $0x1f8] sm:$0xff] %vm34, %v6978
    %7043 = vst.msk [vmem:[#allocation3 + $0x208] sm:$0xff] %vm34, %v6979
    %7044 = vst.msk [vmem:[#allocation3 + $0x218] sm:$0xff] %vm34, %v6980
    %7045 = vst.msk [vmem:[#allocation3 + $0x228] sm:$0xff] %vm34, %v6981
    %7046 = vst.msk [vmem:[#allocation3 + $0x238] sm:$0xff] %vm34, %v6982
    %7047 = vst.msk [vmem:[#allocation3 + $0x248] sm:$0xff] %vm34, %v6983
    %7048 = vst.msk [vmem:[#allocation3 + $0x258] sm:$0xff] %vm34, %v6984
    %7049 = vst.msk [vmem:[#allocation3 + $0x268] sm:$0xff] %vm34, %v6985
    %7050 = vst.msk [vmem:[#allocation3 + $0x278] sm:$0xff] %vm34, %v6986
    %7051 = vst.msk [vmem:[#allocation3 + $0x288] sm:$0xff] %vm34, %v6987
    %7052 = vst.msk [vmem:[#allocation3 + $0x298] sm:$0xff] %vm34, %v6988
    %7053 = vst.msk [vmem:[#allocation3 + $0x2a8] sm:$0xff] %vm34, %v6989
    %7054 = vst.msk [vmem:[#allocation3 + $0x2b8] sm:$0xff] %vm34, %v6990
    %7055 = vst.msk [vmem:[#allocation3 + $0x2c8] sm:$0xff] %vm34, %v6991
    %7056 = vst.msk [vmem:[#allocation3 + $0x2d8] sm:$0xff] %vm34, %v6992
    %7057 = vst.msk [vmem:[#allocation3 + $0x2e8] sm:$0xff] %vm34, %v6993
    %7058 = vst.msk [vmem:[#allocation3 + $0x2f8] sm:$0xff] %vm34, %v6994
    %7059 = vst.msk [vmem:[#allocation3 + $0x308] sm:$0xff] %vm34, %v6995
    %7060 = vst.msk [vmem:[#allocation3 + $0x318] sm:$0xff] %vm34, %v6996
    %7061 = vst.msk [vmem:[#allocation3 + $0x328] sm:$0xff] %vm34, %v6997
    %7062 = vst.msk [vmem:[#allocation3 + $0x338] sm:$0xff] %vm34, %v6998
    %7063 = vst.msk [vmem:[#allocation3 + $0x348] sm:$0xff] %vm34, %v6999
    %7064 = vst.msk [vmem:[#allocation3 + $0x358] sm:$0xff] %vm34, %v7000
    %7065 = vst.msk [vmem:[#allocation3 + $0x368] sm:$0xff] %vm34, %v7001
    %7066 = vst.msk [vmem:[#allocation3 + $0x378] sm:$0xff] %vm34, %v7002
    %7067 = vst.msk [vmem:[#allocation3 + $0x388] sm:$0xff] %vm34, %v7003
    %7068 = vst.msk [vmem:[#allocation3 + $0x398] sm:$0xff] %vm34, %v7004
    %7069 = vst.msk [vmem:[#allocation3 + $0x3a8] sm:$0xff] %vm34, %v7005
    %7070 = vst.msk [vmem:[#allocation3 + $0x3b8] sm:$0xff] %vm34, %v7006
    %7071 = vst.msk [vmem:[#allocation3 + $0x3c8] sm:$0xff] %vm34, %v7007
    %7072 = vst.msk [vmem:[#allocation3 + $0x3d8] sm:$0xff] %vm34, %v7008
    %7073 = vst.msk [vmem:[#allocation3 + $0x3e8] sm:$0xff] %vm34, %v7009
    %7074 = vst.msk [vmem:[#allocation3 + $0x3f8] sm:$0xff] %vm34, %v7010
    %v7075 = vld [vmem:[#allocation3] sm:$0xff]
    %v7076 = vld [vmem:[#allocation3 + $0x8] sm:$0xff]
    %v7077 = vld [vmem:[#allocation3 + $0x10] sm:$0xff]
    %v7078 = vld [vmem:[#allocation3 + $0x18] sm:$0xff]
    %v7079 = vld [vmem:[#allocation3 + $0x20] sm:$0xff]
    %v7080 = vld [vmem:[#allocation3 + $0x28] sm:$0xff]
    %v7081 = vld [vmem:[#allocation3 + $0x30] sm:$0xff]
    %v7082 = vld [vmem:[#allocation3 + $0x38] sm:$0xff]
    %v7083 = vld [vmem:[#allocation3 + $0x40] sm:$0xff]
    %v7084 = vld [vmem:[#allocation3 + $0x48] sm:$0xff]
    %v7085 = vld [vmem:[#allocation3 + $0x50] sm:$0xff]
    %v7086 = vld [vmem:[#allocation3 + $0x58] sm:$0xff]
    %v7087 = vld [vmem:[#allocation3 + $0x60] sm:$0xff]
    %v7088 = vld [vmem:[#allocation3 + $0x68] sm:$0xff]
    %v7089 = vld [vmem:[#allocation3 + $0x70] sm:$0xff]
    %v7090 = vld [vmem:[#allocation3 + $0x78] sm:$0xff]
    %v7091 = vld [vmem:[#allocation3 + $0x80] sm:$0xff]
    %v7092 = vld [vmem:[#allocation3 + $0x88] sm:$0xff]
    %v7093 = vld [vmem:[#allocation3 + $0x90] sm:$0xff]
    %v7094 = vld [vmem:[#allocation3 + $0x98] sm:$0xff]
    %v7095 = vld [vmem:[#allocation3 + $0xa0] sm:$0xff]
    %v7096 = vld [vmem:[#allocation3 + $0xa8] sm:$0xff]
    %v7097 = vld [vmem:[#allocation3 + $0xb0] sm:$0xff]
    %v7098 = vld [vmem:[#allocation3 + $0xb8] sm:$0xff]
    %v7099 = vld [vmem:[#allocation3 + $0xc0] sm:$0xff]
    %v7100 = vld [vmem:[#allocation3 + $0xc8] sm:$0xff]
    %v7101 = vld [vmem:[#allocation3 + $0xd0] sm:$0xff]
    %v7102 = vld [vmem:[#allocation3 + $0xd8] sm:$0xff]
    %v7103 = vld [vmem:[#allocation3 + $0xe0] sm:$0xff]
    %v7104 = vld [vmem:[#allocation3 + $0xe8] sm:$0xff]
    %v7105 = vld [vmem:[#allocation3 + $0xf0] sm:$0xff]
    %v7106 = vld [vmem:[#allocation3 + $0xf8] sm:$0xff]
    %v7107 = vld [vmem:[#allocation3 + $0x100] sm:$0xff]
    %v7108 = vld [vmem:[#allocation3 + $0x108] sm:$0xff]
    %v7109 = vld [vmem:[#allocation3 + $0x110] sm:$0xff]
    %v7110 = vld [vmem:[#allocation3 + $0x118] sm:$0xff]
    %v7111 = vld [vmem:[#allocation3 + $0x120] sm:$0xff]
    %v7112 = vld [vmem:[#allocation3 + $0x128] sm:$0xff]
    %v7113 = vld [vmem:[#allocation3 + $0x130] sm:$0xff]
    %v7114 = vld [vmem:[#allocation3 + $0x138] sm:$0xff]
    %v7115 = vld [vmem:[#allocation3 + $0x140] sm:$0xff]
    %v7116 = vld [vmem:[#allocation3 + $0x148] sm:$0xff]
    %v7117 = vld [vmem:[#allocation3 + $0x150] sm:$0xff]
    %v7118 = vld [vmem:[#allocation3 + $0x158] sm:$0xff]
    %v7119 = vld [vmem:[#allocation3 + $0x160] sm:$0xff]
    %v7120 = vld [vmem:[#allocation3 + $0x168] sm:$0xff]
    %v7121 = vld [vmem:[#allocation3 + $0x170] sm:$0xff]
    %v7122 = vld [vmem:[#allocation3 + $0x178] sm:$0xff]
    %v7123 = vld [vmem:[#allocation3 + $0x180] sm:$0xff]
    %v7124 = vld [vmem:[#allocation3 + $0x188] sm:$0xff]
    %v7125 = vld [vmem:[#allocation3 + $0x190] sm:$0xff]
    %v7126 = vld [vmem:[#allocation3 + $0x198] sm:$0xff]
    %v7127 = vld [vmem:[#allocation3 + $0x1a0] sm:$0xff]
    %v7128 = vld [vmem:[#allocation3 + $0x1a8] sm:$0xff]
    %v7129 = vld [vmem:[#allocation3 + $0x1b0] sm:$0xff]
    %v7130 = vld [vmem:[#allocation3 + $0x1b8] sm:$0xff]
    %v7131 = vld [vmem:[#allocation3 + $0x1c0] sm:$0xff]
    %v7132 = vld [vmem:[#allocation3 + $0x1c8] sm:$0xff]
    %v7133 = vld [vmem:[#allocation3 + $0x1d0] sm:$0xff]
    %v7134 = vld [vmem:[#allocation3 + $0x1d8] sm:$0xff]
    %v7135 = vld [vmem:[#allocation3 + $0x1e0] sm:$0xff]
    %v7136 = vld [vmem:[#allocation3 + $0x1e8] sm:$0xff]
    %v7137 = vld [vmem:[#allocation3 + $0x1f0] sm:$0xff]
    %v7138 = vld [vmem:[#allocation3 + $0x1f8] sm:$0xff]
    %v7139 = vld [vmem:[#allocation3 + $0x200] sm:$0xff]
    %v7140 = vld [vmem:[#allocation3 + $0x208] sm:$0xff]
    %v7141 = vld [vmem:[#allocation3 + $0x210] sm:$0xff]
    %v7142 = vld [vmem:[#allocation3 + $0x218] sm:$0xff]
    %v7143 = vld [vmem:[#allocation3 + $0x220] sm:$0xff]
    %v7144 = vld [vmem:[#allocation3 + $0x228] sm:$0xff]
    %v7145 = vld [vmem:[#allocation3 + $0x230] sm:$0xff]
    %v7146 = vld [vmem:[#allocation3 + $0x238] sm:$0xff]
    %v7147 = vld [vmem:[#allocation3 + $0x240] sm:$0xff]
    %v7148 = vld [vmem:[#allocation3 + $0x248] sm:$0xff]
    %v7149 = vld [vmem:[#allocation3 + $0x250] sm:$0xff]
    %v7150 = vld [vmem:[#allocation3 + $0x258] sm:$0xff]
    %v7151 = vld [vmem:[#allocation3 + $0x260] sm:$0xff]
    %v7152 = vld [vmem:[#allocation3 + $0x268] sm:$0xff]
    %v7153 = vld [vmem:[#allocation3 + $0x270] sm:$0xff]
    %v7154 = vld [vmem:[#allocation3 + $0x278] sm:$0xff]
    %v7155 = vld [vmem:[#allocation3 + $0x280] sm:$0xff]
    %v7156 = vld [vmem:[#allocation3 + $0x288] sm:$0xff]
    %v7157 = vld [vmem:[#allocation3 + $0x290] sm:$0xff]
    %v7158 = vld [vmem:[#allocation3 + $0x298] sm:$0xff]
    %v7159 = vld [vmem:[#allocation3 + $0x2a0] sm:$0xff]
    %v7160 = vld [vmem:[#allocation3 + $0x2a8] sm:$0xff]
    %v7161 = vld [vmem:[#allocation3 + $0x2b0] sm:$0xff]
    %v7162 = vld [vmem:[#allocation3 + $0x2b8] sm:$0xff]
    %v7163 = vld [vmem:[#allocation3 + $0x2c0] sm:$0xff]
    %v7164 = vld [vmem:[#allocation3 + $0x2c8] sm:$0xff]
    %v7165 = vld [vmem:[#allocation3 + $0x2d0] sm:$0xff]
    %v7166 = vld [vmem:[#allocation3 + $0x2d8] sm:$0xff]
    %v7167 = vld [vmem:[#allocation3 + $0x2e0] sm:$0xff]
    %v7168 = vld [vmem:[#allocation3 + $0x2e8] sm:$0xff]
    %v7169 = vld [vmem:[#allocation3 + $0x2f0] sm:$0xff]
    %v7170 = vld [vmem:[#allocation3 + $0x2f8] sm:$0xff]
    %v7171 = vld [vmem:[#allocation3 + $0x300] sm:$0xff]
    %v7172 = vld [vmem:[#allocation3 + $0x308] sm:$0xff]
    %v7173 = vld [vmem:[#allocation3 + $0x310] sm:$0xff]
    %v7174 = vld [vmem:[#allocation3 + $0x318] sm:$0xff]
    %v7175 = vld [vmem:[#allocation3 + $0x320] sm:$0xff]
    %v7176 = vld [vmem:[#allocation3 + $0x328] sm:$0xff]
    %v7177 = vld [vmem:[#allocation3 + $0x330] sm:$0xff]
    %v7178 = vld [vmem:[#allocation3 + $0x338] sm:$0xff]
    %v7179 = vld [vmem:[#allocation3 + $0x340] sm:$0xff]
    %v7180 = vld [vmem:[#allocation3 + $0x348] sm:$0xff]
    %v7181 = vld [vmem:[#allocation3 + $0x350] sm:$0xff]
    %v7182 = vld [vmem:[#allocation3 + $0x358] sm:$0xff]
    %v7183 = vld [vmem:[#allocation3 + $0x360] sm:$0xff]
    %v7184 = vld [vmem:[#allocation3 + $0x368] sm:$0xff]
    %v7185 = vld [vmem:[#allocation3 + $0x370] sm:$0xff]
    %v7186 = vld [vmem:[#allocation3 + $0x378] sm:$0xff]
    %v7187 = vld [vmem:[#allocation3 + $0x380] sm:$0xff]
    %v7188 = vld [vmem:[#allocation3 + $0x388] sm:$0xff]
    %v7189 = vld [vmem:[#allocation3 + $0x390] sm:$0xff]
    %v7190 = vld [vmem:[#allocation3 + $0x398] sm:$0xff]
    %v7191 = vld [vmem:[#allocation3 + $0x3a0] sm:$0xff]
    %v7192 = vld [vmem:[#allocation3 + $0x3a8] sm:$0xff]
    %v7193 = vld [vmem:[#allocation3 + $0x3b0] sm:$0xff]
    %v7194 = vld [vmem:[#allocation3 + $0x3b8] sm:$0xff]
    %v7195 = vld [vmem:[#allocation3 + $0x3c0] sm:$0xff]
    %v7196 = vld [vmem:[#allocation3 + $0x3c8] sm:$0xff]
    %v7197 = vld [vmem:[#allocation3 + $0x3d0] sm:$0xff]
    %v7198 = vld [vmem:[#allocation3 + $0x3d8] sm:$0xff]
    %v7199 = vld [vmem:[#allocation3 + $0x3e0] sm:$0xff]
    %v7200 = vld [vmem:[#allocation3 + $0x3e8] sm:$0xff]
    %v7201 = vld [vmem:[#allocation3 + $0x3f0] sm:$0xff]
    %v7202 = vld [vmem:[#allocation3 + $0x3f8] sm:$0xff]
    %v7203 = vpack.c.bf16 %v7077, %v7075
    %v7204 = vpack.c.bf16 %v7078, %v7076
    %v7205 = vpack.c.bf16 %v7081, %v7079
    %v7206 = vpack.c.bf16 %v7082, %v7080
    %v7207 = vpack.c.bf16 %v7085, %v7083
    %v7208 = vpack.c.bf16 %v7086, %v7084
    %v7209 = vpack.c.bf16 %v7089, %v7087
    %v7210 = vpack.c.bf16 %v7090, %v7088
    %v7211 = vpack.c.bf16 %v7093, %v7091
    %v7212 = vpack.c.bf16 %v7094, %v7092
    %v7213 = vpack.c.bf16 %v7097, %v7095
    %v7214 = vpack.c.bf16 %v7098, %v7096
    %v7215 = vpack.c.bf16 %v7101, %v7099
    %v7216 = vpack.c.bf16 %v7102, %v7100
    %v7217 = vpack.c.bf16 %v7105, %v7103
    %v7218 = vpack.c.bf16 %v7106, %v7104
    %v7219 = vpack.c.bf16 %v7109, %v7107
    %v7220 = vpack.c.bf16 %v7110, %v7108
    %v7221 = vpack.c.bf16 %v7113, %v7111
    %v7222 = vpack.c.bf16 %v7114, %v7112
    %v7223 = vpack.c.bf16 %v7117, %v7115
    %v7224 = vpack.c.bf16 %v7118, %v7116
    %v7225 = vpack.c.bf16 %v7121, %v7119
    %v7226 = vpack.c.bf16 %v7122, %v7120
    %v7227 = vpack.c.bf16 %v7125, %v7123
    %v7228 = vpack.c.bf16 %v7126, %v7124
    %v7229 = vpack.c.bf16 %v7129, %v7127
    %v7230 = vpack.c.bf16 %v7130, %v7128
    %v7231 = vpack.c.bf16 %v7133, %v7131
    %v7232 = vpack.c.bf16 %v7134, %v7132
    %v7233 = vpack.c.bf16 %v7137, %v7135
    %v7234 = vpack.c.bf16 %v7138, %v7136
    %v7235 = vpack.c.bf16 %v7141, %v7139
    %v7236 = vpack.c.bf16 %v7142, %v7140
    %v7237 = vpack.c.bf16 %v7145, %v7143
    %v7238 = vpack.c.bf16 %v7146, %v7144
    %v7239 = vpack.c.bf16 %v7149, %v7147
    %v7240 = vpack.c.bf16 %v7150, %v7148
    %v7241 = vpack.c.bf16 %v7153, %v7151
    %v7242 = vpack.c.bf16 %v7154, %v7152
    %v7243 = vpack.c.bf16 %v7157, %v7155
    %v7244 = vpack.c.bf16 %v7158, %v7156
    %v7245 = vpack.c.bf16 %v7161, %v7159
    %v7246 = vpack.c.bf16 %v7162, %v7160
    %v7247 = vpack.c.bf16 %v7165, %v7163
    %v7248 = vpack.c.bf16 %v7166, %v7164
    %v7249 = vpack.c.bf16 %v7169, %v7167
    %v7250 = vpack.c.bf16 %v7170, %v7168
    %v7251 = vpack.c.bf16 %v7173, %v7171
    %v7252 = vpack.c.bf16 %v7174, %v7172
    %v7253 = vpack.c.bf16 %v7177, %v7175
    %v7254 = vpack.c.bf16 %v7178, %v7176
    %v7255 = vpack.c.bf16 %v7181, %v7179
    %v7256 = vpack.c.bf16 %v7182, %v7180
    %v7257 = vpack.c.bf16 %v7185, %v7183
    %v7258 = vpack.c.bf16 %v7186, %v7184
    %v7259 = vpack.c.bf16 %v7189, %v7187
    %v7260 = vpack.c.bf16 %v7190, %v7188
    %v7261 = vpack.c.bf16 %v7193, %v7191
    %v7262 = vpack.c.bf16 %v7194, %v7192
    %v7263 = vpack.c.bf16 %v7197, %v7195
    %v7264 = vpack.c.bf16 %v7198, %v7196
    %v7265 = vpack.c.bf16 %v7201, %v7199
    %v7266 = vpack.c.bf16 %v7202, %v7200
    %v7267 = vld [vmem:[%s3] sm:$0xf]
    %v7268 = vld [vmem:[%s3 + $0x4] sm:$0xf]
    %v7269 = vld [vmem:[%s3 + $0x8] sm:$0xf]
    %v7270 = vld [vmem:[%s3 + $0xc] sm:$0xf]
    %v7271 = vld [vmem:[%s3 + $0x10] sm:$0xf]
    %v7272 = vld [vmem:[%s3 + $0x14] sm:$0xf]
    %v7273 = vld [vmem:[%s3 + $0x18] sm:$0xf]
    %v7274 = vld [vmem:[%s3 + $0x1c] sm:$0xf]
    %v7275 = vld [vmem:[%s3 + $0x20] sm:$0xf]
    %v7276 = vld [vmem:[%s3 + $0x24] sm:$0xf]
    %v7277 = vld [vmem:[%s3 + $0x28] sm:$0xf]
    %v7278 = vld [vmem:[%s3 + $0x2c] sm:$0xf]
    %v7279 = vld [vmem:[%s3 + $0x30] sm:$0xf]
    %v7280 = vld [vmem:[%s3 + $0x34] sm:$0xf]
    %v7281 = vld [vmem:[%s3 + $0x38] sm:$0xf]
    %v7282 = vld [vmem:[%s3 + $0x3c] sm:$0xf]
    %v7283 = vld [vmem:[%s3 + $0x40] sm:$0xf]
    %v7284 = vld [vmem:[%s3 + $0x44] sm:$0xf]
    %v7285 = vld [vmem:[%s4] sm:$0x1]
    %v7287 = vlaneseq
    %v7288 = vshrl.u32 %v7287, 7
    %v7289 = vsub.s32 0, %v7288
    %v7290 = vrot.slane %v7285, %v7289
    %v7310 = vunpack.c.l.b16 %v7267
    %v7311 = vunpack.c.l.b16 %v7268
    %v7312 = vunpack.c.l.b16 %v7269
    %v7313 = vunpack.c.l.b16 %v7270
    %v7314 = vunpack.c.l.b16 %v7271
    %v7315 = vunpack.c.l.b16 %v7272
    %v7316 = vunpack.c.l.b16 %v7273
    %v7317 = vunpack.c.l.b16 %v7274
    %v7318 = vunpack.c.l.b16 %v7275
    %v7319 = vunpack.c.l.b16 %v7276
    %v7320 = vunpack.c.l.b16 %v7277
    %v7321 = vunpack.c.l.b16 %v7278
    %v7322 = vunpack.c.l.b16 %v7279
    %v7323 = vunpack.c.l.b16 %v7280
    %v7324 = vunpack.c.l.b16 %v7281
    %v7325 = vunpack.c.l.b16 %v7282
    %v7326 = vunpack.c.l.b16 %v7283
    %v7327 = vunpack.c.l.b16 %v7284
    %v7328 = vpack.c.b16 %v7311, %v7310
    %v7329 = vpack.c.b16 %v7313, %v7312
    %v7330 = vpack.c.b16 %v7315, %v7314
    %v7331 = vpack.c.b16 %v7317, %v7316
    %v7332 = vpack.c.b16 %v7319, %v7318
    %v7333 = vpack.c.b16 %v7321, %v7320
    %v7334 = vpack.c.b16 %v7323, %v7322
    %v7335 = vpack.c.b16 %v7325, %v7324
    %v7336 = vpack.c.b16 %v7327, %v7326
    %v7347 = vsel %vm34, %v7204, 0
    %v7350 = vsel %vm34, %v7206, 0
    %v7353 = vsel %vm34, %v7208, 0
    %v7356 = vsel %vm34, %v7210, 0
    %v7359 = vsel %vm34, %v7212, 0
    %v7362 = vsel %vm34, %v7214, 0
    %v7365 = vsel %vm34, %v7216, 0
    %v7368 = vsel %vm34, %v7218, 0
    %v7371 = vsel %vm34, %v7220, 0
    %v7374 = vsel %vm34, %v7222, 0
    %v7377 = vsel %vm34, %v7224, 0
    %v7380 = vsel %vm34, %v7226, 0
    %v7383 = vsel %vm34, %v7228, 0
    %v7386 = vsel %vm34, %v7230, 0
    %v7389 = vsel %vm34, %v7232, 0
    %v7392 = vsel %vm34, %v7234, 0
    %v7395 = vsel %vm34, %v7236, 0
    %v7398 = vsel %vm34, %v7238, 0
    %v7401 = vsel %vm34, %v7240, 0
    %v7404 = vsel %vm34, %v7242, 0
    %v7407 = vsel %vm34, %v7244, 0
    %v7410 = vsel %vm34, %v7246, 0
    %v7413 = vsel %vm34, %v7248, 0
    %v7416 = vsel %vm34, %v7250, 0
    %v7419 = vsel %vm34, %v7252, 0
    %v7422 = vsel %vm34, %v7254, 0
    %v7425 = vsel %vm34, %v7256, 0
    %v7428 = vsel %vm34, %v7258, 0
    %v7431 = vsel %vm34, %v7260, 0
    %v7434 = vsel %vm34, %v7262, 0
    %v7437 = vsel %vm34, %v7264, 0
    %v7440 = vsel %vm34, %v7266, 0
    %7442 = vmatprep.subr.bf16.mxu0 0
    %7443 = vmatpush1.bf16.msra.mxu0 %v7335
    %7444 = vmatprep.subr.bf16.mxu0 0
    %7445 = vmatpush1.bf16.msra.mxu0 %v7334
    %7446 = vmatprep.subr.bf16.mxu0 0
    %7447 = vmatpush1.bf16.msra.mxu0 %v7333
    %7448 = vmatprep.subr.bf16.mxu0 0
    %7449 = vmatpush1.bf16.msra.mxu0 %v7332
    %7450 = vmatprep.subr.bf16.mxu0 0
    %7451 = vmatpush1.bf16.msra.mxu0 %v7331
    %7452 = vmatprep.subr.bf16.mxu0 0
    %7453 = vmatpush1.bf16.msra.mxu0 %v7330
    %7454 = vmatprep.subr.bf16.mxu0 0
    %7455 = vmatpush1.bf16.msra.mxu0 %v7329
    %7456 = vmatprep.subr.bf16.mxu0 0
    %7457 = vmatpush1.bf16.msra.mxu0 %v7328
    %7458 = vmatprep.subr.bf16.mxu0 0
    %7459 = vmatpush2.bf16.msra.mxu0 0
    %7460 = vmatprep.subr.bf16.mxu0 0
    %7461 = vmatpush2.bf16.msra.mxu0 0
    %7462 = vmatprep.subr.bf16.mxu0 0
    %7463 = vmatpush2.bf16.msra.mxu0 0
    %7464 = vmatprep.subr.bf16.mxu0 0
    %7465 = vmatpush2.bf16.msra.mxu0 0
    %7466 = vmatprep.subr.bf16.mxu0 0
    %7467 = vmatpush2.bf16.msra.mxu0 0
    %7468 = vmatprep.subr.bf16.mxu0 0
    %7469 = vmatpush2.bf16.msra.mxu0 0
    %7470 = vmatprep.subr.bf16.mxu0 0
    %7471 = vmatpush2.bf16.msra.mxu0 0
    %7472 = vmatprep.subr.bf16.mxu0 0
    %7473 = vmatpush2.bf16.msra.mxu0 %v7336
    %7474 = vmatprep.mubr.bf16.mxu0 %v7347
    %7475 = vmatmul.mubr.bf16.gmra.mxu0 %v7203
    %v7476 = vpop.f32.mrf.mxu0
    %v7477 = vadd.f32 %v7290, %v7476
    %v7478 = vpop.f32.mrf.mxu0
    %v7479 = vpop.f32.mrf.mxu0
    %v7480 = vadd.f32 %v7290, %v7479
    %v7481 = vpop.f32.mrf.mxu0
    %7482 = vmatprep.mubr.bf16.mxu0 %v7350
    %7483 = vmatmul.mubr.bf16.gmra.mxu0 %v7205
    %v7484 = vpop.f32.mrf.mxu0
    %v7485 = vadd.f32 %v7290, %v7484
    %v7486 = vpop.f32.mrf.mxu0
    %v7487 = vpop.f32.mrf.mxu0
    %v7488 = vadd.f32 %v7290, %v7487
    %v7489 = vpop.f32.mrf.mxu0
    %7490 = vmatprep.mubr.bf16.mxu0 %v7353
    %7491 = vmatmul.mubr.bf16.gmra.mxu0 %v7207
    %v7492 = vpop.f32.mrf.mxu0
    %v7493 = vadd.f32 %v7290, %v7492
    %v7494 = vpop.f32.mrf.mxu0
    %v7495 = vpop.f32.mrf.mxu0
    %v7496 = vadd.f32 %v7290, %v7495
    %v7497 = vpop.f32.mrf.mxu0
    %7498 = vmatprep.mubr.bf16.mxu0 %v7356
    %7499 = vmatmul.mubr.bf16.gmra.mxu0 %v7209
    %v7500 = vpop.f32.mrf.mxu0
    %v7501 = vadd.f32 %v7290, %v7500
    %v7502 = vpop.f32.mrf.mxu0
    %v7503 = vpop.f32.mrf.mxu0
    %v7504 = vadd.f32 %v7290, %v7503
    %v7505 = vpop.f32.mrf.mxu0
    %7506 = vmatprep.mubr.bf16.mxu0 %v7359
    %7507 = vmatmul.mubr.bf16.gmra.mxu0 %v7211
    %v7508 = vpop.f32.mrf.mxu0
    %v7509 = vadd.f32 %v7290, %v7508
    %v7510 = vpop.f32.mrf.mxu0
    %v7511 = vpop.f32.mrf.mxu0
    %v7512 = vadd.f32 %v7290, %v7511
    %v7513 = vpop.f32.mrf.mxu0
    %7514 = vmatprep.mubr.bf16.mxu0 %v7362
    %7515 = vmatmul.mubr.bf16.gmra.mxu0 %v7213
    %v7516 = vpop.f32.mrf.mxu0
    %v7517 = vadd.f32 %v7290, %v7516
    %v7518 = vpop.f32.mrf.mxu0
    %v7519 = vpop.f32.mrf.mxu0
    %v7520 = vadd.f32 %v7290, %v7519
    %v7521 = vpop.f32.mrf.mxu0
    %7522 = vmatprep.mubr.bf16.mxu0 %v7365
    %7523 = vmatmul.mubr.bf16.gmra.mxu0 %v7215
    %v7524 = vpop.f32.mrf.mxu0
    %v7525 = vadd.f32 %v7290, %v7524
    %v7526 = vpop.f32.mrf.mxu0
    %v7527 = vpop.f32.mrf.mxu0
    %v7528 = vadd.f32 %v7290, %v7527
    %v7529 = vpop.f32.mrf.mxu0
    %7530 = vmatprep.mubr.bf16.mxu0 %v7368
    %7531 = vmatmul.mubr.bf16.gmra.mxu0 %v7217
    %v7532 = vpop.f32.mrf.mxu0
    %v7533 = vadd.f32 %v7290, %v7532
    %v7534 = vpop.f32.mrf.mxu0
    %v7535 = vpop.f32.mrf.mxu0
    %v7536 = vadd.f32 %v7290, %v7535
    %v7537 = vpop.f32.mrf.mxu0
    %7538 = vmatprep.mubr.bf16.mxu0 %v7371
    %7539 = vmatmul.mubr.bf16.gmra.mxu0 %v7219
    %v7540 = vpop.f32.mrf.mxu0
    %v7541 = vadd.f32 %v7290, %v7540
    %v7542 = vpop.f32.mrf.mxu0
    %v7543 = vpop.f32.mrf.mxu0
    %v7544 = vadd.f32 %v7290, %v7543
    %v7545 = vpop.f32.mrf.mxu0
    %7546 = vmatprep.mubr.bf16.mxu0 %v7374
    %7547 = vmatmul.mubr.bf16.gmra.mxu0 %v7221
    %v7548 = vpop.f32.mrf.mxu0
    %v7549 = vadd.f32 %v7290, %v7548
    %v7550 = vpop.f32.mrf.mxu0
    %v7551 = vpop.f32.mrf.mxu0
    %v7552 = vadd.f32 %v7290, %v7551
    %v7553 = vpop.f32.mrf.mxu0
    %7554 = vmatprep.mubr.bf16.mxu0 %v7377
    %7555 = vmatmul.mubr.bf16.gmra.mxu0 %v7223
    %v7556 = vpop.f32.mrf.mxu0
    %v7557 = vadd.f32 %v7290, %v7556
    %v7558 = vpop.f32.mrf.mxu0
    %v7559 = vpop.f32.mrf.mxu0
    %v7560 = vadd.f32 %v7290, %v7559
    %v7561 = vpop.f32.mrf.mxu0
    %7562 = vmatprep.mubr.bf16.mxu0 %v7380
    %7563 = vmatmul.mubr.bf16.gmra.mxu0 %v7225
    %v7564 = vpop.f32.mrf.mxu0
    %v7565 = vadd.f32 %v7290, %v7564
    %v7566 = vpop.f32.mrf.mxu0
    %v7567 = vpop.f32.mrf.mxu0
    %v7568 = vadd.f32 %v7290, %v7567
    %v7569 = vpop.f32.mrf.mxu0
    %7570 = vmatprep.mubr.bf16.mxu0 %v7383
    %7571 = vmatmul.mubr.bf16.gmra.mxu0 %v7227
    %v7572 = vpop.f32.mrf.mxu0
    %v7573 = vadd.f32 %v7290, %v7572
    %v7574 = vpop.f32.mrf.mxu0
    %v7575 = vpop.f32.mrf.mxu0
    %v7576 = vadd.f32 %v7290, %v7575
    %v7577 = vpop.f32.mrf.mxu0
    %7578 = vmatprep.mubr.bf16.mxu0 %v7386
    %7579 = vmatmul.mubr.bf16.gmra.mxu0 %v7229
    %v7580 = vpop.f32.mrf.mxu0
    %v7581 = vadd.f32 %v7290, %v7580
    %v7582 = vpop.f32.mrf.mxu0
    %v7583 = vpop.f32.mrf.mxu0
    %v7584 = vadd.f32 %v7290, %v7583
    %v7585 = vpop.f32.mrf.mxu0
    %7586 = vmatprep.mubr.bf16.mxu0 %v7389
    %7587 = vmatmul.mubr.bf16.gmra.mxu0 %v7231
    %v7588 = vpop.f32.mrf.mxu0
    %v7589 = vadd.f32 %v7290, %v7588
    %v7590 = vpop.f32.mrf.mxu0
    %v7591 = vpop.f32.mrf.mxu0
    %v7592 = vadd.f32 %v7290, %v7591
    %v7593 = vpop.f32.mrf.mxu0
    %7594 = vmatprep.mubr.bf16.mxu0 %v7392
    %7595 = vmatmul.mubr.bf16.gmra.mxu0 %v7233
    %v7596 = vpop.f32.mrf.mxu0
    %v7597 = vadd.f32 %v7290, %v7596
    %v7598 = vpop.f32.mrf.mxu0
    %v7599 = vpop.f32.mrf.mxu0
    %v7600 = vadd.f32 %v7290, %v7599
    %v7601 = vpop.f32.mrf.mxu0
    %7602 = vmatprep.mubr.bf16.mxu0 %v7395
    %7603 = vmatmul.mubr.bf16.gmra.mxu0 %v7235
    %v7604 = vpop.f32.mrf.mxu0
    %v7605 = vadd.f32 %v7290, %v7604
    %v7606 = vpop.f32.mrf.mxu0
    %v7607 = vpop.f32.mrf.mxu0
    %v7608 = vadd.f32 %v7290, %v7607
    %v7609 = vpop.f32.mrf.mxu0
    %7610 = vmatprep.mubr.bf16.mxu0 %v7398
    %7611 = vmatmul.mubr.bf16.gmra.mxu0 %v7237
    %v7612 = vpop.f32.mrf.mxu0
    %v7613 = vadd.f32 %v7290, %v7612
    %v7614 = vpop.f32.mrf.mxu0
    %v7615 = vpop.f32.mrf.mxu0
    %v7616 = vadd.f32 %v7290, %v7615
    %v7617 = vpop.f32.mrf.mxu0
    %7618 = vmatprep.mubr.bf16.mxu0 %v7401
    %7619 = vmatmul.mubr.bf16.gmra.mxu0 %v7239
    %v7620 = vpop.f32.mrf.mxu0
    %v7621 = vadd.f32 %v7290, %v7620
    %v7622 = vpop.f32.mrf.mxu0
    %v7623 = vpop.f32.mrf.mxu0
    %v7624 = vadd.f32 %v7290, %v7623
    %v7625 = vpop.f32.mrf.mxu0
    %7626 = vmatprep.mubr.bf16.mxu0 %v7404
    %7627 = vmatmul.mubr.bf16.gmra.mxu0 %v7241
    %v7628 = vpop.f32.mrf.mxu0
    %v7629 = vadd.f32 %v7290, %v7628
    %v7630 = vpop.f32.mrf.mxu0
    %v7631 = vpop.f32.mrf.mxu0
    %v7632 = vadd.f32 %v7290, %v7631
    %v7633 = vpop.f32.mrf.mxu0
    %7634 = vmatprep.mubr.bf16.mxu0 %v7407
    %7635 = vmatmul.mubr.bf16.gmra.mxu0 %v7243
    %v7636 = vpop.f32.mrf.mxu0
    %v7637 = vadd.f32 %v7290, %v7636
    %v7638 = vpop.f32.mrf.mxu0
    %v7639 = vpop.f32.mrf.mxu0
    %v7640 = vadd.f32 %v7290, %v7639
    %v7641 = vpop.f32.mrf.mxu0
    %7642 = vmatprep.mubr.bf16.mxu0 %v7410
    %7643 = vmatmul.mubr.bf16.gmra.mxu0 %v7245
    %v7644 = vpop.f32.mrf.mxu0
    %v7645 = vadd.f32 %v7290, %v7644
    %v7646 = vpop.f32.mrf.mxu0
    %v7647 = vpop.f32.mrf.mxu0
    %v7648 = vadd.f32 %v7290, %v7647
    %v7649 = vpop.f32.mrf.mxu0
    %7650 = vmatprep.mubr.bf16.mxu0 %v7413
    %7651 = vmatmul.mubr.bf16.gmra.mxu0 %v7247
    %v7652 = vpop.f32.mrf.mxu0
    %v7653 = vadd.f32 %v7290, %v7652
    %v7654 = vpop.f32.mrf.mxu0
    %v7655 = vpop.f32.mrf.mxu0
    %v7656 = vadd.f32 %v7290, %v7655
    %v7657 = vpop.f32.mrf.mxu0
    %7658 = vmatprep.mubr.bf16.mxu0 %v7416
    %7659 = vmatmul.mubr.bf16.gmra.mxu0 %v7249
    %v7660 = vpop.f32.mrf.mxu0
    %v7661 = vadd.f32 %v7290, %v7660
    %v7662 = vpop.f32.mrf.mxu0
    %v7663 = vpop.f32.mrf.mxu0
    %v7664 = vadd.f32 %v7290, %v7663
    %v7665 = vpop.f32.mrf.mxu0
    %7666 = vmatprep.mubr.bf16.mxu0 %v7419
    %7667 = vmatmul.mubr.bf16.gmra.mxu0 %v7251
    %v7668 = vpop.f32.mrf.mxu0
    %v7669 = vadd.f32 %v7290, %v7668
    %v7670 = vpop.f32.mrf.mxu0
    %v7671 = vpop.f32.mrf.mxu0
    %v7672 = vadd.f32 %v7290, %v7671
    %v7673 = vpop.f32.mrf.mxu0
    %7674 = vmatprep.mubr.bf16.mxu0 %v7422
    %7675 = vmatmul.mubr.bf16.gmra.mxu0 %v7253
    %v7676 = vpop.f32.mrf.mxu0
    %v7677 = vadd.f32 %v7290, %v7676
    %v7678 = vpop.f32.mrf.mxu0
    %v7679 = vpop.f32.mrf.mxu0
    %v7680 = vadd.f32 %v7290, %v7679
    %v7681 = vpop.f32.mrf.mxu0
    %7682 = vmatprep.mubr.bf16.mxu0 %v7425
    %7683 = vmatmul.mubr.bf16.gmra.mxu0 %v7255
    %v7684 = vpop.f32.mrf.mxu0
    %v7685 = vadd.f32 %v7290, %v7684
    %v7686 = vpop.f32.mrf.mxu0
    %v7687 = vpop.f32.mrf.mxu0
    %v7688 = vadd.f32 %v7290, %v7687
    %v7689 = vpop.f32.mrf.mxu0
    %7690 = vmatprep.mubr.bf16.mxu0 %v7428
    %7691 = vmatmul.mubr.bf16.gmra.mxu0 %v7257
    %v7692 = vpop.f32.mrf.mxu0
    %v7693 = vadd.f32 %v7290, %v7692
    %v7694 = vpop.f32.mrf.mxu0
    %v7695 = vpop.f32.mrf.mxu0
    %v7696 = vadd.f32 %v7290, %v7695
    %v7697 = vpop.f32.mrf.mxu0
    %7698 = vmatprep.mubr.bf16.mxu0 %v7431
    %7699 = vmatmul.mubr.bf16.gmra.mxu0 %v7259
    %v7700 = vpop.f32.mrf.mxu0
    %v7701 = vadd.f32 %v7290, %v7700
    %v7702 = vpop.f32.mrf.mxu0
    %v7703 = vpop.f32.mrf.mxu0
    %v7704 = vadd.f32 %v7290, %v7703
    %v7705 = vpop.f32.mrf.mxu0
    %7706 = vmatprep.mubr.bf16.mxu0 %v7434
    %7707 = vmatmul.mubr.bf16.gmra.mxu0 %v7261
    %v7708 = vpop.f32.mrf.mxu0
    %v7709 = vadd.f32 %v7290, %v7708
    %v7710 = vpop.f32.mrf.mxu0
    %v7711 = vpop.f32.mrf.mxu0
    %v7712 = vadd.f32 %v7290, %v7711
    %v7713 = vpop.f32.mrf.mxu0
    %7714 = vmatprep.mubr.bf16.mxu0 %v7437
    %7715 = vmatmul.mubr.bf16.gmra.mxu0 %v7263
    %v7716 = vpop.f32.mrf.mxu0
    %v7717 = vadd.f32 %v7290, %v7716
    %v7718 = vpop.f32.mrf.mxu0
    %v7719 = vpop.f32.mrf.mxu0
    %v7720 = vadd.f32 %v7290, %v7719
    %v7721 = vpop.f32.mrf.mxu0
    %7722 = vmatprep.mubr.bf16.mxu0 %v7440
    %7723 = vmatmul.mubr.bf16.gmra.mxu0 %v7265
    %v7724 = vpop.f32.mrf.mxu0
    %v7725 = vadd.f32 %v7290, %v7724
    %v7726 = vpop.f32.mrf.mxu0
    %v7727 = vpop.f32.mrf.mxu0
    %v7728 = vadd.f32 %v7290, %v7727
    %v7729 = vpop.f32.mrf.mxu0
    %7730 = vdwg.mxu0
    %v7731 = vmax.f32 %v7477, 0.0
    %v7732 = vmax.f32 %v7480, 0.0
    %v7733 = vmax.f32 %v7485, 0.0
    %v7734 = vmax.f32 %v7488, 0.0
    %v7735 = vmax.f32 %v7493, 0.0
    %v7736 = vmax.f32 %v7496, 0.0
    %v7737 = vmax.f32 %v7501, 0.0
    %v7738 = vmax.f32 %v7504, 0.0
    %v7739 = vmax.f32 %v7509, 0.0
    %v7740 = vmax.f32 %v7512, 0.0
    %v7741 = vmax.f32 %v7517, 0.0
    %v7742 = vmax.f32 %v7520, 0.0
    %v7743 = vmax.f32 %v7525, 0.0
    %v7744 = vmax.f32 %v7528, 0.0
    %v7745 = vmax.f32 %v7533, 0.0
    %v7746 = vmax.f32 %v7536, 0.0
    %v7747 = vmax.f32 %v7541, 0.0
    %v7748 = vmax.f32 %v7544, 0.0
    %v7749 = vmax.f32 %v7549, 0.0
    %v7750 = vmax.f32 %v7552, 0.0
    %v7751 = vmax.f32 %v7557, 0.0
    %v7752 = vmax.f32 %v7560, 0.0
    %v7753 = vmax.f32 %v7565, 0.0
    %v7754 = vmax.f32 %v7568, 0.0
    %v7755 = vmax.f32 %v7573, 0.0
    %v7756 = vmax.f32 %v7576, 0.0
    %v7757 = vmax.f32 %v7581, 0.0
    %v7758 = vmax.f32 %v7584, 0.0
    %v7759 = vmax.f32 %v7589, 0.0
    %v7760 = vmax.f32 %v7592, 0.0
    %v7761 = vmax.f32 %v7597, 0.0
    %v7762 = vmax.f32 %v7600, 0.0
    %v7763 = vmax.f32 %v7605, 0.0
    %v7764 = vmax.f32 %v7608, 0.0
    %v7765 = vmax.f32 %v7613, 0.0
    %v7766 = vmax.f32 %v7616, 0.0
    %v7767 = vmax.f32 %v7621, 0.0
    %v7768 = vmax.f32 %v7624, 0.0
    %v7769 = vmax.f32 %v7629, 0.0
    %v7770 = vmax.f32 %v7632, 0.0
    %v7771 = vmax.f32 %v7637, 0.0
    %v7772 = vmax.f32 %v7640, 0.0
    %v7773 = vmax.f32 %v7645, 0.0
    %v7774 = vmax.f32 %v7648, 0.0
    %v7775 = vmax.f32 %v7653, 0.0
    %v7776 = vmax.f32 %v7656, 0.0
    %v7777 = vmax.f32 %v7661, 0.0
    %v7778 = vmax.f32 %v7664, 0.0
    %v7779 = vmax.f32 %v7669, 0.0
    %v7780 = vmax.f32 %v7672, 0.0
    %v7781 = vmax.f32 %v7677, 0.0
    %v7782 = vmax.f32 %v7680, 0.0
    %v7783 = vmax.f32 %v7685, 0.0
    %v7784 = vmax.f32 %v7688, 0.0
    %v7785 = vmax.f32 %v7693, 0.0
    %v7786 = vmax.f32 %v7696, 0.0
    %v7787 = vmax.f32 %v7701, 0.0
    %v7788 = vmax.f32 %v7704, 0.0
    %v7789 = vmax.f32 %v7709, 0.0
    %v7790 = vmax.f32 %v7712, 0.0
    %v7791 = vmax.f32 %v7717, 0.0
    %v7792 = vmax.f32 %v7720, 0.0
    %v7793 = vmax.f32 %v7725, 0.0
    %v7794 = vmax.f32 %v7728, 0.0
    %vm7795 = vcmask 261120
    %v7796 = vsel %vm7795, %v7731, 0.0
    %v7797 = vsel %vm7795, %v7733, 0.0
    %v7798 = vadd.f32 %v7796, %v7797
    %v7799 = vsel %vm7795, %v7735, 0.0
    %v7800 = vadd.f32 %v7798, %v7799
    %v7801 = vsel %vm7795, %v7737, 0.0
    %v7802 = vadd.f32 %v7800, %v7801
    %v7803 = vrot.slane %v7802, 4
    %v7804 = vadd.f32 %v7802, %v7803
    %v7805 = vrot.slane %v7804, 2
    %v7806 = vadd.f32 %v7804, %v7805
    %v7807 = vrot.slane %v7806, 1
    %v7808 = vadd.f32 %v7806, %v7807
    %v7809 = vsel %vm7795, %v7763, 0.0
    %v7810 = vsel %vm7795, %v7765, 0.0
    %v7811 = vadd.f32 %v7809, %v7810
    %v7812 = vsel %vm7795, %v7767, 0.0
    %v7813 = vadd.f32 %v7811, %v7812
    %v7814 = vsel %vm7795, %v7769, 0.0
    %v7815 = vadd.f32 %v7813, %v7814
    %v7816 = vrot.slane %v7815, 4
    %v7817 = vadd.f32 %v7815, %v7816
    %v7818 = vrot.slane %v7817, 2
    %v7819 = vadd.f32 %v7817, %v7818
    %v7820 = vrot.slane %v7819, 1
    %v7821 = vadd.f32 %v7819, %v7820
    %v7822 = vmul.f32 %v7808, 0.03125
    %v7823 = vmul.f32 %v7821, 0.03125
    %v7827 = vunpack.c.l.s4 1983009808
    %v7828 = vunpack.c.0.s8 %v7827
    %v7829 = vlaneseq
    %v7830 = vshrl.u32 %v7829, 7
    %v7831 = vsub.s32 %v7828, %v7830
    %v7832 = vrot.slane %v7822, %v7831
    %v7834 = vunpack.c.l.s4 1983009808
    %v7835 = vunpack.c.0.s8 %v7834
    %v7836 = vlaneseq
    %v7837 = vshrl.u32 %v7836, 7
    %v7838 = vsub.s32 %v7835, %v7837
    %v7839 = vrot.slane %v7823, %v7838
    %vm7840 = vcmask 1044484
    %v7841 = vsel %vm7840, %v7832, %v7832
    %vm7842 = vcmask 1046534
    %v7843 = vsel %vm7842, %v7832, %v7841
    %v7844 = vrot.slane %v7839, 7
    %vm7845 = vcmask 1041409
    %v7846 = vsel %vm7845, %v7844, %v7843
    %vm7847 = vcmask 1043459
    %v7848 = vsel %vm7847, %v7844, %v7846
    %vm7849 = vcmask 1045509
    %v7850 = vsel %vm7849, %v7844, %v7848
    %vm7851 = vcmask 1047559
    %v7852 = vsel %vm7851, %v7844, %v7850
    %vm7854 = vcmask 254976
    %7855 = vst.msk [vmem:[#allocation4] sm:$0x3] %vm7854, %v7852
    %v7856 = vsel %vm7795, %v7732, 0.0
    %v7857 = vsel %vm7795, %v7734, 0.0
    %v7858 = vadd.f32 %v7856, %v7857
    %v7859 = vsel %vm7795, %v7736, 0.0
    %v7860 = vadd.f32 %v7858, %v7859
    %v7861 = vsel %vm7795, %v7738, 0.0
    %v7862 = vadd.f32 %v7860, %v7861
    %v7863 = vrot.slane %v7862, 4
    %v7864 = vadd.f32 %v7862, %v7863
    %v7865 = vrot.slane %v7864, 2
    %v7866 = vadd.f32 %v7864, %v7865
    %v7867 = vrot.slane %v7866, 1
    %v7868 = vadd.f32 %v7866, %v7867
    %v7869 = vsel %vm7795, %v7764, 0.0
    %v7870 = vsel %vm7795, %v7766, 0.0
    %v7871 = vadd.f32 %v7869, %v7870
    %v7872 = vsel %vm7795, %v7768, 0.0
    %v7873 = vadd.f32 %v7871, %v7872
    %v7874 = vsel %vm7795, %v7770, 0.0
    %v7875 = vadd.f32 %v7873, %v7874
    %v7876 = vrot.slane %v7875, 4
    %v7877 = vadd.f32 %v7875, %v7876
    %v7878 = vrot.slane %v7877, 2
    %v7879 = vadd.f32 %v7877, %v7878
    %v7880 = vrot.slane %v7879, 1
    %v7881 = vadd.f32 %v7879, %v7880
    %v7882 = vmul.f32 %v7868, 0.03125
    %v7883 = vmul.f32 %v7881, 0.03125
    %v7887 = vunpack.c.l.s4 1983009808
    %v7888 = vunpack.c.0.s8 %v7887
    %v7889 = vlaneseq
    %v7890 = vshrl.u32 %v7889, 7
    %v7891 = vsub.s32 %v7888, %v7890
    %v7892 = vrot.slane %v7882, %v7891
    %v7894 = vunpack.c.l.s4 1983009808
    %v7895 = vunpack.c.0.s8 %v7894
    %v7896 = vlaneseq
    %v7897 = vshrl.u32 %v7896, 7
    %v7898 = vsub.s32 %v7895, %v7897
    %v7899 = vrot.slane %v7883, %v7898
    %v7900 = vsel %vm7840, %v7892, %v7892
    %v7901 = vsel %vm7842, %v7892, %v7900
    %v7902 = vrot.slane %v7899, 7
    %v7903 = vsel %vm7845, %v7902, %v7901
    %v7904 = vsel %vm7847, %v7902, %v7903
    %v7905 = vsel %vm7849, %v7902, %v7904
    %v7906 = vsel %vm7851, %v7902, %v7905
    %7907 = vrot.lane.b32.xlu0 %v7906, 32
    %v7908 = vpop.permute.xlu0 %7907
    %vm7910 = vcmask 517376
    %7911 = vst.msk [vmem:[#allocation4] sm:$0x3] %vm7910, %v7908
    %v7912 = vsel %vm7795, %v7739, 0.0
    %v7913 = vsel %vm7795, %v7741, 0.0
    %v7914 = vadd.f32 %v7912, %v7913
    %v7915 = vsel %vm7795, %v7743, 0.0
    %v7916 = vadd.f32 %v7914, %v7915
    %v7917 = vsel %vm7795, %v7745, 0.0
    %v7918 = vadd.f32 %v7916, %v7917
    %v7919 = vrot.slane %v7918, 4
    %v7920 = vadd.f32 %v7918, %v7919
    %v7921 = vrot.slane %v7920, 2
    %v7922 = vadd.f32 %v7920, %v7921
    %v7923 = vrot.slane %v7922, 1
    %v7924 = vadd.f32 %v7922, %v7923
    %v7925 = vsel %vm7795, %v7771, 0.0
    %v7926 = vsel %vm7795, %v7773, 0.0
    %v7927 = vadd.f32 %v7925, %v7926
    %v7928 = vsel %vm7795, %v7775, 0.0
    %v7929 = vadd.f32 %v7927, %v7928
    %v7930 = vsel %vm7795, %v7777, 0.0
    %v7931 = vadd.f32 %v7929, %v7930
    %v7932 = vrot.slane %v7931, 4
    %v7933 = vadd.f32 %v7931, %v7932
    %v7934 = vrot.slane %v7933, 2
    %v7935 = vadd.f32 %v7933, %v7934
    %v7936 = vrot.slane %v7935, 1
    %v7937 = vadd.f32 %v7935, %v7936
    %v7938 = vmul.f32 %v7924, 0.03125
    %v7939 = vmul.f32 %v7937, 0.03125
    %v7943 = vunpack.c.l.s4 1983009808
    %v7944 = vunpack.c.0.s8 %v7943
    %v7945 = vlaneseq
    %v7946 = vshrl.u32 %v7945, 7
    %v7947 = vsub.s32 %v7944, %v7946
    %v7948 = vrot.slane %v7938, %v7947
    %v7950 = vunpack.c.l.s4 1983009808
    %v7951 = vunpack.c.0.s8 %v7950
    %v7952 = vlaneseq
    %v7953 = vshrl.u32 %v7952, 7
    %v7954 = vsub.s32 %v7951, %v7953
    %v7955 = vrot.slane %v7939, %v7954
    %v7956 = vsel %vm7840, %v7948, %v7948
    %v7957 = vsel %vm7842, %v7948, %v7956
    %v7958 = vrot.slane %v7955, 7
    %v7959 = vsel %vm7845, %v7958, %v7957
    %v7960 = vsel %vm7847, %v7958, %v7959
    %v7961 = vsel %vm7849, %v7958, %v7960
    %v7962 = vsel %vm7851, %v7958, %v7961
    %7963 = vrot.lane.b32.xlu0 %v7962, 64
    %v7964 = vpop.permute.xlu0 %7963
    %vm7966 = vcmask 779776
    %7967 = vst.msk [vmem:[#allocation4] sm:$0x3] %vm7966, %v7964
    %v7968 = vsel %vm7795, %v7740, 0.0
    %v7969 = vsel %vm7795, %v7742, 0.0
    %v7970 = vadd.f32 %v7968, %v7969
    %v7971 = vsel %vm7795, %v7744, 0.0
    %v7972 = vadd.f32 %v7970, %v7971
    %v7973 = vsel %vm7795, %v7746, 0.0
    %v7974 = vadd.f32 %v7972, %v7973
    %v7975 = vrot.slane %v7974, 4
    %v7976 = vadd.f32 %v7974, %v7975
    %v7977 = vrot.slane %v7976, 2
    %v7978 = vadd.f32 %v7976, %v7977
    %v7979 = vrot.slane %v7978, 1
    %v7980 = vadd.f32 %v7978, %v7979
    %v7981 = vsel %vm7795, %v7772, 0.0
    %v7982 = vsel %vm7795, %v7774, 0.0
    %v7983 = vadd.f32 %v7981, %v7982
    %v7984 = vsel %vm7795, %v7776, 0.0
    %v7985 = vadd.f32 %v7983, %v7984
    %v7986 = vsel %vm7795, %v7778, 0.0
    %v7987 = vadd.f32 %v7985, %v7986
    %v7988 = vrot.slane %v7987, 4
    %v7989 = vadd.f32 %v7987, %v7988
    %v7990 = vrot.slane %v7989, 2
    %v7991 = vadd.f32 %v7989, %v7990
    %v7992 = vrot.slane %v7991, 1
    %v7993 = vadd.f32 %v7991, %v7992
    %v7994 = vmul.f32 %v7980, 0.03125
    %v7995 = vmul.f32 %v7993, 0.03125
    %v7999 = vunpack.c.l.s4 1983009808
    %v8000 = vunpack.c.0.s8 %v7999
    %v8001 = vlaneseq
    %v8002 = vshrl.u32 %v8001, 7
    %v8003 = vsub.s32 %v8000, %v8002
    %v8004 = vrot.slane %v7994, %v8003
    %v8006 = vunpack.c.l.s4 1983009808
    %v8007 = vunpack.c.0.s8 %v8006
    %v8008 = vlaneseq
    %v8009 = vshrl.u32 %v8008, 7
    %v8010 = vsub.s32 %v8007, %v8009
    %v8011 = vrot.slane %v7995, %v8010
    %v8012 = vsel %vm7840, %v8004, %v8004
    %v8013 = vsel %vm7842, %v8004, %v8012
    %v8014 = vrot.slane %v8011, 7
    %v8015 = vsel %vm7845, %v8014, %v8013
    %v8016 = vsel %vm7847, %v8014, %v8015
    %v8017 = vsel %vm7849, %v8014, %v8016
    %v8018 = vsel %vm7851, %v8014, %v8017
    %8019 = vrot.lane.b32.xlu0 %v8018, 96
    %v8020 = vpop.permute.xlu0 %8019
    %vm8022 = vcmask 1042176
    %8023 = vst.msk [vmem:[#allocation4] sm:$0x3] %vm8022, %v8020
    %v8024 = vsel %vm7795, %v7747, 0.0
    %v8025 = vsel %vm7795, %v7749, 0.0
    %v8026 = vadd.f32 %v8024, %v8025
    %v8027 = vsel %vm7795, %v7751, 0.0
    %v8028 = vadd.f32 %v8026, %v8027
    %v8029 = vsel %vm7795, %v7753, 0.0
    %v8030 = vadd.f32 %v8028, %v8029
    %v8031 = vrot.slane %v8030, 4
    %v8032 = vadd.f32 %v8030, %v8031
    %v8033 = vrot.slane %v8032, 2
    %v8034 = vadd.f32 %v8032, %v8033
    %v8035 = vrot.slane %v8034, 1
    %v8036 = vadd.f32 %v8034, %v8035
    %v8037 = vsel %vm7795, %v7779, 0.0
    %v8038 = vsel %vm7795, %v7781, 0.0
    %v8039 = vadd.f32 %v8037, %v8038
    %v8040 = vsel %vm7795, %v7783, 0.0
    %v8041 = vadd.f32 %v8039, %v8040
    %v8042 = vsel %vm7795, %v7785, 0.0
    %v8043 = vadd.f32 %v8041, %v8042
    %v8044 = vrot.slane %v8043, 4
    %v8045 = vadd.f32 %v8043, %v8044
    %v8046 = vrot.slane %v8045, 2
    %v8047 = vadd.f32 %v8045, %v8046
    %v8048 = vrot.slane %v8047, 1
    %v8049 = vadd.f32 %v8047, %v8048
    %v8050 = vmul.f32 %v8036, 0.03125
    %v8051 = vmul.f32 %v8049, 0.03125
    %v8055 = vunpack.c.l.s4 1983009808
    %v8056 = vunpack.c.0.s8 %v8055
    %v8057 = vlaneseq
    %v8058 = vshrl.u32 %v8057, 7
    %v8059 = vsub.s32 %v8056, %v8058
    %v8060 = vrot.slane %v8050, %v8059
    %v8062 = vunpack.c.l.s4 1983009808
    %v8063 = vunpack.c.0.s8 %v8062
    %v8064 = vlaneseq
    %v8065 = vshrl.u32 %v8064, 7
    %v8066 = vsub.s32 %v8063, %v8065
    %v8067 = vrot.slane %v8051, %v8066
    %v8068 = vsel %vm7840, %v8060, %v8060
    %v8069 = vsel %vm7842, %v8060, %v8068
    %v8070 = vrot.slane %v8067, 7
    %v8071 = vsel %vm7845, %v8070, %v8069
    %v8072 = vsel %vm7847, %v8070, %v8071
    %v8073 = vsel %vm7849, %v8070, %v8072
    %v8074 = vsel %vm7851, %v8070, %v8073
    %8076 = vst.msk [vmem:[#allocation4 + $0x2] sm:$0x3] %vm7854, %v8074
    %v8077 = vsel %vm7795, %v7748, 0.0
    %v8078 = vsel %vm7795, %v7750, 0.0
    %v8079 = vadd.f32 %v8077, %v8078
    %v8080 = vsel %vm7795, %v7752, 0.0
    %v8081 = vadd.f32 %v8079, %v8080
    %v8082 = vsel %vm7795, %v7754, 0.0
    %v8083 = vadd.f32 %v8081, %v8082
    %v8084 = vrot.slane %v8083, 4
    %v8085 = vadd.f32 %v8083, %v8084
    %v8086 = vrot.slane %v8085, 2
    %v8087 = vadd.f32 %v8085, %v8086
    %v8088 = vrot.slane %v8087, 1
    %v8089 = vadd.f32 %v8087, %v8088
    %v8090 = vsel %vm7795, %v7780, 0.0
    %v8091 = vsel %vm7795, %v7782, 0.0
    %v8092 = vadd.f32 %v8090, %v8091
    %v8093 = vsel %vm7795, %v7784, 0.0
    %v8094 = vadd.f32 %v8092, %v8093
    %v8095 = vsel %vm7795, %v7786, 0.0
    %v8096 = vadd.f32 %v8094, %v8095
    %v8097 = vrot.slane %v8096, 4
    %v8098 = vadd.f32 %v8096, %v8097
    %v8099 = vrot.slane %v8098, 2
    %v8100 = vadd.f32 %v8098, %v8099
    %v8101 = vrot.slane %v8100, 1
    %v8102 = vadd.f32 %v8100, %v8101
    %v8103 = vmul.f32 %v8089, 0.03125
    %v8104 = vmul.f32 %v8102, 0.03125
    %v8108 = vunpack.c.l.s4 1983009808
    %v8109 = vunpack.c.0.s8 %v8108
    %v8110 = vlaneseq
    %v8111 = vshrl.u32 %v8110, 7
    %v8112 = vsub.s32 %v8109, %v8111
    %v8113 = vrot.slane %v8103, %v8112
    %v8115 = vunpack.c.l.s4 1983009808
    %v8116 = vunpack.c.0.s8 %v8115
    %v8117 = vlaneseq
    %v8118 = vshrl.u32 %v8117, 7
    %v8119 = vsub.s32 %v8116, %v8118
    %v8120 = vrot.slane %v8104, %v8119
    %v8121 = vsel %vm7840, %v8113, %v8113
    %v8122 = vsel %vm7842, %v8113, %v8121
    %v8123 = vrot.slane %v8120, 7
    %v8124 = vsel %vm7845, %v8123, %v8122
    %v8125 = vsel %vm7847, %v8123, %v8124
    %v8126 = vsel %vm7849, %v8123, %v8125
    %v8127 = vsel %vm7851, %v8123, %v8126
    %8128 = vrot.lane.b32.xlu0 %v8127, 32
    %v8129 = vpop.permute.xlu0 %8128
    %8131 = vst.msk [vmem:[#allocation4 + $0x2] sm:$0x3] %vm7910, %v8129
    %v8132 = vsel %vm7795, %v7755, 0.0
    %v8133 = vsel %vm7795, %v7757, 0.0
    %v8134 = vadd.f32 %v8132, %v8133
    %v8135 = vsel %vm7795, %v7759, 0.0
    %v8136 = vadd.f32 %v8134, %v8135
    %v8137 = vsel %vm7795, %v7761, 0.0
    %v8138 = vadd.f32 %v8136, %v8137
    %v8139 = vrot.slane %v8138, 4
    %v8140 = vadd.f32 %v8138, %v8139
    %v8141 = vrot.slane %v8140, 2
    %v8142 = vadd.f32 %v8140, %v8141
    %v8143 = vrot.slane %v8142, 1
    %v8144 = vadd.f32 %v8142, %v8143
    %v8145 = vsel %vm7795, %v7787, 0.0
    %v8146 = vsel %vm7795, %v7789, 0.0
    %v8147 = vadd.f32 %v8145, %v8146
    %v8148 = vsel %vm7795, %v7791, 0.0
    %v8149 = vadd.f32 %v8147, %v8148
    %v8150 = vsel %vm7795, %v7793, 0.0
    %v8151 = vadd.f32 %v8149, %v8150
    %v8152 = vrot.slane %v8151, 4
    %v8153 = vadd.f32 %v8151, %v8152
    %v8154 = vrot.slane %v8153, 2
    %v8155 = vadd.f32 %v8153, %v8154
    %v8156 = vrot.slane %v8155, 1
    %v8157 = vadd.f32 %v8155, %v8156
    %v8158 = vmul.f32 %v8144, 0.03125
    %v8159 = vmul.f32 %v8157, 0.03125
    %v8163 = vunpack.c.l.s4 1983009808
    %v8164 = vunpack.c.0.s8 %v8163
    %v8165 = vlaneseq
    %v8166 = vshrl.u32 %v8165, 7
    %v8167 = vsub.s32 %v8164, %v8166
    %v8168 = vrot.slane %v8158, %v8167
    %v8170 = vunpack.c.l.s4 1983009808
    %v8171 = vunpack.c.0.s8 %v8170
    %v8172 = vlaneseq
    %v8173 = vshrl.u32 %v8172, 7
    %v8174 = vsub.s32 %v8171, %v8173
    %v8175 = vrot.slane %v8159, %v8174
    %v8176 = vsel %vm7840, %v8168, %v8168
    %v8177 = vsel %vm7842, %v8168, %v8176
    %v8178 = vrot.slane %v8175, 7
    %v8179 = vsel %vm7845, %v8178, %v8177
    %v8180 = vsel %vm7847, %v8178, %v8179
    %v8181 = vsel %vm7849, %v8178, %v8180
    %v8182 = vsel %vm7851, %v8178, %v8181
    %8183 = vrot.lane.b32.xlu0 %v8182, 64
    %v8184 = vpop.permute.xlu0 %8183
    %8186 = vst.msk [vmem:[#allocation4 + $0x2] sm:$0x3] %vm7966, %v8184
    %v8187 = vsel %vm7795, %v7756, 0.0
    %v8188 = vsel %vm7795, %v7758, 0.0
    %v8189 = vadd.f32 %v8187, %v8188
    %v8190 = vsel %vm7795, %v7760, 0.0
    %v8191 = vadd.f32 %v8189, %v8190
    %v8192 = vsel %vm7795, %v7762, 0.0
    %v8193 = vadd.f32 %v8191, %v8192
    %v8194 = vrot.slane %v8193, 4
    %v8195 = vadd.f32 %v8193, %v8194
    %v8196 = vrot.slane %v8195, 2
    %v8197 = vadd.f32 %v8195, %v8196
    %v8198 = vrot.slane %v8197, 1
    %v8199 = vadd.f32 %v8197, %v8198
    %v8200 = vsel %vm7795, %v7788, 0.0
    %v8201 = vsel %vm7795, %v7790, 0.0
    %v8202 = vadd.f32 %v8200, %v8201
    %v8203 = vsel %vm7795, %v7792, 0.0
    %v8204 = vadd.f32 %v8202, %v8203
    %v8205 = vsel %vm7795, %v7794, 0.0
    %v8206 = vadd.f32 %v8204, %v8205
    %v8207 = vrot.slane %v8206, 4
    %v8208 = vadd.f32 %v8206, %v8207
    %v8209 = vrot.slane %v8208, 2
    %v8210 = vadd.f32 %v8208, %v8209
    %v8211 = vrot.slane %v8210, 1
    %v8212 = vadd.f32 %v8210, %v8211
    %v8213 = vmul.f32 %v8199, 0.03125
    %v8214 = vmul.f32 %v8212, 0.03125
    %v8218 = vunpack.c.l.s4 1983009808
    %v8219 = vunpack.c.0.s8 %v8218
    %v8220 = vlaneseq
    %v8221 = vshrl.u32 %v8220, 7
    %v8222 = vsub.s32 %v8219, %v8221
    %v8223 = vrot.slane %v8213, %v8222
    %v8225 = vunpack.c.l.s4 1983009808
    %v8226 = vunpack.c.0.s8 %v8225
    %v8227 = vlaneseq
    %v8228 = vshrl.u32 %v8227, 7
    %v8229 = vsub.s32 %v8226, %v8228
    %v8230 = vrot.slane %v8214, %v8229
    %v8231 = vsel %vm7840, %v8223, %v8223
    %v8232 = vsel %vm7842, %v8223, %v8231
    %v8233 = vrot.slane %v8230, 7
    %v8234 = vsel %vm7845, %v8233, %v8232
    %v8235 = vsel %vm7847, %v8233, %v8234
    %v8236 = vsel %vm7849, %v8233, %v8235
    %v8237 = vsel %vm7851, %v8233, %v8236
    %8238 = vrot.lane.b32.xlu0 %v8237, 96
    %v8239 = vpop.permute.xlu0 %8238
    %8241 = vst.msk [vmem:[#allocation4 + $0x2] sm:$0x3] %vm8022, %v8239
    %v8242 = vld [vmem:[#allocation4] sm:$0xf]
    %v8245 = vunpack.c.l.s4 1983009808
    %v8246 = vunpack.c.0.s8 %v8245
    %v8247 = vlaneseq
    %v8248 = vshrl.u32 %v8247, 7
    %v8249 = vsub.s32 %v8246, %v8248
    %v8250 = vrot.slane %v8242, %v8249
    %v8251 = vcombine.high %v8250, %v8250
    %v8254 = vpack.c.bf16 %v8250, %v8250
    %v8255 = vpack.c.bf16 %v8251, %v8251
    %v8256 = vld [vmem:[%s5] sm:$0xff]
    %v8257 = vld [vmem:[%s5 + $0x8] sm:$0xff]
    %v8258 = vld [vmem:[%s5 + $0x10] sm:$0xff]
    %v8259 = vld [vmem:[%s5 + $0x18] sm:$0xff]
    %v8260 = vld [vmem:[%s5 + $0x20] sm:$0xff]
    %v8261 = vld [vmem:[%s5 + $0x28] sm:$0xff]
    %v8262 = vld [vmem:[%s5 + $0x30] sm:$0xff]
    %v8263 = vld [vmem:[%s5 + $0x38] sm:$0xff]
    %v8264 = vld [vmem:[%s5 + $0x40] sm:$0xff]
    %v8265 = vld [vmem:[%s5 + $0x48] sm:$0xff]
    %v8266 = vld [vmem:[%s5 + $0x50] sm:$0xff]
    %v8267 = vld [vmem:[%s5 + $0x58] sm:$0xff]
    %v8268 = vld [vmem:[%s5 + $0x60] sm:$0xff]
    %v8269 = vld [vmem:[%s5 + $0x68] sm:$0xff]
    %v8270 = vld [vmem:[%s5 + $0x70] sm:$0xff]
    %v8271 = vld [vmem:[%s5 + $0x78] sm:$0xff]
    %v8272 = vld [vmem:[%s5 + $0x80] sm:$0xff]
    %v8273 = vld [vmem:[%s5 + $0x88] sm:$0xff]
    %v8274 = vld [vmem:[%s5 + $0x90] sm:$0xff]
    %v8275 = vld [vmem:[%s5 + $0x98] sm:$0xff]
    %v8276 = vld [vmem:[%s5 + $0xa0] sm:$0xff]
    %v8277 = vld [vmem:[%s5 + $0xa8] sm:$0xff]
    %v8278 = vld [vmem:[%s5 + $0xb0] sm:$0xff]
    %v8279 = vld [vmem:[%s5 + $0xb8] sm:$0xff]
    %v8280 = vld [vmem:[%s5 + $0xc0] sm:$0xff]
    %v8281 = vld [vmem:[%s5 + $0xc8] sm:$0xff]
    %v8282 = vld [vmem:[%s5 + $0xd0] sm:$0xff]
    %v8283 = vld [vmem:[%s5 + $0xd8] sm:$0xff]
    %v8284 = vld [vmem:[%s5 + $0xe0] sm:$0xff]
    %v8285 = vld [vmem:[%s5 + $0xe8] sm:$0xff]
    %v8286 = vld [vmem:[%s5 + $0xf0] sm:$0xff]
    %v8287 = vld [vmem:[%s5 + $0xf8] sm:$0xff]
    %v8288 = vld [vmem:[%s6] sm:$0x3]
    %v8290 = vlaneseq
    %v8291 = vshrl.u32 %v8290, 7
    %v8292 = vsub.s32 0, %v8291
    %v8293 = vrot.slane %v8288, %v8292
    %v8294 = vlaneseq
    %v8295 = vshrl.u32 %v8294, 7
    %v8296 = vsub.s32 1, %v8295
    %v8297 = vrot.slane %v8288, %v8296
    %v8332 = vunpack.c.l.b16 %v8256
    %v8333 = vunpack.c.h.b16 %v8256
    %v8334 = vunpack.c.l.b16 %v8257
    %v8335 = vunpack.c.h.b16 %v8257
    %v8336 = vunpack.c.l.b16 %v8258
    %v8337 = vunpack.c.h.b16 %v8258
    %v8338 = vunpack.c.l.b16 %v8259
    %v8339 = vunpack.c.h.b16 %v8259
    %v8340 = vunpack.c.l.b16 %v8260
    %v8341 = vunpack.c.h.b16 %v8260
    %v8342 = vunpack.c.l.b16 %v8261
    %v8343 = vunpack.c.h.b16 %v8261
    %v8344 = vunpack.c.l.b16 %v8262
    %v8345 = vunpack.c.h.b16 %v8262
    %v8346 = vunpack.c.l.b16 %v8263
    %v8347 = vunpack.c.h.b16 %v8263
    %v8348 = vunpack.c.l.b16 %v8264
    %v8349 = vunpack.c.h.b16 %v8264
    %v8350 = vunpack.c.l.b16 %v8265
    %v8351 = vunpack.c.h.b16 %v8265
    %v8352 = vunpack.c.l.b16 %v8266
    %v8353 = vunpack.c.h.b16 %v8266
    %v8354 = vunpack.c.l.b16 %v8267
    %v8355 = vunpack.c.h.b16 %v8267
    %v8356 = vunpack.c.l.b16 %v8268
    %v8357 = vunpack.c.h.b16 %v8268
    %v8358 = vunpack.c.l.b16 %v8269
    %v8359 = vunpack.c.h.b16 %v8269
    %v8360 = vunpack.c.l.b16 %v8270
    %v8361 = vunpack.c.h.b16 %v8270
    %v8362 = vunpack.c.l.b16 %v8271
    %v8363 = vunpack.c.h.b16 %v8271
    %v8364 = vunpack.c.l.b16 %v8272
    %v8365 = vunpack.c.h.b16 %v8272
    %v8366 = vunpack.c.l.b16 %v8273
    %v8367 = vunpack.c.h.b16 %v8273
    %v8368 = vunpack.c.l.b16 %v8274
    %v8369 = vunpack.c.h.b16 %v8274
    %v8370 = vunpack.c.l.b16 %v8275
    %v8371 = vunpack.c.h.b16 %v8275
    %v8372 = vunpack.c.l.b16 %v8276
    %v8373 = vunpack.c.h.b16 %v8276
    %v8374 = vunpack.c.l.b16 %v8277
    %v8375 = vunpack.c.h.b16 %v8277
    %v8376 = vunpack.c.l.b16 %v8278
    %v8377 = vunpack.c.h.b16 %v8278
    %v8378 = vunpack.c.l.b16 %v8279
    %v8379 = vunpack.c.h.b16 %v8279
    %v8380 = vunpack.c.l.b16 %v8280
    %v8381 = vunpack.c.h.b16 %v8280
    %v8382 = vunpack.c.l.b16 %v8281
    %v8383 = vunpack.c.h.b16 %v8281
    %v8384 = vunpack.c.l.b16 %v8282
    %v8385 = vunpack.c.h.b16 %v8282
    %v8386 = vunpack.c.l.b16 %v8283
    %v8387 = vunpack.c.h.b16 %v8283
    %v8388 = vunpack.c.l.b16 %v8284
    %v8389 = vunpack.c.h.b16 %v8284
    %v8390 = vunpack.c.l.b16 %v8285
    %v8391 = vunpack.c.h.b16 %v8285
    %v8392 = vunpack.c.l.b16 %v8286
    %v8393 = vunpack.c.h.b16 %v8286
    %v8394 = vunpack.c.l.b16 %v8287
    %v8395 = vunpack.c.h.b16 %v8287
    %v8396 = vpack.c.b16 %v8334, %v8332
    %v8397 = vpack.c.b16 %v8335, %v8333
    %v8398 = vpack.c.b16 %v8338, %v8336
    %v8399 = vpack.c.b16 %v8339, %v8337
    %v8400 = vpack.c.b16 %v8342, %v8340
    %v8401 = vpack.c.b16 %v8343, %v8341
    %v8402 = vpack.c.b16 %v8346, %v8344
    %v8403 = vpack.c.b16 %v8347, %v8345
    %v8404 = vpack.c.b16 %v8350, %v8348
    %v8405 = vpack.c.b16 %v8351, %v8349
    %v8406 = vpack.c.b16 %v8354, %v8352
    %v8407 = vpack.c.b16 %v8355, %v8353
    %v8408 = vpack.c.b16 %v8358, %v8356
    %v8409 = vpack.c.b16 %v8359, %v8357
    %v8410 = vpack.c.b16 %v8362, %v8360
    %v8411 = vpack.c.b16 %v8363, %v8361
    %v8412 = vpack.c.b16 %v8366, %v8364
    %v8413 = vpack.c.b16 %v8367, %v8365
    %v8414 = vpack.c.b16 %v8370, %v8368
    %v8415 = vpack.c.b16 %v8371, %v8369
    %v8416 = vpack.c.b16 %v8374, %v8372
    %v8417 = vpack.c.b16 %v8375, %v8373
    %v8418 = vpack.c.b16 %v8378, %v8376
    %v8419 = vpack.c.b16 %v8379, %v8377
    %v8420 = vpack.c.b16 %v8382, %v8380
    %v8421 = vpack.c.b16 %v8383, %v8381
    %v8422 = vpack.c.b16 %v8386, %v8384
    %v8423 = vpack.c.b16 %v8387, %v8385
    %v8424 = vpack.c.b16 %v8390, %v8388
    %v8425 = vpack.c.b16 %v8391, %v8389
    %v8426 = vpack.c.b16 %v8394, %v8392
    %v8427 = vpack.c.b16 %v8395, %v8393
    %8460 = vmatprep.subr.bf16.mxu0 %v8411
    %8461 = vmatpush1.bf16.msra.mxu0 %v8410
    %8462 = vmatprep.subr.bf16.mxu0 %v8409
    %8463 = vmatpush1.bf16.msra.mxu0 %v8408
    %8464 = vmatprep.subr.bf16.mxu0 %v8407
    %8465 = vmatpush1.bf16.msra.mxu0 %v8406
    %8466 = vmatprep.subr.bf16.mxu0 %v8405
    %8467 = vmatpush1.bf16.msra.mxu0 %v8404
    %8468 = vmatprep.subr.bf16.mxu0 %v8403
    %8469 = vmatpush1.bf16.msra.mxu0 %v8402
    %8470 = vmatprep.subr.bf16.mxu0 %v8401
    %8471 = vmatpush1.bf16.msra.mxu0 %v8400
    %8472 = vmatprep.subr.bf16.mxu0 %v8399
    %8473 = vmatpush1.bf16.msra.mxu0 %v8398
    %8474 = vmatprep.subr.bf16.mxu0 %v8397
    %8475 = vmatpush1.bf16.msra.mxu0 %v8396
    %8476 = vmatprep.subr.bf16.mxu0 %v8427
    %8477 = vmatpush2.bf16.msra.mxu0 %v8426
    %8478 = vmatprep.subr.bf16.mxu0 %v8425
    %8479 = vmatpush2.bf16.msra.mxu0 %v8424
    %8480 = vmatprep.subr.bf16.mxu0 %v8423
    %8481 = vmatpush2.bf16.msra.mxu0 %v8422
    %8482 = vmatprep.subr.bf16.mxu0 %v8421
    %8483 = vmatpush2.bf16.msra.mxu0 %v8420
    %8484 = vmatprep.subr.bf16.mxu0 %v8419
    %8485 = vmatpush2.bf16.msra.mxu0 %v8418
    %8486 = vmatprep.subr.bf16.mxu0 %v8417
    %8487 = vmatpush2.bf16.msra.mxu0 %v8416
    %8488 = vmatprep.subr.bf16.mxu0 %v8415
    %8489 = vmatpush2.bf16.msra.mxu0 %v8414
    %8490 = vmatprep.subr.bf16.mxu0 %v8413
    %8491 = vmatpush2.bf16.msra.mxu0 %v8412
    %8492 = vmatprep.mubr.bf16.mxu0 %v8255
    %8493 = vmatmul.mubr.bf16.gmra.mxu0 %v8254
    %v8494 = vpop.f32.mrf.mxu0
    %v8495 = vadd.f32 %v8293, %v8494
    %v8496 = vpop.f32.mrf.mxu0
    %v8497 = vadd.f32 %v8297, %v8496
    %v8498 = vpop.f32.mrf.mxu0
    %v8499 = vpop.f32.mrf.mxu0
    %8500 = vdwg.mxu0
    %v8501 = vmax.f32 %v8495, 0.0
    %v8502 = vmax.f32 %v8497, 0.0
    %v8503 = vpack.c.bf16 %v8501, %v8501
    %v8504 = vpack.c.bf16 %v8502, %v8502
    %v8505 = vld [vmem:[%s7] sm:$0xf]
    %v8506 = vld [vmem:[%s7 + $0x4] sm:$0xf]
    %v8507 = vld [vmem:[%s7 + $0x8] sm:$0xf]
    %v8508 = vld [vmem:[%s7 + $0xc] sm:$0xf]
    %v8509 = vld [vmem:[%s7 + $0x10] sm:$0xf]
    %v8510 = vld [vmem:[%s7 + $0x14] sm:$0xf]
    %v8511 = vld [vmem:[%s7 + $0x18] sm:$0xf]
    %v8512 = vld [vmem:[%s7 + $0x1c] sm:$0xf]
    %v8513 = vld [vmem:[%s7 + $0x20] sm:$0xf]
    %v8514 = vld [vmem:[%s7 + $0x24] sm:$0xf]
    %v8515 = vld [vmem:[%s7 + $0x28] sm:$0xf]
    %v8516 = vld [vmem:[%s7 + $0x2c] sm:$0xf]
    %v8517 = vld [vmem:[%s7 + $0x30] sm:$0xf]
    %v8518 = vld [vmem:[%s7 + $0x34] sm:$0xf]
    %v8519 = vld [vmem:[%s7 + $0x38] sm:$0xf]
    %v8520 = vld [vmem:[%s7 + $0x3c] sm:$0xf]
    %v8521 = vld [vmem:[%s7 + $0x40] sm:$0xf]
    %v8522 = vld [vmem:[%s7 + $0x44] sm:$0xf]
    %v8523 = vld [vmem:[%s7 + $0x48] sm:$0xf]
    %v8524 = vld [vmem:[%s7 + $0x4c] sm:$0xf]
    %v8525 = vld [vmem:[%s7 + $0x50] sm:$0xf]
    %v8526 = vld [vmem:[%s7 + $0x54] sm:$0xf]
    %v8527 = vld [vmem:[%s7 + $0x58] sm:$0xf]
    %v8528 = vld [vmem:[%s7 + $0x5c] sm:$0xf]
    %v8529 = vld [vmem:[%s7 + $0x60] sm:$0xf]
    %v8530 = vld [vmem:[%s7 + $0x64] sm:$0xf]
    %v8531 = vld [vmem:[%s7 + $0x68] sm:$0xf]
    %v8532 = vld [vmem:[%s7 + $0x6c] sm:$0xf]
    %v8533 = vld [vmem:[%s7 + $0x70] sm:$0xf]
    %v8534 = vld [vmem:[%s7 + $0x74] sm:$0xf]
    %v8535 = vld [vmem:[%s7 + $0x78] sm:$0xf]
    %v8536 = vld [vmem:[%s7 + $0x7c] sm:$0xf]
    %v8537 = vld [vmem:[%s8] sm:$0x1]
    %v8539 = vlaneseq
    %v8540 = vshrl.u32 %v8539, 7
    %v8541 = vsub.s32 0, %v8540
    %v8542 = vrot.slane %v8537, %v8541
    %v8576 = vunpack.c.l.b16 %v8505
    %v8577 = vunpack.c.l.b16 %v8506
    %v8578 = vunpack.c.l.b16 %v8507
    %v8579 = vunpack.c.l.b16 %v8508
    %v8580 = vunpack.c.l.b16 %v8509
    %v8581 = vunpack.c.l.b16 %v8510
    %v8582 = vunpack.c.l.b16 %v8511
    %v8583 = vunpack.c.l.b16 %v8512
    %v8584 = vunpack.c.l.b16 %v8513
    %v8585 = vunpack.c.l.b16 %v8514
    %v8586 = vunpack.c.l.b16 %v8515
    %v8587 = vunpack.c.l.b16 %v8516
    %v8588 = vunpack.c.l.b16 %v8517
    %v8589 = vunpack.c.l.b16 %v8518
    %v8590 = vunpack.c.l.b16 %v8519
    %v8591 = vunpack.c.l.b16 %v8520
    %v8592 = vunpack.c.l.b16 %v8521
    %v8593 = vunpack.c.l.b16 %v8522
    %v8594 = vunpack.c.l.b16 %v8523
    %v8595 = vunpack.c.l.b16 %v8524
    %v8596 = vunpack.c.l.b16 %v8525
    %v8597 = vunpack.c.l.b16 %v8526
    %v8598 = vunpack.c.l.b16 %v8527
    %v8599 = vunpack.c.l.b16 %v8528
    %v8600 = vunpack.c.l.b16 %v8529
    %v8601 = vunpack.c.l.b16 %v8530
    %v8602 = vunpack.c.l.b16 %v8531
    %v8603 = vunpack.c.l.b16 %v8532
    %v8604 = vunpack.c.l.b16 %v8533
    %v8605 = vunpack.c.l.b16 %v8534
    %v8606 = vunpack.c.l.b16 %v8535
    %v8607 = vunpack.c.l.b16 %v8536
    %v8608 = vpack.c.b16 %v8577, %v8576
    %v8609 = vpack.c.b16 %v8579, %v8578
    %v8610 = vpack.c.b16 %v8581, %v8580
    %v8611 = vpack.c.b16 %v8583, %v8582
    %v8612 = vpack.c.b16 %v8585, %v8584
    %v8613 = vpack.c.b16 %v8587, %v8586
    %v8614 = vpack.c.b16 %v8589, %v8588
    %v8615 = vpack.c.b16 %v8591, %v8590
    %v8616 = vpack.c.b16 %v8593, %v8592
    %v8617 = vpack.c.b16 %v8595, %v8594
    %v8618 = vpack.c.b16 %v8597, %v8596
    %v8619 = vpack.c.b16 %v8599, %v8598
    %v8620 = vpack.c.b16 %v8601, %v8600
    %v8621 = vpack.c.b16 %v8603, %v8602
    %v8622 = vpack.c.b16 %v8605, %v8604
    %v8623 = vpack.c.b16 %v8607, %v8606
    %8640 = vmatprep.subr.bf16.mxu0 0
    %8641 = vmatpush1.bf16.msra.mxu0 %v8615
    %8642 = vmatprep.subr.bf16.mxu0 0
    %8643 = vmatpush1.bf16.msra.mxu0 %v8614
    %8644 = vmatprep.subr.bf16.mxu0 0
    %8645 = vmatpush1.bf16.msra.mxu0 %v8613
    %8646 = vmatprep.subr.bf16.mxu0 0
    %8647 = vmatpush1.bf16.msra.mxu0 %v8612
    %8648 = vmatprep.subr.bf16.mxu0 0
    %8649 = vmatpush1.bf16.msra.mxu0 %v8611
    %8650 = vmatprep.subr.bf16.mxu0 0
    %8651 = vmatpush1.bf16.msra.mxu0 %v8610
    %8652 = vmatprep.subr.bf16.mxu0 0
    %8653 = vmatpush1.bf16.msra.mxu0 %v8609
    %8654 = vmatprep.subr.bf16.mxu0 0
    %8655 = vmatpush1.bf16.msra.mxu0 %v8608
    %8656 = vmatprep.subr.bf16.mxu0 0
    %8657 = vmatpush2.bf16.msra.mxu0 %v8623
    %8658 = vmatprep.subr.bf16.mxu0 0
    %8659 = vmatpush2.bf16.msra.mxu0 %v8622
    %8660 = vmatprep.subr.bf16.mxu0 0
    %8661 = vmatpush2.bf16.msra.mxu0 %v8621
    %8662 = vmatprep.subr.bf16.mxu0 0
    %8663 = vmatpush2.bf16.msra.mxu0 %v8620
    %8664 = vmatprep.subr.bf16.mxu0 0
    %8665 = vmatpush2.bf16.msra.mxu0 %v8619
    %8666 = vmatprep.subr.bf16.mxu0 0
    %8667 = vmatpush2.bf16.msra.mxu0 %v8618
    %8668 = vmatprep.subr.bf16.mxu0 0
    %8669 = vmatpush2.bf16.msra.mxu0 %v8617
    %8670 = vmatprep.subr.bf16.mxu0 0
    %8671 = vmatpush2.bf16.msra.mxu0 %v8616
    %8672 = vmatprep.mubr.bf16.mxu0 %v8504
    %8673 = vmatmul.mubr.bf16.gmra.mxu0 %v8503
    %v8674 = vpop.f32.mrf.mxu0
    %v8675 = vadd.f32 %v8542, %v8674
    %v8676 = vpop.f32.mrf.mxu0
    %v8677 = vpop.f32.mrf.mxu0
    %v8678 = vpop.f32.mrf.mxu0
    %8679 = vdwg.mxu0
    %8680 = vst [vmem:[#allocation5] sm:$0x3] %v8675
    // Predicated region
    $region38: #{cnn_forward.1} parent=1 // pred_check
      _
    $region39: #{cnn_forward.1} parent=1 // pred_check_branch
      %8682 = sbr.rel (0) target = $region41
    $region40: #{cnn_forward.1} parent=1 // pred_region
      %s8684 = ssub.s32 32, 32
      %8685 = vsyncadd [#allocation6], %s8684
      %s8687 = sshll.u32 [#allocation5], 4
      %s8688 = int_to_ptr.vmem [resolvable:$true] %s8687
      %8690 = dma.vmem_to_hbm [thread:$0]  %s8688, 32, %s9, [#allocation6]
    $region41: #{cnn_forward.1} parent=1 // pred_fallthru
      _
    // Predicated region
    $region42: #{cnn_forward.1} parent=1 // pred_check
      _
    $region43: #{cnn_forward.1} parent=1 // pred_check_branch
      %8692 = sbr.rel (0) target = $region45
    $region44: #{cnn_forward.1} parent=1 // pred_region
      %8693 = dma.done [#allocation6], 32
    $region45: #{cnn_forward.1} parent=1 // pred_fallthru
      _
    %8694 = vsyncpa [#allocation6], 1

</llo_original>
